<compile_context>
chip_gen: v5e
topology: v5e:2x2
jax: 0.10.0
libtpu: 0.0.40
codegen_flags: <defaults>
</compile_context>

<pallas_src>
from functools import partial

import jax
import jax.numpy as jnp
from jax.experimental import pallas as pl
from jax.experimental.pallas import tpu as pltpu

EPS = 1e-5      # BatchNorm2d default eps
LANE = 128      # TPU lane width


def _round_up(x, m):
    return (x + m - 1) // m * m


def doubleconv_kernel(x_ref, w1_ref, g1_ref, b1_ref, w2_ref, g2_ref, b2_ref,
                      o_ref, xpad_ref, *, H, W, LP):
    """Fused (3x3 same-conv -> BN(batch stats) -> ReLU) x 2.

    x_ref    : (N, H, W, Cp)       input, channels zero-padded to Cp (lane-dense)
    w1_ref   : (9*Cp, Cp)          stage-1 weights, tap-major rows (ky*3+kx)*Cp+ci
    g1/b1    : (1, Cp)             stage-1 BN scale / shift (padded lanes = 0)
    w2_ref   : (9*Cp, Cp)          stage-2 weights
    g2/b2    : (1, Cp)
    o_ref    : (N*H*W, Cp)         output, 128-lane-dense unmasked stores
    xpad_ref : (N, H+2, WP, Cp)    halo-padded activation scratch; the interior
                                   lives at rows [1, H+1) x cols [LP, LP+W)
                                   with LP a multiple of the native sublane tile.
    """
    N, _, WP, Cp = xpad_ref.shape
    M = N * H * W
    cdtype = xpad_ref.dtype

    # ---- Zero ONLY the halo ring (the interior is fully rewritten per stage) ----
    zrow = jnp.zeros((N, 1, WP, Cp), cdtype)
    xpad_ref[:, 0:1, :, :] = zrow                                  # top halo row
    xpad_ref[:, H + 1:H + 2, :, :] = zrow                          # bottom halo row
    xpad_ref[:, 1:H + 1, 0:LP, :] = jnp.zeros((N, H, LP, Cp), cdtype)          # left pad (halo col LP-1)
    xpad_ref[:, 1:H + 1, LP + W:WP, :] = jnp.zeros((N, H, WP - LP - W, Cp), cdtype)  # right pad (halo col LP+W)

    def conv_bn_relu(w_ref, g_ref, b_ref):
        # 3x3 conv as 9 unrolled per-tap MXU matmuls, f32 accumulation.
        # (No im2col concat; pairing taps for K=256 dots is a further option on
        # 256-deep MXUs, but the K copies it needs are exactly what we removed.)
        acc = None
        for t in range(9):
            ky, kx = divmod(t, 3)
            tap = xpad_ref[:, ky:ky + H, LP - 1 + kx:LP - 1 + kx + W, :]
            part = jnp.dot(tap.reshape(M, Cp), w_ref[t * Cp:(t + 1) * Cp, :],
                           preferred_element_type=jnp.float32)
            acc = part if acc is None else acc + part               # (M, Cp) f32

        # BatchNorm (training mode, biased stats over N*H*W) folded into a single
        # per-channel scale/shift: one reduction pass + one fused elementwise pass.
        # Padded lanes: acc==0 -> mean=var=0, gamma=beta=0 -> output stays 0.
        inv_m = 1.0 / M
        mean = jnp.sum(acc, axis=0, keepdims=True) * inv_m          # (1, Cp)
        ex2 = jnp.sum(acc * acc, axis=0, keepdims=True) * inv_m     # E[x^2]
        var = ex2 - mean * mean
        scale = g_ref[...] * jax.lax.rsqrt(var + EPS)
        shift = b_ref[...] - mean * scale
        return jnp.maximum(acc * scale + shift, 0.0)                # (M, Cp) f32

    # Stage 1: sublane-aligned, unmasked interior store of the input.
    xpad_ref[:, 1:H + 1, LP:LP + W, :] = x_ref[...].astype(cdtype)
    y1 = conv_bn_relu(w1_ref, g1_ref, b1_ref)

    # Stage 2: the stage-1 activation never leaves VMEM.
    xpad_ref[:, 1:H + 1, LP:LP + W, :] = y1.reshape(N, H, W, Cp).astype(cdtype)
    y2 = conv_bn_relu(w2_ref, g2_ref, b2_ref)

    o_ref[...] = y2.astype(o_ref.dtype)                             # lane-dense store


def doubleconv_forward(x_nchw, params, *, compute_dtype=jnp.float32):
    """Full Doubleconv forward. Input is NCHW like PyTorch; output NCHW.

    compute_dtype=jnp.bfloat16 feeds the MXU bf16 operands with f32 accumulation
    and halves resident VMEM / HBM bytes (the production option on v6e/v7x).
    """
    N, Cin, H, W = x_nchw.shape
    Cout = params["w1"].shape[-1]
    Cp = _round_up(max(Cin, Cout), LANE)                 # lane-padded channels

    # Interior column offset of the halo scratch: multiple of the native sublane
    # tile (8 rows f32, 16 rows bf16) so the interior store is unmasked.
    itemsize = jnp.dtype(compute_dtype).itemsize
    lp = 8 * max(1, 4 // itemsize)
    wp = _round_up(lp + W + 1, 8)                        # left pad + W + right halo

    # NCHW -> NHWC, channels zero-padded to the lane width (lane-dense layout).
    x = jnp.transpose(x_nchw, (0, 2, 3, 1)).astype(compute_dtype)
    x = jnp.pad(x, ((0, 0), (0, 0), (0, 0), (0, Cp - Cin)))

    def prep_w(w_hwio):
        # (3,3,Ci,Co) HWIO -> tap-major (9*Cp, Cp); padded rows/cols are zero.
        ci, co = w_hwio.shape[2], w_hwio.shape[3]
        w = jnp.zeros((3, 3, Cp, Cp), compute_dtype)
        w = w.at[:, :, :ci, :co].set(w_hwio.astype(compute_dtype))
        return w.reshape(9 * Cp, Cp)

    def prep_v(v):
        out = jnp.zeros((1, Cp), jnp.float32)            # BN math stays f32
        return out.at[0, :v.shape[0]].set(v.astype(jnp.float32))

    w1 = prep_w(params["w1"])
    w2 = prep_w(params["w2"])
    g1, b1 = prep_v(params["gamma1"]), prep_v(params["beta1"])
    g2, b2 = prep_v(params["gamma2"]), prep_v(params["beta2"])

    kernel = partial(doubleconv_kernel, H=H, W=W, LP=lp)

    out = pl.pallas_call(
        kernel,
        out_shape=jax.ShapeDtypeStruct((N * H * W, Cp), compute_dtype),
        grid=(1,),
        in_specs=[
            pl.BlockSpec((N, H, W, Cp), lambda i: (0, 0, 0, 0)),
            pl.BlockSpec((9 * Cp, Cp), lambda i: (0, 0)),
            pl.BlockSpec((1, Cp), lambda i: (0, 0)),
            pl.BlockSpec((1, Cp), lambda i: (0, 0)),
            pl.BlockSpec((9 * Cp, Cp), lambda i: (0, 0)),
            pl.BlockSpec((1, Cp), lambda i: (0, 0)),
            pl.BlockSpec((1, Cp), lambda i: (0, 0)),
        ],
        out_specs=pl.BlockSpec((N * H * W, Cp), lambda i: (0, 0)),
        scratch_shapes=[pltpu.VMEM((N, H + 2, wp, Cp), compute_dtype)],
        compiler_params=pltpu.CompilerParams(
            dimension_semantics=("arbitrary",),
            vmem_limit_bytes=32 * 1024 * 1024,   # headroom above v5e's 16 MiB default
        ),
    )(x, w1, g1, b1, w2, g2, b2)

    # Drop channel padding, back to NCHW (free reshape: (M,Cp) is contiguous).
    out = out.reshape(N, H, W, Cp)[..., :Cout]
    return jnp.transpose(out, (0, 3, 1, 2))


def init_params(key, in_channel, out_channel):
    """Deterministic parameter init (shapes from Doubleconv.__init__)."""
    k1, k2 = jax.random.split(key)
    w1 = jax.random.normal(k1, (3, 3, in_channel, out_channel), jnp.float32)
    w1 = w1 * (2.0 / (9 * in_channel)) ** 0.5
    w2 = jax.random.normal(k2, (3, 3, out_channel, out_channel), jnp.float32)
    w2 = w2 * (2.0 / (9 * out_channel)) ** 0.5
    gamma1 = jnp.ones((out_channel,), jnp.float32)
    beta1 = jnp.zeros((out_channel,), jnp.float32)
    gamma2 = jnp.ones((out_channel,), jnp.float32)
    beta2 = jnp.zeros((out_channel,), jnp.float32)
    return dict(w1=w1, gamma1=gamma1, beta1=beta1,
                w2=w2, gamma2=gamma2, beta2=beta2)


def reference_forward(x_nchw, params):
    """Pure-JAX reference (lax conv + explicit training-mode BN)."""
    def cbr(x, w_hwio, gamma, beta):
        y = jax.lax.conv_general_dilated(
            x, w_hwio, window_strides=(1, 1), padding="SAME",
            dimension_numbers=("NHWC", "HWIO", "NHWC"))
        mean = jnp.mean(y, axis=(0, 1, 2), keepdims=True)
        var = jnp.mean((y - mean) ** 2, axis=(0, 1, 2), keepdims=True)
        y = (y - mean) * jax.lax.rsqrt(var + EPS)
        y = y * gamma.reshape(1, 1, 1, -1) + beta.reshape(1, 1, 1, -1)
        return jnp.maximum(y, 0.0)

    x = jnp.transpose(x_nchw, (0, 2, 3, 1))
    x = cbr(x, params["w1"], params["gamma1"], params["beta1"])
    x = cbr(x, params["w2"], params["gamma2"], params["beta2"])
    return jnp.transpose(x, (0, 3, 1, 2))


if __name__ == "__main__":
    N, Cin, Cout, H, W = 2, 4, 8, 16, 16

    key = jax.random.PRNGKey(0)
    kx, kp = jax.random.split(key)
    x = jax.random.normal(kx, (N, Cin, H, W), jnp.float32)   # NCHW like PyTorch
    params = init_params(kp, Cin, Cout)

    ref = jax.block_until_ready(reference_forward(x, params))

    # f32 MXU path: tight check against the lax-conv reference.
    out = jax.block_until_ready(doubleconv_forward(x, params))
    assert out.shape == (N, Cout, H, W)
    assert jnp.allclose(out, ref, rtol=1e-3, atol=1e-3), "f32 mismatch vs reference"

    # bf16 MXU-operand path (production option on v6e/v7x): looser tolerance
    # because activations/weights are rounded to bf16 before the conv matmuls.
    out_bf16 = jax.block_until_ready(
        doubleconv_forward(x, params, compute_dtype=jnp.bfloat16))
    assert out_bf16.shape == (N, Cout, H, W)
    assert jnp.allclose(out_bf16.astype(jnp.float32), ref, rtol=1e-1, atol=1e-1), \
        "bf16 mismatch vs reference"

    print("KERNEL_OK")
</pallas_src>

<mosaic_0001>
module attributes {stable_mosaic.version = 11 : i64} {
  func.func @doubleconv_kernel(%arg0: i32, %arg1: memref<2x16x16x128xf32, #tpu.memory_space<vmem>>, %arg2: memref<1152x128xf32, #tpu.memory_space<vmem>>, %arg3: memref<1x128xf32, #tpu.memory_space<vmem>>, %arg4: memref<1x128xf32, #tpu.memory_space<vmem>>, %arg5: memref<1152x128xf32, #tpu.memory_space<vmem>>, %arg6: memref<1x128xf32, #tpu.memory_space<vmem>>, %arg7: memref<1x128xf32, #tpu.memory_space<vmem>>, %arg8: memref<512x128xf32, #tpu.memory_space<vmem>>, %arg9: memref<2x18x32x128xf32, #tpu.memory_space<vmem>>) attributes {dimension_semantics = [#tpu.dimension_semantics<arbitrary>], iteration_bounds = array<i64: 1>, scalar_prefetch = 0 : i64, scratch_operands = 1 : i64, tpu.core_type = #tpu.core_type<tc>, window_params = [{pipeline_mode = #tpu.pipeline_mode<synchronous>, transform_indices = @transform_0, window_bounds = array<i64: 2, 16, 16, 128>}, {pipeline_mode = #tpu.pipeline_mode<synchronous>, transform_indices = @transform_1, window_bounds = array<i64: 1152, 128>}, {pipeline_mode = #tpu.pipeline_mode<synchronous>, transform_indices = @transform_2, window_bounds = array<i64: 1, 128>}, {pipeline_mode = #tpu.pipeline_mode<synchronous>, transform_indices = @transform_3, window_bounds = array<i64: 1, 128>}, {pipeline_mode = #tpu.pipeline_mode<synchronous>, transform_indices = @transform_4, window_bounds = array<i64: 1152, 128>}, {pipeline_mode = #tpu.pipeline_mode<synchronous>, transform_indices = @transform_5, window_bounds = array<i64: 1, 128>}, {pipeline_mode = #tpu.pipeline_mode<synchronous>, transform_indices = @transform_6, window_bounds = array<i64: 1, 128>}, {pipeline_mode = #tpu.pipeline_mode<synchronous>, transform_indices = @transform_7, window_bounds = array<i64: 512, 128>}]} {
    %cst = arith.constant 0.000000e+00 : f32
    %0 = vector.broadcast %cst : f32 to vector<2x1x32x128xf32>
    %c0 = arith.constant 0 : index
    %c0_0 = arith.constant 0 : index
    %c0_1 = arith.constant 0 : index
    %c0_2 = arith.constant 0 : index
    %1 = vector.load %arg9[%c0, %c0_0, %c0_1, %c0_2] : memref<2x18x32x128xf32, #tpu.memory_space<vmem>>, vector<2x1x32x128xf32>
    tpu.vector_store %arg9[%c0, %c0_0, %c0_1, %c0_2], %0 {strides = array<i32>} : memref<2x18x32x128xf32, #tpu.memory_space<vmem>>, vector<2x1x32x128xf32>,
    %c0_3 = arith.constant 0 : index
    %c17 = arith.constant 17 : index
    %c0_4 = arith.constant 0 : index
    %c0_5 = arith.constant 0 : index
    %2 = vector.load %arg9[%c0_3, %c17, %c0_4, %c0_5] : memref<2x18x32x128xf32, #tpu.memory_space<vmem>>, vector<2x1x32x128xf32>
    tpu.vector_store %arg9[%c0_3, %c17, %c0_4, %c0_5], %0 {strides = array<i32>} : memref<2x18x32x128xf32, #tpu.memory_space<vmem>>, vector<2x1x32x128xf32>,
    %cst_6 = arith.constant 0.000000e+00 : f32
    %3 = vector.broadcast %cst_6 : f32 to vector<2x16x8x128xf32>
    %c0_7 = arith.constant 0 : index
    %c1 = arith.constant 1 : index
    %c0_8 = arith.constant 0 : index
    %c0_9 = arith.constant 0 : index
    %4 = vector.load %arg9[%c0_7, %c1, %c0_8, %c0_9] : memref<2x18x32x128xf32, #tpu.memory_space<vmem>>, vector<2x16x8x128xf32>
    tpu.vector_store %arg9[%c0_7, %c1, %c0_8, %c0_9], %3 {strides = array<i32>} : memref<2x18x32x128xf32, #tpu.memory_space<vmem>>, vector<2x16x8x128xf32>,
    %cst_10 = arith.constant 0.000000e+00 : f32
    %5 = vector.broadcast %cst_10 : f32 to vector<2x16x8x128xf32>
    %c0_11 = arith.constant 0 : index
    %c1_12 = arith.constant 1 : index
    %c24 = arith.constant 24 : index
    %c0_13 = arith.constant 0 : index
    %6 = vector.load %arg9[%c0_11, %c1_12, %c24, %c0_13] : memref<2x18x32x128xf32, #tpu.memory_space<vmem>>, vector<2x16x8x128xf32>
    tpu.vector_store %arg9[%c0_11, %c1_12, %c24, %c0_13], %5 {strides = array<i32>} : memref<2x18x32x128xf32, #tpu.memory_space<vmem>>, vector<2x16x8x128xf32>,
    %c0_14 = arith.constant 0 : index
    %c0_15 = arith.constant 0 : index
    %c0_16 = arith.constant 0 : index
    %c0_17 = arith.constant 0 : index
    %7 = vector.load %arg1[%c0_14, %c0_15, %c0_16, %c0_17] : memref<2x16x16x128xf32, #tpu.memory_space<vmem>>, vector<2x16x16x128xf32>
    %c0_18 = arith.constant 0 : index
    %c1_19 = arith.constant 1 : index
    %c8 = arith.constant 8 : index
    %c0_20 = arith.constant 0 : index
    %8 = vector.load %arg9[%c0_18, %c1_19, %c8, %c0_20] : memref<2x18x32x128xf32, #tpu.memory_space<vmem>>, vector<2x16x16x128xf32>
    tpu.vector_store %arg9[%c0_18, %c1_19, %c8, %c0_20], %7 {strides = array<i32>} : memref<2x18x32x128xf32, #tpu.memory_space<vmem>>, vector<2x16x16x128xf32>,
    %c0_21 = arith.constant 0 : index
    %c0_22 = arith.constant 0 : index
    %c7 = arith.constant 7 : index
    %c0_23 = arith.constant 0 : index
    %9 = vector.load %arg9[%c0_21, %c0_22, %c7, %c0_23] : memref<2x18x32x128xf32, #tpu.memory_space<vmem>>, vector<2x16x16x128xf32>
    %10 = vector.shape_cast %9 : vector<2x16x16x128xf32> to vector<512x128xf32>
    %c0_24 = arith.constant 0 : index
    %c0_25 = arith.constant 0 : index
    %11 = vector.load %arg2[%c0_24, %c0_25] : memref<1152x128xf32, #tpu.memory_space<vmem>>, vector<128x128xf32>
    %cst_26 = arith.constant dense<0.000000e+00> : vector<512x128xf32>
    %12 = tpu.matmul %10, %11, %cst_26 {dimension_numbers = #tpu.dot_dimension_numbers<[1], [0], [0], [1], [0, 0, 1, 1], [], []>} : vector<512x128xf32>, vector<128x128xf32>, vector<512x128xf32> -> vector<512x128xf32>
    %c0_27 = arith.constant 0 : index
    %c0_28 = arith.constant 0 : index
    %c8_29 = arith.constant 8 : index
    %c0_30 = arith.constant 0 : index
    %13 = vector.load %arg9[%c0_27, %c0_28, %c8_29, %c0_30] : memref<2x18x32x128xf32, #tpu.memory_space<vmem>>, vector<2x16x16x128xf32>
    %14 = vector.shape_cast %13 : vector<2x16x16x128xf32> to vector<512x128xf32>
    %c128 = arith.constant 128 : index
    %c0_31 = arith.constant 0 : index
    %15 = vector.load %arg2[%c128, %c0_31] : memref<1152x128xf32, #tpu.memory_space<vmem>>, vector<128x128xf32>
    %cst_32 = arith.constant dense<0.000000e+00> : vector<512x128xf32>
    %16 = tpu.matmul %14, %15, %cst_32 {dimension_numbers = #tpu.dot_dimension_numbers<[1], [0], [0], [1], [0, 0, 1, 1], [], []>} : vector<512x128xf32>, vector<128x128xf32>, vector<512x128xf32> -> vector<512x128xf32>
    %17 = arith.addf %12, %16 : vector<512x128xf32>
    %c0_33 = arith.constant 0 : index
    %c0_34 = arith.constant 0 : index
    %c9 = arith.constant 9 : index
    %c0_35 = arith.constant 0 : index
    %18 = vector.load %arg9[%c0_33, %c0_34, %c9, %c0_35] : memref<2x18x32x128xf32, #tpu.memory_space<vmem>>, vector<2x16x16x128xf32>
    %19 = vector.shape_cast %18 : vector<2x16x16x128xf32> to vector<512x128xf32>
    %c256 = arith.constant 256 : index
    %c0_36 = arith.constant 0 : index
    %20 = vector.load %arg2[%c256, %c0_36] : memref<1152x128xf32, #tpu.memory_space<vmem>>, vector<128x128xf32>
    %cst_37 = arith.constant dense<0.000000e+00> : vector<512x128xf32>
    %21 = tpu.matmul %19, %20, %cst_37 {dimension_numbers = #tpu.dot_dimension_numbers<[1], [0], [0], [1], [0, 0, 1, 1], [], []>} : vector<512x128xf32>, vector<128x128xf32>, vector<512x128xf32> -> vector<512x128xf32>
    %22 = arith.addf %17, %21 : vector<512x128xf32>
    %c0_38 = arith.constant 0 : index
    %c1_39 = arith.constant 1 : index
    %c7_40 = arith.constant 7 : index
    %c0_41 = arith.constant 0 : index
    %23 = vector.load %arg9[%c0_38, %c1_39, %c7_40, %c0_41] : memref<2x18x32x128xf32, #tpu.memory_space<vmem>>, vector<2x16x16x128xf32>
    %24 = vector.shape_cast %23 : vector<2x16x16x128xf32> to vector<512x128xf32>
    %c384 = arith.constant 384 : index
    %c0_42 = arith.constant 0 : index
    %25 = vector.load %arg2[%c384, %c0_42] : memref<1152x128xf32, #tpu.memory_space<vmem>>, vector<128x128xf32>
    %cst_43 = arith.constant dense<0.000000e+00> : vector<512x128xf32>
    %26 = tpu.matmul %24, %25, %cst_43 {dimension_numbers = #tpu.dot_dimension_numbers<[1], [0], [0], [1], [0, 0, 1, 1], [], []>} : vector<512x128xf32>, vector<128x128xf32>, vector<512x128xf32> -> vector<512x128xf32>
    %27 = arith.addf %22, %26 : vector<512x128xf32>
    %c0_44 = arith.constant 0 : index
    %c1_45 = arith.constant 1 : index
    %c8_46 = arith.constant 8 : index
    %c0_47 = arith.constant 0 : index
    %28 = vector.load %arg9[%c0_44, %c1_45, %c8_46, %c0_47] : memref<2x18x32x128xf32, #tpu.memory_space<vmem>>, vector<2x16x16x128xf32>
    %29 = vector.shape_cast %28 : vector<2x16x16x128xf32> to vector<512x128xf32>
    %c512 = arith.constant 512 : index
    %c0_48 = arith.constant 0 : index
    %30 = vector.load %arg2[%c512, %c0_48] : memref<1152x128xf32, #tpu.memory_space<vmem>>, vector<128x128xf32>
    %cst_49 = arith.constant dense<0.000000e+00> : vector<512x128xf32>
    %31 = tpu.matmul %29, %30, %cst_49 {dimension_numbers = #tpu.dot_dimension_numbers<[1], [0], [0], [1], [0, 0, 1, 1], [], []>} : vector<512x128xf32>, vector<128x128xf32>, vector<512x128xf32> -> vector<512x128xf32>
    %32 = arith.addf %27, %31 : vector<512x128xf32>
    %c0_50 = arith.constant 0 : index
    %c1_51 = arith.constant 1 : index
    %c9_52 = arith.constant 9 : index
    %c0_53 = arith.constant 0 : index
    %33 = vector.load %arg9[%c0_50, %c1_51, %c9_52, %c0_53] : memref<2x18x32x128xf32, #tpu.memory_space<vmem>>, vector<2x16x16x128xf32>
    %34 = vector.shape_cast %33 : vector<2x16x16x128xf32> to vector<512x128xf32>
    %c640 = arith.constant 640 : index
    %c0_54 = arith.constant 0 : index
    %35 = vector.load %arg2[%c640, %c0_54] : memref<1152x128xf32, #tpu.memory_space<vmem>>, vector<128x128xf32>
    %cst_55 = arith.constant dense<0.000000e+00> : vector<512x128xf32>
    %36 = tpu.matmul %34, %35, %cst_55 {dimension_numbers = #tpu.dot_dimension_numbers<[1], [0], [0], [1], [0, 0, 1, 1], [], []>} : vector<512x128xf32>, vector<128x128xf32>, vector<512x128xf32> -> vector<512x128xf32>
    %37 = arith.addf %32, %36 : vector<512x128xf32>
    %c0_56 = arith.constant 0 : index
    %c2 = arith.constant 2 : index
    %c7_57 = arith.constant 7 : index
    %c0_58 = arith.constant 0 : index
    %38 = vector.load %arg9[%c0_56, %c2, %c7_57, %c0_58] : memref<2x18x32x128xf32, #tpu.memory_space<vmem>>, vector<2x16x16x128xf32>
    %39 = vector.shape_cast %38 : vector<2x16x16x128xf32> to vector<512x128xf32>
    %c768 = arith.constant 768 : index
    %c0_59 = arith.constant 0 : index
    %40 = vector.load %arg2[%c768, %c0_59] : memref<1152x128xf32, #tpu.memory_space<vmem>>, vector<128x128xf32>
    %cst_60 = arith.constant dense<0.000000e+00> : vector<512x128xf32>
    %41 = tpu.matmul %39, %40, %cst_60 {dimension_numbers = #tpu.dot_dimension_numbers<[1], [0], [0], [1], [0, 0, 1, 1], [], []>} : vector<512x128xf32>, vector<128x128xf32>, vector<512x128xf32> -> vector<512x128xf32>
    %42 = arith.addf %37, %41 : vector<512x128xf32>
    %c0_61 = arith.constant 0 : index
    %c2_62 = arith.constant 2 : index
    %c8_63 = arith.constant 8 : index
    %c0_64 = arith.constant 0 : index
    %43 = vector.load %arg9[%c0_61, %c2_62, %c8_63, %c0_64] : memref<2x18x32x128xf32, #tpu.memory_space<vmem>>, vector<2x16x16x128xf32>
    %44 = vector.shape_cast %43 : vector<2x16x16x128xf32> to vector<512x128xf32>
    %c896 = arith.constant 896 : index
    %c0_65 = arith.constant 0 : index
    %45 = vector.load %arg2[%c896, %c0_65] : memref<1152x128xf32, #tpu.memory_space<vmem>>, vector<128x128xf32>
    %cst_66 = arith.constant dense<0.000000e+00> : vector<512x128xf32>
    %46 = tpu.matmul %44, %45, %cst_66 {dimension_numbers = #tpu.dot_dimension_numbers<[1], [0], [0], [1], [0, 0, 1, 1], [], []>} : vector<512x128xf32>, vector<128x128xf32>, vector<512x128xf32> -> vector<512x128xf32>
    %47 = arith.addf %42, %46 : vector<512x128xf32>
    %c0_67 = arith.constant 0 : index
    %c2_68 = arith.constant 2 : index
    %c9_69 = arith.constant 9 : index
    %c0_70 = arith.constant 0 : index
    %48 = vector.load %arg9[%c0_67, %c2_68, %c9_69, %c0_70] : memref<2x18x32x128xf32, #tpu.memory_space<vmem>>, vector<2x16x16x128xf32>
    %49 = vector.shape_cast %48 : vector<2x16x16x128xf32> to vector<512x128xf32>
    %c1024 = arith.constant 1024 : index
    %c0_71 = arith.constant 0 : index
    %50 = vector.load %arg2[%c1024, %c0_71] : memref<1152x128xf32, #tpu.memory_space<vmem>>, vector<128x128xf32>
    %cst_72 = arith.constant dense<0.000000e+00> : vector<512x128xf32>
    %51 = tpu.matmul %49, %50, %cst_72 {dimension_numbers = #tpu.dot_dimension_numbers<[1], [0], [0], [1], [0, 0, 1, 1], [], []>} : vector<512x128xf32>, vector<128x128xf32>, vector<512x128xf32> -> vector<512x128xf32>
    %52 = arith.addf %47, %51 : vector<512x128xf32>
    %cst_73 = arith.constant dense<0.000000e+00> : vector<128xf32>
    %53 = vector.multi_reduction <add>, %52, %cst_73 [0] : vector<512x128xf32> to vector<128xf32>
    %54 = vector.shape_cast %53 : vector<128xf32> to vector<1x128xf32>
    %cst_74 = arith.constant 0.001953125 : f32
    %55 = vector.broadcast %cst_74 : f32 to vector<1x128xf32>
    %56 = arith.mulf %54, %55 : vector<1x128xf32>
    %57 = arith.mulf %52, %52 : vector<512x128xf32>
    %cst_75 = arith.constant dense<0.000000e+00> : vector<128xf32>
    %58 = vector.multi_reduction <add>, %57, %cst_75 [0] : vector<512x128xf32> to vector<128xf32>
    %59 = vector.shape_cast %58 : vector<128xf32> to vector<1x128xf32>
    %cst_76 = arith.constant 0.001953125 : f32
    %60 = vector.broadcast %cst_76 : f32 to vector<1x128xf32>
    %61 = arith.mulf %59, %60 : vector<1x128xf32>
    %62 = arith.mulf %56, %56 : vector<1x128xf32>
    %63 = arith.subf %61, %62 : vector<1x128xf32>
    %c0_77 = arith.constant 0 : index
    %c0_78 = arith.constant 0 : index
    %64 = vector.load %arg3[%c0_77, %c0_78] : memref<1x128xf32, #tpu.memory_space<vmem>>, vector<1x128xf32>
    %cst_79 = arith.constant 9.99999974E-6 : f32
    %65 = vector.broadcast %cst_79 : f32 to vector<1x128xf32>
    %66 = arith.addf %63, %65 : vector<1x128xf32>
    %67 = math.rsqrt %66 : vector<1x128xf32>
    %68 = arith.mulf %64, %67 : vector<1x128xf32>
    %c0_80 = arith.constant 0 : index
    %c0_81 = arith.constant 0 : index
    %69 = vector.load %arg4[%c0_80, %c0_81] : memref<1x128xf32, #tpu.memory_space<vmem>>, vector<1x128xf32>
    %70 = arith.mulf %56, %68 : vector<1x128xf32>
    %71 = arith.subf %69, %70 : vector<1x128xf32>
    %72 = vector.broadcast %68 : vector<1x128xf32> to vector<512x128xf32>
    %73 = arith.mulf %52, %72 : vector<512x128xf32>
    %74 = vector.broadcast %71 : vector<1x128xf32> to vector<512x128xf32>
    %75 = arith.addf %73, %74 : vector<512x128xf32>
    %cst_82 = arith.constant 0.000000e+00 : f32
    %76 = vector.broadcast %cst_82 : f32 to vector<512x128xf32>
    %77 = arith.maximumf %75, %76 : vector<512x128xf32>
    %78 = vector.shape_cast %77 : vector<512x128xf32> to vector<2x16x16x128xf32>
    %c0_83 = arith.constant 0 : index
    %c1_84 = arith.constant 1 : index
    %c8_85 = arith.constant 8 : index
    %c0_86 = arith.constant 0 : index
    %79 = vector.load %arg9[%c0_83, %c1_84, %c8_85, %c0_86] : memref<2x18x32x128xf32, #tpu.memory_space<vmem>>, vector<2x16x16x128xf32>
    tpu.vector_store %arg9[%c0_83, %c1_84, %c8_85, %c0_86], %78 {strides = array<i32>} : memref<2x18x32x128xf32, #tpu.memory_space<vmem>>, vector<2x16x16x128xf32>,
    %c0_87 = arith.constant 0 : index
    %c0_88 = arith.constant 0 : index
    %c7_89 = arith.constant 7 : index
    %c0_90 = arith.constant 0 : index
    %80 = vector.load %arg9[%c0_87, %c0_88, %c7_89, %c0_90] : memref<2x18x32x128xf32, #tpu.memory_space<vmem>>, vector<2x16x16x128xf32>
    %81 = vector.shape_cast %80 : vector<2x16x16x128xf32> to vector<512x128xf32>
    %c0_91 = arith.constant 0 : index
    %c0_92 = arith.constant 0 : index
    %82 = vector.load %arg5[%c0_91, %c0_92] : memref<1152x128xf32, #tpu.memory_space<vmem>>, vector<128x128xf32>
    %cst_93 = arith.constant dense<0.000000e+00> : vector<512x128xf32>
    %83 = tpu.matmul %81, %82, %cst_93 {dimension_numbers = #tpu.dot_dimension_numbers<[1], [0], [0], [1], [0, 0, 1, 1], [], []>} : vector<512x128xf32>, vector<128x128xf32>, vector<512x128xf32> -> vector<512x128xf32>
    %c0_94 = arith.constant 0 : index
    %c0_95 = arith.constant 0 : index
    %c8_96 = arith.constant 8 : index
    %c0_97 = arith.constant 0 : index
    %84 = vector.load %arg9[%c0_94, %c0_95, %c8_96, %c0_97] : memref<2x18x32x128xf32, #tpu.memory_space<vmem>>, vector<2x16x16x128xf32>
    %85 = vector.shape_cast %84 : vector<2x16x16x128xf32> to vector<512x128xf32>
    %c128_98 = arith.constant 128 : index
    %c0_99 = arith.constant 0 : index
    %86 = vector.load %arg5[%c128_98, %c0_99] : memref<1152x128xf32, #tpu.memory_space<vmem>>, vector<128x128xf32>
    %cst_100 = arith.constant dense<0.000000e+00> : vector<512x128xf32>
    %87 = tpu.matmul %85, %86, %cst_100 {dimension_numbers = #tpu.dot_dimension_numbers<[1], [0], [0], [1], [0, 0, 1, 1], [], []>} : vector<512x128xf32>, vector<128x128xf32>, vector<512x128xf32> -> vector<512x128xf32>
    %88 = arith.addf %83, %87 : vector<512x128xf32>
    %c0_101 = arith.constant 0 : index
    %c0_102 = arith.constant 0 : index
    %c9_103 = arith.constant 9 : index
    %c0_104 = arith.constant 0 : index
    %89 = vector.load %arg9[%c0_101, %c0_102, %c9_103, %c0_104] : memref<2x18x32x128xf32, #tpu.memory_space<vmem>>, vector<2x16x16x128xf32>
    %90 = vector.shape_cast %89 : vector<2x16x16x128xf32> to vector<512x128xf32>
    %c256_105 = arith.constant 256 : index
    %c0_106 = arith.constant 0 : index
    %91 = vector.load %arg5[%c256_105, %c0_106] : memref<1152x128xf32, #tpu.memory_space<vmem>>, vector<128x128xf32>
    %cst_107 = arith.constant dense<0.000000e+00> : vector<512x128xf32>
    %92 = tpu.matmul %90, %91, %cst_107 {dimension_numbers = #tpu.dot_dimension_numbers<[1], [0], [0], [1], [0, 0, 1, 1], [], []>} : vector<512x128xf32>, vector<128x128xf32>, vector<512x128xf32> -> vector<512x128xf32>
    %93 = arith.addf %88, %92 : vector<512x128xf32>
    %c0_108 = arith.constant 0 : index
    %c1_109 = arith.constant 1 : index
    %c7_110 = arith.constant 7 : index
    %c0_111 = arith.constant 0 : index
    %94 = vector.load %arg9[%c0_108, %c1_109, %c7_110, %c0_111] : memref<2x18x32x128xf32, #tpu.memory_space<vmem>>, vector<2x16x16x128xf32>
    %95 = vector.shape_cast %94 : vector<2x16x16x128xf32> to vector<512x128xf32>
    %c384_112 = arith.constant 384 : index
    %c0_113 = arith.constant 0 : index
    %96 = vector.load %arg5[%c384_112, %c0_113] : memref<1152x128xf32, #tpu.memory_space<vmem>>, vector<128x128xf32>
    %cst_114 = arith.constant dense<0.000000e+00> : vector<512x128xf32>
    %97 = tpu.matmul %95, %96, %cst_114 {dimension_numbers = #tpu.dot_dimension_numbers<[1], [0], [0], [1], [0, 0, 1, 1], [], []>} : vector<512x128xf32>, vector<128x128xf32>, vector<512x128xf32> -> vector<512x128xf32>
    %98 = arith.addf %93, %97 : vector<512x128xf32>
    %c0_115 = arith.constant 0 : index
    %c1_116 = arith.constant 1 : index
    %c8_117 = arith.constant 8 : index
    %c0_118 = arith.constant 0 : index
    %99 = vector.load %arg9[%c0_115, %c1_116, %c8_117, %c0_118] : memref<2x18x32x128xf32, #tpu.memory_space<vmem>>, vector<2x16x16x128xf32>
    %100 = vector.shape_cast %99 : vector<2x16x16x128xf32> to vector<512x128xf32>
    %c512_119 = arith.constant 512 : index
    %c0_120 = arith.constant 0 : index
    %101 = vector.load %arg5[%c512_119, %c0_120] : memref<1152x128xf32, #tpu.memory_space<vmem>>, vector<128x128xf32>
    %cst_121 = arith.constant dense<0.000000e+00> : vector<512x128xf32>
    %102 = tpu.matmul %100, %101, %cst_121 {dimension_numbers = #tpu.dot_dimension_numbers<[1], [0], [0], [1], [0, 0, 1, 1], [], []>} : vector<512x128xf32>, vector<128x128xf32>, vector<512x128xf32> -> vector<512x128xf32>
    %103 = arith.addf %98, %102 : vector<512x128xf32>
    %c0_122 = arith.constant 0 : index
    %c1_123 = arith.constant 1 : index
    %c9_124 = arith.constant 9 : index
    %c0_125 = arith.constant 0 : index
    %104 = vector.load %arg9[%c0_122, %c1_123, %c9_124, %c0_125] : memref<2x18x32x128xf32, #tpu.memory_space<vmem>>, vector<2x16x16x128xf32>
    %105 = vector.shape_cast %104 : vector<2x16x16x128xf32> to vector<512x128xf32>
    %c640_126 = arith.constant 640 : index
    %c0_127 = arith.constant 0 : index
    %106 = vector.load %arg5[%c640_126, %c0_127] : memref<1152x128xf32, #tpu.memory_space<vmem>>, vector<128x128xf32>
    %cst_128 = arith.constant dense<0.000000e+00> : vector<512x128xf32>
    %107 = tpu.matmul %105, %106, %cst_128 {dimension_numbers = #tpu.dot_dimension_numbers<[1], [0], [0], [1], [0, 0, 1, 1], [], []>} : vector<512x128xf32>, vector<128x128xf32>, vector<512x128xf32> -> vector<512x128xf32>
    %108 = arith.addf %103, %107 : vector<512x128xf32>
    %c0_129 = arith.constant 0 : index
    %c2_130 = arith.constant 2 : index
    %c7_131 = arith.constant 7 : index
    %c0_132 = arith.constant 0 : index
    %109 = vector.load %arg9[%c0_129, %c2_130, %c7_131, %c0_132] : memref<2x18x32x128xf32, #tpu.memory_space<vmem>>, vector<2x16x16x128xf32>
    %110 = vector.shape_cast %109 : vector<2x16x16x128xf32> to vector<512x128xf32>
    %c768_133 = arith.constant 768 : index
    %c0_134 = arith.constant 0 : index
    %111 = vector.load %arg5[%c768_133, %c0_134] : memref<1152x128xf32, #tpu.memory_space<vmem>>, vector<128x128xf32>
    %cst_135 = arith.constant dense<0.000000e+00> : vector<512x128xf32>
    %112 = tpu.matmul %110, %111, %cst_135 {dimension_numbers = #tpu.dot_dimension_numbers<[1], [0], [0], [1], [0, 0, 1, 1], [], []>} : vector<512x128xf32>, vector<128x128xf32>, vector<512x128xf32> -> vector<512x128xf32>
    %113 = arith.addf %108, %112 : vector<512x128xf32>
    %c0_136 = arith.constant 0 : index
    %c2_137 = arith.constant 2 : index
    %c8_138 = arith.constant 8 : index
    %c0_139 = arith.constant 0 : index
    %114 = vector.load %arg9[%c0_136, %c2_137, %c8_138, %c0_139] : memref<2x18x32x128xf32, #tpu.memory_space<vmem>>, vector<2x16x16x128xf32>
    %115 = vector.shape_cast %114 : vector<2x16x16x128xf32> to vector<512x128xf32>
    %c896_140 = arith.constant 896 : index
    %c0_141 = arith.constant 0 : index
    %116 = vector.load %arg5[%c896_140, %c0_141] : memref<1152x128xf32, #tpu.memory_space<vmem>>, vector<128x128xf32>
    %cst_142 = arith.constant dense<0.000000e+00> : vector<512x128xf32>
    %117 = tpu.matmul %115, %116, %cst_142 {dimension_numbers = #tpu.dot_dimension_numbers<[1], [0], [0], [1], [0, 0, 1, 1], [], []>} : vector<512x128xf32>, vector<128x128xf32>, vector<512x128xf32> -> vector<512x128xf32>
    %118 = arith.addf %113, %117 : vector<512x128xf32>
    %c0_143 = arith.constant 0 : index
    %c2_144 = arith.constant 2 : index
    %c9_145 = arith.constant 9 : index
    %c0_146 = arith.constant 0 : index
    %119 = vector.load %arg9[%c0_143, %c2_144, %c9_145, %c0_146] : memref<2x18x32x128xf32, #tpu.memory_space<vmem>>, vector<2x16x16x128xf32>
    %120 = vector.shape_cast %119 : vector<2x16x16x128xf32> to vector<512x128xf32>
    %c1024_147 = arith.constant 1024 : index
    %c0_148 = arith.constant 0 : index
    %121 = vector.load %arg5[%c1024_147, %c0_148] : memref<1152x128xf32, #tpu.memory_space<vmem>>, vector<128x128xf32>
    %cst_149 = arith.constant dense<0.000000e+00> : vector<512x128xf32>
    %122 = tpu.matmul %120, %121, %cst_149 {dimension_numbers = #tpu.dot_dimension_numbers<[1], [0], [0], [1], [0, 0, 1, 1], [], []>} : vector<512x128xf32>, vector<128x128xf32>, vector<512x128xf32> -> vector<512x128xf32>
    %123 = arith.addf %118, %122 : vector<512x128xf32>
    %cst_150 = arith.constant dense<0.000000e+00> : vector<128xf32>
    %124 = vector.multi_reduction <add>, %123, %cst_150 [0] : vector<512x128xf32> to vector<128xf32>
    %125 = vector.shape_cast %124 : vector<128xf32> to vector<1x128xf32>
    %cst_151 = arith.constant 0.001953125 : f32
    %126 = vector.broadcast %cst_151 : f32 to vector<1x128xf32>
    %127 = arith.mulf %125, %126 : vector<1x128xf32>
    %128 = arith.mulf %123, %123 : vector<512x128xf32>
    %cst_152 = arith.constant dense<0.000000e+00> : vector<128xf32>
    %129 = vector.multi_reduction <add>, %128, %cst_152 [0] : vector<512x128xf32> to vector<128xf32>
    %130 = vector.shape_cast %129 : vector<128xf32> to vector<1x128xf32>
    %cst_153 = arith.constant 0.001953125 : f32
    %131 = vector.broadcast %cst_153 : f32 to vector<1x128xf32>
    %132 = arith.mulf %130, %131 : vector<1x128xf32>
    %133 = arith.mulf %127, %127 : vector<1x128xf32>
    %134 = arith.subf %132, %133 : vector<1x128xf32>
    %c0_154 = arith.constant 0 : index
    %c0_155 = arith.constant 0 : index
    %135 = vector.load %arg6[%c0_154, %c0_155] : memref<1x128xf32, #tpu.memory_space<vmem>>, vector<1x128xf32>
    %cst_156 = arith.constant 9.99999974E-6 : f32
    %136 = vector.broadcast %cst_156 : f32 to vector<1x128xf32>
    %137 = arith.addf %134, %136 : vector<1x128xf32>
    %138 = math.rsqrt %137 : vector<1x128xf32>
    %139 = arith.mulf %135, %138 : vector<1x128xf32>
    %c0_157 = arith.constant 0 : index
    %c0_158 = arith.constant 0 : index
    %140 = vector.load %arg7[%c0_157, %c0_158] : memref<1x128xf32, #tpu.memory_space<vmem>>, vector<1x128xf32>
    %141 = arith.mulf %127, %139 : vector<1x128xf32>
    %142 = arith.subf %140, %141 : vector<1x128xf32>
    %143 = vector.broadcast %139 : vector<1x128xf32> to vector<512x128xf32>
    %144 = arith.mulf %123, %143 : vector<512x128xf32>
    %145 = vector.broadcast %142 : vector<1x128xf32> to vector<512x128xf32>
    %146 = arith.addf %144, %145 : vector<512x128xf32>
    %cst_159 = arith.constant 0.000000e+00 : f32
    %147 = vector.broadcast %cst_159 : f32 to vector<512x128xf32>
    %148 = arith.maximumf %146, %147 : vector<512x128xf32>
    %c0_160 = arith.constant 0 : index
    %c0_161 = arith.constant 0 : index
    %149 = vector.load %arg8[%c0_160, %c0_161] : memref<512x128xf32, #tpu.memory_space<vmem>>, vector<512x128xf32>
    tpu.vector_store %arg8[%c0_160, %c0_161], %148 {strides = array<i32>} : memref<512x128xf32, #tpu.memory_space<vmem>>, vector<512x128xf32>,
    return
  }
  func.func @transform_0(%arg0: i32) -> (i32, i32, i32, i32) {
    %c0_i32 = arith.constant 0 : i32
    %c0_i32_0 = arith.constant 0 : i32
    %c0_i32_1 = arith.constant 0 : i32
    %c0_i32_2 = arith.constant 0 : i32
    %c0_i32_3 = arith.constant 0 : i32
    return %c0_i32, %c0_i32_0, %c0_i32_1, %c0_i32_2 : i32, i32, i32, i32
  }
  func.func @transform_1(%arg0: i32) -> (i32, i32) {
    %c0_i32 = arith.constant 0 : i32
    %c0_i32_0 = arith.constant 0 : i32
    %c0_i32_1 = arith.constant 0 : i32
    return %c0_i32, %c0_i32_0 : i32, i32
  }
  func.func @transform_2(%arg0: i32) -> (i32, i32) {
    %c0_i32 = arith.constant 0 : i32
    %c0_i32_0 = arith.constant 0 : i32
    %c0_i32_1 = arith.constant 0 : i32
    return %c0_i32, %c0_i32_0 : i32, i32
  }
  func.func @transform_3(%arg0: i32) -> (i32, i32) {
    %c0_i32 = arith.constant 0 : i32
    %c0_i32_0 = arith.constant 0 : i32
    %c0_i32_1 = arith.constant 0 : i32
    return %c0_i32, %c0_i32_0 : i32, i32
  }
  func.func @transform_4(%arg0: i32) -> (i32, i32) {
    %c0_i32 = arith.constant 0 : i32
    %c0_i32_0 = arith.constant 0 : i32
    %c0_i32_1 = arith.constant 0 : i32
    return %c0_i32, %c0_i32_0 : i32, i32
  }
  func.func @transform_5(%arg0: i32) -> (i32, i32) {
    %c0_i32 = arith.constant 0 : i32
    %c0_i32_0 = arith.constant 0 : i32
    %c0_i32_1 = arith.constant 0 : i32
    return %c0_i32, %c0_i32_0 : i32, i32
  }
  func.func @transform_6(%arg0: i32) -> (i32, i32) {
    %c0_i32 = arith.constant 0 : i32
    %c0_i32_0 = arith.constant 0 : i32
    %c0_i32_1 = arith.constant 0 : i32
    return %c0_i32, %c0_i32_0 : i32, i32
  }
  func.func @transform_7(%arg0: i32) -> (i32, i32) {
    %c0_i32 = arith.constant 0 : i32
    %c0_i32_0 = arith.constant 0 : i32
    %c0_i32_1 = arith.constant 0 : i32
    return %c0_i32, %c0_i32_0 : i32, i32
  }
}

</mosaic_0001>

<llo_original>
// kernel: tpu_custom_call.1
$region0: #{tpu_custom_call.1}
  #allocation0 [shape = 'u32[]', space=smem, size = 0x4, offset = 0x4, fixed_abs, tag = 'smem constant byte address 0x4 - core index']
  #allocation1 [shape = 'u32[72,128]{1,0:T(1,128)}', space=vmem, size = 0x9000, scoped, tag = 'internal scratch']
  #allocation2 [shape = 'f32[2,18,32,128]{3,2,1,0:T(8,128)}', space=vmem, size = 0x90000, scoped, tag = 'scratch operand']
  %s0 = inlined_call_operand.hbm [shape: f32[2,16,16,128], index: 0, kind: input, shape index: {}]
  %s1 = inlined_call_operand.hbm [shape: f32[1152,128], index: 1, kind: input, shape index: {}]
  %s2 = inlined_call_operand.vmem [shape: f32[1,128], index: 2, kind: input, shape index: {}]
  %s3 = inlined_call_operand.vmem [shape: f32[1,128], index: 3, kind: input, shape index: {}]
  %s4 = inlined_call_operand.hbm [shape: f32[1152,128], index: 4, kind: input, shape index: {}]
  %s5 = inlined_call_operand.vmem [shape: f32[1,128], index: 5, kind: input, shape index: {}]
  %s6 = inlined_call_operand.vmem [shape: f32[1,128], index: 6, kind: input, shape index: {}]
  %s7 = inlined_call_operand.hbm [shape: f32[512,128], index: 7, kind: output, shape index: {}]
  %s8 = sld [smem:[#allocation0]]
  $region50: #{tpu_custom_call.1} parent=0
    _
  %s10 = ssub.s32 1, %s8
  %s11 = scalar_select 0, %s10, %s8
  $region1: #{tpu_custom_call.1} parent=0
    #allocation3 [shape = 'u8[262144]{0}', space=vmem, size = 0x40000, scoped, tag = 'input window, operand 0, single buffered']
    #allocation4 [shape = 's32[1]{0}', space=sflag, size = 0x4, scoped, tag = 'scoped memory for tpu_custom_call.1']
    #allocation5 [shape = 's32[1]{0}', space=sflag, size = 0x4, scoped, tag = 'scoped memory for tpu_custom_call.1']
    #allocation6 [shape = 'u8[589824]{0}', space=vmem, size = 0x90000, scoped, tag = 'input window, operand 1, single buffered']
    #allocation7 [shape = 's32[1]{0}', space=sflag, size = 0x4, scoped, tag = 'scoped memory for tpu_custom_call.1']
    #allocation8 [shape = 'u8[589824]{0}', space=vmem, size = 0x90000, scoped, tag = 'input window, operand 4, single buffered']
    #allocation9 [shape = 'u8[262144]{0}', space=vmem, size = 0x40000, scoped, tag = 'output window, operand 0, single buffered']
    %12 = vsyncpa [#allocation4], 0
    %13 = vsyncpa [#allocation7], 0
    %14 = vsyncpa [#allocation5], 0
    // Predicated region
    $region2: #{tpu_custom_call.1} parent=1 // pred_check
      _
    $region3: #{tpu_custom_call.1} parent=1 // pred_check_branch
      %16 = sbr.rel (0) target = $region5
    $region4: #{tpu_custom_call.1} parent=1 // pred_region
      %18 = vsyncadd [#allocation4], 0
      %s19 = sshll.u32 %s0, 4
      %s20 = int_to_ptr.hbm [resolvable:$true] %s19
      %s21 = sshll.u32 [#allocation3], 4
      %s22 = int_to_ptr.vmem [resolvable:$true] %s21
      %27 = dma.hbm_to_vmem [thread:$0]  %s20, 8192, %s22, [#allocation4], 128, 128, 8
    $region5: #{tpu_custom_call.1} parent=1 // pred_fallthru
      _
    // Predicated region
    $region6: #{tpu_custom_call.1} parent=1 // pred_check
      _
    $region7: #{tpu_custom_call.1} parent=1 // pred_check_branch
      %29 = sbr.rel (0) target = $region9
    $region8: #{tpu_custom_call.1} parent=1 // pred_region
      %31 = vsyncadd [#allocation7], 0
      %s32 = sshll.u32 %s1, 4
      %s33 = int_to_ptr.hbm [resolvable:$true] %s32
      %s34 = sshll.u32 [#allocation6], 4
      %s35 = int_to_ptr.vmem [resolvable:$true] %s34
      %40 = dma.hbm_to_vmem [thread:$0]  %s33, 18432, %s35, [#allocation7], 128, 128, 8
    $region9: #{tpu_custom_call.1} parent=1 // pred_fallthru
      _
    // Predicated region
    $region10: #{tpu_custom_call.1} parent=1 // pred_check
      _
    $region11: #{tpu_custom_call.1} parent=1 // pred_check_branch
      %42 = sbr.rel (0) target = $region13
    $region12: #{tpu_custom_call.1} parent=1 // pred_region
      _
    $region13: #{tpu_custom_call.1} parent=1 // pred_fallthru
      _
    // Predicated region
    $region14: #{tpu_custom_call.1} parent=1 // pred_check
      _
    $region15: #{tpu_custom_call.1} parent=1 // pred_check_branch
      %44 = sbr.rel (0) target = $region17
    $region16: #{tpu_custom_call.1} parent=1 // pred_region
      _
    $region17: #{tpu_custom_call.1} parent=1 // pred_fallthru
      _
    // Predicated region
    $region18: #{tpu_custom_call.1} parent=1 // pred_check
      _
    $region19: #{tpu_custom_call.1} parent=1 // pred_check_branch
      %46 = sbr.rel (0) target = $region21
    $region20: #{tpu_custom_call.1} parent=1 // pred_region
      %48 = vsyncadd [#allocation7], 0
      %s49 = sshll.u32 %s4, 4
      %s50 = int_to_ptr.hbm [resolvable:$true] %s49
      %s51 = sshll.u32 [#allocation8], 4
      %s52 = int_to_ptr.vmem [resolvable:$true] %s51
      %57 = dma.hbm_to_vmem [thread:$0]  %s50, 18432, %s52, [#allocation7], 128, 128, 8
    $region21: #{tpu_custom_call.1} parent=1 // pred_fallthru
      _
    // Predicated region
    $region22: #{tpu_custom_call.1} parent=1 // pred_check
      _
    $region23: #{tpu_custom_call.1} parent=1 // pred_check_branch
      %59 = sbr.rel (0) target = $region25
    $region24: #{tpu_custom_call.1} parent=1 // pred_region
      _
    $region25: #{tpu_custom_call.1} parent=1 // pred_fallthru
      _
    // Predicated region
    $region26: #{tpu_custom_call.1} parent=1 // pred_check
      _
    $region27: #{tpu_custom_call.1} parent=1 // pred_check_branch
      %61 = sbr.rel (0) target = $region29
    $region28: #{tpu_custom_call.1} parent=1 // pred_region
      _
    $region29: #{tpu_custom_call.1} parent=1 // pred_fallthru
      _
    // Predicated region
    $region30: #{tpu_custom_call.1} parent=1 // pred_check
      _
    $region31: #{tpu_custom_call.1} parent=1 // pred_check_branch
      %63 = sbr.rel (0) target = $region33
    $region32: #{tpu_custom_call.1} parent=1 // pred_region
      %65 = dma.done [#allocation4], 8192
    $region33: #{tpu_custom_call.1} parent=1 // pred_fallthru
      _
    // Predicated region
    $region34: #{tpu_custom_call.1} parent=1 // pred_check
      _
    $region35: #{tpu_custom_call.1} parent=1 // pred_check_branch
      %67 = sbr.rel (0) target = $region37
    $region36: #{tpu_custom_call.1} parent=1 // pred_region
      %69 = dma.done [#allocation7], 18432
    $region37: #{tpu_custom_call.1} parent=1 // pred_fallthru
      _
    // Predicated region
    $region38: #{tpu_custom_call.1} parent=1 // pred_check
      _
    $region39: #{tpu_custom_call.1} parent=1 // pred_check_branch
      %71 = sbr.rel (0) target = $region41
    $region40: #{tpu_custom_call.1} parent=1 // pred_region
      %73 = dma.done [#allocation7], 18432
    $region41: #{tpu_custom_call.1} parent=1 // pred_fallthru
      _
    %74 = vst [vmem:[#allocation2] sm:$0xff] 0.0
    %75 = vst [vmem:[#allocation2 + $0x8] sm:$0xff] 0.0
    %76 = vst [vmem:[#allocation2 + $0x10] sm:$0xff] 0.0
    %77 = vst [vmem:[#allocation2 + $0x18] sm:$0xff] 0.0
    %78 = vst [vmem:[#allocation2 + $0x240] sm:$0xff] 0.0
    %79 = vst [vmem:[#allocation2 + $0x248] sm:$0xff] 0.0
    %80 = vst [vmem:[#allocation2 + $0x250] sm:$0xff] 0.0
    %81 = vst [vmem:[#allocation2 + $0x258] sm:$0xff] 0.0
    %s82 = scalar_lea.vmem [#allocation2], 544
    %83 = vst [vmem:[%s82] sm:$0xff] 0.0
    %84 = vst [vmem:[%s82 + $0x8] sm:$0xff] 0.0
    %85 = vst [vmem:[%s82 + $0x10] sm:$0xff] 0.0
    %86 = vst [vmem:[%s82 + $0x18] sm:$0xff] 0.0
    %87 = vst [vmem:[%s82 + $0x240] sm:$0xff] 0.0
    %88 = vst [vmem:[%s82 + $0x248] sm:$0xff] 0.0
    %89 = vst [vmem:[%s82 + $0x250] sm:$0xff] 0.0
    %90 = vst [vmem:[%s82 + $0x258] sm:$0xff] 0.0
    %s91 = scalar_lea.vmem [#allocation2], 32
    %92 = vst [vmem:[%s91] sm:$0xff] 0.0
    %93 = vst [vmem:[%s91 + $0x20] sm:$0xff] 0.0
    %94 = vst [vmem:[%s91 + $0x40] sm:$0xff] 0.0
    %95 = vst [vmem:[%s91 + $0x60] sm:$0xff] 0.0
    %96 = vst [vmem:[%s91 + $0x80] sm:$0xff] 0.0
    %97 = vst [vmem:[%s91 + $0xa0] sm:$0xff] 0.0
    %98 = vst [vmem:[%s91 + $0xc0] sm:$0xff] 0.0
    %99 = vst [vmem:[%s91 + $0xe0] sm:$0xff] 0.0
    %100 = vst [vmem:[%s91 + $0x100] sm:$0xff] 0.0
    %101 = vst [vmem:[%s91 + $0x120] sm:$0xff] 0.0
    %102 = vst [vmem:[%s91 + $0x140] sm:$0xff] 0.0
    %103 = vst [vmem:[%s91 + $0x160] sm:$0xff] 0.0
    %104 = vst [vmem:[%s91 + $0x180] sm:$0xff] 0.0
    %105 = vst [vmem:[%s91 + $0x1a0] sm:$0xff] 0.0
    %106 = vst [vmem:[%s91 + $0x1c0] sm:$0xff] 0.0
    %107 = vst [vmem:[%s91 + $0x1e0] sm:$0xff] 0.0
    %108 = vst [vmem:[%s91 + $0x240] sm:$0xff] 0.0
    %109 = vst [vmem:[%s91 + $0x260] sm:$0xff] 0.0
    %110 = vst [vmem:[%s91 + $0x280] sm:$0xff] 0.0
    %111 = vst [vmem:[%s91 + $0x2a0] sm:$0xff] 0.0
    %112 = vst [vmem:[%s91 + $0x2c0] sm:$0xff] 0.0
    %113 = vst [vmem:[%s91 + $0x2e0] sm:$0xff] 0.0
    %114 = vst [vmem:[%s91 + $0x300] sm:$0xff] 0.0
    %115 = vst [vmem:[%s91 + $0x320] sm:$0xff] 0.0
    %116 = vst [vmem:[%s91 + $0x340] sm:$0xff] 0.0
    %117 = vst [vmem:[%s91 + $0x360] sm:$0xff] 0.0
    %118 = vst [vmem:[%s91 + $0x380] sm:$0xff] 0.0
    %119 = vst [vmem:[%s91 + $0x3a0] sm:$0xff] 0.0
    %120 = vst [vmem:[%s91 + $0x3c0] sm:$0xff] 0.0
    %121 = vst [vmem:[%s91 + $0x3e0] sm:$0xff] 0.0
    %122 = vst [vmem:[%s91 + $0x400] sm:$0xff] 0.0
    %123 = vst [vmem:[%s91 + $0x420] sm:$0xff] 0.0
    %124 = vst [vmem:[%s91 + $0x18] sm:$0xff] 0.0
    %125 = vst [vmem:[%s91 + $0x38] sm:$0xff] 0.0
    %126 = vst [vmem:[%s91 + $0x58] sm:$0xff] 0.0
    %127 = vst [vmem:[%s91 + $0x78] sm:$0xff] 0.0
    %128 = vst [vmem:[%s91 + $0x98] sm:$0xff] 0.0
    %129 = vst [vmem:[%s91 + $0xb8] sm:$0xff] 0.0
    %130 = vst [vmem:[%s91 + $0xd8] sm:$0xff] 0.0
    %131 = vst [vmem:[%s91 + $0xf8] sm:$0xff] 0.0
    %132 = vst [vmem:[%s91 + $0x118] sm:$0xff] 0.0
    %133 = vst [vmem:[%s91 + $0x138] sm:$0xff] 0.0
    %134 = vst [vmem:[%s91 + $0x158] sm:$0xff] 0.0
    %135 = vst [vmem:[%s91 + $0x178] sm:$0xff] 0.0
    %136 = vst [vmem:[%s91 + $0x198] sm:$0xff] 0.0
    %137 = vst [vmem:[%s91 + $0x1b8] sm:$0xff] 0.0
    %138 = vst [vmem:[%s91 + $0x1d8] sm:$0xff] 0.0
    %139 = vst [vmem:[%s91 + $0x1f8] sm:$0xff] 0.0
    %140 = vst [vmem:[%s91 + $0x258] sm:$0xff] 0.0
    %141 = vst [vmem:[%s91 + $0x278] sm:$0xff] 0.0
    %142 = vst [vmem:[%s91 + $0x298] sm:$0xff] 0.0
    %143 = vst [vmem:[%s91 + $0x2b8] sm:$0xff] 0.0
    %144 = vst [vmem:[%s91 + $0x2d8] sm:$0xff] 0.0
    %145 = vst [vmem:[%s91 + $0x2f8] sm:$0xff] 0.0
    %146 = vst [vmem:[%s91 + $0x318] sm:$0xff] 0.0
    %147 = vst [vmem:[%s91 + $0x338] sm:$0xff] 0.0
    %148 = vst [vmem:[%s91 + $0x358] sm:$0xff] 0.0
    %149 = vst [vmem:[%s91 + $0x378] sm:$0xff] 0.0
    %150 = vst [vmem:[%s91 + $0x398] sm:$0xff] 0.0
    %151 = vst [vmem:[%s91 + $0x3b8] sm:$0xff] 0.0
    %152 = vst [vmem:[%s91 + $0x3d8] sm:$0xff] 0.0
    %153 = vst [vmem:[%s91 + $0x3f8] sm:$0xff] 0.0
    %154 = vst [vmem:[%s91 + $0x418] sm:$0xff] 0.0
    %155 = vst [vmem:[%s91 + $0x438] sm:$0xff] 0.0
    %v156 = vld [vmem:[#allocation3] sm:$0xff]
    %v157 = vld [vmem:[#allocation3 + $0x8] sm:$0xff]
    %v158 = vld [vmem:[#allocation3 + $0x10] sm:$0xff]
    %v159 = vld [vmem:[#allocation3 + $0x18] sm:$0xff]
    %v160 = vld [vmem:[#allocation3 + $0x20] sm:$0xff]
    %v161 = vld [vmem:[#allocation3 + $0x28] sm:$0xff]
    %v162 = vld [vmem:[#allocation3 + $0x30] sm:$0xff]
    %v163 = vld [vmem:[#allocation3 + $0x38] sm:$0xff]
    %v164 = vld [vmem:[#allocation3 + $0x40] sm:$0xff]
    %v165 = vld [vmem:[#allocation3 + $0x48] sm:$0xff]
    %v166 = vld [vmem:[#allocation3 + $0x50] sm:$0xff]
    %v167 = vld [vmem:[#allocation3 + $0x58] sm:$0xff]
    %v168 = vld [vmem:[#allocation3 + $0x60] sm:$0xff]
    %v169 = vld [vmem:[#allocation3 + $0x68] sm:$0xff]
    %v170 = vld [vmem:[#allocation3 + $0x70] sm:$0xff]
    %v171 = vld [vmem:[#allocation3 + $0x78] sm:$0xff]
    %v172 = vld [vmem:[#allocation3 + $0x80] sm:$0xff]
    %v173 = vld [vmem:[#allocation3 + $0x88] sm:$0xff]
    %v174 = vld [vmem:[#allocation3 + $0x90] sm:$0xff]
    %v175 = vld [vmem:[#allocation3 + $0x98] sm:$0xff]
    %v176 = vld [vmem:[#allocation3 + $0xa0] sm:$0xff]
    %v177 = vld [vmem:[#allocation3 + $0xa8] sm:$0xff]
    %v178 = vld [vmem:[#allocation3 + $0xb0] sm:$0xff]
    %v179 = vld [vmem:[#allocation3 + $0xb8] sm:$0xff]
    %v180 = vld [vmem:[#allocation3 + $0xc0] sm:$0xff]
    %v181 = vld [vmem:[#allocation3 + $0xc8] sm:$0xff]
    %v182 = vld [vmem:[#allocation3 + $0xd0] sm:$0xff]
    %v183 = vld [vmem:[#allocation3 + $0xd8] sm:$0xff]
    %v184 = vld [vmem:[#allocation3 + $0xe0] sm:$0xff]
    %v185 = vld [vmem:[#allocation3 + $0xe8] sm:$0xff]
    %v186 = vld [vmem:[#allocation3 + $0xf0] sm:$0xff]
    %v187 = vld [vmem:[#allocation3 + $0xf8] sm:$0xff]
    %v188 = vld [vmem:[#allocation3 + $0x100] sm:$0xff]
    %v189 = vld [vmem:[#allocation3 + $0x108] sm:$0xff]
    %v190 = vld [vmem:[#allocation3 + $0x110] sm:$0xff]
    %v191 = vld [vmem:[#allocation3 + $0x118] sm:$0xff]
    %v192 = vld [vmem:[#allocation3 + $0x120] sm:$0xff]
    %v193 = vld [vmem:[#allocation3 + $0x128] sm:$0xff]
    %v194 = vld [vmem:[#allocation3 + $0x130] sm:$0xff]
    %v195 = vld [vmem:[#allocation3 + $0x138] sm:$0xff]
    %v196 = vld [vmem:[#allocation3 + $0x140] sm:$0xff]
    %v197 = vld [vmem:[#allocation3 + $0x148] sm:$0xff]
    %v198 = vld [vmem:[#allocation3 + $0x150] sm:$0xff]
    %v199 = vld [vmem:[#allocation3 + $0x158] sm:$0xff]
    %v200 = vld [vmem:[#allocation3 + $0x160] sm:$0xff]
    %v201 = vld [vmem:[#allocation3 + $0x168] sm:$0xff]
    %v202 = vld [vmem:[#allocation3 + $0x170] sm:$0xff]
    %v203 = vld [vmem:[#allocation3 + $0x178] sm:$0xff]
    %v204 = vld [vmem:[#allocation3 + $0x180] sm:$0xff]
    %v205 = vld [vmem:[#allocation3 + $0x188] sm:$0xff]
    %v206 = vld [vmem:[#allocation3 + $0x190] sm:$0xff]
    %v207 = vld [vmem:[#allocation3 + $0x198] sm:$0xff]
    %v208 = vld [vmem:[#allocation3 + $0x1a0] sm:$0xff]
    %v209 = vld [vmem:[#allocation3 + $0x1a8] sm:$0xff]
    %v210 = vld [vmem:[#allocation3 + $0x1b0] sm:$0xff]
    %v211 = vld [vmem:[#allocation3 + $0x1b8] sm:$0xff]
    %v212 = vld [vmem:[#allocation3 + $0x1c0] sm:$0xff]
    %v213 = vld [vmem:[#allocation3 + $0x1c8] sm:$0xff]
    %v214 = vld [vmem:[#allocation3 + $0x1d0] sm:$0xff]
    %v215 = vld [vmem:[#allocation3 + $0x1d8] sm:$0xff]
    %v216 = vld [vmem:[#allocation3 + $0x1e0] sm:$0xff]
    %v217 = vld [vmem:[#allocation3 + $0x1e8] sm:$0xff]
    %v218 = vld [vmem:[#allocation3 + $0x1f0] sm:$0xff]
    %v219 = vld [vmem:[#allocation3 + $0x1f8] sm:$0xff]
    %220 = vst [vmem:[%s91 + $0x8] sm:$0xff] %v156
    %221 = vst [vmem:[%s91 + $0x10] sm:$0xff] %v157
    %222 = vst [vmem:[%s91 + $0x28] sm:$0xff] %v158
    %223 = vst [vmem:[%s91 + $0x30] sm:$0xff] %v159
    %224 = vst [vmem:[%s91 + $0x48] sm:$0xff] %v160
    %225 = vst [vmem:[%s91 + $0x50] sm:$0xff] %v161
    %226 = vst [vmem:[%s91 + $0x68] sm:$0xff] %v162
    %227 = vst [vmem:[%s91 + $0x70] sm:$0xff] %v163
    %228 = vst [vmem:[%s91 + $0x88] sm:$0xff] %v164
    %229 = vst [vmem:[%s91 + $0x90] sm:$0xff] %v165
    %230 = vst [vmem:[%s91 + $0xa8] sm:$0xff] %v166
    %231 = vst [vmem:[%s91 + $0xb0] sm:$0xff] %v167
    %232 = vst [vmem:[%s91 + $0xc8] sm:$0xff] %v168
    %233 = vst [vmem:[%s91 + $0xd0] sm:$0xff] %v169
    %234 = vst [vmem:[%s91 + $0xe8] sm:$0xff] %v170
    %235 = vst [vmem:[%s91 + $0xf0] sm:$0xff] %v171
    %236 = vst [vmem:[%s91 + $0x108] sm:$0xff] %v172
    %237 = vst [vmem:[%s91 + $0x110] sm:$0xff] %v173
    %238 = vst [vmem:[%s91 + $0x128] sm:$0xff] %v174
    %239 = vst [vmem:[%s91 + $0x130] sm:$0xff] %v175
    %240 = vst [vmem:[%s91 + $0x148] sm:$0xff] %v176
    %241 = vst [vmem:[%s91 + $0x150] sm:$0xff] %v177
    %242 = vst [vmem:[%s91 + $0x168] sm:$0xff] %v178
    %243 = vst [vmem:[%s91 + $0x170] sm:$0xff] %v179
    %244 = vst [vmem:[%s91 + $0x188] sm:$0xff] %v180
    %245 = vst [vmem:[%s91 + $0x190] sm:$0xff] %v181
    %246 = vst [vmem:[%s91 + $0x1a8] sm:$0xff] %v182
    %247 = vst [vmem:[%s91 + $0x1b0] sm:$0xff] %v183
    %248 = vst [vmem:[%s91 + $0x1c8] sm:$0xff] %v184
    %249 = vst [vmem:[%s91 + $0x1d0] sm:$0xff] %v185
    %250 = vst [vmem:[%s91 + $0x1e8] sm:$0xff] %v186
    %251 = vst [vmem:[%s91 + $0x1f0] sm:$0xff] %v187
    %252 = vst [vmem:[%s91 + $0x248] sm:$0xff] %v188
    %253 = vst [vmem:[%s91 + $0x250] sm:$0xff] %v189
    %254 = vst [vmem:[%s91 + $0x268] sm:$0xff] %v190
    %255 = vst [vmem:[%s91 + $0x270] sm:$0xff] %v191
    %256 = vst [vmem:[%s91 + $0x288] sm:$0xff] %v192
    %257 = vst [vmem:[%s91 + $0x290] sm:$0xff] %v193
    %258 = vst [vmem:[%s91 + $0x2a8] sm:$0xff] %v194
    %259 = vst [vmem:[%s91 + $0x2b0] sm:$0xff] %v195
    %260 = vst [vmem:[%s91 + $0x2c8] sm:$0xff] %v196
    %261 = vst [vmem:[%s91 + $0x2d0] sm:$0xff] %v197
    %262 = vst [vmem:[%s91 + $0x2e8] sm:$0xff] %v198
    %263 = vst [vmem:[%s91 + $0x2f0] sm:$0xff] %v199
    %264 = vst [vmem:[%s91 + $0x308] sm:$0xff] %v200
    %265 = vst [vmem:[%s91 + $0x310] sm:$0xff] %v201
    %266 = vst [vmem:[%s91 + $0x328] sm:$0xff] %v202
    %267 = vst [vmem:[%s91 + $0x330] sm:$0xff] %v203
    %268 = vst [vmem:[%s91 + $0x348] sm:$0xff] %v204
    %269 = vst [vmem:[%s91 + $0x350] sm:$0xff] %v205
    %270 = vst [vmem:[%s91 + $0x368] sm:$0xff] %v206
    %271 = vst [vmem:[%s91 + $0x370] sm:$0xff] %v207
    %272 = vst [vmem:[%s91 + $0x388] sm:$0xff] %v208
    %273 = vst [vmem:[%s91 + $0x390] sm:$0xff] %v209
    %274 = vst [vmem:[%s91 + $0x3a8] sm:$0xff] %v210
    %275 = vst [vmem:[%s91 + $0x3b0] sm:$0xff] %v211
    %276 = vst [vmem:[%s91 + $0x3c8] sm:$0xff] %v212
    %277 = vst [vmem:[%s91 + $0x3d0] sm:$0xff] %v213
    %278 = vst [vmem:[%s91 + $0x3e8] sm:$0xff] %v214
    %279 = vst [vmem:[%s91 + $0x3f0] sm:$0xff] %v215
    %280 = vst [vmem:[%s91 + $0x408] sm:$0xff] %v216
    %281 = vst [vmem:[%s91 + $0x410] sm:$0xff] %v217
    %282 = vst [vmem:[%s91 + $0x428] sm:$0xff] %v218
    %283 = vst [vmem:[%s91 + $0x430] sm:$0xff] %v219
    %v284 = vld [vmem:[#allocation2 + $0x7] sm:$0xff]
    %v285 = vld [vmem:[#allocation2 + $0xf] sm:$0xff]
    %v286 = vld [vmem:[#allocation2 + $0x27] sm:$0xff]
    %v287 = vld [vmem:[#allocation2 + $0x2f] sm:$0xff]
    %v288 = vld [vmem:[#allocation2 + $0x47] sm:$0xff]
    %v289 = vld [vmem:[#allocation2 + $0x4f] sm:$0xff]
    %v290 = vld [vmem:[#allocation2 + $0x67] sm:$0xff]
    %v291 = vld [vmem:[#allocation2 + $0x6f] sm:$0xff]
    %v292 = vld [vmem:[#allocation2 + $0x87] sm:$0xff]
    %v293 = vld [vmem:[#allocation2 + $0x8f] sm:$0xff]
    %v294 = vld [vmem:[#allocation2 + $0xa7] sm:$0xff]
    %v295 = vld [vmem:[#allocation2 + $0xaf] sm:$0xff]
    %v296 = vld [vmem:[#allocation2 + $0xc7] sm:$0xff]
    %v297 = vld [vmem:[#allocation2 + $0xcf] sm:$0xff]
    %v298 = vld [vmem:[#allocation2 + $0xe7] sm:$0xff]
    %v299 = vld [vmem:[#allocation2 + $0xef] sm:$0xff]
    %v300 = vld [vmem:[#allocation2 + $0x107] sm:$0xff]
    %v301 = vld [vmem:[#allocation2 + $0x10f] sm:$0xff]
    %v302 = vld [vmem:[#allocation2 + $0x127] sm:$0xff]
    %v303 = vld [vmem:[#allocation2 + $0x12f] sm:$0xff]
    %v304 = vld [vmem:[#allocation2 + $0x147] sm:$0xff]
    %v305 = vld [vmem:[#allocation2 + $0x14f] sm:$0xff]
    %v306 = vld [vmem:[#allocation2 + $0x167] sm:$0xff]
    %v307 = vld [vmem:[#allocation2 + $0x16f] sm:$0xff]
    %v308 = vld [vmem:[#allocation2 + $0x187] sm:$0xff]
    %v309 = vld [vmem:[#allocation2 + $0x18f] sm:$0xff]
    %v310 = vld [vmem:[#allocation2 + $0x1a7] sm:$0xff]
    %v311 = vld [vmem:[#allocation2 + $0x1af] sm:$0xff]
    %v312 = vld [vmem:[#allocation2 + $0x1c7] sm:$0xff]
    %v313 = vld [vmem:[#allocation2 + $0x1cf] sm:$0xff]
    %v314 = vld [vmem:[#allocation2 + $0x1e7] sm:$0xff]
    %v315 = vld [vmem:[#allocation2 + $0x1ef] sm:$0xff]
    %v316 = vld [vmem:[#allocation2 + $0x247] sm:$0xff]
    %v317 = vld [vmem:[#allocation2 + $0x24f] sm:$0xff]
    %v318 = vld [vmem:[#allocation2 + $0x267] sm:$0xff]
    %v319 = vld [vmem:[#allocation2 + $0x26f] sm:$0xff]
    %v320 = vld [vmem:[#allocation2 + $0x287] sm:$0xff]
    %v321 = vld [vmem:[#allocation2 + $0x28f] sm:$0xff]
    %v322 = vld [vmem:[#allocation2 + $0x2a7] sm:$0xff]
    %v323 = vld [vmem:[#allocation2 + $0x2af] sm:$0xff]
    %v324 = vld [vmem:[#allocation2 + $0x2c7] sm:$0xff]
    %v325 = vld [vmem:[#allocation2 + $0x2cf] sm:$0xff]
    %v326 = vld [vmem:[#allocation2 + $0x2e7] sm:$0xff]
    %v327 = vld [vmem:[#allocation2 + $0x2ef] sm:$0xff]
    %v328 = vld [vmem:[#allocation2 + $0x307] sm:$0xff]
    %v329 = vld [vmem:[#allocation2 + $0x30f] sm:$0xff]
    %v330 = vld [vmem:[#allocation2 + $0x327] sm:$0xff]
    %v331 = vld [vmem:[#allocation2 + $0x32f] sm:$0xff]
    %v332 = vld [vmem:[#allocation2 + $0x347] sm:$0xff]
    %v333 = vld [vmem:[#allocation2 + $0x34f] sm:$0xff]
    %v334 = vld [vmem:[#allocation2 + $0x367] sm:$0xff]
    %v335 = vld [vmem:[#allocation2 + $0x36f] sm:$0xff]
    %v336 = vld [vmem:[#allocation2 + $0x387] sm:$0xff]
    %v337 = vld [vmem:[#allocation2 + $0x38f] sm:$0xff]
    %v338 = vld [vmem:[#allocation2 + $0x3a7] sm:$0xff]
    %v339 = vld [vmem:[#allocation2 + $0x3af] sm:$0xff]
    %v340 = vld [vmem:[#allocation2 + $0x3c7] sm:$0xff]
    %v341 = vld [vmem:[#allocation2 + $0x3cf] sm:$0xff]
    %v342 = vld [vmem:[#allocation2 + $0x3e7] sm:$0xff]
    %v343 = vld [vmem:[#allocation2 + $0x3ef] sm:$0xff]
    %v344 = vld [vmem:[#allocation2 + $0x407] sm:$0xff]
    %v345 = vld [vmem:[#allocation2 + $0x40f] sm:$0xff]
    %v346 = vld [vmem:[#allocation2 + $0x427] sm:$0xff]
    %v347 = vld [vmem:[#allocation2 + $0x42f] sm:$0xff]
    %v348 = vld [vmem:[#allocation6] sm:$0xff]
    %v349 = vld [vmem:[#allocation6 + $0x8] sm:$0xff]
    %v350 = vld [vmem:[#allocation6 + $0x10] sm:$0xff]
    %v351 = vld [vmem:[#allocation6 + $0x18] sm:$0xff]
    %v352 = vld [vmem:[#allocation6 + $0x20] sm:$0xff]
    %v353 = vld [vmem:[#allocation6 + $0x28] sm:$0xff]
    %v354 = vld [vmem:[#allocation6 + $0x30] sm:$0xff]
    %v355 = vld [vmem:[#allocation6 + $0x38] sm:$0xff]
    %v356 = vld [vmem:[#allocation6 + $0x40] sm:$0xff]
    %v357 = vld [vmem:[#allocation6 + $0x48] sm:$0xff]
    %v358 = vld [vmem:[#allocation6 + $0x50] sm:$0xff]
    %v359 = vld [vmem:[#allocation6 + $0x58] sm:$0xff]
    %v360 = vld [vmem:[#allocation6 + $0x60] sm:$0xff]
    %v361 = vld [vmem:[#allocation6 + $0x68] sm:$0xff]
    %v362 = vld [vmem:[#allocation6 + $0x70] sm:$0xff]
    %v363 = vld [vmem:[#allocation6 + $0x78] sm:$0xff]
    %v364 = vld [vmem:[#allocation2 + $0x8] sm:$0xff]
    %v365 = vld [vmem:[#allocation2 + $0x10] sm:$0xff]
    %v366 = vld [vmem:[#allocation2 + $0x28] sm:$0xff]
    %v367 = vld [vmem:[#allocation2 + $0x30] sm:$0xff]
    %v368 = vld [vmem:[#allocation2 + $0x48] sm:$0xff]
    %v369 = vld [vmem:[#allocation2 + $0x50] sm:$0xff]
    %v370 = vld [vmem:[#allocation2 + $0x68] sm:$0xff]
    %v371 = vld [vmem:[#allocation2 + $0x70] sm:$0xff]
    %v372 = vld [vmem:[#allocation2 + $0x88] sm:$0xff]
    %v373 = vld [vmem:[#allocation2 + $0x90] sm:$0xff]
    %v374 = vld [vmem:[#allocation2 + $0xa8] sm:$0xff]
    %v375 = vld [vmem:[#allocation2 + $0xb0] sm:$0xff]
    %v376 = vld [vmem:[#allocation2 + $0xc8] sm:$0xff]
    %v377 = vld [vmem:[#allocation2 + $0xd0] sm:$0xff]
    %v378 = vld [vmem:[#allocation2 + $0xe8] sm:$0xff]
    %v379 = vld [vmem:[#allocation2 + $0xf0] sm:$0xff]
    %v380 = vld [vmem:[#allocation2 + $0x108] sm:$0xff]
    %v381 = vld [vmem:[#allocation2 + $0x110] sm:$0xff]
    %v382 = vld [vmem:[#allocation2 + $0x128] sm:$0xff]
    %v383 = vld [vmem:[#allocation2 + $0x130] sm:$0xff]
    %v384 = vld [vmem:[#allocation2 + $0x148] sm:$0xff]
    %v385 = vld [vmem:[#allocation2 + $0x150] sm:$0xff]
    %v386 = vld [vmem:[#allocation2 + $0x168] sm:$0xff]
    %v387 = vld [vmem:[#allocation2 + $0x170] sm:$0xff]
    %v388 = vld [vmem:[#allocation2 + $0x188] sm:$0xff]
    %v389 = vld [vmem:[#allocation2 + $0x190] sm:$0xff]
    %v390 = vld [vmem:[#allocation2 + $0x1a8] sm:$0xff]
    %v391 = vld [vmem:[#allocation2 + $0x1b0] sm:$0xff]
    %v392 = vld [vmem:[#allocation2 + $0x1c8] sm:$0xff]
    %v393 = vld [vmem:[#allocation2 + $0x1d0] sm:$0xff]
    %v394 = vld [vmem:[#allocation2 + $0x1e8] sm:$0xff]
    %v395 = vld [vmem:[#allocation2 + $0x1f0] sm:$0xff]
    %v396 = vld [vmem:[#allocation2 + $0x248] sm:$0xff]
    %v397 = vld [vmem:[#allocation2 + $0x250] sm:$0xff]
    %v398 = vld [vmem:[#allocation2 + $0x268] sm:$0xff]
    %v399 = vld [vmem:[#allocation2 + $0x270] sm:$0xff]
    %v400 = vld [vmem:[#allocation2 + $0x288] sm:$0xff]
    %v401 = vld [vmem:[#allocation2 + $0x290] sm:$0xff]
    %v402 = vld [vmem:[#allocation2 + $0x2a8] sm:$0xff]
    %v403 = vld [vmem:[#allocation2 + $0x2b0] sm:$0xff]
    %v404 = vld [vmem:[#allocation2 + $0x2c8] sm:$0xff]
    %v405 = vld [vmem:[#allocation2 + $0x2d0] sm:$0xff]
    %v406 = vld [vmem:[#allocation2 + $0x2e8] sm:$0xff]
    %v407 = vld [vmem:[#allocation2 + $0x2f0] sm:$0xff]
    %v408 = vld [vmem:[#allocation2 + $0x308] sm:$0xff]
    %v409 = vld [vmem:[#allocation2 + $0x310] sm:$0xff]
    %v410 = vld [vmem:[#allocation2 + $0x328] sm:$0xff]
    %v411 = vld [vmem:[#allocation2 + $0x330] sm:$0xff]
    %v412 = vld [vmem:[#allocation2 + $0x348] sm:$0xff]
    %v413 = vld [vmem:[#allocation2 + $0x350] sm:$0xff]
    %v414 = vld [vmem:[#allocation2 + $0x368] sm:$0xff]
    %v415 = vld [vmem:[#allocation2 + $0x370] sm:$0xff]
    %v416 = vld [vmem:[#allocation2 + $0x388] sm:$0xff]
    %v417 = vld [vmem:[#allocation2 + $0x390] sm:$0xff]
    %v418 = vld [vmem:[#allocation2 + $0x3a8] sm:$0xff]
    %v419 = vld [vmem:[#allocation2 + $0x3b0] sm:$0xff]
    %v420 = vld [vmem:[#allocation2 + $0x3c8] sm:$0xff]
    %v421 = vld [vmem:[#allocation2 + $0x3d0] sm:$0xff]
    %v422 = vld [vmem:[#allocation2 + $0x3e8] sm:$0xff]
    %v423 = vld [vmem:[#allocation2 + $0x3f0] sm:$0xff]
    %v424 = vld [vmem:[#allocation2 + $0x408] sm:$0xff]
    %v425 = vld [vmem:[#allocation2 + $0x410] sm:$0xff]
    %v426 = vld [vmem:[#allocation2 + $0x428] sm:$0xff]
    %v427 = vld [vmem:[#allocation2 + $0x430] sm:$0xff]
    %v428 = vld [vmem:[#allocation6 + $0x80] sm:$0xff]
    %v429 = vld [vmem:[#allocation6 + $0x88] sm:$0xff]
    %v430 = vld [vmem:[#allocation6 + $0x90] sm:$0xff]
    %v431 = vld [vmem:[#allocation6 + $0x98] sm:$0xff]
    %v432 = vld [vmem:[#allocation6 + $0xa0] sm:$0xff]
    %v433 = vld [vmem:[#allocation6 + $0xa8] sm:$0xff]
    %v434 = vld [vmem:[#allocation6 + $0xb0] sm:$0xff]
    %v435 = vld [vmem:[#allocation6 + $0xb8] sm:$0xff]
    %v436 = vld [vmem:[#allocation6 + $0xc0] sm:$0xff]
    %v437 = vld [vmem:[#allocation6 + $0xc8] sm:$0xff]
    %v438 = vld [vmem:[#allocation6 + $0xd0] sm:$0xff]
    %v439 = vld [vmem:[#allocation6 + $0xd8] sm:$0xff]
    %v440 = vld [vmem:[#allocation6 + $0xe0] sm:$0xff]
    %v441 = vld [vmem:[#allocation6 + $0xe8] sm:$0xff]
    %v442 = vld [vmem:[#allocation6 + $0xf0] sm:$0xff]
    %v443 = vld [vmem:[#allocation6 + $0xf8] sm:$0xff]
    %444 = vmatpush.msra.mxu0 %v443
    %445 = vmatpush.msra.mxu0 %v442
    %446 = vmatpush.msra.mxu0 %v441
    %447 = vmatpush.msra.mxu0 %v440
    %448 = vmatpush.msra.mxu0 %v439
    %449 = vmatpush.msra.mxu0 %v438
    %450 = vmatpush.msra.mxu0 %v437
    %451 = vmatpush.msra.mxu0 %v436
    %452 = vmatpush.msra.mxu0 %v435
    %453 = vmatpush.msra.mxu0 %v434
    %454 = vmatpush.msra.mxu0 %v433
    %455 = vmatpush.msra.mxu0 %v432
    %456 = vmatpush.msra.mxu0 %v431
    %457 = vmatpush.msra.mxu0 %v430
    %458 = vmatpush.msra.mxu0 %v429
    %459 = vmatpush.msra.mxu0 %v428
    %460 = vmatmul.f32.gmra.mxu0 %v364
    %v461 = vpop.f32.mrf.mxu0
    %v462 = vadd.f32 0.0, %v461
    %463 = vmatmul.f32.gmra.mxu0 %v365
    %v464 = vpop.f32.mrf.mxu0
    %v465 = vadd.f32 0.0, %v464
    %466 = vmatmul.f32.gmra.mxu0 %v366
    %v467 = vpop.f32.mrf.mxu0
    %v468 = vadd.f32 0.0, %v467
    %469 = vmatmul.f32.gmra.mxu0 %v367
    %v470 = vpop.f32.mrf.mxu0
    %v471 = vadd.f32 0.0, %v470
    %472 = vmatmul.f32.gmra.mxu0 %v368
    %v473 = vpop.f32.mrf.mxu0
    %v474 = vadd.f32 0.0, %v473
    %475 = vmatmul.f32.gmra.mxu0 %v369
    %v476 = vpop.f32.mrf.mxu0
    %v477 = vadd.f32 0.0, %v476
    %478 = vmatmul.f32.gmra.mxu0 %v370
    %v479 = vpop.f32.mrf.mxu0
    %v480 = vadd.f32 0.0, %v479
    %481 = vmatmul.f32.gmra.mxu0 %v371
    %v482 = vpop.f32.mrf.mxu0
    %v483 = vadd.f32 0.0, %v482
    %484 = vmatmul.f32.gmra.mxu0 %v372
    %v485 = vpop.f32.mrf.mxu0
    %v486 = vadd.f32 0.0, %v485
    %487 = vmatmul.f32.gmra.mxu0 %v373
    %v488 = vpop.f32.mrf.mxu0
    %v489 = vadd.f32 0.0, %v488
    %490 = vmatmul.f32.gmra.mxu0 %v374
    %v491 = vpop.f32.mrf.mxu0
    %v492 = vadd.f32 0.0, %v491
    %493 = vmatmul.f32.gmra.mxu0 %v375
    %v494 = vpop.f32.mrf.mxu0
    %v495 = vadd.f32 0.0, %v494
    %496 = vmatmul.f32.gmra.mxu0 %v376
    %v497 = vpop.f32.mrf.mxu0
    %v498 = vadd.f32 0.0, %v497
    %499 = vmatmul.f32.gmra.mxu0 %v377
    %v500 = vpop.f32.mrf.mxu0
    %v501 = vadd.f32 0.0, %v500
    %502 = vmatmul.f32.gmra.mxu0 %v378
    %v503 = vpop.f32.mrf.mxu0
    %v504 = vadd.f32 0.0, %v503
    %505 = vmatmul.f32.gmra.mxu0 %v379
    %v506 = vpop.f32.mrf.mxu0
    %v507 = vadd.f32 0.0, %v506
    %508 = vmatmul.f32.gmra.mxu0 %v380
    %v509 = vpop.f32.mrf.mxu0
    %v510 = vadd.f32 0.0, %v509
    %511 = vmatmul.f32.gmra.mxu0 %v381
    %v512 = vpop.f32.mrf.mxu0
    %v513 = vadd.f32 0.0, %v512
    %514 = vmatmul.f32.gmra.mxu0 %v382
    %v515 = vpop.f32.mrf.mxu0
    %v516 = vadd.f32 0.0, %v515
    %517 = vmatmul.f32.gmra.mxu0 %v383
    %v518 = vpop.f32.mrf.mxu0
    %v519 = vadd.f32 0.0, %v518
    %520 = vmatmul.f32.gmra.mxu0 %v384
    %v521 = vpop.f32.mrf.mxu0
    %v522 = vadd.f32 0.0, %v521
    %523 = vmatmul.f32.gmra.mxu0 %v385
    %v524 = vpop.f32.mrf.mxu0
    %v525 = vadd.f32 0.0, %v524
    %526 = vmatmul.f32.gmra.mxu0 %v386
    %v527 = vpop.f32.mrf.mxu0
    %v528 = vadd.f32 0.0, %v527
    %529 = vmatmul.f32.gmra.mxu0 %v387
    %v530 = vpop.f32.mrf.mxu0
    %v531 = vadd.f32 0.0, %v530
    %532 = vmatmul.f32.gmra.mxu0 %v388
    %v533 = vpop.f32.mrf.mxu0
    %v534 = vadd.f32 0.0, %v533
    %535 = vmatmul.f32.gmra.mxu0 %v389
    %v536 = vpop.f32.mrf.mxu0
    %v537 = vadd.f32 0.0, %v536
    %538 = vmatmul.f32.gmra.mxu0 %v390
    %v539 = vpop.f32.mrf.mxu0
    %v540 = vadd.f32 0.0, %v539
    %541 = vmatmul.f32.gmra.mxu0 %v391
    %v542 = vpop.f32.mrf.mxu0
    %v543 = vadd.f32 0.0, %v542
    %544 = vmatmul.f32.gmra.mxu0 %v392
    %v545 = vpop.f32.mrf.mxu0
    %v546 = vadd.f32 0.0, %v545
    %547 = vmatmul.f32.gmra.mxu0 %v393
    %v548 = vpop.f32.mrf.mxu0
    %v549 = vadd.f32 0.0, %v548
    %550 = vmatmul.f32.gmra.mxu0 %v394
    %v551 = vpop.f32.mrf.mxu0
    %v552 = vadd.f32 0.0, %v551
    %553 = vmatmul.f32.gmra.mxu0 %v395
    %v554 = vpop.f32.mrf.mxu0
    %v555 = vadd.f32 0.0, %v554
    %556 = vmatmul.f32.gmra.mxu0 %v396
    %v557 = vpop.f32.mrf.mxu0
    %v558 = vadd.f32 0.0, %v557
    %559 = vmatmul.f32.gmra.mxu0 %v397
    %v560 = vpop.f32.mrf.mxu0
    %v561 = vadd.f32 0.0, %v560
    %562 = vmatmul.f32.gmra.mxu0 %v398
    %v563 = vpop.f32.mrf.mxu0
    %v564 = vadd.f32 0.0, %v563
    %565 = vmatmul.f32.gmra.mxu0 %v399
    %v566 = vpop.f32.mrf.mxu0
    %v567 = vadd.f32 0.0, %v566
    %568 = vmatmul.f32.gmra.mxu0 %v400
    %v569 = vpop.f32.mrf.mxu0
    %v570 = vadd.f32 0.0, %v569
    %571 = vmatmul.f32.gmra.mxu0 %v401
    %v572 = vpop.f32.mrf.mxu0
    %v573 = vadd.f32 0.0, %v572
    %574 = vmatmul.f32.gmra.mxu0 %v402
    %v575 = vpop.f32.mrf.mxu0
    %v576 = vadd.f32 0.0, %v575
    %577 = vmatmul.f32.gmra.mxu0 %v403
    %v578 = vpop.f32.mrf.mxu0
    %v579 = vadd.f32 0.0, %v578
    %580 = vmatmul.f32.gmra.mxu0 %v404
    %v581 = vpop.f32.mrf.mxu0
    %v582 = vadd.f32 0.0, %v581
    %583 = vmatmul.f32.gmra.mxu0 %v405
    %v584 = vpop.f32.mrf.mxu0
    %v585 = vadd.f32 0.0, %v584
    %586 = vmatmul.f32.gmra.mxu0 %v406
    %v587 = vpop.f32.mrf.mxu0
    %v588 = vadd.f32 0.0, %v587
    %589 = vmatmul.f32.gmra.mxu0 %v407
    %v590 = vpop.f32.mrf.mxu0
    %v591 = vadd.f32 0.0, %v590
    %592 = vmatmul.f32.gmra.mxu0 %v408
    %v593 = vpop.f32.mrf.mxu0
    %v594 = vadd.f32 0.0, %v593
    %595 = vmatmul.f32.gmra.mxu0 %v409
    %v596 = vpop.f32.mrf.mxu0
    %v597 = vadd.f32 0.0, %v596
    %598 = vmatmul.f32.gmra.mxu0 %v410
    %v599 = vpop.f32.mrf.mxu0
    %v600 = vadd.f32 0.0, %v599
    %601 = vmatmul.f32.gmra.mxu0 %v411
    %v602 = vpop.f32.mrf.mxu0
    %v603 = vadd.f32 0.0, %v602
    %604 = vmatmul.f32.gmra.mxu0 %v412
    %v605 = vpop.f32.mrf.mxu0
    %v606 = vadd.f32 0.0, %v605
    %607 = vmatmul.f32.gmra.mxu0 %v413
    %v608 = vpop.f32.mrf.mxu0
    %v609 = vadd.f32 0.0, %v608
    %610 = vmatmul.f32.gmra.mxu0 %v414
    %v611 = vpop.f32.mrf.mxu0
    %v612 = vadd.f32 0.0, %v611
    %613 = vmatmul.f32.gmra.mxu0 %v415
    %v614 = vpop.f32.mrf.mxu0
    %v615 = vadd.f32 0.0, %v614
    %616 = vmatmul.f32.gmra.mxu0 %v416
    %v617 = vpop.f32.mrf.mxu0
    %v618 = vadd.f32 0.0, %v617
    %619 = vmatmul.f32.gmra.mxu0 %v417
    %v620 = vpop.f32.mrf.mxu0
    %v621 = vadd.f32 0.0, %v620
    %622 = vmatmul.f32.gmra.mxu0 %v418
    %v623 = vpop.f32.mrf.mxu0
    %v624 = vadd.f32 0.0, %v623
    %625 = vmatmul.f32.gmra.mxu0 %v419
    %v626 = vpop.f32.mrf.mxu0
    %v627 = vadd.f32 0.0, %v626
    %628 = vmatmul.f32.gmra.mxu0 %v420
    %v629 = vpop.f32.mrf.mxu0
    %v630 = vadd.f32 0.0, %v629
    %631 = vmatmul.f32.gmra.mxu0 %v421
    %v632 = vpop.f32.mrf.mxu0
    %v633 = vadd.f32 0.0, %v632
    %634 = vmatmul.f32.gmra.mxu0 %v422
    %v635 = vpop.f32.mrf.mxu0
    %v636 = vadd.f32 0.0, %v635
    %637 = vmatmul.f32.gmra.mxu0 %v423
    %v638 = vpop.f32.mrf.mxu0
    %v639 = vadd.f32 0.0, %v638
    %640 = vmatmul.f32.gmra.mxu0 %v424
    %v641 = vpop.f32.mrf.mxu0
    %v642 = vadd.f32 0.0, %v641
    %643 = vmatmul.f32.gmra.mxu0 %v425
    %v644 = vpop.f32.mrf.mxu0
    %v645 = vadd.f32 0.0, %v644
    %646 = vmatmul.f32.gmra.mxu0 %v426
    %v647 = vpop.f32.mrf.mxu0
    %v648 = vadd.f32 0.0, %v647
    %649 = vmatmul.f32.gmra.mxu0 %v427
    %v650 = vpop.f32.mrf.mxu0
    %v651 = vadd.f32 0.0, %v650
    %652 = vdwg.mxu0
    %653 = vmatpush.msra.mxu0 %v363
    %654 = vmatpush.msra.mxu0 %v362
    %655 = vmatpush.msra.mxu0 %v361
    %656 = vmatpush.msra.mxu0 %v360
    %657 = vmatpush.msra.mxu0 %v359
    %658 = vmatpush.msra.mxu0 %v358
    %659 = vmatpush.msra.mxu0 %v357
    %660 = vmatpush.msra.mxu0 %v356
    %661 = vmatpush.msra.mxu0 %v355
    %662 = vmatpush.msra.mxu0 %v354
    %663 = vmatpush.msra.mxu0 %v353
    %664 = vmatpush.msra.mxu0 %v352
    %665 = vmatpush.msra.mxu0 %v351
    %666 = vmatpush.msra.mxu0 %v350
    %667 = vmatpush.msra.mxu0 %v349
    %668 = vmatpush.msra.mxu0 %v348
    %669 = vmatmul.f32.gmra.mxu0 %v284
    %v670 = vpop.f32.mrf.mxu0
    %v671 = vadd.f32 %v462, %v670
    %672 = vmatmul.f32.gmra.mxu0 %v285
    %v673 = vpop.f32.mrf.mxu0
    %v674 = vadd.f32 %v465, %v673
    %675 = vmatmul.f32.gmra.mxu0 %v286
    %v676 = vpop.f32.mrf.mxu0
    %v677 = vadd.f32 %v468, %v676
    %678 = vmatmul.f32.gmra.mxu0 %v287
    %v679 = vpop.f32.mrf.mxu0
    %v680 = vadd.f32 %v471, %v679
    %681 = vmatmul.f32.gmra.mxu0 %v288
    %v682 = vpop.f32.mrf.mxu0
    %v683 = vadd.f32 %v474, %v682
    %684 = vmatmul.f32.gmra.mxu0 %v289
    %v685 = vpop.f32.mrf.mxu0
    %v686 = vadd.f32 %v477, %v685
    %687 = vmatmul.f32.gmra.mxu0 %v290
    %v688 = vpop.f32.mrf.mxu0
    %v689 = vadd.f32 %v480, %v688
    %690 = vmatmul.f32.gmra.mxu0 %v291
    %v691 = vpop.f32.mrf.mxu0
    %v692 = vadd.f32 %v483, %v691
    %693 = vmatmul.f32.gmra.mxu0 %v292
    %v694 = vpop.f32.mrf.mxu0
    %v695 = vadd.f32 %v486, %v694
    %696 = vmatmul.f32.gmra.mxu0 %v293
    %v697 = vpop.f32.mrf.mxu0
    %v698 = vadd.f32 %v489, %v697
    %699 = vmatmul.f32.gmra.mxu0 %v294
    %v700 = vpop.f32.mrf.mxu0
    %v701 = vadd.f32 %v492, %v700
    %702 = vmatmul.f32.gmra.mxu0 %v295
    %v703 = vpop.f32.mrf.mxu0
    %v704 = vadd.f32 %v495, %v703
    %705 = vmatmul.f32.gmra.mxu0 %v296
    %v706 = vpop.f32.mrf.mxu0
    %v707 = vadd.f32 %v498, %v706
    %708 = vmatmul.f32.gmra.mxu0 %v297
    %v709 = vpop.f32.mrf.mxu0
    %v710 = vadd.f32 %v501, %v709
    %711 = vmatmul.f32.gmra.mxu0 %v298
    %v712 = vpop.f32.mrf.mxu0
    %v713 = vadd.f32 %v504, %v712
    %714 = vmatmul.f32.gmra.mxu0 %v299
    %v715 = vpop.f32.mrf.mxu0
    %v716 = vadd.f32 %v507, %v715
    %717 = vmatmul.f32.gmra.mxu0 %v300
    %v718 = vpop.f32.mrf.mxu0
    %v719 = vadd.f32 %v510, %v718
    %720 = vmatmul.f32.gmra.mxu0 %v301
    %v721 = vpop.f32.mrf.mxu0
    %v722 = vadd.f32 %v513, %v721
    %723 = vmatmul.f32.gmra.mxu0 %v302
    %v724 = vpop.f32.mrf.mxu0
    %v725 = vadd.f32 %v516, %v724
    %726 = vmatmul.f32.gmra.mxu0 %v303
    %v727 = vpop.f32.mrf.mxu0
    %v728 = vadd.f32 %v519, %v727
    %729 = vmatmul.f32.gmra.mxu0 %v304
    %v730 = vpop.f32.mrf.mxu0
    %v731 = vadd.f32 %v522, %v730
    %732 = vmatmul.f32.gmra.mxu0 %v305
    %v733 = vpop.f32.mrf.mxu0
    %v734 = vadd.f32 %v525, %v733
    %735 = vmatmul.f32.gmra.mxu0 %v306
    %v736 = vpop.f32.mrf.mxu0
    %v737 = vadd.f32 %v528, %v736
    %738 = vmatmul.f32.gmra.mxu0 %v307
    %v739 = vpop.f32.mrf.mxu0
    %v740 = vadd.f32 %v531, %v739
    %741 = vmatmul.f32.gmra.mxu0 %v308
    %v742 = vpop.f32.mrf.mxu0
    %v743 = vadd.f32 %v534, %v742
    %744 = vmatmul.f32.gmra.mxu0 %v309
    %v745 = vpop.f32.mrf.mxu0
    %v746 = vadd.f32 %v537, %v745
    %747 = vmatmul.f32.gmra.mxu0 %v310
    %v748 = vpop.f32.mrf.mxu0
    %v749 = vadd.f32 %v540, %v748
    %750 = vmatmul.f32.gmra.mxu0 %v311
    %v751 = vpop.f32.mrf.mxu0
    %v752 = vadd.f32 %v543, %v751
    %753 = vmatmul.f32.gmra.mxu0 %v312
    %v754 = vpop.f32.mrf.mxu0
    %v755 = vadd.f32 %v546, %v754
    %756 = vmatmul.f32.gmra.mxu0 %v313
    %v757 = vpop.f32.mrf.mxu0
    %v758 = vadd.f32 %v549, %v757
    %759 = vmatmul.f32.gmra.mxu0 %v314
    %v760 = vpop.f32.mrf.mxu0
    %v761 = vadd.f32 %v552, %v760
    %762 = vmatmul.f32.gmra.mxu0 %v315
    %v763 = vpop.f32.mrf.mxu0
    %v764 = vadd.f32 %v555, %v763
    %765 = vmatmul.f32.gmra.mxu0 %v316
    %v766 = vpop.f32.mrf.mxu0
    %v767 = vadd.f32 %v558, %v766
    %768 = vmatmul.f32.gmra.mxu0 %v317
    %v769 = vpop.f32.mrf.mxu0
    %v770 = vadd.f32 %v561, %v769
    %771 = vmatmul.f32.gmra.mxu0 %v318
    %v772 = vpop.f32.mrf.mxu0
    %v773 = vadd.f32 %v564, %v772
    %774 = vmatmul.f32.gmra.mxu0 %v319
    %v775 = vpop.f32.mrf.mxu0
    %v776 = vadd.f32 %v567, %v775
    %777 = vmatmul.f32.gmra.mxu0 %v320
    %v778 = vpop.f32.mrf.mxu0
    %v779 = vadd.f32 %v570, %v778
    %780 = vmatmul.f32.gmra.mxu0 %v321
    %v781 = vpop.f32.mrf.mxu0
    %v782 = vadd.f32 %v573, %v781
    %783 = vmatmul.f32.gmra.mxu0 %v322
    %v784 = vpop.f32.mrf.mxu0
    %v785 = vadd.f32 %v576, %v784
    %786 = vmatmul.f32.gmra.mxu0 %v323
    %v787 = vpop.f32.mrf.mxu0
    %v788 = vadd.f32 %v579, %v787
    %789 = vmatmul.f32.gmra.mxu0 %v324
    %v790 = vpop.f32.mrf.mxu0
    %v791 = vadd.f32 %v582, %v790
    %792 = vmatmul.f32.gmra.mxu0 %v325
    %v793 = vpop.f32.mrf.mxu0
    %v794 = vadd.f32 %v585, %v793
    %795 = vmatmul.f32.gmra.mxu0 %v326
    %v796 = vpop.f32.mrf.mxu0
    %v797 = vadd.f32 %v588, %v796
    %798 = vmatmul.f32.gmra.mxu0 %v327
    %v799 = vpop.f32.mrf.mxu0
    %v800 = vadd.f32 %v591, %v799
    %801 = vmatmul.f32.gmra.mxu0 %v328
    %v802 = vpop.f32.mrf.mxu0
    %v803 = vadd.f32 %v594, %v802
    %804 = vmatmul.f32.gmra.mxu0 %v329
    %v805 = vpop.f32.mrf.mxu0
    %v806 = vadd.f32 %v597, %v805
    %807 = vmatmul.f32.gmra.mxu0 %v330
    %v808 = vpop.f32.mrf.mxu0
    %v809 = vadd.f32 %v600, %v808
    %810 = vmatmul.f32.gmra.mxu0 %v331
    %v811 = vpop.f32.mrf.mxu0
    %v812 = vadd.f32 %v603, %v811
    %813 = vmatmul.f32.gmra.mxu0 %v332
    %v814 = vpop.f32.mrf.mxu0
    %v815 = vadd.f32 %v606, %v814
    %816 = vmatmul.f32.gmra.mxu0 %v333
    %v817 = vpop.f32.mrf.mxu0
    %v818 = vadd.f32 %v609, %v817
    %819 = vmatmul.f32.gmra.mxu0 %v334
    %v820 = vpop.f32.mrf.mxu0
    %v821 = vadd.f32 %v612, %v820
    %822 = vmatmul.f32.gmra.mxu0 %v335
    %v823 = vpop.f32.mrf.mxu0
    %v824 = vadd.f32 %v615, %v823
    %825 = vmatmul.f32.gmra.mxu0 %v336
    %v826 = vpop.f32.mrf.mxu0
    %v827 = vadd.f32 %v618, %v826
    %828 = vmatmul.f32.gmra.mxu0 %v337
    %v829 = vpop.f32.mrf.mxu0
    %v830 = vadd.f32 %v621, %v829
    %831 = vmatmul.f32.gmra.mxu0 %v338
    %v832 = vpop.f32.mrf.mxu0
    %v833 = vadd.f32 %v624, %v832
    %834 = vmatmul.f32.gmra.mxu0 %v339
    %v835 = vpop.f32.mrf.mxu0
    %v836 = vadd.f32 %v627, %v835
    %837 = vmatmul.f32.gmra.mxu0 %v340
    %v838 = vpop.f32.mrf.mxu0
    %v839 = vadd.f32 %v630, %v838
    %840 = vmatmul.f32.gmra.mxu0 %v341
    %v841 = vpop.f32.mrf.mxu0
    %v842 = vadd.f32 %v633, %v841
    %843 = vmatmul.f32.gmra.mxu0 %v342
    %v844 = vpop.f32.mrf.mxu0
    %v845 = vadd.f32 %v636, %v844
    %846 = vmatmul.f32.gmra.mxu0 %v343
    %v847 = vpop.f32.mrf.mxu0
    %v848 = vadd.f32 %v639, %v847
    %849 = vmatmul.f32.gmra.mxu0 %v344
    %v850 = vpop.f32.mrf.mxu0
    %v851 = vadd.f32 %v642, %v850
    %852 = vmatmul.f32.gmra.mxu0 %v345
    %v853 = vpop.f32.mrf.mxu0
    %v854 = vadd.f32 %v645, %v853
    %855 = vmatmul.f32.gmra.mxu0 %v346
    %v856 = vpop.f32.mrf.mxu0
    %v857 = vadd.f32 %v648, %v856
    %858 = vmatmul.f32.gmra.mxu0 %v347
    %v859 = vpop.f32.mrf.mxu0
    %v860 = vadd.f32 %v651, %v859
    %861 = vdwg.mxu0
    %v862 = vld [vmem:[#allocation2 + $0x9] sm:$0xff]
    %v863 = vld [vmem:[#allocation2 + $0x11] sm:$0xff]
    %v864 = vld [vmem:[#allocation2 + $0x29] sm:$0xff]
    %v865 = vld [vmem:[#allocation2 + $0x31] sm:$0xff]
    %v866 = vld [vmem:[#allocation2 + $0x49] sm:$0xff]
    %v867 = vld [vmem:[#allocation2 + $0x51] sm:$0xff]
    %v868 = vld [vmem:[#allocation2 + $0x69] sm:$0xff]
    %v869 = vld [vmem:[#allocation2 + $0x71] sm:$0xff]
    %v870 = vld [vmem:[#allocation2 + $0x89] sm:$0xff]
    %v871 = vld [vmem:[#allocation2 + $0x91] sm:$0xff]
    %v872 = vld [vmem:[#allocation2 + $0xa9] sm:$0xff]
    %v873 = vld [vmem:[#allocation2 + $0xb1] sm:$0xff]
    %v874 = vld [vmem:[#allocation2 + $0xc9] sm:$0xff]
    %v875 = vld [vmem:[#allocation2 + $0xd1] sm:$0xff]
    %v876 = vld [vmem:[#allocation2 + $0xe9] sm:$0xff]
    %v877 = vld [vmem:[#allocation2 + $0xf1] sm:$0xff]
    %v878 = vld [vmem:[#allocation2 + $0x109] sm:$0xff]
    %v879 = vld [vmem:[#allocation2 + $0x111] sm:$0xff]
    %v880 = vld [vmem:[#allocation2 + $0x129] sm:$0xff]
    %v881 = vld [vmem:[#allocation2 + $0x131] sm:$0xff]
    %v882 = vld [vmem:[#allocation2 + $0x149] sm:$0xff]
    %v883 = vld [vmem:[#allocation2 + $0x151] sm:$0xff]
    %v884 = vld [vmem:[#allocation2 + $0x169] sm:$0xff]
    %v885 = vld [vmem:[#allocation2 + $0x171] sm:$0xff]
    %v886 = vld [vmem:[#allocation2 + $0x189] sm:$0xff]
    %v887 = vld [vmem:[#allocation2 + $0x191] sm:$0xff]
    %v888 = vld [vmem:[#allocation2 + $0x1a9] sm:$0xff]
    %v889 = vld [vmem:[#allocation2 + $0x1b1] sm:$0xff]
    %v890 = vld [vmem:[#allocation2 + $0x1c9] sm:$0xff]
    %v891 = vld [vmem:[#allocation2 + $0x1d1] sm:$0xff]
    %v892 = vld [vmem:[#allocation2 + $0x1e9] sm:$0xff]
    %v893 = vld [vmem:[#allocation2 + $0x1f1] sm:$0xff]
    %v894 = vld [vmem:[#allocation2 + $0x249] sm:$0xff]
    %v895 = vld [vmem:[#allocation2 + $0x251] sm:$0xff]
    %v896 = vld [vmem:[#allocation2 + $0x269] sm:$0xff]
    %v897 = vld [vmem:[#allocation2 + $0x271] sm:$0xff]
    %v898 = vld [vmem:[#allocation2 + $0x289] sm:$0xff]
    %v899 = vld [vmem:[#allocation2 + $0x291] sm:$0xff]
    %v900 = vld [vmem:[#allocation2 + $0x2a9] sm:$0xff]
    %v901 = vld [vmem:[#allocation2 + $0x2b1] sm:$0xff]
    %v902 = vld [vmem:[#allocation2 + $0x2c9] sm:$0xff]
    %v903 = vld [vmem:[#allocation2 + $0x2d1] sm:$0xff]
    %v904 = vld [vmem:[#allocation2 + $0x2e9] sm:$0xff]
    %v905 = vld [vmem:[#allocation2 + $0x2f1] sm:$0xff]
    %v906 = vld [vmem:[#allocation2 + $0x309] sm:$0xff]
    %v907 = vld [vmem:[#allocation2 + $0x311] sm:$0xff]
    %v908 = vld [vmem:[#allocation2 + $0x329] sm:$0xff]
    %v909 = vld [vmem:[#allocation2 + $0x331] sm:$0xff]
    %v910 = vld [vmem:[#allocation2 + $0x349] sm:$0xff]
    %v911 = vld [vmem:[#allocation2 + $0x351] sm:$0xff]
    %v912 = vld [vmem:[#allocation2 + $0x369] sm:$0xff]
    %v913 = vld [vmem:[#allocation2 + $0x371] sm:$0xff]
    %v914 = vld [vmem:[#allocation2 + $0x389] sm:$0xff]
    %v915 = vld [vmem:[#allocation2 + $0x391] sm:$0xff]
    %v916 = vld [vmem:[#allocation2 + $0x3a9] sm:$0xff]
    %v917 = vld [vmem:[#allocation2 + $0x3b1] sm:$0xff]
    %v918 = vld [vmem:[#allocation2 + $0x3c9] sm:$0xff]
    %v919 = vld [vmem:[#allocation2 + $0x3d1] sm:$0xff]
    %v920 = vld [vmem:[#allocation2 + $0x3e9] sm:$0xff]
    %v921 = vld [vmem:[#allocation2 + $0x3f1] sm:$0xff]
    %v922 = vld [vmem:[#allocation2 + $0x409] sm:$0xff]
    %v923 = vld [vmem:[#allocation2 + $0x411] sm:$0xff]
    %v924 = vld [vmem:[#allocation2 + $0x429] sm:$0xff]
    %v925 = vld [vmem:[#allocation2 + $0x431] sm:$0xff]
    %v926 = vld [vmem:[#allocation6 + $0x100] sm:$0xff]
    %v927 = vld [vmem:[#allocation6 + $0x108] sm:$0xff]
    %v928 = vld [vmem:[#allocation6 + $0x110] sm:$0xff]
    %v929 = vld [vmem:[#allocation6 + $0x118] sm:$0xff]
    %v930 = vld [vmem:[#allocation6 + $0x120] sm:$0xff]
    %v931 = vld [vmem:[#allocation6 + $0x128] sm:$0xff]
    %v932 = vld [vmem:[#allocation6 + $0x130] sm:$0xff]
    %v933 = vld [vmem:[#allocation6 + $0x138] sm:$0xff]
    %v934 = vld [vmem:[#allocation6 + $0x140] sm:$0xff]
    %v935 = vld [vmem:[#allocation6 + $0x148] sm:$0xff]
    %v936 = vld [vmem:[#allocation6 + $0x150] sm:$0xff]
    %v937 = vld [vmem:[#allocation6 + $0x158] sm:$0xff]
    %v938 = vld [vmem:[#allocation6 + $0x160] sm:$0xff]
    %v939 = vld [vmem:[#allocation6 + $0x168] sm:$0xff]
    %v940 = vld [vmem:[#allocation6 + $0x170] sm:$0xff]
    %v941 = vld [vmem:[#allocation6 + $0x178] sm:$0xff]
    %942 = vmatpush.msra.mxu0 %v941
    %943 = vmatpush.msra.mxu0 %v940
    %944 = vmatpush.msra.mxu0 %v939
    %945 = vmatpush.msra.mxu0 %v938
    %946 = vmatpush.msra.mxu0 %v937
    %947 = vmatpush.msra.mxu0 %v936
    %948 = vmatpush.msra.mxu0 %v935
    %949 = vmatpush.msra.mxu0 %v934
    %950 = vmatpush.msra.mxu0 %v933
    %951 = vmatpush.msra.mxu0 %v932
    %952 = vmatpush.msra.mxu0 %v931
    %953 = vmatpush.msra.mxu0 %v930
    %954 = vmatpush.msra.mxu0 %v929
    %955 = vmatpush.msra.mxu0 %v928
    %956 = vmatpush.msra.mxu0 %v927
    %957 = vmatpush.msra.mxu0 %v926
    %958 = vmatmul.f32.gmra.mxu0 %v862
    %v959 = vpop.f32.mrf.mxu0
    %v960 = vadd.f32 0.0, %v959
    %961 = vmatmul.f32.gmra.mxu0 %v863
    %v962 = vpop.f32.mrf.mxu0
    %v963 = vadd.f32 0.0, %v962
    %964 = vmatmul.f32.gmra.mxu0 %v864
    %v965 = vpop.f32.mrf.mxu0
    %v966 = vadd.f32 0.0, %v965
    %967 = vmatmul.f32.gmra.mxu0 %v865
    %v968 = vpop.f32.mrf.mxu0
    %v969 = vadd.f32 0.0, %v968
    %970 = vmatmul.f32.gmra.mxu0 %v866
    %v971 = vpop.f32.mrf.mxu0
    %v972 = vadd.f32 0.0, %v971
    %973 = vmatmul.f32.gmra.mxu0 %v867
    %v974 = vpop.f32.mrf.mxu0
    %v975 = vadd.f32 0.0, %v974
    %976 = vmatmul.f32.gmra.mxu0 %v868
    %v977 = vpop.f32.mrf.mxu0
    %v978 = vadd.f32 0.0, %v977
    %979 = vmatmul.f32.gmra.mxu0 %v869
    %v980 = vpop.f32.mrf.mxu0
    %v981 = vadd.f32 0.0, %v980
    %982 = vmatmul.f32.gmra.mxu0 %v870
    %v983 = vpop.f32.mrf.mxu0
    %v984 = vadd.f32 0.0, %v983
    %985 = vmatmul.f32.gmra.mxu0 %v871
    %v986 = vpop.f32.mrf.mxu0
    %v987 = vadd.f32 0.0, %v986
    %988 = vmatmul.f32.gmra.mxu0 %v872
    %v989 = vpop.f32.mrf.mxu0
    %v990 = vadd.f32 0.0, %v989
    %991 = vmatmul.f32.gmra.mxu0 %v873
    %v992 = vpop.f32.mrf.mxu0
    %v993 = vadd.f32 0.0, %v992
    %994 = vmatmul.f32.gmra.mxu0 %v874
    %v995 = vpop.f32.mrf.mxu0
    %v996 = vadd.f32 0.0, %v995
    %997 = vmatmul.f32.gmra.mxu0 %v875
    %v998 = vpop.f32.mrf.mxu0
    %v999 = vadd.f32 0.0, %v998
    %1000 = vmatmul.f32.gmra.mxu0 %v876
    %v1001 = vpop.f32.mrf.mxu0
    %v1002 = vadd.f32 0.0, %v1001
    %1003 = vmatmul.f32.gmra.mxu0 %v877
    %v1004 = vpop.f32.mrf.mxu0
    %v1005 = vadd.f32 0.0, %v1004
    %1006 = vmatmul.f32.gmra.mxu0 %v878
    %v1007 = vpop.f32.mrf.mxu0
    %v1008 = vadd.f32 0.0, %v1007
    %1009 = vmatmul.f32.gmra.mxu0 %v879
    %v1010 = vpop.f32.mrf.mxu0
    %v1011 = vadd.f32 0.0, %v1010
    %1012 = vmatmul.f32.gmra.mxu0 %v880
    %v1013 = vpop.f32.mrf.mxu0
    %v1014 = vadd.f32 0.0, %v1013
    %1015 = vmatmul.f32.gmra.mxu0 %v881
    %v1016 = vpop.f32.mrf.mxu0
    %v1017 = vadd.f32 0.0, %v1016
    %1018 = vmatmul.f32.gmra.mxu0 %v882
    %v1019 = vpop.f32.mrf.mxu0
    %v1020 = vadd.f32 0.0, %v1019
    %1021 = vmatmul.f32.gmra.mxu0 %v883
    %v1022 = vpop.f32.mrf.mxu0
    %v1023 = vadd.f32 0.0, %v1022
    %1024 = vmatmul.f32.gmra.mxu0 %v884
    %v1025 = vpop.f32.mrf.mxu0
    %v1026 = vadd.f32 0.0, %v1025
    %1027 = vmatmul.f32.gmra.mxu0 %v885
    %v1028 = vpop.f32.mrf.mxu0
    %v1029 = vadd.f32 0.0, %v1028
    %1030 = vmatmul.f32.gmra.mxu0 %v886
    %v1031 = vpop.f32.mrf.mxu0
    %v1032 = vadd.f32 0.0, %v1031
    %1033 = vmatmul.f32.gmra.mxu0 %v887
    %v1034 = vpop.f32.mrf.mxu0
    %v1035 = vadd.f32 0.0, %v1034
    %1036 = vmatmul.f32.gmra.mxu0 %v888
    %v1037 = vpop.f32.mrf.mxu0
    %v1038 = vadd.f32 0.0, %v1037
    %1039 = vmatmul.f32.gmra.mxu0 %v889
    %v1040 = vpop.f32.mrf.mxu0
    %v1041 = vadd.f32 0.0, %v1040
    %1042 = vmatmul.f32.gmra.mxu0 %v890
    %v1043 = vpop.f32.mrf.mxu0
    %v1044 = vadd.f32 0.0, %v1043
    %1045 = vmatmul.f32.gmra.mxu0 %v891
    %v1046 = vpop.f32.mrf.mxu0
    %v1047 = vadd.f32 0.0, %v1046
    %1048 = vmatmul.f32.gmra.mxu0 %v892
    %v1049 = vpop.f32.mrf.mxu0
    %v1050 = vadd.f32 0.0, %v1049
    %1051 = vmatmul.f32.gmra.mxu0 %v893
    %v1052 = vpop.f32.mrf.mxu0
    %v1053 = vadd.f32 0.0, %v1052
    %1054 = vmatmul.f32.gmra.mxu0 %v894
    %v1055 = vpop.f32.mrf.mxu0
    %v1056 = vadd.f32 0.0, %v1055
    %1057 = vmatmul.f32.gmra.mxu0 %v895
    %v1058 = vpop.f32.mrf.mxu0
    %v1059 = vadd.f32 0.0, %v1058
    %1060 = vmatmul.f32.gmra.mxu0 %v896
    %v1061 = vpop.f32.mrf.mxu0
    %v1062 = vadd.f32 0.0, %v1061
    %1063 = vmatmul.f32.gmra.mxu0 %v897
    %v1064 = vpop.f32.mrf.mxu0
    %v1065 = vadd.f32 0.0, %v1064
    %1066 = vmatmul.f32.gmra.mxu0 %v898
    %v1067 = vpop.f32.mrf.mxu0
    %v1068 = vadd.f32 0.0, %v1067
    %1069 = vmatmul.f32.gmra.mxu0 %v899
    %v1070 = vpop.f32.mrf.mxu0
    %v1071 = vadd.f32 0.0, %v1070
    %1072 = vmatmul.f32.gmra.mxu0 %v900
    %v1073 = vpop.f32.mrf.mxu0
    %v1074 = vadd.f32 0.0, %v1073
    %1075 = vmatmul.f32.gmra.mxu0 %v901
    %v1076 = vpop.f32.mrf.mxu0
    %v1077 = vadd.f32 0.0, %v1076
    %1078 = vmatmul.f32.gmra.mxu0 %v902
    %v1079 = vpop.f32.mrf.mxu0
    %v1080 = vadd.f32 0.0, %v1079
    %1081 = vmatmul.f32.gmra.mxu0 %v903
    %v1082 = vpop.f32.mrf.mxu0
    %v1083 = vadd.f32 0.0, %v1082
    %1084 = vmatmul.f32.gmra.mxu0 %v904
    %v1085 = vpop.f32.mrf.mxu0
    %v1086 = vadd.f32 0.0, %v1085
    %1087 = vmatmul.f32.gmra.mxu0 %v905
    %v1088 = vpop.f32.mrf.mxu0
    %v1089 = vadd.f32 0.0, %v1088
    %1090 = vmatmul.f32.gmra.mxu0 %v906
    %v1091 = vpop.f32.mrf.mxu0
    %v1092 = vadd.f32 0.0, %v1091
    %1093 = vmatmul.f32.gmra.mxu0 %v907
    %v1094 = vpop.f32.mrf.mxu0
    %v1095 = vadd.f32 0.0, %v1094
    %1096 = vmatmul.f32.gmra.mxu0 %v908
    %v1097 = vpop.f32.mrf.mxu0
    %v1098 = vadd.f32 0.0, %v1097
    %1099 = vmatmul.f32.gmra.mxu0 %v909
    %v1100 = vpop.f32.mrf.mxu0
    %v1101 = vadd.f32 0.0, %v1100
    %1102 = vmatmul.f32.gmra.mxu0 %v910
    %v1103 = vpop.f32.mrf.mxu0
    %v1104 = vadd.f32 0.0, %v1103
    %1105 = vmatmul.f32.gmra.mxu0 %v911
    %v1106 = vpop.f32.mrf.mxu0
    %v1107 = vadd.f32 0.0, %v1106
    %1108 = vmatmul.f32.gmra.mxu0 %v912
    %v1109 = vpop.f32.mrf.mxu0
    %v1110 = vadd.f32 0.0, %v1109
    %1111 = vmatmul.f32.gmra.mxu0 %v913
    %v1112 = vpop.f32.mrf.mxu0
    %v1113 = vadd.f32 0.0, %v1112
    %1114 = vmatmul.f32.gmra.mxu0 %v914
    %v1115 = vpop.f32.mrf.mxu0
    %v1116 = vadd.f32 0.0, %v1115
    %1117 = vmatmul.f32.gmra.mxu0 %v915
    %v1118 = vpop.f32.mrf.mxu0
    %v1119 = vadd.f32 0.0, %v1118
    %1120 = vmatmul.f32.gmra.mxu0 %v916
    %v1121 = vpop.f32.mrf.mxu0
    %v1122 = vadd.f32 0.0, %v1121
    %1123 = vmatmul.f32.gmra.mxu0 %v917
    %v1124 = vpop.f32.mrf.mxu0
    %v1125 = vadd.f32 0.0, %v1124
    %1126 = vmatmul.f32.gmra.mxu0 %v918
    %v1127 = vpop.f32.mrf.mxu0
    %v1128 = vadd.f32 0.0, %v1127
    %1129 = vmatmul.f32.gmra.mxu0 %v919
    %v1130 = vpop.f32.mrf.mxu0
    %v1131 = vadd.f32 0.0, %v1130
    %1132 = vmatmul.f32.gmra.mxu0 %v920
    %v1133 = vpop.f32.mrf.mxu0
    %v1134 = vadd.f32 0.0, %v1133
    %1135 = vmatmul.f32.gmra.mxu0 %v921
    %v1136 = vpop.f32.mrf.mxu0
    %v1137 = vadd.f32 0.0, %v1136
    %1138 = vmatmul.f32.gmra.mxu0 %v922
    %v1139 = vpop.f32.mrf.mxu0
    %v1140 = vadd.f32 0.0, %v1139
    %1141 = vmatmul.f32.gmra.mxu0 %v923
    %v1142 = vpop.f32.mrf.mxu0
    %v1143 = vadd.f32 0.0, %v1142
    %1144 = vmatmul.f32.gmra.mxu0 %v924
    %v1145 = vpop.f32.mrf.mxu0
    %v1146 = vadd.f32 0.0, %v1145
    %1147 = vmatmul.f32.gmra.mxu0 %v925
    %v1148 = vpop.f32.mrf.mxu0
    %v1149 = vadd.f32 0.0, %v1148
    %1150 = vdwg.mxu0
    %v1151 = vadd.f32 %v671, %v960
    %v1152 = vadd.f32 %v674, %v963
    %v1153 = vadd.f32 %v677, %v966
    %v1154 = vadd.f32 %v680, %v969
    %v1155 = vadd.f32 %v683, %v972
    %v1156 = vadd.f32 %v686, %v975
    %v1157 = vadd.f32 %v689, %v978
    %v1158 = vadd.f32 %v692, %v981
    %v1159 = vadd.f32 %v695, %v984
    %v1160 = vadd.f32 %v698, %v987
    %v1161 = vadd.f32 %v701, %v990
    %v1162 = vadd.f32 %v704, %v993
    %v1163 = vadd.f32 %v707, %v996
    %v1164 = vadd.f32 %v710, %v999
    %v1165 = vadd.f32 %v713, %v1002
    %v1166 = vadd.f32 %v716, %v1005
    %v1167 = vadd.f32 %v719, %v1008
    %v1168 = vadd.f32 %v722, %v1011
    %v1169 = vadd.f32 %v725, %v1014
    %v1170 = vadd.f32 %v728, %v1017
    %v1171 = vadd.f32 %v731, %v1020
    %v1172 = vadd.f32 %v734, %v1023
    %v1173 = vadd.f32 %v737, %v1026
    %v1174 = vadd.f32 %v740, %v1029
    %v1175 = vadd.f32 %v743, %v1032
    %v1176 = vadd.f32 %v746, %v1035
    %v1177 = vadd.f32 %v749, %v1038
    %v1178 = vadd.f32 %v752, %v1041
    %v1179 = vadd.f32 %v755, %v1044
    %v1180 = vadd.f32 %v758, %v1047
    %v1181 = vadd.f32 %v761, %v1050
    %v1182 = vadd.f32 %v764, %v1053
    %v1183 = vadd.f32 %v767, %v1056
    %v1184 = vadd.f32 %v770, %v1059
    %v1185 = vadd.f32 %v773, %v1062
    %v1186 = vadd.f32 %v776, %v1065
    %v1187 = vadd.f32 %v779, %v1068
    %v1188 = vadd.f32 %v782, %v1071
    %v1189 = vadd.f32 %v785, %v1074
    %v1190 = vadd.f32 %v788, %v1077
    %v1191 = vadd.f32 %v791, %v1080
    %v1192 = vadd.f32 %v794, %v1083
    %v1193 = vadd.f32 %v797, %v1086
    %v1194 = vadd.f32 %v800, %v1089
    %v1195 = vadd.f32 %v803, %v1092
    %v1196 = vadd.f32 %v806, %v1095
    %v1197 = vadd.f32 %v809, %v1098
    %v1198 = vadd.f32 %v812, %v1101
    %v1199 = vadd.f32 %v815, %v1104
    %v1200 = vadd.f32 %v818, %v1107
    %v1201 = vadd.f32 %v821, %v1110
    %v1202 = vadd.f32 %v824, %v1113
    %v1203 = vadd.f32 %v827, %v1116
    %v1204 = vadd.f32 %v830, %v1119
    %v1205 = vadd.f32 %v833, %v1122
    %v1206 = vadd.f32 %v836, %v1125
    %v1207 = vadd.f32 %v839, %v1128
    %v1208 = vadd.f32 %v842, %v1131
    %v1209 = vadd.f32 %v845, %v1134
    %v1210 = vadd.f32 %v848, %v1137
    %v1211 = vadd.f32 %v851, %v1140
    %v1212 = vadd.f32 %v854, %v1143
    %v1213 = vadd.f32 %v857, %v1146
    %v1214 = vadd.f32 %v860, %v1149
    %v1215 = vld [vmem:[%s91 + $0x7] sm:$0xff]
    %v1216 = vld [vmem:[%s91 + $0xf] sm:$0xff]
    %v1217 = vld [vmem:[%s91 + $0x27] sm:$0xff]
    %v1218 = vld [vmem:[%s91 + $0x2f] sm:$0xff]
    %v1219 = vld [vmem:[%s91 + $0x47] sm:$0xff]
    %v1220 = vld [vmem:[%s91 + $0x4f] sm:$0xff]
    %v1221 = vld [vmem:[%s91 + $0x67] sm:$0xff]
    %v1222 = vld [vmem:[%s91 + $0x6f] sm:$0xff]
    %v1223 = vld [vmem:[%s91 + $0x87] sm:$0xff]
    %v1224 = vld [vmem:[%s91 + $0x8f] sm:$0xff]
    %v1225 = vld [vmem:[%s91 + $0xa7] sm:$0xff]
    %v1226 = vld [vmem:[%s91 + $0xaf] sm:$0xff]
    %v1227 = vld [vmem:[%s91 + $0xc7] sm:$0xff]
    %v1228 = vld [vmem:[%s91 + $0xcf] sm:$0xff]
    %v1229 = vld [vmem:[%s91 + $0xe7] sm:$0xff]
    %v1230 = vld [vmem:[%s91 + $0xef] sm:$0xff]
    %v1231 = vld [vmem:[%s91 + $0x107] sm:$0xff]
    %v1232 = vld [vmem:[%s91 + $0x10f] sm:$0xff]
    %v1233 = vld [vmem:[%s91 + $0x127] sm:$0xff]
    %v1234 = vld [vmem:[%s91 + $0x12f] sm:$0xff]
    %v1235 = vld [vmem:[%s91 + $0x147] sm:$0xff]
    %v1236 = vld [vmem:[%s91 + $0x14f] sm:$0xff]
    %v1237 = vld [vmem:[%s91 + $0x167] sm:$0xff]
    %v1238 = vld [vmem:[%s91 + $0x16f] sm:$0xff]
    %v1239 = vld [vmem:[%s91 + $0x187] sm:$0xff]
    %v1240 = vld [vmem:[%s91 + $0x18f] sm:$0xff]
    %v1241 = vld [vmem:[%s91 + $0x1a7] sm:$0xff]
    %v1242 = vld [vmem:[%s91 + $0x1af] sm:$0xff]
    %v1243 = vld [vmem:[%s91 + $0x1c7] sm:$0xff]
    %v1244 = vld [vmem:[%s91 + $0x1cf] sm:$0xff]
    %v1245 = vld [vmem:[%s91 + $0x1e7] sm:$0xff]
    %v1246 = vld [vmem:[%s91 + $0x1ef] sm:$0xff]
    %v1247 = vld [vmem:[%s91 + $0x247] sm:$0xff]
    %v1248 = vld [vmem:[%s91 + $0x24f] sm:$0xff]
    %v1249 = vld [vmem:[%s91 + $0x267] sm:$0xff]
    %v1250 = vld [vmem:[%s91 + $0x26f] sm:$0xff]
    %v1251 = vld [vmem:[%s91 + $0x287] sm:$0xff]
    %v1252 = vld [vmem:[%s91 + $0x28f] sm:$0xff]
    %v1253 = vld [vmem:[%s91 + $0x2a7] sm:$0xff]
    %v1254 = vld [vmem:[%s91 + $0x2af] sm:$0xff]
    %v1255 = vld [vmem:[%s91 + $0x2c7] sm:$0xff]
    %v1256 = vld [vmem:[%s91 + $0x2cf] sm:$0xff]
    %v1257 = vld [vmem:[%s91 + $0x2e7] sm:$0xff]
    %v1258 = vld [vmem:[%s91 + $0x2ef] sm:$0xff]
    %v1259 = vld [vmem:[%s91 + $0x307] sm:$0xff]
    %v1260 = vld [vmem:[%s91 + $0x30f] sm:$0xff]
    %v1261 = vld [vmem:[%s91 + $0x327] sm:$0xff]
    %v1262 = vld [vmem:[%s91 + $0x32f] sm:$0xff]
    %v1263 = vld [vmem:[%s91 + $0x347] sm:$0xff]
    %v1264 = vld [vmem:[%s91 + $0x34f] sm:$0xff]
    %v1265 = vld [vmem:[%s91 + $0x367] sm:$0xff]
    %v1266 = vld [vmem:[%s91 + $0x36f] sm:$0xff]
    %v1267 = vld [vmem:[%s91 + $0x387] sm:$0xff]
    %v1268 = vld [vmem:[%s91 + $0x38f] sm:$0xff]
    %v1269 = vld [vmem:[%s91 + $0x3a7] sm:$0xff]
    %v1270 = vld [vmem:[%s91 + $0x3af] sm:$0xff]
    %v1271 = vld [vmem:[%s91 + $0x3c7] sm:$0xff]
    %v1272 = vld [vmem:[%s91 + $0x3cf] sm:$0xff]
    %v1273 = vld [vmem:[%s91 + $0x3e7] sm:$0xff]
    %v1274 = vld [vmem:[%s91 + $0x3ef] sm:$0xff]
    %v1275 = vld [vmem:[%s91 + $0x407] sm:$0xff]
    %v1276 = vld [vmem:[%s91 + $0x40f] sm:$0xff]
    %v1277 = vld [vmem:[%s91 + $0x427] sm:$0xff]
    %v1278 = vld [vmem:[%s91 + $0x42f] sm:$0xff]
    %v1279 = vld [vmem:[#allocation6 + $0x180] sm:$0xff]
    %v1280 = vld [vmem:[#allocation6 + $0x188] sm:$0xff]
    %v1281 = vld [vmem:[#allocation6 + $0x190] sm:$0xff]
    %v1282 = vld [vmem:[#allocation6 + $0x198] sm:$0xff]
    %v1283 = vld [vmem:[#allocation6 + $0x1a0] sm:$0xff]
    %v1284 = vld [vmem:[#allocation6 + $0x1a8] sm:$0xff]
    %v1285 = vld [vmem:[#allocation6 + $0x1b0] sm:$0xff]
    %v1286 = vld [vmem:[#allocation6 + $0x1b8] sm:$0xff]
    %v1287 = vld [vmem:[#allocation6 + $0x1c0] sm:$0xff]
    %v1288 = vld [vmem:[#allocation6 + $0x1c8] sm:$0xff]
    %v1289 = vld [vmem:[#allocation6 + $0x1d0] sm:$0xff]
    %v1290 = vld [vmem:[#allocation6 + $0x1d8] sm:$0xff]
    %v1291 = vld [vmem:[#allocation6 + $0x1e0] sm:$0xff]
    %v1292 = vld [vmem:[#allocation6 + $0x1e8] sm:$0xff]
    %v1293 = vld [vmem:[#allocation6 + $0x1f0] sm:$0xff]
    %v1294 = vld [vmem:[#allocation6 + $0x1f8] sm:$0xff]
    %1295 = vmatpush.msra.mxu0 %v1294
    %1296 = vmatpush.msra.mxu0 %v1293
    %1297 = vmatpush.msra.mxu0 %v1292
    %1298 = vmatpush.msra.mxu0 %v1291
    %1299 = vmatpush.msra.mxu0 %v1290
    %1300 = vmatpush.msra.mxu0 %v1289
    %1301 = vmatpush.msra.mxu0 %v1288
    %1302 = vmatpush.msra.mxu0 %v1287
    %1303 = vmatpush.msra.mxu0 %v1286
    %1304 = vmatpush.msra.mxu0 %v1285
    %1305 = vmatpush.msra.mxu0 %v1284
    %1306 = vmatpush.msra.mxu0 %v1283
    %1307 = vmatpush.msra.mxu0 %v1282
    %1308 = vmatpush.msra.mxu0 %v1281
    %1309 = vmatpush.msra.mxu0 %v1280
    %1310 = vmatpush.msra.mxu0 %v1279
    %1311 = vmatmul.f32.gmra.mxu0 %v1215
    %v1312 = vpop.f32.mrf.mxu0
    %v1313 = vadd.f32 0.0, %v1312
    %1314 = vmatmul.f32.gmra.mxu0 %v1216
    %v1315 = vpop.f32.mrf.mxu0
    %v1316 = vadd.f32 0.0, %v1315
    %1317 = vmatmul.f32.gmra.mxu0 %v1217
    %v1318 = vpop.f32.mrf.mxu0
    %v1319 = vadd.f32 0.0, %v1318
    %1320 = vmatmul.f32.gmra.mxu0 %v1218
    %v1321 = vpop.f32.mrf.mxu0
    %v1322 = vadd.f32 0.0, %v1321
    %1323 = vmatmul.f32.gmra.mxu0 %v1219
    %v1324 = vpop.f32.mrf.mxu0
    %v1325 = vadd.f32 0.0, %v1324
    %1326 = vmatmul.f32.gmra.mxu0 %v1220
    %v1327 = vpop.f32.mrf.mxu0
    %v1328 = vadd.f32 0.0, %v1327
    %1329 = vmatmul.f32.gmra.mxu0 %v1221
    %v1330 = vpop.f32.mrf.mxu0
    %v1331 = vadd.f32 0.0, %v1330
    %1332 = vmatmul.f32.gmra.mxu0 %v1222
    %v1333 = vpop.f32.mrf.mxu0
    %v1334 = vadd.f32 0.0, %v1333
    %1335 = vmatmul.f32.gmra.mxu0 %v1223
    %v1336 = vpop.f32.mrf.mxu0
    %v1337 = vadd.f32 0.0, %v1336
    %1338 = vmatmul.f32.gmra.mxu0 %v1224
    %v1339 = vpop.f32.mrf.mxu0
    %v1340 = vadd.f32 0.0, %v1339
    %1341 = vmatmul.f32.gmra.mxu0 %v1225
    %v1342 = vpop.f32.mrf.mxu0
    %v1343 = vadd.f32 0.0, %v1342
    %1344 = vmatmul.f32.gmra.mxu0 %v1226
    %v1345 = vpop.f32.mrf.mxu0
    %v1346 = vadd.f32 0.0, %v1345
    %1347 = vmatmul.f32.gmra.mxu0 %v1227
    %v1348 = vpop.f32.mrf.mxu0
    %v1349 = vadd.f32 0.0, %v1348
    %1350 = vmatmul.f32.gmra.mxu0 %v1228
    %v1351 = vpop.f32.mrf.mxu0
    %v1352 = vadd.f32 0.0, %v1351
    %1353 = vmatmul.f32.gmra.mxu0 %v1229
    %v1354 = vpop.f32.mrf.mxu0
    %v1355 = vadd.f32 0.0, %v1354
    %1356 = vmatmul.f32.gmra.mxu0 %v1230
    %v1357 = vpop.f32.mrf.mxu0
    %v1358 = vadd.f32 0.0, %v1357
    %1359 = vmatmul.f32.gmra.mxu0 %v1231
    %v1360 = vpop.f32.mrf.mxu0
    %v1361 = vadd.f32 0.0, %v1360
    %1362 = vmatmul.f32.gmra.mxu0 %v1232
    %v1363 = vpop.f32.mrf.mxu0
    %v1364 = vadd.f32 0.0, %v1363
    %1365 = vmatmul.f32.gmra.mxu0 %v1233
    %v1366 = vpop.f32.mrf.mxu0
    %v1367 = vadd.f32 0.0, %v1366
    %1368 = vmatmul.f32.gmra.mxu0 %v1234
    %v1369 = vpop.f32.mrf.mxu0
    %v1370 = vadd.f32 0.0, %v1369
    %1371 = vmatmul.f32.gmra.mxu0 %v1235
    %v1372 = vpop.f32.mrf.mxu0
    %v1373 = vadd.f32 0.0, %v1372
    %1374 = vmatmul.f32.gmra.mxu0 %v1236
    %v1375 = vpop.f32.mrf.mxu0
    %v1376 = vadd.f32 0.0, %v1375
    %1377 = vmatmul.f32.gmra.mxu0 %v1237
    %v1378 = vpop.f32.mrf.mxu0
    %v1379 = vadd.f32 0.0, %v1378
    %1380 = vmatmul.f32.gmra.mxu0 %v1238
    %v1381 = vpop.f32.mrf.mxu0
    %v1382 = vadd.f32 0.0, %v1381
    %1383 = vmatmul.f32.gmra.mxu0 %v1239
    %v1384 = vpop.f32.mrf.mxu0
    %v1385 = vadd.f32 0.0, %v1384
    %1386 = vmatmul.f32.gmra.mxu0 %v1240
    %v1387 = vpop.f32.mrf.mxu0
    %v1388 = vadd.f32 0.0, %v1387
    %1389 = vmatmul.f32.gmra.mxu0 %v1241
    %v1390 = vpop.f32.mrf.mxu0
    %v1391 = vadd.f32 0.0, %v1390
    %1392 = vmatmul.f32.gmra.mxu0 %v1242
    %v1393 = vpop.f32.mrf.mxu0
    %v1394 = vadd.f32 0.0, %v1393
    %1395 = vmatmul.f32.gmra.mxu0 %v1243
    %v1396 = vpop.f32.mrf.mxu0
    %v1397 = vadd.f32 0.0, %v1396
    %1398 = vmatmul.f32.gmra.mxu0 %v1244
    %v1399 = vpop.f32.mrf.mxu0
    %v1400 = vadd.f32 0.0, %v1399
    %1401 = vmatmul.f32.gmra.mxu0 %v1245
    %v1402 = vpop.f32.mrf.mxu0
    %v1403 = vadd.f32 0.0, %v1402
    %1404 = vmatmul.f32.gmra.mxu0 %v1246
    %v1405 = vpop.f32.mrf.mxu0
    %v1406 = vadd.f32 0.0, %v1405
    %1407 = vmatmul.f32.gmra.mxu0 %v1247
    %v1408 = vpop.f32.mrf.mxu0
    %v1409 = vadd.f32 0.0, %v1408
    %1410 = vmatmul.f32.gmra.mxu0 %v1248
    %v1411 = vpop.f32.mrf.mxu0
    %v1412 = vadd.f32 0.0, %v1411
    %1413 = vmatmul.f32.gmra.mxu0 %v1249
    %v1414 = vpop.f32.mrf.mxu0
    %v1415 = vadd.f32 0.0, %v1414
    %1416 = vmatmul.f32.gmra.mxu0 %v1250
    %v1417 = vpop.f32.mrf.mxu0
    %v1418 = vadd.f32 0.0, %v1417
    %1419 = vmatmul.f32.gmra.mxu0 %v1251
    %v1420 = vpop.f32.mrf.mxu0
    %v1421 = vadd.f32 0.0, %v1420
    %1422 = vmatmul.f32.gmra.mxu0 %v1252
    %v1423 = vpop.f32.mrf.mxu0
    %v1424 = vadd.f32 0.0, %v1423
    %1425 = vmatmul.f32.gmra.mxu0 %v1253
    %v1426 = vpop.f32.mrf.mxu0
    %v1427 = vadd.f32 0.0, %v1426
    %1428 = vmatmul.f32.gmra.mxu0 %v1254
    %v1429 = vpop.f32.mrf.mxu0
    %v1430 = vadd.f32 0.0, %v1429
    %1431 = vmatmul.f32.gmra.mxu0 %v1255
    %v1432 = vpop.f32.mrf.mxu0
    %v1433 = vadd.f32 0.0, %v1432
    %1434 = vmatmul.f32.gmra.mxu0 %v1256
    %v1435 = vpop.f32.mrf.mxu0
    %v1436 = vadd.f32 0.0, %v1435
    %1437 = vmatmul.f32.gmra.mxu0 %v1257
    %v1438 = vpop.f32.mrf.mxu0
    %v1439 = vadd.f32 0.0, %v1438
    %1440 = vmatmul.f32.gmra.mxu0 %v1258
    %v1441 = vpop.f32.mrf.mxu0
    %v1442 = vadd.f32 0.0, %v1441
    %1443 = vmatmul.f32.gmra.mxu0 %v1259
    %v1444 = vpop.f32.mrf.mxu0
    %v1445 = vadd.f32 0.0, %v1444
    %1446 = vmatmul.f32.gmra.mxu0 %v1260
    %v1447 = vpop.f32.mrf.mxu0
    %v1448 = vadd.f32 0.0, %v1447
    %1449 = vmatmul.f32.gmra.mxu0 %v1261
    %v1450 = vpop.f32.mrf.mxu0
    %v1451 = vadd.f32 0.0, %v1450
    %1452 = vmatmul.f32.gmra.mxu0 %v1262
    %v1453 = vpop.f32.mrf.mxu0
    %v1454 = vadd.f32 0.0, %v1453
    %1455 = vmatmul.f32.gmra.mxu0 %v1263
    %v1456 = vpop.f32.mrf.mxu0
    %v1457 = vadd.f32 0.0, %v1456
    %1458 = vmatmul.f32.gmra.mxu0 %v1264
    %v1459 = vpop.f32.mrf.mxu0
    %v1460 = vadd.f32 0.0, %v1459
    %1461 = vmatmul.f32.gmra.mxu0 %v1265
    %v1462 = vpop.f32.mrf.mxu0
    %v1463 = vadd.f32 0.0, %v1462
    %1464 = vmatmul.f32.gmra.mxu0 %v1266
    %v1465 = vpop.f32.mrf.mxu0
    %v1466 = vadd.f32 0.0, %v1465
    %1467 = vmatmul.f32.gmra.mxu0 %v1267
    %v1468 = vpop.f32.mrf.mxu0
    %v1469 = vadd.f32 0.0, %v1468
    %1470 = vmatmul.f32.gmra.mxu0 %v1268
    %v1471 = vpop.f32.mrf.mxu0
    %v1472 = vadd.f32 0.0, %v1471
    %1473 = vmatmul.f32.gmra.mxu0 %v1269
    %v1474 = vpop.f32.mrf.mxu0
    %v1475 = vadd.f32 0.0, %v1474
    %1476 = vmatmul.f32.gmra.mxu0 %v1270
    %v1477 = vpop.f32.mrf.mxu0
    %v1478 = vadd.f32 0.0, %v1477
    %1479 = vmatmul.f32.gmra.mxu0 %v1271
    %v1480 = vpop.f32.mrf.mxu0
    %v1481 = vadd.f32 0.0, %v1480
    %1482 = vmatmul.f32.gmra.mxu0 %v1272
    %v1483 = vpop.f32.mrf.mxu0
    %v1484 = vadd.f32 0.0, %v1483
    %1485 = vmatmul.f32.gmra.mxu0 %v1273
    %v1486 = vpop.f32.mrf.mxu0
    %v1487 = vadd.f32 0.0, %v1486
    %1488 = vmatmul.f32.gmra.mxu0 %v1274
    %v1489 = vpop.f32.mrf.mxu0
    %v1490 = vadd.f32 0.0, %v1489
    %1491 = vmatmul.f32.gmra.mxu0 %v1275
    %v1492 = vpop.f32.mrf.mxu0
    %v1493 = vadd.f32 0.0, %v1492
    %1494 = vmatmul.f32.gmra.mxu0 %v1276
    %v1495 = vpop.f32.mrf.mxu0
    %v1496 = vadd.f32 0.0, %v1495
    %1497 = vmatmul.f32.gmra.mxu0 %v1277
    %v1498 = vpop.f32.mrf.mxu0
    %v1499 = vadd.f32 0.0, %v1498
    %1500 = vmatmul.f32.gmra.mxu0 %v1278
    %v1501 = vpop.f32.mrf.mxu0
    %v1502 = vadd.f32 0.0, %v1501
    %1503 = vdwg.mxu0
    %v1504 = vadd.f32 %v1151, %v1313
    %v1505 = vadd.f32 %v1152, %v1316
    %v1506 = vadd.f32 %v1153, %v1319
    %v1507 = vadd.f32 %v1154, %v1322
    %v1508 = vadd.f32 %v1155, %v1325
    %v1509 = vadd.f32 %v1156, %v1328
    %v1510 = vadd.f32 %v1157, %v1331
    %v1511 = vadd.f32 %v1158, %v1334
    %v1512 = vadd.f32 %v1159, %v1337
    %v1513 = vadd.f32 %v1160, %v1340
    %v1514 = vadd.f32 %v1161, %v1343
    %v1515 = vadd.f32 %v1162, %v1346
    %v1516 = vadd.f32 %v1163, %v1349
    %v1517 = vadd.f32 %v1164, %v1352
    %v1518 = vadd.f32 %v1165, %v1355
    %v1519 = vadd.f32 %v1166, %v1358
    %v1520 = vadd.f32 %v1167, %v1361
    %v1521 = vadd.f32 %v1168, %v1364
    %v1522 = vadd.f32 %v1169, %v1367
    %v1523 = vadd.f32 %v1170, %v1370
    %v1524 = vadd.f32 %v1171, %v1373
    %v1525 = vadd.f32 %v1172, %v1376
    %v1526 = vadd.f32 %v1173, %v1379
    %v1527 = vadd.f32 %v1174, %v1382
    %v1528 = vadd.f32 %v1175, %v1385
    %v1529 = vadd.f32 %v1176, %v1388
    %v1530 = vadd.f32 %v1177, %v1391
    %v1531 = vadd.f32 %v1178, %v1394
    %v1532 = vadd.f32 %v1179, %v1397
    %v1533 = vadd.f32 %v1180, %v1400
    %v1534 = vadd.f32 %v1181, %v1403
    %v1535 = vadd.f32 %v1182, %v1406
    %v1536 = vadd.f32 %v1183, %v1409
    %v1537 = vadd.f32 %v1184, %v1412
    %v1538 = vadd.f32 %v1185, %v1415
    %v1539 = vadd.f32 %v1186, %v1418
    %v1540 = vadd.f32 %v1187, %v1421
    %v1541 = vadd.f32 %v1188, %v1424
    %v1542 = vadd.f32 %v1189, %v1427
    %v1543 = vadd.f32 %v1190, %v1430
    %v1544 = vadd.f32 %v1191, %v1433
    %v1545 = vadd.f32 %v1192, %v1436
    %v1546 = vadd.f32 %v1193, %v1439
    %v1547 = vadd.f32 %v1194, %v1442
    %v1548 = vadd.f32 %v1195, %v1445
    %v1549 = vadd.f32 %v1196, %v1448
    %v1550 = vadd.f32 %v1197, %v1451
    %v1551 = vadd.f32 %v1198, %v1454
    %v1552 = vadd.f32 %v1199, %v1457
    %v1553 = vadd.f32 %v1200, %v1460
    %v1554 = vadd.f32 %v1201, %v1463
    %v1555 = vadd.f32 %v1202, %v1466
    %v1556 = vadd.f32 %v1203, %v1469
    %v1557 = vadd.f32 %v1204, %v1472
    %v1558 = vadd.f32 %v1205, %v1475
    %v1559 = vadd.f32 %v1206, %v1478
    %v1560 = vadd.f32 %v1207, %v1481
    %v1561 = vadd.f32 %v1208, %v1484
    %v1562 = vadd.f32 %v1209, %v1487
    %v1563 = vadd.f32 %v1210, %v1490
    %v1564 = vadd.f32 %v1211, %v1493
    %v1565 = vadd.f32 %v1212, %v1496
    %v1566 = vadd.f32 %v1213, %v1499
    %v1567 = vadd.f32 %v1214, %v1502
    %v1568 = vld [vmem:[%s91 + $0x8] sm:$0xff]
    %v1569 = vld [vmem:[%s91 + $0x10] sm:$0xff]
    %v1570 = vld [vmem:[%s91 + $0x28] sm:$0xff]
    %v1571 = vld [vmem:[%s91 + $0x30] sm:$0xff]
    %v1572 = vld [vmem:[%s91 + $0x48] sm:$0xff]
    %v1573 = vld [vmem:[%s91 + $0x50] sm:$0xff]
    %v1574 = vld [vmem:[%s91 + $0x68] sm:$0xff]
    %v1575 = vld [vmem:[%s91 + $0x70] sm:$0xff]
    %v1576 = vld [vmem:[%s91 + $0x88] sm:$0xff]
    %v1577 = vld [vmem:[%s91 + $0x90] sm:$0xff]
    %v1578 = vld [vmem:[%s91 + $0xa8] sm:$0xff]
    %v1579 = vld [vmem:[%s91 + $0xb0] sm:$0xff]
    %v1580 = vld [vmem:[%s91 + $0xc8] sm:$0xff]
    %v1581 = vld [vmem:[%s91 + $0xd0] sm:$0xff]
    %v1582 = vld [vmem:[%s91 + $0xe8] sm:$0xff]
    %v1583 = vld [vmem:[%s91 + $0xf0] sm:$0xff]
    %v1584 = vld [vmem:[%s91 + $0x108] sm:$0xff]
    %v1585 = vld [vmem:[%s91 + $0x110] sm:$0xff]
    %v1586 = vld [vmem:[%s91 + $0x128] sm:$0xff]
    %v1587 = vld [vmem:[%s91 + $0x130] sm:$0xff]
    %v1588 = vld [vmem:[%s91 + $0x148] sm:$0xff]
    %v1589 = vld [vmem:[%s91 + $0x150] sm:$0xff]
    %v1590 = vld [vmem:[%s91 + $0x168] sm:$0xff]
    %v1591 = vld [vmem:[%s91 + $0x170] sm:$0xff]
    %v1592 = vld [vmem:[%s91 + $0x188] sm:$0xff]
    %v1593 = vld [vmem:[%s91 + $0x190] sm:$0xff]
    %v1594 = vld [vmem:[%s91 + $0x1a8] sm:$0xff]
    %v1595 = vld [vmem:[%s91 + $0x1b0] sm:$0xff]
    %v1596 = vld [vmem:[%s91 + $0x1c8] sm:$0xff]
    %v1597 = vld [vmem:[%s91 + $0x1d0] sm:$0xff]
    %v1598 = vld [vmem:[%s91 + $0x1e8] sm:$0xff]
    %v1599 = vld [vmem:[%s91 + $0x1f0] sm:$0xff]
    %v1600 = vld [vmem:[%s91 + $0x248] sm:$0xff]
    %v1601 = vld [vmem:[%s91 + $0x250] sm:$0xff]
    %v1602 = vld [vmem:[%s91 + $0x268] sm:$0xff]
    %v1603 = vld [vmem:[%s91 + $0x270] sm:$0xff]
    %v1604 = vld [vmem:[%s91 + $0x288] sm:$0xff]
    %v1605 = vld [vmem:[%s91 + $0x290] sm:$0xff]
    %v1606 = vld [vmem:[%s91 + $0x2a8] sm:$0xff]
    %v1607 = vld [vmem:[%s91 + $0x2b0] sm:$0xff]
    %v1608 = vld [vmem:[%s91 + $0x2c8] sm:$0xff]
    %v1609 = vld [vmem:[%s91 + $0x2d0] sm:$0xff]
    %v1610 = vld [vmem:[%s91 + $0x2e8] sm:$0xff]
    %v1611 = vld [vmem:[%s91 + $0x2f0] sm:$0xff]
    %v1612 = vld [vmem:[%s91 + $0x308] sm:$0xff]
    %v1613 = vld [vmem:[%s91 + $0x310] sm:$0xff]
    %v1614 = vld [vmem:[%s91 + $0x328] sm:$0xff]
    %v1615 = vld [vmem:[%s91 + $0x330] sm:$0xff]
    %v1616 = vld [vmem:[%s91 + $0x348] sm:$0xff]
    %v1617 = vld [vmem:[%s91 + $0x350] sm:$0xff]
    %v1618 = vld [vmem:[%s91 + $0x368] sm:$0xff]
    %v1619 = vld [vmem:[%s91 + $0x370] sm:$0xff]
    %v1620 = vld [vmem:[%s91 + $0x388] sm:$0xff]
    %v1621 = vld [vmem:[%s91 + $0x390] sm:$0xff]
    %v1622 = vld [vmem:[%s91 + $0x3a8] sm:$0xff]
    %v1623 = vld [vmem:[%s91 + $0x3b0] sm:$0xff]
    %v1624 = vld [vmem:[%s91 + $0x3c8] sm:$0xff]
    %v1625 = vld [vmem:[%s91 + $0x3d0] sm:$0xff]
    %v1626 = vld [vmem:[%s91 + $0x3e8] sm:$0xff]
    %v1627 = vld [vmem:[%s91 + $0x3f0] sm:$0xff]
    %v1628 = vld [vmem:[%s91 + $0x408] sm:$0xff]
    %v1629 = vld [vmem:[%s91 + $0x410] sm:$0xff]
    %v1630 = vld [vmem:[%s91 + $0x428] sm:$0xff]
    %v1631 = vld [vmem:[%s91 + $0x430] sm:$0xff]
    %v1632 = vld [vmem:[#allocation6 + $0x200] sm:$0xff]
    %v1633 = vld [vmem:[#allocation6 + $0x208] sm:$0xff]
    %v1634 = vld [vmem:[#allocation6 + $0x210] sm:$0xff]
    %v1635 = vld [vmem:[#allocation6 + $0x218] sm:$0xff]
    %v1636 = vld [vmem:[#allocation6 + $0x220] sm:$0xff]
    %v1637 = vld [vmem:[#allocation6 + $0x228] sm:$0xff]
    %v1638 = vld [vmem:[#allocation6 + $0x230] sm:$0xff]
    %v1639 = vld [vmem:[#allocation6 + $0x238] sm:$0xff]
    %v1640 = vld [vmem:[#allocation6 + $0x240] sm:$0xff]
    %v1641 = vld [vmem:[#allocation6 + $0x248] sm:$0xff]
    %v1642 = vld [vmem:[#allocation6 + $0x250] sm:$0xff]
    %v1643 = vld [vmem:[#allocation6 + $0x258] sm:$0xff]
    %v1644 = vld [vmem:[#allocation6 + $0x260] sm:$0xff]
    %v1645 = vld [vmem:[#allocation6 + $0x268] sm:$0xff]
    %v1646 = vld [vmem:[#allocation6 + $0x270] sm:$0xff]
    %v1647 = vld [vmem:[#allocation6 + $0x278] sm:$0xff]
    %1648 = vmatpush.msra.mxu0 %v1647
    %1649 = vmatpush.msra.mxu0 %v1646
    %1650 = vmatpush.msra.mxu0 %v1645
    %1651 = vmatpush.msra.mxu0 %v1644
    %1652 = vmatpush.msra.mxu0 %v1643
    %1653 = vmatpush.msra.mxu0 %v1642
    %1654 = vmatpush.msra.mxu0 %v1641
    %1655 = vmatpush.msra.mxu0 %v1640
    %1656 = vmatpush.msra.mxu0 %v1639
    %1657 = vmatpush.msra.mxu0 %v1638
    %1658 = vmatpush.msra.mxu0 %v1637
    %1659 = vmatpush.msra.mxu0 %v1636
    %1660 = vmatpush.msra.mxu0 %v1635
    %1661 = vmatpush.msra.mxu0 %v1634
    %1662 = vmatpush.msra.mxu0 %v1633
    %1663 = vmatpush.msra.mxu0 %v1632
    %1664 = vmatmul.f32.gmra.mxu0 %v1568
    %v1665 = vpop.f32.mrf.mxu0
    %v1666 = vadd.f32 0.0, %v1665
    %1667 = vmatmul.f32.gmra.mxu0 %v1569
    %v1668 = vpop.f32.mrf.mxu0
    %v1669 = vadd.f32 0.0, %v1668
    %1670 = vmatmul.f32.gmra.mxu0 %v1570
    %v1671 = vpop.f32.mrf.mxu0
    %v1672 = vadd.f32 0.0, %v1671
    %1673 = vmatmul.f32.gmra.mxu0 %v1571
    %v1674 = vpop.f32.mrf.mxu0
    %v1675 = vadd.f32 0.0, %v1674
    %1676 = vmatmul.f32.gmra.mxu0 %v1572
    %v1677 = vpop.f32.mrf.mxu0
    %v1678 = vadd.f32 0.0, %v1677
    %1679 = vmatmul.f32.gmra.mxu0 %v1573
    %v1680 = vpop.f32.mrf.mxu0
    %v1681 = vadd.f32 0.0, %v1680
    %1682 = vmatmul.f32.gmra.mxu0 %v1574
    %v1683 = vpop.f32.mrf.mxu0
    %v1684 = vadd.f32 0.0, %v1683
    %1685 = vmatmul.f32.gmra.mxu0 %v1575
    %v1686 = vpop.f32.mrf.mxu0
    %v1687 = vadd.f32 0.0, %v1686
    %1688 = vmatmul.f32.gmra.mxu0 %v1576
    %v1689 = vpop.f32.mrf.mxu0
    %v1690 = vadd.f32 0.0, %v1689
    %1691 = vmatmul.f32.gmra.mxu0 %v1577
    %v1692 = vpop.f32.mrf.mxu0
    %v1693 = vadd.f32 0.0, %v1692
    %1694 = vmatmul.f32.gmra.mxu0 %v1578
    %v1695 = vpop.f32.mrf.mxu0
    %v1696 = vadd.f32 0.0, %v1695
    %1697 = vmatmul.f32.gmra.mxu0 %v1579
    %v1698 = vpop.f32.mrf.mxu0
    %v1699 = vadd.f32 0.0, %v1698
    %1700 = vmatmul.f32.gmra.mxu0 %v1580
    %v1701 = vpop.f32.mrf.mxu0
    %v1702 = vadd.f32 0.0, %v1701
    %1703 = vmatmul.f32.gmra.mxu0 %v1581
    %v1704 = vpop.f32.mrf.mxu0
    %v1705 = vadd.f32 0.0, %v1704
    %1706 = vmatmul.f32.gmra.mxu0 %v1582
    %v1707 = vpop.f32.mrf.mxu0
    %v1708 = vadd.f32 0.0, %v1707
    %1709 = vmatmul.f32.gmra.mxu0 %v1583
    %v1710 = vpop.f32.mrf.mxu0
    %v1711 = vadd.f32 0.0, %v1710
    %1712 = vmatmul.f32.gmra.mxu0 %v1584
    %v1713 = vpop.f32.mrf.mxu0
    %v1714 = vadd.f32 0.0, %v1713
    %1715 = vmatmul.f32.gmra.mxu0 %v1585
    %v1716 = vpop.f32.mrf.mxu0
    %v1717 = vadd.f32 0.0, %v1716
    %1718 = vmatmul.f32.gmra.mxu0 %v1586
    %v1719 = vpop.f32.mrf.mxu0
    %v1720 = vadd.f32 0.0, %v1719
    %1721 = vmatmul.f32.gmra.mxu0 %v1587
    %v1722 = vpop.f32.mrf.mxu0
    %v1723 = vadd.f32 0.0, %v1722
    %1724 = vmatmul.f32.gmra.mxu0 %v1588
    %v1725 = vpop.f32.mrf.mxu0
    %v1726 = vadd.f32 0.0, %v1725
    %1727 = vmatmul.f32.gmra.mxu0 %v1589
    %v1728 = vpop.f32.mrf.mxu0
    %v1729 = vadd.f32 0.0, %v1728
    %1730 = vmatmul.f32.gmra.mxu0 %v1590
    %v1731 = vpop.f32.mrf.mxu0
    %v1732 = vadd.f32 0.0, %v1731
    %1733 = vmatmul.f32.gmra.mxu0 %v1591
    %v1734 = vpop.f32.mrf.mxu0
    %v1735 = vadd.f32 0.0, %v1734
    %1736 = vmatmul.f32.gmra.mxu0 %v1592
    %v1737 = vpop.f32.mrf.mxu0
    %v1738 = vadd.f32 0.0, %v1737
    %1739 = vmatmul.f32.gmra.mxu0 %v1593
    %v1740 = vpop.f32.mrf.mxu0
    %v1741 = vadd.f32 0.0, %v1740
    %1742 = vmatmul.f32.gmra.mxu0 %v1594
    %v1743 = vpop.f32.mrf.mxu0
    %v1744 = vadd.f32 0.0, %v1743
    %1745 = vmatmul.f32.gmra.mxu0 %v1595
    %v1746 = vpop.f32.mrf.mxu0
    %v1747 = vadd.f32 0.0, %v1746
    %1748 = vmatmul.f32.gmra.mxu0 %v1596
    %v1749 = vpop.f32.mrf.mxu0
    %v1750 = vadd.f32 0.0, %v1749
    %1751 = vmatmul.f32.gmra.mxu0 %v1597
    %v1752 = vpop.f32.mrf.mxu0
    %v1753 = vadd.f32 0.0, %v1752
    %1754 = vmatmul.f32.gmra.mxu0 %v1598
    %v1755 = vpop.f32.mrf.mxu0
    %v1756 = vadd.f32 0.0, %v1755
    %1757 = vmatmul.f32.gmra.mxu0 %v1599
    %v1758 = vpop.f32.mrf.mxu0
    %v1759 = vadd.f32 0.0, %v1758
    %1760 = vmatmul.f32.gmra.mxu0 %v1600
    %v1761 = vpop.f32.mrf.mxu0
    %v1762 = vadd.f32 0.0, %v1761
    %1763 = vmatmul.f32.gmra.mxu0 %v1601
    %v1764 = vpop.f32.mrf.mxu0
    %v1765 = vadd.f32 0.0, %v1764
    %1766 = vmatmul.f32.gmra.mxu0 %v1602
    %v1767 = vpop.f32.mrf.mxu0
    %v1768 = vadd.f32 0.0, %v1767
    %1769 = vmatmul.f32.gmra.mxu0 %v1603
    %v1770 = vpop.f32.mrf.mxu0
    %v1771 = vadd.f32 0.0, %v1770
    %1772 = vmatmul.f32.gmra.mxu0 %v1604
    %v1773 = vpop.f32.mrf.mxu0
    %v1774 = vadd.f32 0.0, %v1773
    %1775 = vmatmul.f32.gmra.mxu0 %v1605
    %v1776 = vpop.f32.mrf.mxu0
    %v1777 = vadd.f32 0.0, %v1776
    %1778 = vmatmul.f32.gmra.mxu0 %v1606
    %v1779 = vpop.f32.mrf.mxu0
    %v1780 = vadd.f32 0.0, %v1779
    %1781 = vmatmul.f32.gmra.mxu0 %v1607
    %v1782 = vpop.f32.mrf.mxu0
    %v1783 = vadd.f32 0.0, %v1782
    %1784 = vmatmul.f32.gmra.mxu0 %v1608
    %v1785 = vpop.f32.mrf.mxu0
    %v1786 = vadd.f32 0.0, %v1785
    %1787 = vmatmul.f32.gmra.mxu0 %v1609
    %v1788 = vpop.f32.mrf.mxu0
    %v1789 = vadd.f32 0.0, %v1788
    %1790 = vmatmul.f32.gmra.mxu0 %v1610
    %v1791 = vpop.f32.mrf.mxu0
    %v1792 = vadd.f32 0.0, %v1791
    %1793 = vmatmul.f32.gmra.mxu0 %v1611
    %v1794 = vpop.f32.mrf.mxu0
    %v1795 = vadd.f32 0.0, %v1794
    %1796 = vmatmul.f32.gmra.mxu0 %v1612
    %v1797 = vpop.f32.mrf.mxu0
    %v1798 = vadd.f32 0.0, %v1797
    %1799 = vmatmul.f32.gmra.mxu0 %v1613
    %v1800 = vpop.f32.mrf.mxu0
    %v1801 = vadd.f32 0.0, %v1800
    %1802 = vmatmul.f32.gmra.mxu0 %v1614
    %v1803 = vpop.f32.mrf.mxu0
    %v1804 = vadd.f32 0.0, %v1803
    %1805 = vmatmul.f32.gmra.mxu0 %v1615
    %v1806 = vpop.f32.mrf.mxu0
    %v1807 = vadd.f32 0.0, %v1806
    %1808 = vmatmul.f32.gmra.mxu0 %v1616
    %v1809 = vpop.f32.mrf.mxu0
    %v1810 = vadd.f32 0.0, %v1809
    %1811 = vmatmul.f32.gmra.mxu0 %v1617
    %v1812 = vpop.f32.mrf.mxu0
    %v1813 = vadd.f32 0.0, %v1812
    %1814 = vmatmul.f32.gmra.mxu0 %v1618
    %v1815 = vpop.f32.mrf.mxu0
    %v1816 = vadd.f32 0.0, %v1815
    %1817 = vmatmul.f32.gmra.mxu0 %v1619
    %v1818 = vpop.f32.mrf.mxu0
    %v1819 = vadd.f32 0.0, %v1818
    %1820 = vmatmul.f32.gmra.mxu0 %v1620
    %v1821 = vpop.f32.mrf.mxu0
    %v1822 = vadd.f32 0.0, %v1821
    %1823 = vmatmul.f32.gmra.mxu0 %v1621
    %v1824 = vpop.f32.mrf.mxu0
    %v1825 = vadd.f32 0.0, %v1824
    %1826 = vmatmul.f32.gmra.mxu0 %v1622
    %v1827 = vpop.f32.mrf.mxu0
    %v1828 = vadd.f32 0.0, %v1827
    %1829 = vmatmul.f32.gmra.mxu0 %v1623
    %v1830 = vpop.f32.mrf.mxu0
    %v1831 = vadd.f32 0.0, %v1830
    %1832 = vmatmul.f32.gmra.mxu0 %v1624
    %v1833 = vpop.f32.mrf.mxu0
    %v1834 = vadd.f32 0.0, %v1833
    %1835 = vmatmul.f32.gmra.mxu0 %v1625
    %v1836 = vpop.f32.mrf.mxu0
    %v1837 = vadd.f32 0.0, %v1836
    %1838 = vmatmul.f32.gmra.mxu0 %v1626
    %v1839 = vpop.f32.mrf.mxu0
    %v1840 = vadd.f32 0.0, %v1839
    %1841 = vmatmul.f32.gmra.mxu0 %v1627
    %v1842 = vpop.f32.mrf.mxu0
    %v1843 = vadd.f32 0.0, %v1842
    %1844 = vmatmul.f32.gmra.mxu0 %v1628
    %v1845 = vpop.f32.mrf.mxu0
    %v1846 = vadd.f32 0.0, %v1845
    %1847 = vmatmul.f32.gmra.mxu0 %v1629
    %v1848 = vpop.f32.mrf.mxu0
    %v1849 = vadd.f32 0.0, %v1848
    %1850 = vmatmul.f32.gmra.mxu0 %v1630
    %v1851 = vpop.f32.mrf.mxu0
    %v1852 = vadd.f32 0.0, %v1851
    %1853 = vmatmul.f32.gmra.mxu0 %v1631
    %v1854 = vpop.f32.mrf.mxu0
    %v1855 = vadd.f32 0.0, %v1854
    %1856 = vdwg.mxu0
    %v1857 = vadd.f32 %v1504, %v1666
    %v1858 = vadd.f32 %v1505, %v1669
    %v1859 = vadd.f32 %v1506, %v1672
    %v1860 = vadd.f32 %v1507, %v1675
    %v1861 = vadd.f32 %v1508, %v1678
    %v1862 = vadd.f32 %v1509, %v1681
    %v1863 = vadd.f32 %v1510, %v1684
    %v1864 = vadd.f32 %v1511, %v1687
    %v1865 = vadd.f32 %v1512, %v1690
    %v1866 = vadd.f32 %v1513, %v1693
    %v1867 = vadd.f32 %v1514, %v1696
    %v1868 = vadd.f32 %v1515, %v1699
    %v1869 = vadd.f32 %v1516, %v1702
    %v1870 = vadd.f32 %v1517, %v1705
    %v1871 = vadd.f32 %v1518, %v1708
    %v1872 = vadd.f32 %v1519, %v1711
    %v1873 = vadd.f32 %v1520, %v1714
    %v1874 = vadd.f32 %v1521, %v1717
    %v1875 = vadd.f32 %v1522, %v1720
    %v1876 = vadd.f32 %v1523, %v1723
    %v1877 = vadd.f32 %v1524, %v1726
    %v1878 = vadd.f32 %v1525, %v1729
    %v1879 = vadd.f32 %v1526, %v1732
    %v1880 = vadd.f32 %v1527, %v1735
    %v1881 = vadd.f32 %v1528, %v1738
    %v1882 = vadd.f32 %v1529, %v1741
    %v1883 = vadd.f32 %v1530, %v1744
    %v1884 = vadd.f32 %v1531, %v1747
    %v1885 = vadd.f32 %v1532, %v1750
    %v1886 = vadd.f32 %v1533, %v1753
    %v1887 = vadd.f32 %v1534, %v1756
    %v1888 = vadd.f32 %v1535, %v1759
    %v1889 = vadd.f32 %v1536, %v1762
    %v1890 = vadd.f32 %v1537, %v1765
    %v1891 = vadd.f32 %v1538, %v1768
    %v1892 = vadd.f32 %v1539, %v1771
    %v1893 = vadd.f32 %v1540, %v1774
    %v1894 = vadd.f32 %v1541, %v1777
    %v1895 = vadd.f32 %v1542, %v1780
    %v1896 = vadd.f32 %v1543, %v1783
    %v1897 = vadd.f32 %v1544, %v1786
    %v1898 = vadd.f32 %v1545, %v1789
    %v1899 = vadd.f32 %v1546, %v1792
    %v1900 = vadd.f32 %v1547, %v1795
    %v1901 = vadd.f32 %v1548, %v1798
    %v1902 = vadd.f32 %v1549, %v1801
    %v1903 = vadd.f32 %v1550, %v1804
    %v1904 = vadd.f32 %v1551, %v1807
    %v1905 = vadd.f32 %v1552, %v1810
    %v1906 = vadd.f32 %v1553, %v1813
    %v1907 = vadd.f32 %v1554, %v1816
    %v1908 = vadd.f32 %v1555, %v1819
    %v1909 = vadd.f32 %v1556, %v1822
    %v1910 = vadd.f32 %v1557, %v1825
    %v1911 = vadd.f32 %v1558, %v1828
    %v1912 = vadd.f32 %v1559, %v1831
    %v1913 = vadd.f32 %v1560, %v1834
    %v1914 = vadd.f32 %v1561, %v1837
    %v1915 = vadd.f32 %v1562, %v1840
    %v1916 = vadd.f32 %v1563, %v1843
    %v1917 = vadd.f32 %v1564, %v1846
    %v1918 = vadd.f32 %v1565, %v1849
    %v1919 = vadd.f32 %v1566, %v1852
    %v1920 = vadd.f32 %v1567, %v1855
    %v1921 = vld [vmem:[%s91 + $0x9] sm:$0xff]
    %v1922 = vld [vmem:[%s91 + $0x11] sm:$0xff]
    %v1923 = vld [vmem:[%s91 + $0x29] sm:$0xff]
    %v1924 = vld [vmem:[%s91 + $0x31] sm:$0xff]
    %v1925 = vld [vmem:[%s91 + $0x49] sm:$0xff]
    %v1926 = vld [vmem:[%s91 + $0x51] sm:$0xff]
    %v1927 = vld [vmem:[%s91 + $0x69] sm:$0xff]
    %v1928 = vld [vmem:[%s91 + $0x71] sm:$0xff]
    %v1929 = vld [vmem:[%s91 + $0x89] sm:$0xff]
    %v1930 = vld [vmem:[%s91 + $0x91] sm:$0xff]
    %v1931 = vld [vmem:[%s91 + $0xa9] sm:$0xff]
    %v1932 = vld [vmem:[%s91 + $0xb1] sm:$0xff]
    %v1933 = vld [vmem:[%s91 + $0xc9] sm:$0xff]
    %v1934 = vld [vmem:[%s91 + $0xd1] sm:$0xff]
    %v1935 = vld [vmem:[%s91 + $0xe9] sm:$0xff]
    %v1936 = vld [vmem:[%s91 + $0xf1] sm:$0xff]
    %v1937 = vld [vmem:[%s91 + $0x109] sm:$0xff]
    %v1938 = vld [vmem:[%s91 + $0x111] sm:$0xff]
    %v1939 = vld [vmem:[%s91 + $0x129] sm:$0xff]
    %v1940 = vld [vmem:[%s91 + $0x131] sm:$0xff]
    %v1941 = vld [vmem:[%s91 + $0x149] sm:$0xff]
    %v1942 = vld [vmem:[%s91 + $0x151] sm:$0xff]
    %v1943 = vld [vmem:[%s91 + $0x169] sm:$0xff]
    %v1944 = vld [vmem:[%s91 + $0x171] sm:$0xff]
    %v1945 = vld [vmem:[%s91 + $0x189] sm:$0xff]
    %v1946 = vld [vmem:[%s91 + $0x191] sm:$0xff]
    %v1947 = vld [vmem:[%s91 + $0x1a9] sm:$0xff]
    %v1948 = vld [vmem:[%s91 + $0x1b1] sm:$0xff]
    %v1949 = vld [vmem:[%s91 + $0x1c9] sm:$0xff]
    %v1950 = vld [vmem:[%s91 + $0x1d1] sm:$0xff]
    %v1951 = vld [vmem:[%s91 + $0x1e9] sm:$0xff]
    %v1952 = vld [vmem:[%s91 + $0x1f1] sm:$0xff]
    %v1953 = vld [vmem:[%s91 + $0x249] sm:$0xff]
    %v1954 = vld [vmem:[%s91 + $0x251] sm:$0xff]
    %v1955 = vld [vmem:[%s91 + $0x269] sm:$0xff]
    %v1956 = vld [vmem:[%s91 + $0x271] sm:$0xff]
    %v1957 = vld [vmem:[%s91 + $0x289] sm:$0xff]
    %v1958 = vld [vmem:[%s91 + $0x291] sm:$0xff]
    %v1959 = vld [vmem:[%s91 + $0x2a9] sm:$0xff]
    %v1960 = vld [vmem:[%s91 + $0x2b1] sm:$0xff]
    %v1961 = vld [vmem:[%s91 + $0x2c9] sm:$0xff]
    %v1962 = vld [vmem:[%s91 + $0x2d1] sm:$0xff]
    %v1963 = vld [vmem:[%s91 + $0x2e9] sm:$0xff]
    %v1964 = vld [vmem:[%s91 + $0x2f1] sm:$0xff]
    %v1965 = vld [vmem:[%s91 + $0x309] sm:$0xff]
    %v1966 = vld [vmem:[%s91 + $0x311] sm:$0xff]
    %v1967 = vld [vmem:[%s91 + $0x329] sm:$0xff]
    %v1968 = vld [vmem:[%s91 + $0x331] sm:$0xff]
    %v1969 = vld [vmem:[%s91 + $0x349] sm:$0xff]
    %v1970 = vld [vmem:[%s91 + $0x351] sm:$0xff]
    %v1971 = vld [vmem:[%s91 + $0x369] sm:$0xff]
    %v1972 = vld [vmem:[%s91 + $0x371] sm:$0xff]
    %v1973 = vld [vmem:[%s91 + $0x389] sm:$0xff]
    %v1974 = vld [vmem:[%s91 + $0x391] sm:$0xff]
    %v1975 = vld [vmem:[%s91 + $0x3a9] sm:$0xff]
    %v1976 = vld [vmem:[%s91 + $0x3b1] sm:$0xff]
    %v1977 = vld [vmem:[%s91 + $0x3c9] sm:$0xff]
    %v1978 = vld [vmem:[%s91 + $0x3d1] sm:$0xff]
    %v1979 = vld [vmem:[%s91 + $0x3e9] sm:$0xff]
    %v1980 = vld [vmem:[%s91 + $0x3f1] sm:$0xff]
    %v1981 = vld [vmem:[%s91 + $0x409] sm:$0xff]
    %v1982 = vld [vmem:[%s91 + $0x411] sm:$0xff]
    %v1983 = vld [vmem:[%s91 + $0x429] sm:$0xff]
    %v1984 = vld [vmem:[%s91 + $0x431] sm:$0xff]
    %v1985 = vld [vmem:[#allocation6 + $0x280] sm:$0xff]
    %v1986 = vld [vmem:[#allocation6 + $0x288] sm:$0xff]
    %v1987 = vld [vmem:[#allocation6 + $0x290] sm:$0xff]
    %v1988 = vld [vmem:[#allocation6 + $0x298] sm:$0xff]
    %v1989 = vld [vmem:[#allocation6 + $0x2a0] sm:$0xff]
    %v1990 = vld [vmem:[#allocation6 + $0x2a8] sm:$0xff]
    %v1991 = vld [vmem:[#allocation6 + $0x2b0] sm:$0xff]
    %v1992 = vld [vmem:[#allocation6 + $0x2b8] sm:$0xff]
    %v1993 = vld [vmem:[#allocation6 + $0x2c0] sm:$0xff]
    %v1994 = vld [vmem:[#allocation6 + $0x2c8] sm:$0xff]
    %v1995 = vld [vmem:[#allocation6 + $0x2d0] sm:$0xff]
    %v1996 = vld [vmem:[#allocation6 + $0x2d8] sm:$0xff]
    %v1997 = vld [vmem:[#allocation6 + $0x2e0] sm:$0xff]
    %v1998 = vld [vmem:[#allocation6 + $0x2e8] sm:$0xff]
    %v1999 = vld [vmem:[#allocation6 + $0x2f0] sm:$0xff]
    %v2000 = vld [vmem:[#allocation6 + $0x2f8] sm:$0xff]
    %2001 = vmatpush.msra.mxu0 %v2000
    %2002 = vmatpush.msra.mxu0 %v1999
    %2003 = vmatpush.msra.mxu0 %v1998
    %2004 = vmatpush.msra.mxu0 %v1997
    %2005 = vmatpush.msra.mxu0 %v1996
    %2006 = vmatpush.msra.mxu0 %v1995
    %2007 = vmatpush.msra.mxu0 %v1994
    %2008 = vmatpush.msra.mxu0 %v1993
    %2009 = vmatpush.msra.mxu0 %v1992
    %2010 = vmatpush.msra.mxu0 %v1991
    %2011 = vmatpush.msra.mxu0 %v1990
    %2012 = vmatpush.msra.mxu0 %v1989
    %2013 = vmatpush.msra.mxu0 %v1988
    %2014 = vmatpush.msra.mxu0 %v1987
    %2015 = vmatpush.msra.mxu0 %v1986
    %2016 = vmatpush.msra.mxu0 %v1985
    %2017 = vmatmul.f32.gmra.mxu0 %v1921
    %v2018 = vpop.f32.mrf.mxu0
    %v2019 = vadd.f32 0.0, %v2018
    %2020 = vmatmul.f32.gmra.mxu0 %v1922
    %v2021 = vpop.f32.mrf.mxu0
    %v2022 = vadd.f32 0.0, %v2021
    %2023 = vmatmul.f32.gmra.mxu0 %v1923
    %v2024 = vpop.f32.mrf.mxu0
    %v2025 = vadd.f32 0.0, %v2024
    %2026 = vmatmul.f32.gmra.mxu0 %v1924
    %v2027 = vpop.f32.mrf.mxu0
    %v2028 = vadd.f32 0.0, %v2027
    %2029 = vmatmul.f32.gmra.mxu0 %v1925
    %v2030 = vpop.f32.mrf.mxu0
    %v2031 = vadd.f32 0.0, %v2030
    %2032 = vmatmul.f32.gmra.mxu0 %v1926
    %v2033 = vpop.f32.mrf.mxu0
    %v2034 = vadd.f32 0.0, %v2033
    %2035 = vmatmul.f32.gmra.mxu0 %v1927
    %v2036 = vpop.f32.mrf.mxu0
    %v2037 = vadd.f32 0.0, %v2036
    %2038 = vmatmul.f32.gmra.mxu0 %v1928
    %v2039 = vpop.f32.mrf.mxu0
    %v2040 = vadd.f32 0.0, %v2039
    %2041 = vmatmul.f32.gmra.mxu0 %v1929
    %v2042 = vpop.f32.mrf.mxu0
    %v2043 = vadd.f32 0.0, %v2042
    %2044 = vmatmul.f32.gmra.mxu0 %v1930
    %v2045 = vpop.f32.mrf.mxu0
    %v2046 = vadd.f32 0.0, %v2045
    %2047 = vmatmul.f32.gmra.mxu0 %v1931
    %v2048 = vpop.f32.mrf.mxu0
    %v2049 = vadd.f32 0.0, %v2048
    %2050 = vmatmul.f32.gmra.mxu0 %v1932
    %v2051 = vpop.f32.mrf.mxu0
    %v2052 = vadd.f32 0.0, %v2051
    %2053 = vmatmul.f32.gmra.mxu0 %v1933
    %v2054 = vpop.f32.mrf.mxu0
    %v2055 = vadd.f32 0.0, %v2054
    %2056 = vmatmul.f32.gmra.mxu0 %v1934
    %v2057 = vpop.f32.mrf.mxu0
    %v2058 = vadd.f32 0.0, %v2057
    %2059 = vmatmul.f32.gmra.mxu0 %v1935
    %v2060 = vpop.f32.mrf.mxu0
    %v2061 = vadd.f32 0.0, %v2060
    %2062 = vmatmul.f32.gmra.mxu0 %v1936
    %v2063 = vpop.f32.mrf.mxu0
    %v2064 = vadd.f32 0.0, %v2063
    %2065 = vmatmul.f32.gmra.mxu0 %v1937
    %v2066 = vpop.f32.mrf.mxu0
    %v2067 = vadd.f32 0.0, %v2066
    %2068 = vmatmul.f32.gmra.mxu0 %v1938
    %v2069 = vpop.f32.mrf.mxu0
    %v2070 = vadd.f32 0.0, %v2069
    %2071 = vmatmul.f32.gmra.mxu0 %v1939
    %v2072 = vpop.f32.mrf.mxu0
    %v2073 = vadd.f32 0.0, %v2072
    %2074 = vmatmul.f32.gmra.mxu0 %v1940
    %v2075 = vpop.f32.mrf.mxu0
    %v2076 = vadd.f32 0.0, %v2075
    %2077 = vmatmul.f32.gmra.mxu0 %v1941
    %v2078 = vpop.f32.mrf.mxu0
    %v2079 = vadd.f32 0.0, %v2078
    %2080 = vmatmul.f32.gmra.mxu0 %v1942
    %v2081 = vpop.f32.mrf.mxu0
    %v2082 = vadd.f32 0.0, %v2081
    %2083 = vmatmul.f32.gmra.mxu0 %v1943
    %v2084 = vpop.f32.mrf.mxu0
    %v2085 = vadd.f32 0.0, %v2084
    %2086 = vmatmul.f32.gmra.mxu0 %v1944
    %v2087 = vpop.f32.mrf.mxu0
    %v2088 = vadd.f32 0.0, %v2087
    %2089 = vmatmul.f32.gmra.mxu0 %v1945
    %v2090 = vpop.f32.mrf.mxu0
    %v2091 = vadd.f32 0.0, %v2090
    %2092 = vmatmul.f32.gmra.mxu0 %v1946
    %v2093 = vpop.f32.mrf.mxu0
    %v2094 = vadd.f32 0.0, %v2093
    %2095 = vmatmul.f32.gmra.mxu0 %v1947
    %v2096 = vpop.f32.mrf.mxu0
    %v2097 = vadd.f32 0.0, %v2096
    %2098 = vmatmul.f32.gmra.mxu0 %v1948
    %v2099 = vpop.f32.mrf.mxu0
    %v2100 = vadd.f32 0.0, %v2099
    %2101 = vmatmul.f32.gmra.mxu0 %v1949
    %v2102 = vpop.f32.mrf.mxu0
    %v2103 = vadd.f32 0.0, %v2102
    %2104 = vmatmul.f32.gmra.mxu0 %v1950
    %v2105 = vpop.f32.mrf.mxu0
    %v2106 = vadd.f32 0.0, %v2105
    %2107 = vmatmul.f32.gmra.mxu0 %v1951
    %v2108 = vpop.f32.mrf.mxu0
    %v2109 = vadd.f32 0.0, %v2108
    %2110 = vmatmul.f32.gmra.mxu0 %v1952
    %v2111 = vpop.f32.mrf.mxu0
    %v2112 = vadd.f32 0.0, %v2111
    %2113 = vmatmul.f32.gmra.mxu0 %v1953
    %v2114 = vpop.f32.mrf.mxu0
    %v2115 = vadd.f32 0.0, %v2114
    %2116 = vmatmul.f32.gmra.mxu0 %v1954
    %v2117 = vpop.f32.mrf.mxu0
    %v2118 = vadd.f32 0.0, %v2117
    %2119 = vmatmul.f32.gmra.mxu0 %v1955
    %v2120 = vpop.f32.mrf.mxu0
    %v2121 = vadd.f32 0.0, %v2120
    %2122 = vmatmul.f32.gmra.mxu0 %v1956
    %v2123 = vpop.f32.mrf.mxu0
    %v2124 = vadd.f32 0.0, %v2123
    %2125 = vmatmul.f32.gmra.mxu0 %v1957
    %v2126 = vpop.f32.mrf.mxu0
    %v2127 = vadd.f32 0.0, %v2126
    %2128 = vmatmul.f32.gmra.mxu0 %v1958
    %v2129 = vpop.f32.mrf.mxu0
    %v2130 = vadd.f32 0.0, %v2129
    %2131 = vmatmul.f32.gmra.mxu0 %v1959
    %v2132 = vpop.f32.mrf.mxu0
    %v2133 = vadd.f32 0.0, %v2132
    %2134 = vmatmul.f32.gmra.mxu0 %v1960
    %v2135 = vpop.f32.mrf.mxu0
    %v2136 = vadd.f32 0.0, %v2135
    %2137 = vmatmul.f32.gmra.mxu0 %v1961
    %v2138 = vpop.f32.mrf.mxu0
    %v2139 = vadd.f32 0.0, %v2138
    %2140 = vmatmul.f32.gmra.mxu0 %v1962
    %v2141 = vpop.f32.mrf.mxu0
    %v2142 = vadd.f32 0.0, %v2141
    %2143 = vmatmul.f32.gmra.mxu0 %v1963
    %v2144 = vpop.f32.mrf.mxu0
    %v2145 = vadd.f32 0.0, %v2144
    %2146 = vmatmul.f32.gmra.mxu0 %v1964
    %v2147 = vpop.f32.mrf.mxu0
    %v2148 = vadd.f32 0.0, %v2147
    %2149 = vmatmul.f32.gmra.mxu0 %v1965
    %v2150 = vpop.f32.mrf.mxu0
    %v2151 = vadd.f32 0.0, %v2150
    %2152 = vmatmul.f32.gmra.mxu0 %v1966
    %v2153 = vpop.f32.mrf.mxu0
    %v2154 = vadd.f32 0.0, %v2153
    %2155 = vmatmul.f32.gmra.mxu0 %v1967
    %v2156 = vpop.f32.mrf.mxu0
    %v2157 = vadd.f32 0.0, %v2156
    %2158 = vmatmul.f32.gmra.mxu0 %v1968
    %v2159 = vpop.f32.mrf.mxu0
    %v2160 = vadd.f32 0.0, %v2159
    %2161 = vmatmul.f32.gmra.mxu0 %v1969
    %v2162 = vpop.f32.mrf.mxu0
    %v2163 = vadd.f32 0.0, %v2162
    %2164 = vmatmul.f32.gmra.mxu0 %v1970
    %v2165 = vpop.f32.mrf.mxu0
    %v2166 = vadd.f32 0.0, %v2165
    %2167 = vmatmul.f32.gmra.mxu0 %v1971
    %v2168 = vpop.f32.mrf.mxu0
    %v2169 = vadd.f32 0.0, %v2168
    %2170 = vmatmul.f32.gmra.mxu0 %v1972
    %v2171 = vpop.f32.mrf.mxu0
    %v2172 = vadd.f32 0.0, %v2171
    %2173 = vmatmul.f32.gmra.mxu0 %v1973
    %v2174 = vpop.f32.mrf.mxu0
    %v2175 = vadd.f32 0.0, %v2174
    %2176 = vmatmul.f32.gmra.mxu0 %v1974
    %v2177 = vpop.f32.mrf.mxu0
    %v2178 = vadd.f32 0.0, %v2177
    %2179 = vmatmul.f32.gmra.mxu0 %v1975
    %v2180 = vpop.f32.mrf.mxu0
    %v2181 = vadd.f32 0.0, %v2180
    %2182 = vmatmul.f32.gmra.mxu0 %v1976
    %v2183 = vpop.f32.mrf.mxu0
    %v2184 = vadd.f32 0.0, %v2183
    %2185 = vmatmul.f32.gmra.mxu0 %v1977
    %v2186 = vpop.f32.mrf.mxu0
    %v2187 = vadd.f32 0.0, %v2186
    %2188 = vmatmul.f32.gmra.mxu0 %v1978
    %v2189 = vpop.f32.mrf.mxu0
    %v2190 = vadd.f32 0.0, %v2189
    %2191 = vmatmul.f32.gmra.mxu0 %v1979
    %v2192 = vpop.f32.mrf.mxu0
    %v2193 = vadd.f32 0.0, %v2192
    %2194 = vmatmul.f32.gmra.mxu0 %v1980
    %v2195 = vpop.f32.mrf.mxu0
    %v2196 = vadd.f32 0.0, %v2195
    %2197 = vmatmul.f32.gmra.mxu0 %v1981
    %v2198 = vpop.f32.mrf.mxu0
    %v2199 = vadd.f32 0.0, %v2198
    %2200 = vmatmul.f32.gmra.mxu0 %v1982
    %v2201 = vpop.f32.mrf.mxu0
    %v2202 = vadd.f32 0.0, %v2201
    %2203 = vmatmul.f32.gmra.mxu0 %v1983
    %v2204 = vpop.f32.mrf.mxu0
    %v2205 = vadd.f32 0.0, %v2204
    %2206 = vmatmul.f32.gmra.mxu0 %v1984
    %v2207 = vpop.f32.mrf.mxu0
    %v2208 = vadd.f32 0.0, %v2207
    %2209 = vdwg.mxu0
    %v2210 = vadd.f32 %v1857, %v2019
    %v2211 = vadd.f32 %v1858, %v2022
    %v2212 = vadd.f32 %v1859, %v2025
    %v2213 = vadd.f32 %v1860, %v2028
    %v2214 = vadd.f32 %v1861, %v2031
    %v2215 = vadd.f32 %v1862, %v2034
    %v2216 = vadd.f32 %v1863, %v2037
    %v2217 = vadd.f32 %v1864, %v2040
    %v2218 = vadd.f32 %v1865, %v2043
    %v2219 = vadd.f32 %v1866, %v2046
    %v2220 = vadd.f32 %v1867, %v2049
    %v2221 = vadd.f32 %v1868, %v2052
    %v2222 = vadd.f32 %v1869, %v2055
    %v2223 = vadd.f32 %v1870, %v2058
    %v2224 = vadd.f32 %v1871, %v2061
    %v2225 = vadd.f32 %v1872, %v2064
    %v2226 = vadd.f32 %v1873, %v2067
    %v2227 = vadd.f32 %v1874, %v2070
    %v2228 = vadd.f32 %v1875, %v2073
    %v2229 = vadd.f32 %v1876, %v2076
    %v2230 = vadd.f32 %v1877, %v2079
    %v2231 = vadd.f32 %v1878, %v2082
    %v2232 = vadd.f32 %v1879, %v2085
    %v2233 = vadd.f32 %v1880, %v2088
    %v2234 = vadd.f32 %v1881, %v2091
    %v2235 = vadd.f32 %v1882, %v2094
    %v2236 = vadd.f32 %v1883, %v2097
    %v2237 = vadd.f32 %v1884, %v2100
    %v2238 = vadd.f32 %v1885, %v2103
    %v2239 = vadd.f32 %v1886, %v2106
    %v2240 = vadd.f32 %v1887, %v2109
    %v2241 = vadd.f32 %v1888, %v2112
    %v2242 = vadd.f32 %v1889, %v2115
    %v2243 = vadd.f32 %v1890, %v2118
    %v2244 = vadd.f32 %v1891, %v2121
    %v2245 = vadd.f32 %v1892, %v2124
    %v2246 = vadd.f32 %v1893, %v2127
    %v2247 = vadd.f32 %v1894, %v2130
    %v2248 = vadd.f32 %v1895, %v2133
    %v2249 = vadd.f32 %v1896, %v2136
    %v2250 = vadd.f32 %v1897, %v2139
    %v2251 = vadd.f32 %v1898, %v2142
    %v2252 = vadd.f32 %v1899, %v2145
    %v2253 = vadd.f32 %v1900, %v2148
    %v2254 = vadd.f32 %v1901, %v2151
    %v2255 = vadd.f32 %v1902, %v2154
    %v2256 = vadd.f32 %v1903, %v2157
    %v2257 = vadd.f32 %v1904, %v2160
    %v2258 = vadd.f32 %v1905, %v2163
    %v2259 = vadd.f32 %v1906, %v2166
    %v2260 = vadd.f32 %v1907, %v2169
    %v2261 = vadd.f32 %v1908, %v2172
    %v2262 = vadd.f32 %v1909, %v2175
    %v2263 = vadd.f32 %v1910, %v2178
    %v2264 = vadd.f32 %v1911, %v2181
    %v2265 = vadd.f32 %v1912, %v2184
    %v2266 = vadd.f32 %v1913, %v2187
    %v2267 = vadd.f32 %v1914, %v2190
    %v2268 = vadd.f32 %v1915, %v2193
    %v2269 = vadd.f32 %v1916, %v2196
    %v2270 = vadd.f32 %v1917, %v2199
    %v2271 = vadd.f32 %v1918, %v2202
    %v2272 = vadd.f32 %v1919, %v2205
    %v2273 = vadd.f32 %v1920, %v2208
    %s2274 = scalar_lea.vmem [#allocation2], 64
    %v2275 = vld [vmem:[%s2274 + $0x7] sm:$0xff]
    %v2276 = vld [vmem:[%s2274 + $0xf] sm:$0xff]
    %v2277 = vld [vmem:[%s2274 + $0x27] sm:$0xff]
    %v2278 = vld [vmem:[%s2274 + $0x2f] sm:$0xff]
    %v2279 = vld [vmem:[%s2274 + $0x47] sm:$0xff]
    %v2280 = vld [vmem:[%s2274 + $0x4f] sm:$0xff]
    %v2281 = vld [vmem:[%s2274 + $0x67] sm:$0xff]
    %v2282 = vld [vmem:[%s2274 + $0x6f] sm:$0xff]
    %v2283 = vld [vmem:[%s2274 + $0x87] sm:$0xff]
    %v2284 = vld [vmem:[%s2274 + $0x8f] sm:$0xff]
    %v2285 = vld [vmem:[%s2274 + $0xa7] sm:$0xff]
    %v2286 = vld [vmem:[%s2274 + $0xaf] sm:$0xff]
    %v2287 = vld [vmem:[%s2274 + $0xc7] sm:$0xff]
    %v2288 = vld [vmem:[%s2274 + $0xcf] sm:$0xff]
    %v2289 = vld [vmem:[%s2274 + $0xe7] sm:$0xff]
    %v2290 = vld [vmem:[%s2274 + $0xef] sm:$0xff]
    %v2291 = vld [vmem:[%s2274 + $0x107] sm:$0xff]
    %v2292 = vld [vmem:[%s2274 + $0x10f] sm:$0xff]
    %v2293 = vld [vmem:[%s2274 + $0x127] sm:$0xff]
    %v2294 = vld [vmem:[%s2274 + $0x12f] sm:$0xff]
    %v2295 = vld [vmem:[%s2274 + $0x147] sm:$0xff]
    %v2296 = vld [vmem:[%s2274 + $0x14f] sm:$0xff]
    %v2297 = vld [vmem:[%s2274 + $0x167] sm:$0xff]
    %v2298 = vld [vmem:[%s2274 + $0x16f] sm:$0xff]
    %v2299 = vld [vmem:[%s2274 + $0x187] sm:$0xff]
    %v2300 = vld [vmem:[%s2274 + $0x18f] sm:$0xff]
    %v2301 = vld [vmem:[%s2274 + $0x1a7] sm:$0xff]
    %v2302 = vld [vmem:[%s2274 + $0x1af] sm:$0xff]
    %v2303 = vld [vmem:[%s2274 + $0x1c7] sm:$0xff]
    %v2304 = vld [vmem:[%s2274 + $0x1cf] sm:$0xff]
    %v2305 = vld [vmem:[%s2274 + $0x1e7] sm:$0xff]
    %v2306 = vld [vmem:[%s2274 + $0x1ef] sm:$0xff]
    %v2307 = vld [vmem:[%s2274 + $0x247] sm:$0xff]
    %v2308 = vld [vmem:[%s2274 + $0x24f] sm:$0xff]
    %v2309 = vld [vmem:[%s2274 + $0x267] sm:$0xff]
    %v2310 = vld [vmem:[%s2274 + $0x26f] sm:$0xff]
    %v2311 = vld [vmem:[%s2274 + $0x287] sm:$0xff]
    %v2312 = vld [vmem:[%s2274 + $0x28f] sm:$0xff]
    %v2313 = vld [vmem:[%s2274 + $0x2a7] sm:$0xff]
    %v2314 = vld [vmem:[%s2274 + $0x2af] sm:$0xff]
    %v2315 = vld [vmem:[%s2274 + $0x2c7] sm:$0xff]
    %v2316 = vld [vmem:[%s2274 + $0x2cf] sm:$0xff]
    %v2317 = vld [vmem:[%s2274 + $0x2e7] sm:$0xff]
    %v2318 = vld [vmem:[%s2274 + $0x2ef] sm:$0xff]
    %v2319 = vld [vmem:[%s2274 + $0x307] sm:$0xff]
    %v2320 = vld [vmem:[%s2274 + $0x30f] sm:$0xff]
    %v2321 = vld [vmem:[%s2274 + $0x327] sm:$0xff]
    %v2322 = vld [vmem:[%s2274 + $0x32f] sm:$0xff]
    %v2323 = vld [vmem:[%s2274 + $0x347] sm:$0xff]
    %v2324 = vld [vmem:[%s2274 + $0x34f] sm:$0xff]
    %v2325 = vld [vmem:[%s2274 + $0x367] sm:$0xff]
    %v2326 = vld [vmem:[%s2274 + $0x36f] sm:$0xff]
    %v2327 = vld [vmem:[%s2274 + $0x387] sm:$0xff]
    %v2328 = vld [vmem:[%s2274 + $0x38f] sm:$0xff]
    %v2329 = vld [vmem:[%s2274 + $0x3a7] sm:$0xff]
    %v2330 = vld [vmem:[%s2274 + $0x3af] sm:$0xff]
    %v2331 = vld [vmem:[%s2274 + $0x3c7] sm:$0xff]
    %v2332 = vld [vmem:[%s2274 + $0x3cf] sm:$0xff]
    %v2333 = vld [vmem:[%s2274 + $0x3e7] sm:$0xff]
    %v2334 = vld [vmem:[%s2274 + $0x3ef] sm:$0xff]
    %v2335 = vld [vmem:[%s2274 + $0x407] sm:$0xff]
    %v2336 = vld [vmem:[%s2274 + $0x40f] sm:$0xff]
    %v2337 = vld [vmem:[%s2274 + $0x427] sm:$0xff]
    %v2338 = vld [vmem:[%s2274 + $0x42f] sm:$0xff]
    %v2339 = vld [vmem:[#allocation6 + $0x300] sm:$0xff]
    %v2340 = vld [vmem:[#allocation6 + $0x308] sm:$0xff]
    %v2341 = vld [vmem:[#allocation6 + $0x310] sm:$0xff]
    %v2342 = vld [vmem:[#allocation6 + $0x318] sm:$0xff]
    %v2343 = vld [vmem:[#allocation6 + $0x320] sm:$0xff]
    %v2344 = vld [vmem:[#allocation6 + $0x328] sm:$0xff]
    %v2345 = vld [vmem:[#allocation6 + $0x330] sm:$0xff]
    %v2346 = vld [vmem:[#allocation6 + $0x338] sm:$0xff]
    %v2347 = vld [vmem:[#allocation6 + $0x340] sm:$0xff]
    %v2348 = vld [vmem:[#allocation6 + $0x348] sm:$0xff]
    %v2349 = vld [vmem:[#allocation6 + $0x350] sm:$0xff]
    %v2350 = vld [vmem:[#allocation6 + $0x358] sm:$0xff]
    %v2351 = vld [vmem:[#allocation6 + $0x360] sm:$0xff]
    %v2352 = vld [vmem:[#allocation6 + $0x368] sm:$0xff]
    %v2353 = vld [vmem:[#allocation6 + $0x370] sm:$0xff]
    %v2354 = vld [vmem:[#allocation6 + $0x378] sm:$0xff]
    %2355 = vmatpush.msra.mxu0 %v2354
    %2356 = vmatpush.msra.mxu0 %v2353
    %2357 = vmatpush.msra.mxu0 %v2352
    %2358 = vmatpush.msra.mxu0 %v2351
    %2359 = vmatpush.msra.mxu0 %v2350
    %2360 = vmatpush.msra.mxu0 %v2349
    %2361 = vmatpush.msra.mxu0 %v2348
    %2362 = vmatpush.msra.mxu0 %v2347
    %2363 = vmatpush.msra.mxu0 %v2346
    %2364 = vmatpush.msra.mxu0 %v2345
    %2365 = vmatpush.msra.mxu0 %v2344
    %2366 = vmatpush.msra.mxu0 %v2343
    %2367 = vmatpush.msra.mxu0 %v2342
    %2368 = vmatpush.msra.mxu0 %v2341
    %2369 = vmatpush.msra.mxu0 %v2340
    %2370 = vmatpush.msra.mxu0 %v2339
    %2371 = vmatmul.f32.gmra.mxu0 %v2275
    %v2372 = vpop.f32.mrf.mxu0
    %v2373 = vadd.f32 0.0, %v2372
    %2374 = vmatmul.f32.gmra.mxu0 %v2276
    %v2375 = vpop.f32.mrf.mxu0
    %v2376 = vadd.f32 0.0, %v2375
    %2377 = vmatmul.f32.gmra.mxu0 %v2277
    %v2378 = vpop.f32.mrf.mxu0
    %v2379 = vadd.f32 0.0, %v2378
    %2380 = vmatmul.f32.gmra.mxu0 %v2278
    %v2381 = vpop.f32.mrf.mxu0
    %v2382 = vadd.f32 0.0, %v2381
    %2383 = vmatmul.f32.gmra.mxu0 %v2279
    %v2384 = vpop.f32.mrf.mxu0
    %v2385 = vadd.f32 0.0, %v2384
    %2386 = vmatmul.f32.gmra.mxu0 %v2280
    %v2387 = vpop.f32.mrf.mxu0
    %v2388 = vadd.f32 0.0, %v2387
    %2389 = vmatmul.f32.gmra.mxu0 %v2281
    %v2390 = vpop.f32.mrf.mxu0
    %v2391 = vadd.f32 0.0, %v2390
    %2392 = vmatmul.f32.gmra.mxu0 %v2282
    %v2393 = vpop.f32.mrf.mxu0
    %v2394 = vadd.f32 0.0, %v2393
    %2395 = vmatmul.f32.gmra.mxu0 %v2283
    %v2396 = vpop.f32.mrf.mxu0
    %v2397 = vadd.f32 0.0, %v2396
    %2398 = vmatmul.f32.gmra.mxu0 %v2284
    %v2399 = vpop.f32.mrf.mxu0
    %v2400 = vadd.f32 0.0, %v2399
    %2401 = vmatmul.f32.gmra.mxu0 %v2285
    %v2402 = vpop.f32.mrf.mxu0
    %v2403 = vadd.f32 0.0, %v2402
    %2404 = vmatmul.f32.gmra.mxu0 %v2286
    %v2405 = vpop.f32.mrf.mxu0
    %v2406 = vadd.f32 0.0, %v2405
    %2407 = vmatmul.f32.gmra.mxu0 %v2287
    %v2408 = vpop.f32.mrf.mxu0
    %v2409 = vadd.f32 0.0, %v2408
    %2410 = vmatmul.f32.gmra.mxu0 %v2288
    %v2411 = vpop.f32.mrf.mxu0
    %v2412 = vadd.f32 0.0, %v2411
    %2413 = vmatmul.f32.gmra.mxu0 %v2289
    %v2414 = vpop.f32.mrf.mxu0
    %v2415 = vadd.f32 0.0, %v2414
    %2416 = vmatmul.f32.gmra.mxu0 %v2290
    %v2417 = vpop.f32.mrf.mxu0
    %v2418 = vadd.f32 0.0, %v2417
    %2419 = vmatmul.f32.gmra.mxu0 %v2291
    %v2420 = vpop.f32.mrf.mxu0
    %v2421 = vadd.f32 0.0, %v2420
    %2422 = vmatmul.f32.gmra.mxu0 %v2292
    %v2423 = vpop.f32.mrf.mxu0
    %v2424 = vadd.f32 0.0, %v2423
    %2425 = vmatmul.f32.gmra.mxu0 %v2293
    %v2426 = vpop.f32.mrf.mxu0
    %v2427 = vadd.f32 0.0, %v2426
    %2428 = vmatmul.f32.gmra.mxu0 %v2294
    %v2429 = vpop.f32.mrf.mxu0
    %v2430 = vadd.f32 0.0, %v2429
    %2431 = vmatmul.f32.gmra.mxu0 %v2295
    %v2432 = vpop.f32.mrf.mxu0
    %v2433 = vadd.f32 0.0, %v2432
    %2434 = vmatmul.f32.gmra.mxu0 %v2296
    %v2435 = vpop.f32.mrf.mxu0
    %v2436 = vadd.f32 0.0, %v2435
    %2437 = vmatmul.f32.gmra.mxu0 %v2297
    %v2438 = vpop.f32.mrf.mxu0
    %v2439 = vadd.f32 0.0, %v2438
    %2440 = vmatmul.f32.gmra.mxu0 %v2298
    %v2441 = vpop.f32.mrf.mxu0
    %v2442 = vadd.f32 0.0, %v2441
    %2443 = vmatmul.f32.gmra.mxu0 %v2299
    %v2444 = vpop.f32.mrf.mxu0
    %v2445 = vadd.f32 0.0, %v2444
    %2446 = vmatmul.f32.gmra.mxu0 %v2300
    %v2447 = vpop.f32.mrf.mxu0
    %v2448 = vadd.f32 0.0, %v2447
    %2449 = vmatmul.f32.gmra.mxu0 %v2301
    %v2450 = vpop.f32.mrf.mxu0
    %v2451 = vadd.f32 0.0, %v2450
    %2452 = vmatmul.f32.gmra.mxu0 %v2302
    %v2453 = vpop.f32.mrf.mxu0
    %v2454 = vadd.f32 0.0, %v2453
    %2455 = vmatmul.f32.gmra.mxu0 %v2303
    %v2456 = vpop.f32.mrf.mxu0
    %v2457 = vadd.f32 0.0, %v2456
    %2458 = vmatmul.f32.gmra.mxu0 %v2304
    %v2459 = vpop.f32.mrf.mxu0
    %v2460 = vadd.f32 0.0, %v2459
    %2461 = vmatmul.f32.gmra.mxu0 %v2305
    %v2462 = vpop.f32.mrf.mxu0
    %v2463 = vadd.f32 0.0, %v2462
    %2464 = vmatmul.f32.gmra.mxu0 %v2306
    %v2465 = vpop.f32.mrf.mxu0
    %v2466 = vadd.f32 0.0, %v2465
    %2467 = vmatmul.f32.gmra.mxu0 %v2307
    %v2468 = vpop.f32.mrf.mxu0
    %v2469 = vadd.f32 0.0, %v2468
    %2470 = vmatmul.f32.gmra.mxu0 %v2308
    %v2471 = vpop.f32.mrf.mxu0
    %v2472 = vadd.f32 0.0, %v2471
    %2473 = vmatmul.f32.gmra.mxu0 %v2309
    %v2474 = vpop.f32.mrf.mxu0
    %v2475 = vadd.f32 0.0, %v2474
    %2476 = vmatmul.f32.gmra.mxu0 %v2310
    %v2477 = vpop.f32.mrf.mxu0
    %v2478 = vadd.f32 0.0, %v2477
    %2479 = vmatmul.f32.gmra.mxu0 %v2311
    %v2480 = vpop.f32.mrf.mxu0
    %v2481 = vadd.f32 0.0, %v2480
    %2482 = vmatmul.f32.gmra.mxu0 %v2312
    %v2483 = vpop.f32.mrf.mxu0
    %v2484 = vadd.f32 0.0, %v2483
    %2485 = vmatmul.f32.gmra.mxu0 %v2313
    %v2486 = vpop.f32.mrf.mxu0
    %v2487 = vadd.f32 0.0, %v2486
    %2488 = vmatmul.f32.gmra.mxu0 %v2314
    %v2489 = vpop.f32.mrf.mxu0
    %v2490 = vadd.f32 0.0, %v2489
    %2491 = vmatmul.f32.gmra.mxu0 %v2315
    %v2492 = vpop.f32.mrf.mxu0
    %v2493 = vadd.f32 0.0, %v2492
    %2494 = vmatmul.f32.gmra.mxu0 %v2316
    %v2495 = vpop.f32.mrf.mxu0
    %v2496 = vadd.f32 0.0, %v2495
    %2497 = vmatmul.f32.gmra.mxu0 %v2317
    %v2498 = vpop.f32.mrf.mxu0
    %v2499 = vadd.f32 0.0, %v2498
    %2500 = vmatmul.f32.gmra.mxu0 %v2318
    %v2501 = vpop.f32.mrf.mxu0
    %v2502 = vadd.f32 0.0, %v2501
    %2503 = vmatmul.f32.gmra.mxu0 %v2319
    %v2504 = vpop.f32.mrf.mxu0
    %v2505 = vadd.f32 0.0, %v2504
    %2506 = vmatmul.f32.gmra.mxu0 %v2320
    %v2507 = vpop.f32.mrf.mxu0
    %v2508 = vadd.f32 0.0, %v2507
    %2509 = vmatmul.f32.gmra.mxu0 %v2321
    %v2510 = vpop.f32.mrf.mxu0
    %v2511 = vadd.f32 0.0, %v2510
    %2512 = vmatmul.f32.gmra.mxu0 %v2322
    %v2513 = vpop.f32.mrf.mxu0
    %v2514 = vadd.f32 0.0, %v2513
    %2515 = vmatmul.f32.gmra.mxu0 %v2323
    %v2516 = vpop.f32.mrf.mxu0
    %v2517 = vadd.f32 0.0, %v2516
    %2518 = vmatmul.f32.gmra.mxu0 %v2324
    %v2519 = vpop.f32.mrf.mxu0
    %v2520 = vadd.f32 0.0, %v2519
    %2521 = vmatmul.f32.gmra.mxu0 %v2325
    %v2522 = vpop.f32.mrf.mxu0
    %v2523 = vadd.f32 0.0, %v2522
    %2524 = vmatmul.f32.gmra.mxu0 %v2326
    %v2525 = vpop.f32.mrf.mxu0
    %v2526 = vadd.f32 0.0, %v2525
    %2527 = vmatmul.f32.gmra.mxu0 %v2327
    %v2528 = vpop.f32.mrf.mxu0
    %v2529 = vadd.f32 0.0, %v2528
    %2530 = vmatmul.f32.gmra.mxu0 %v2328
    %v2531 = vpop.f32.mrf.mxu0
    %v2532 = vadd.f32 0.0, %v2531
    %2533 = vmatmul.f32.gmra.mxu0 %v2329
    %v2534 = vpop.f32.mrf.mxu0
    %v2535 = vadd.f32 0.0, %v2534
    %2536 = vmatmul.f32.gmra.mxu0 %v2330
    %v2537 = vpop.f32.mrf.mxu0
    %v2538 = vadd.f32 0.0, %v2537
    %2539 = vmatmul.f32.gmra.mxu0 %v2331
    %v2540 = vpop.f32.mrf.mxu0
    %v2541 = vadd.f32 0.0, %v2540
    %2542 = vmatmul.f32.gmra.mxu0 %v2332
    %v2543 = vpop.f32.mrf.mxu0
    %v2544 = vadd.f32 0.0, %v2543
    %2545 = vmatmul.f32.gmra.mxu0 %v2333
    %v2546 = vpop.f32.mrf.mxu0
    %v2547 = vadd.f32 0.0, %v2546
    %2548 = vmatmul.f32.gmra.mxu0 %v2334
    %v2549 = vpop.f32.mrf.mxu0
    %v2550 = vadd.f32 0.0, %v2549
    %2551 = vmatmul.f32.gmra.mxu0 %v2335
    %v2552 = vpop.f32.mrf.mxu0
    %v2553 = vadd.f32 0.0, %v2552
    %2554 = vmatmul.f32.gmra.mxu0 %v2336
    %v2555 = vpop.f32.mrf.mxu0
    %v2556 = vadd.f32 0.0, %v2555
    %2557 = vmatmul.f32.gmra.mxu0 %v2337
    %v2558 = vpop.f32.mrf.mxu0
    %v2559 = vadd.f32 0.0, %v2558
    %2560 = vmatmul.f32.gmra.mxu0 %v2338
    %v2561 = vpop.f32.mrf.mxu0
    %v2562 = vadd.f32 0.0, %v2561
    %2563 = vdwg.mxu0
    %v2564 = vadd.f32 %v2210, %v2373
    %v2565 = vadd.f32 %v2211, %v2376
    %v2566 = vadd.f32 %v2212, %v2379
    %v2567 = vadd.f32 %v2213, %v2382
    %v2568 = vadd.f32 %v2214, %v2385
    %v2569 = vadd.f32 %v2215, %v2388
    %v2570 = vadd.f32 %v2216, %v2391
    %v2571 = vadd.f32 %v2217, %v2394
    %v2572 = vadd.f32 %v2218, %v2397
    %v2573 = vadd.f32 %v2219, %v2400
    %v2574 = vadd.f32 %v2220, %v2403
    %v2575 = vadd.f32 %v2221, %v2406
    %v2576 = vadd.f32 %v2222, %v2409
    %v2577 = vadd.f32 %v2223, %v2412
    %v2578 = vadd.f32 %v2224, %v2415
    %v2579 = vadd.f32 %v2225, %v2418
    %v2580 = vadd.f32 %v2226, %v2421
    %v2581 = vadd.f32 %v2227, %v2424
    %v2582 = vadd.f32 %v2228, %v2427
    %v2583 = vadd.f32 %v2229, %v2430
    %v2584 = vadd.f32 %v2230, %v2433
    %v2585 = vadd.f32 %v2231, %v2436
    %v2586 = vadd.f32 %v2232, %v2439
    %v2587 = vadd.f32 %v2233, %v2442
    %v2588 = vadd.f32 %v2234, %v2445
    %v2589 = vadd.f32 %v2235, %v2448
    %v2590 = vadd.f32 %v2236, %v2451
    %v2591 = vadd.f32 %v2237, %v2454
    %v2592 = vadd.f32 %v2238, %v2457
    %v2593 = vadd.f32 %v2239, %v2460
    %v2594 = vadd.f32 %v2240, %v2463
    %v2595 = vadd.f32 %v2241, %v2466
    %v2596 = vadd.f32 %v2242, %v2469
    %v2597 = vadd.f32 %v2243, %v2472
    %v2598 = vadd.f32 %v2244, %v2475
    %v2599 = vadd.f32 %v2245, %v2478
    %v2600 = vadd.f32 %v2246, %v2481
    %v2601 = vadd.f32 %v2247, %v2484
    %v2602 = vadd.f32 %v2248, %v2487
    %v2603 = vadd.f32 %v2249, %v2490
    %v2604 = vadd.f32 %v2250, %v2493
    %v2605 = vadd.f32 %v2251, %v2496
    %v2606 = vadd.f32 %v2252, %v2499
    %v2607 = vadd.f32 %v2253, %v2502
    %v2608 = vadd.f32 %v2254, %v2505
    %v2609 = vadd.f32 %v2255, %v2508
    %v2610 = vadd.f32 %v2256, %v2511
    %v2611 = vadd.f32 %v2257, %v2514
    %v2612 = vadd.f32 %v2258, %v2517
    %v2613 = vadd.f32 %v2259, %v2520
    %v2614 = vadd.f32 %v2260, %v2523
    %v2615 = vadd.f32 %v2261, %v2526
    %v2616 = vadd.f32 %v2262, %v2529
    %v2617 = vadd.f32 %v2263, %v2532
    %v2618 = vadd.f32 %v2264, %v2535
    %v2619 = vadd.f32 %v2265, %v2538
    %v2620 = vadd.f32 %v2266, %v2541
    %v2621 = vadd.f32 %v2267, %v2544
    %v2622 = vadd.f32 %v2268, %v2547
    %v2623 = vadd.f32 %v2269, %v2550
    %v2624 = vadd.f32 %v2270, %v2553
    %v2625 = vadd.f32 %v2271, %v2556
    %v2626 = vadd.f32 %v2272, %v2559
    %v2627 = vadd.f32 %v2273, %v2562
    %v2628 = vld [vmem:[%s2274 + $0x8] sm:$0xff]
    %v2629 = vld [vmem:[%s2274 + $0x10] sm:$0xff]
    %v2630 = vld [vmem:[%s2274 + $0x28] sm:$0xff]
    %v2631 = vld [vmem:[%s2274 + $0x30] sm:$0xff]
    %v2632 = vld [vmem:[%s2274 + $0x48] sm:$0xff]
    %v2633 = vld [vmem:[%s2274 + $0x50] sm:$0xff]
    %v2634 = vld [vmem:[%s2274 + $0x68] sm:$0xff]
    %v2635 = vld [vmem:[%s2274 + $0x70] sm:$0xff]
    %v2636 = vld [vmem:[%s2274 + $0x88] sm:$0xff]
    %v2637 = vld [vmem:[%s2274 + $0x90] sm:$0xff]
    %v2638 = vld [vmem:[%s2274 + $0xa8] sm:$0xff]
    %v2639 = vld [vmem:[%s2274 + $0xb0] sm:$0xff]
    %v2640 = vld [vmem:[%s2274 + $0xc8] sm:$0xff]
    %v2641 = vld [vmem:[%s2274 + $0xd0] sm:$0xff]
    %v2642 = vld [vmem:[%s2274 + $0xe8] sm:$0xff]
    %v2643 = vld [vmem:[%s2274 + $0xf0] sm:$0xff]
    %v2644 = vld [vmem:[%s2274 + $0x108] sm:$0xff]
    %v2645 = vld [vmem:[%s2274 + $0x110] sm:$0xff]
    %v2646 = vld [vmem:[%s2274 + $0x128] sm:$0xff]
    %v2647 = vld [vmem:[%s2274 + $0x130] sm:$0xff]
    %v2648 = vld [vmem:[%s2274 + $0x148] sm:$0xff]
    %v2649 = vld [vmem:[%s2274 + $0x150] sm:$0xff]
    %v2650 = vld [vmem:[%s2274 + $0x168] sm:$0xff]
    %v2651 = vld [vmem:[%s2274 + $0x170] sm:$0xff]
    %v2652 = vld [vmem:[%s2274 + $0x188] sm:$0xff]
    %v2653 = vld [vmem:[%s2274 + $0x190] sm:$0xff]
    %v2654 = vld [vmem:[%s2274 + $0x1a8] sm:$0xff]
    %v2655 = vld [vmem:[%s2274 + $0x1b0] sm:$0xff]
    %v2656 = vld [vmem:[%s2274 + $0x1c8] sm:$0xff]
    %v2657 = vld [vmem:[%s2274 + $0x1d0] sm:$0xff]
    %v2658 = vld [vmem:[%s2274 + $0x1e8] sm:$0xff]
    %v2659 = vld [vmem:[%s2274 + $0x1f0] sm:$0xff]
    %v2660 = vld [vmem:[%s2274 + $0x248] sm:$0xff]
    %v2661 = vld [vmem:[%s2274 + $0x250] sm:$0xff]
    %v2662 = vld [vmem:[%s2274 + $0x268] sm:$0xff]
    %v2663 = vld [vmem:[%s2274 + $0x270] sm:$0xff]
    %v2664 = vld [vmem:[%s2274 + $0x288] sm:$0xff]
    %v2665 = vld [vmem:[%s2274 + $0x290] sm:$0xff]
    %v2666 = vld [vmem:[%s2274 + $0x2a8] sm:$0xff]
    %v2667 = vld [vmem:[%s2274 + $0x2b0] sm:$0xff]
    %v2668 = vld [vmem:[%s2274 + $0x2c8] sm:$0xff]
    %v2669 = vld [vmem:[%s2274 + $0x2d0] sm:$0xff]
    %v2670 = vld [vmem:[%s2274 + $0x2e8] sm:$0xff]
    %v2671 = vld [vmem:[%s2274 + $0x2f0] sm:$0xff]
    %v2672 = vld [vmem:[%s2274 + $0x308] sm:$0xff]
    %v2673 = vld [vmem:[%s2274 + $0x310] sm:$0xff]
    %v2674 = vld [vmem:[%s2274 + $0x328] sm:$0xff]
    %v2675 = vld [vmem:[%s2274 + $0x330] sm:$0xff]
    %v2676 = vld [vmem:[%s2274 + $0x348] sm:$0xff]
    %v2677 = vld [vmem:[%s2274 + $0x350] sm:$0xff]
    %v2678 = vld [vmem:[%s2274 + $0x368] sm:$0xff]
    %v2679 = vld [vmem:[%s2274 + $0x370] sm:$0xff]
    %v2680 = vld [vmem:[%s2274 + $0x388] sm:$0xff]
    %v2681 = vld [vmem:[%s2274 + $0x390] sm:$0xff]
    %v2682 = vld [vmem:[%s2274 + $0x3a8] sm:$0xff]
    %v2683 = vld [vmem:[%s2274 + $0x3b0] sm:$0xff]
    %v2684 = vld [vmem:[%s2274 + $0x3c8] sm:$0xff]
    %v2685 = vld [vmem:[%s2274 + $0x3d0] sm:$0xff]
    %v2686 = vld [vmem:[%s2274 + $0x3e8] sm:$0xff]
    %v2687 = vld [vmem:[%s2274 + $0x3f0] sm:$0xff]
    %v2688 = vld [vmem:[%s2274 + $0x408] sm:$0xff]
    %v2689 = vld [vmem:[%s2274 + $0x410] sm:$0xff]
    %v2690 = vld [vmem:[%s2274 + $0x428] sm:$0xff]
    %v2691 = vld [vmem:[%s2274 + $0x430] sm:$0xff]
    %v2692 = vld [vmem:[#allocation6 + $0x380] sm:$0xff]
    %v2693 = vld [vmem:[#allocation6 + $0x388] sm:$0xff]
    %v2694 = vld [vmem:[#allocation6 + $0x390] sm:$0xff]
    %v2695 = vld [vmem:[#allocation6 + $0x398] sm:$0xff]
    %v2696 = vld [vmem:[#allocation6 + $0x3a0] sm:$0xff]
    %v2697 = vld [vmem:[#allocation6 + $0x3a8] sm:$0xff]
    %v2698 = vld [vmem:[#allocation6 + $0x3b0] sm:$0xff]
    %v2699 = vld [vmem:[#allocation6 + $0x3b8] sm:$0xff]
    %v2700 = vld [vmem:[#allocation6 + $0x3c0] sm:$0xff]
    %v2701 = vld [vmem:[#allocation6 + $0x3c8] sm:$0xff]
    %v2702 = vld [vmem:[#allocation6 + $0x3d0] sm:$0xff]
    %v2703 = vld [vmem:[#allocation6 + $0x3d8] sm:$0xff]
    %v2704 = vld [vmem:[#allocation6 + $0x3e0] sm:$0xff]
    %v2705 = vld [vmem:[#allocation6 + $0x3e8] sm:$0xff]
    %v2706 = vld [vmem:[#allocation6 + $0x3f0] sm:$0xff]
    %v2707 = vld [vmem:[#allocation6 + $0x3f8] sm:$0xff]
    %2708 = vmatpush.msra.mxu0 %v2707
    %2709 = vmatpush.msra.mxu0 %v2706
    %2710 = vmatpush.msra.mxu0 %v2705
    %2711 = vmatpush.msra.mxu0 %v2704
    %2712 = vmatpush.msra.mxu0 %v2703
    %2713 = vmatpush.msra.mxu0 %v2702
    %2714 = vmatpush.msra.mxu0 %v2701
    %2715 = vmatpush.msra.mxu0 %v2700
    %2716 = vmatpush.msra.mxu0 %v2699
    %2717 = vmatpush.msra.mxu0 %v2698
    %2718 = vmatpush.msra.mxu0 %v2697
    %2719 = vmatpush.msra.mxu0 %v2696
    %2720 = vmatpush.msra.mxu0 %v2695
    %2721 = vmatpush.msra.mxu0 %v2694
    %2722 = vmatpush.msra.mxu0 %v2693
    %2723 = vmatpush.msra.mxu0 %v2692
    %2724 = vmatmul.f32.gmra.mxu0 %v2628
    %v2725 = vpop.f32.mrf.mxu0
    %v2726 = vadd.f32 0.0, %v2725
    %2727 = vmatmul.f32.gmra.mxu0 %v2629
    %v2728 = vpop.f32.mrf.mxu0
    %v2729 = vadd.f32 0.0, %v2728
    %2730 = vmatmul.f32.gmra.mxu0 %v2630
    %v2731 = vpop.f32.mrf.mxu0
    %v2732 = vadd.f32 0.0, %v2731
    %2733 = vmatmul.f32.gmra.mxu0 %v2631
    %v2734 = vpop.f32.mrf.mxu0
    %v2735 = vadd.f32 0.0, %v2734
    %2736 = vmatmul.f32.gmra.mxu0 %v2632
    %v2737 = vpop.f32.mrf.mxu0
    %v2738 = vadd.f32 0.0, %v2737
    %2739 = vmatmul.f32.gmra.mxu0 %v2633
    %v2740 = vpop.f32.mrf.mxu0
    %v2741 = vadd.f32 0.0, %v2740
    %2742 = vmatmul.f32.gmra.mxu0 %v2634
    %v2743 = vpop.f32.mrf.mxu0
    %v2744 = vadd.f32 0.0, %v2743
    %2745 = vmatmul.f32.gmra.mxu0 %v2635
    %v2746 = vpop.f32.mrf.mxu0
    %v2747 = vadd.f32 0.0, %v2746
    %2748 = vmatmul.f32.gmra.mxu0 %v2636
    %v2749 = vpop.f32.mrf.mxu0
    %v2750 = vadd.f32 0.0, %v2749
    %2751 = vmatmul.f32.gmra.mxu0 %v2637
    %v2752 = vpop.f32.mrf.mxu0
    %v2753 = vadd.f32 0.0, %v2752
    %2754 = vmatmul.f32.gmra.mxu0 %v2638
    %v2755 = vpop.f32.mrf.mxu0
    %v2756 = vadd.f32 0.0, %v2755
    %2757 = vmatmul.f32.gmra.mxu0 %v2639
    %v2758 = vpop.f32.mrf.mxu0
    %v2759 = vadd.f32 0.0, %v2758
    %2760 = vmatmul.f32.gmra.mxu0 %v2640
    %v2761 = vpop.f32.mrf.mxu0
    %v2762 = vadd.f32 0.0, %v2761
    %2763 = vmatmul.f32.gmra.mxu0 %v2641
    %v2764 = vpop.f32.mrf.mxu0
    %v2765 = vadd.f32 0.0, %v2764
    %2766 = vmatmul.f32.gmra.mxu0 %v2642
    %v2767 = vpop.f32.mrf.mxu0
    %v2768 = vadd.f32 0.0, %v2767
    %2769 = vmatmul.f32.gmra.mxu0 %v2643
    %v2770 = vpop.f32.mrf.mxu0
    %v2771 = vadd.f32 0.0, %v2770
    %2772 = vmatmul.f32.gmra.mxu0 %v2644
    %v2773 = vpop.f32.mrf.mxu0
    %v2774 = vadd.f32 0.0, %v2773
    %2775 = vmatmul.f32.gmra.mxu0 %v2645
    %v2776 = vpop.f32.mrf.mxu0
    %v2777 = vadd.f32 0.0, %v2776
    %2778 = vmatmul.f32.gmra.mxu0 %v2646
    %v2779 = vpop.f32.mrf.mxu0
    %v2780 = vadd.f32 0.0, %v2779
    %2781 = vmatmul.f32.gmra.mxu0 %v2647
    %v2782 = vpop.f32.mrf.mxu0
    %v2783 = vadd.f32 0.0, %v2782
    %2784 = vmatmul.f32.gmra.mxu0 %v2648
    %v2785 = vpop.f32.mrf.mxu0
    %v2786 = vadd.f32 0.0, %v2785
    %2787 = vmatmul.f32.gmra.mxu0 %v2649
    %v2788 = vpop.f32.mrf.mxu0
    %v2789 = vadd.f32 0.0, %v2788
    %2790 = vmatmul.f32.gmra.mxu0 %v2650
    %v2791 = vpop.f32.mrf.mxu0
    %v2792 = vadd.f32 0.0, %v2791
    %2793 = vmatmul.f32.gmra.mxu0 %v2651
    %v2794 = vpop.f32.mrf.mxu0
    %v2795 = vadd.f32 0.0, %v2794
    %2796 = vmatmul.f32.gmra.mxu0 %v2652
    %v2797 = vpop.f32.mrf.mxu0
    %v2798 = vadd.f32 0.0, %v2797
    %2799 = vmatmul.f32.gmra.mxu0 %v2653
    %v2800 = vpop.f32.mrf.mxu0
    %v2801 = vadd.f32 0.0, %v2800
    %2802 = vmatmul.f32.gmra.mxu0 %v2654
    %v2803 = vpop.f32.mrf.mxu0
    %v2804 = vadd.f32 0.0, %v2803
    %2805 = vmatmul.f32.gmra.mxu0 %v2655
    %v2806 = vpop.f32.mrf.mxu0
    %v2807 = vadd.f32 0.0, %v2806
    %2808 = vmatmul.f32.gmra.mxu0 %v2656
    %v2809 = vpop.f32.mrf.mxu0
    %v2810 = vadd.f32 0.0, %v2809
    %2811 = vmatmul.f32.gmra.mxu0 %v2657
    %v2812 = vpop.f32.mrf.mxu0
    %v2813 = vadd.f32 0.0, %v2812
    %2814 = vmatmul.f32.gmra.mxu0 %v2658
    %v2815 = vpop.f32.mrf.mxu0
    %v2816 = vadd.f32 0.0, %v2815
    %2817 = vmatmul.f32.gmra.mxu0 %v2659
    %v2818 = vpop.f32.mrf.mxu0
    %v2819 = vadd.f32 0.0, %v2818
    %2820 = vmatmul.f32.gmra.mxu0 %v2660
    %v2821 = vpop.f32.mrf.mxu0
    %v2822 = vadd.f32 0.0, %v2821
    %2823 = vmatmul.f32.gmra.mxu0 %v2661
    %v2824 = vpop.f32.mrf.mxu0
    %v2825 = vadd.f32 0.0, %v2824
    %2826 = vmatmul.f32.gmra.mxu0 %v2662
    %v2827 = vpop.f32.mrf.mxu0
    %v2828 = vadd.f32 0.0, %v2827
    %2829 = vmatmul.f32.gmra.mxu0 %v2663
    %v2830 = vpop.f32.mrf.mxu0
    %v2831 = vadd.f32 0.0, %v2830
    %2832 = vmatmul.f32.gmra.mxu0 %v2664
    %v2833 = vpop.f32.mrf.mxu0
    %v2834 = vadd.f32 0.0, %v2833
    %2835 = vmatmul.f32.gmra.mxu0 %v2665
    %v2836 = vpop.f32.mrf.mxu0
    %v2837 = vadd.f32 0.0, %v2836
    %2838 = vmatmul.f32.gmra.mxu0 %v2666
    %v2839 = vpop.f32.mrf.mxu0
    %v2840 = vadd.f32 0.0, %v2839
    %2841 = vmatmul.f32.gmra.mxu0 %v2667
    %v2842 = vpop.f32.mrf.mxu0
    %v2843 = vadd.f32 0.0, %v2842
    %2844 = vmatmul.f32.gmra.mxu0 %v2668
    %v2845 = vpop.f32.mrf.mxu0
    %v2846 = vadd.f32 0.0, %v2845
    %2847 = vmatmul.f32.gmra.mxu0 %v2669
    %v2848 = vpop.f32.mrf.mxu0
    %v2849 = vadd.f32 0.0, %v2848
    %2850 = vmatmul.f32.gmra.mxu0 %v2670
    %v2851 = vpop.f32.mrf.mxu0
    %v2852 = vadd.f32 0.0, %v2851
    %2853 = vmatmul.f32.gmra.mxu0 %v2671
    %v2854 = vpop.f32.mrf.mxu0
    %v2855 = vadd.f32 0.0, %v2854
    %2856 = vmatmul.f32.gmra.mxu0 %v2672
    %v2857 = vpop.f32.mrf.mxu0
    %v2858 = vadd.f32 0.0, %v2857
    %2859 = vmatmul.f32.gmra.mxu0 %v2673
    %v2860 = vpop.f32.mrf.mxu0
    %v2861 = vadd.f32 0.0, %v2860
    %2862 = vmatmul.f32.gmra.mxu0 %v2674
    %v2863 = vpop.f32.mrf.mxu0
    %v2864 = vadd.f32 0.0, %v2863
    %2865 = vmatmul.f32.gmra.mxu0 %v2675
    %v2866 = vpop.f32.mrf.mxu0
    %v2867 = vadd.f32 0.0, %v2866
    %2868 = vmatmul.f32.gmra.mxu0 %v2676
    %v2869 = vpop.f32.mrf.mxu0
    %v2870 = vadd.f32 0.0, %v2869
    %2871 = vmatmul.f32.gmra.mxu0 %v2677
    %v2872 = vpop.f32.mrf.mxu0
    %v2873 = vadd.f32 0.0, %v2872
    %2874 = vmatmul.f32.gmra.mxu0 %v2678
    %v2875 = vpop.f32.mrf.mxu0
    %v2876 = vadd.f32 0.0, %v2875
    %2877 = vmatmul.f32.gmra.mxu0 %v2679
    %v2878 = vpop.f32.mrf.mxu0
    %v2879 = vadd.f32 0.0, %v2878
    %2880 = vmatmul.f32.gmra.mxu0 %v2680
    %v2881 = vpop.f32.mrf.mxu0
    %v2882 = vadd.f32 0.0, %v2881
    %2883 = vmatmul.f32.gmra.mxu0 %v2681
    %v2884 = vpop.f32.mrf.mxu0
    %v2885 = vadd.f32 0.0, %v2884
    %2886 = vmatmul.f32.gmra.mxu0 %v2682
    %v2887 = vpop.f32.mrf.mxu0
    %v2888 = vadd.f32 0.0, %v2887
    %2889 = vmatmul.f32.gmra.mxu0 %v2683
    %v2890 = vpop.f32.mrf.mxu0
    %v2891 = vadd.f32 0.0, %v2890
    %2892 = vmatmul.f32.gmra.mxu0 %v2684
    %v2893 = vpop.f32.mrf.mxu0
    %v2894 = vadd.f32 0.0, %v2893
    %2895 = vmatmul.f32.gmra.mxu0 %v2685
    %v2896 = vpop.f32.mrf.mxu0
    %v2897 = vadd.f32 0.0, %v2896
    %2898 = vmatmul.f32.gmra.mxu0 %v2686
    %v2899 = vpop.f32.mrf.mxu0
    %v2900 = vadd.f32 0.0, %v2899
    %2901 = vmatmul.f32.gmra.mxu0 %v2687
    %v2902 = vpop.f32.mrf.mxu0
    %v2903 = vadd.f32 0.0, %v2902
    %2904 = vmatmul.f32.gmra.mxu0 %v2688
    %v2905 = vpop.f32.mrf.mxu0
    %v2906 = vadd.f32 0.0, %v2905
    %2907 = vmatmul.f32.gmra.mxu0 %v2689
    %v2908 = vpop.f32.mrf.mxu0
    %v2909 = vadd.f32 0.0, %v2908
    %2910 = vmatmul.f32.gmra.mxu0 %v2690
    %v2911 = vpop.f32.mrf.mxu0
    %v2912 = vadd.f32 0.0, %v2911
    %2913 = vmatmul.f32.gmra.mxu0 %v2691
    %v2914 = vpop.f32.mrf.mxu0
    %v2915 = vadd.f32 0.0, %v2914
    %2916 = vdwg.mxu0
    %v2917 = vadd.f32 %v2564, %v2726
    %v2918 = vadd.f32 %v2565, %v2729
    %v2919 = vadd.f32 %v2566, %v2732
    %v2920 = vadd.f32 %v2567, %v2735
    %v2921 = vadd.f32 %v2568, %v2738
    %v2922 = vadd.f32 %v2569, %v2741
    %v2923 = vadd.f32 %v2570, %v2744
    %v2924 = vadd.f32 %v2571, %v2747
    %v2925 = vadd.f32 %v2572, %v2750
    %v2926 = vadd.f32 %v2573, %v2753
    %v2927 = vadd.f32 %v2574, %v2756
    %v2928 = vadd.f32 %v2575, %v2759
    %v2929 = vadd.f32 %v2576, %v2762
    %v2930 = vadd.f32 %v2577, %v2765
    %v2931 = vadd.f32 %v2578, %v2768
    %v2932 = vadd.f32 %v2579, %v2771
    %v2933 = vadd.f32 %v2580, %v2774
    %v2934 = vadd.f32 %v2581, %v2777
    %v2935 = vadd.f32 %v2582, %v2780
    %v2936 = vadd.f32 %v2583, %v2783
    %v2937 = vadd.f32 %v2584, %v2786
    %v2938 = vadd.f32 %v2585, %v2789
    %v2939 = vadd.f32 %v2586, %v2792
    %v2940 = vadd.f32 %v2587, %v2795
    %v2941 = vadd.f32 %v2588, %v2798
    %v2942 = vadd.f32 %v2589, %v2801
    %v2943 = vadd.f32 %v2590, %v2804
    %v2944 = vadd.f32 %v2591, %v2807
    %v2945 = vadd.f32 %v2592, %v2810
    %v2946 = vadd.f32 %v2593, %v2813
    %v2947 = vadd.f32 %v2594, %v2816
    %v2948 = vadd.f32 %v2595, %v2819
    %v2949 = vadd.f32 %v2596, %v2822
    %v2950 = vadd.f32 %v2597, %v2825
    %v2951 = vadd.f32 %v2598, %v2828
    %v2952 = vadd.f32 %v2599, %v2831
    %v2953 = vadd.f32 %v2600, %v2834
    %v2954 = vadd.f32 %v2601, %v2837
    %v2955 = vadd.f32 %v2602, %v2840
    %v2956 = vadd.f32 %v2603, %v2843
    %v2957 = vadd.f32 %v2604, %v2846
    %v2958 = vadd.f32 %v2605, %v2849
    %v2959 = vadd.f32 %v2606, %v2852
    %v2960 = vadd.f32 %v2607, %v2855
    %v2961 = vadd.f32 %v2608, %v2858
    %v2962 = vadd.f32 %v2609, %v2861
    %v2963 = vadd.f32 %v2610, %v2864
    %v2964 = vadd.f32 %v2611, %v2867
    %v2965 = vadd.f32 %v2612, %v2870
    %v2966 = vadd.f32 %v2613, %v2873
    %v2967 = vadd.f32 %v2614, %v2876
    %v2968 = vadd.f32 %v2615, %v2879
    %v2969 = vadd.f32 %v2616, %v2882
    %v2970 = vadd.f32 %v2617, %v2885
    %v2971 = vadd.f32 %v2618, %v2888
    %v2972 = vadd.f32 %v2619, %v2891
    %v2973 = vadd.f32 %v2620, %v2894
    %v2974 = vadd.f32 %v2621, %v2897
    %v2975 = vadd.f32 %v2622, %v2900
    %v2976 = vadd.f32 %v2623, %v2903
    %v2977 = vadd.f32 %v2624, %v2906
    %v2978 = vadd.f32 %v2625, %v2909
    %v2979 = vadd.f32 %v2626, %v2912
    %v2980 = vadd.f32 %v2627, %v2915
    %v2981 = vld [vmem:[%s2274 + $0x9] sm:$0xff]
    %v2982 = vld [vmem:[%s2274 + $0x11] sm:$0xff]
    %v2983 = vld [vmem:[%s2274 + $0x29] sm:$0xff]
    %v2984 = vld [vmem:[%s2274 + $0x31] sm:$0xff]
    %v2985 = vld [vmem:[%s2274 + $0x49] sm:$0xff]
    %v2986 = vld [vmem:[%s2274 + $0x51] sm:$0xff]
    %v2987 = vld [vmem:[%s2274 + $0x69] sm:$0xff]
    %v2988 = vld [vmem:[%s2274 + $0x71] sm:$0xff]
    %v2989 = vld [vmem:[%s2274 + $0x89] sm:$0xff]
    %v2990 = vld [vmem:[%s2274 + $0x91] sm:$0xff]
    %v2991 = vld [vmem:[%s2274 + $0xa9] sm:$0xff]
    %v2992 = vld [vmem:[%s2274 + $0xb1] sm:$0xff]
    %v2993 = vld [vmem:[%s2274 + $0xc9] sm:$0xff]
    %v2994 = vld [vmem:[%s2274 + $0xd1] sm:$0xff]
    %v2995 = vld [vmem:[%s2274 + $0xe9] sm:$0xff]
    %v2996 = vld [vmem:[%s2274 + $0xf1] sm:$0xff]
    %v2997 = vld [vmem:[%s2274 + $0x109] sm:$0xff]
    %v2998 = vld [vmem:[%s2274 + $0x111] sm:$0xff]
    %v2999 = vld [vmem:[%s2274 + $0x129] sm:$0xff]
    %v3000 = vld [vmem:[%s2274 + $0x131] sm:$0xff]
    %v3001 = vld [vmem:[%s2274 + $0x149] sm:$0xff]
    %v3002 = vld [vmem:[%s2274 + $0x151] sm:$0xff]
    %v3003 = vld [vmem:[%s2274 + $0x169] sm:$0xff]
    %v3004 = vld [vmem:[%s2274 + $0x171] sm:$0xff]
    %v3005 = vld [vmem:[%s2274 + $0x189] sm:$0xff]
    %v3006 = vld [vmem:[%s2274 + $0x191] sm:$0xff]
    %v3007 = vld [vmem:[%s2274 + $0x1a9] sm:$0xff]
    %v3008 = vld [vmem:[%s2274 + $0x1b1] sm:$0xff]
    %v3009 = vld [vmem:[%s2274 + $0x1c9] sm:$0xff]
    %v3010 = vld [vmem:[%s2274 + $0x1d1] sm:$0xff]
    %v3011 = vld [vmem:[%s2274 + $0x1e9] sm:$0xff]
    %v3012 = vld [vmem:[%s2274 + $0x1f1] sm:$0xff]
    %v3013 = vld [vmem:[%s2274 + $0x249] sm:$0xff]
    %v3014 = vld [vmem:[%s2274 + $0x251] sm:$0xff]
    %v3015 = vld [vmem:[%s2274 + $0x269] sm:$0xff]
    %v3016 = vld [vmem:[%s2274 + $0x271] sm:$0xff]
    %v3017 = vld [vmem:[%s2274 + $0x289] sm:$0xff]
    %v3018 = vld [vmem:[%s2274 + $0x291] sm:$0xff]
    %v3019 = vld [vmem:[%s2274 + $0x2a9] sm:$0xff]
    %v3020 = vld [vmem:[%s2274 + $0x2b1] sm:$0xff]
    %v3021 = vld [vmem:[%s2274 + $0x2c9] sm:$0xff]
    %v3022 = vld [vmem:[%s2274 + $0x2d1] sm:$0xff]
    %v3023 = vld [vmem:[%s2274 + $0x2e9] sm:$0xff]
    %v3024 = vld [vmem:[%s2274 + $0x2f1] sm:$0xff]
    %v3025 = vld [vmem:[%s2274 + $0x309] sm:$0xff]
    %v3026 = vld [vmem:[%s2274 + $0x311] sm:$0xff]
    %v3027 = vld [vmem:[%s2274 + $0x329] sm:$0xff]
    %v3028 = vld [vmem:[%s2274 + $0x331] sm:$0xff]
    %v3029 = vld [vmem:[%s2274 + $0x349] sm:$0xff]
    %v3030 = vld [vmem:[%s2274 + $0x351] sm:$0xff]
    %v3031 = vld [vmem:[%s2274 + $0x369] sm:$0xff]
    %v3032 = vld [vmem:[%s2274 + $0x371] sm:$0xff]
    %v3033 = vld [vmem:[%s2274 + $0x389] sm:$0xff]
    %v3034 = vld [vmem:[%s2274 + $0x391] sm:$0xff]
    %v3035 = vld [vmem:[%s2274 + $0x3a9] sm:$0xff]
    %v3036 = vld [vmem:[%s2274 + $0x3b1] sm:$0xff]
    %v3037 = vld [vmem:[%s2274 + $0x3c9] sm:$0xff]
    %v3038 = vld [vmem:[%s2274 + $0x3d1] sm:$0xff]
    %v3039 = vld [vmem:[%s2274 + $0x3e9] sm:$0xff]
    %v3040 = vld [vmem:[%s2274 + $0x3f1] sm:$0xff]
    %v3041 = vld [vmem:[%s2274 + $0x409] sm:$0xff]
    %v3042 = vld [vmem:[%s2274 + $0x411] sm:$0xff]
    %v3043 = vld [vmem:[%s2274 + $0x429] sm:$0xff]
    %v3044 = vld [vmem:[%s2274 + $0x431] sm:$0xff]
    %v3045 = vld [vmem:[#allocation6 + $0x400] sm:$0xff]
    %v3046 = vld [vmem:[#allocation6 + $0x408] sm:$0xff]
    %v3047 = vld [vmem:[#allocation6 + $0x410] sm:$0xff]
    %v3048 = vld [vmem:[#allocation6 + $0x418] sm:$0xff]
    %v3049 = vld [vmem:[#allocation6 + $0x420] sm:$0xff]
    %v3050 = vld [vmem:[#allocation6 + $0x428] sm:$0xff]
    %v3051 = vld [vmem:[#allocation6 + $0x430] sm:$0xff]
    %v3052 = vld [vmem:[#allocation6 + $0x438] sm:$0xff]
    %v3053 = vld [vmem:[#allocation6 + $0x440] sm:$0xff]
    %v3054 = vld [vmem:[#allocation6 + $0x448] sm:$0xff]
    %v3055 = vld [vmem:[#allocation6 + $0x450] sm:$0xff]
    %v3056 = vld [vmem:[#allocation6 + $0x458] sm:$0xff]
    %v3057 = vld [vmem:[#allocation6 + $0x460] sm:$0xff]
    %v3058 = vld [vmem:[#allocation6 + $0x468] sm:$0xff]
    %v3059 = vld [vmem:[#allocation6 + $0x470] sm:$0xff]
    %v3060 = vld [vmem:[#allocation6 + $0x478] sm:$0xff]
    %3061 = vmatpush.msra.mxu0 %v3060
    %3062 = vmatpush.msra.mxu0 %v3059
    %3063 = vmatpush.msra.mxu0 %v3058
    %3064 = vmatpush.msra.mxu0 %v3057
    %3065 = vmatpush.msra.mxu0 %v3056
    %3066 = vmatpush.msra.mxu0 %v3055
    %3067 = vmatpush.msra.mxu0 %v3054
    %3068 = vmatpush.msra.mxu0 %v3053
    %3069 = vmatpush.msra.mxu0 %v3052
    %3070 = vmatpush.msra.mxu0 %v3051
    %3071 = vmatpush.msra.mxu0 %v3050
    %3072 = vmatpush.msra.mxu0 %v3049
    %3073 = vmatpush.msra.mxu0 %v3048
    %3074 = vmatpush.msra.mxu0 %v3047
    %3075 = vmatpush.msra.mxu0 %v3046
    %3076 = vmatpush.msra.mxu0 %v3045
    %3077 = vmatmul.f32.gmra.mxu0 %v2981
    %v3078 = vpop.f32.mrf.mxu0
    %v3079 = vadd.f32 0.0, %v3078
    %3080 = vmatmul.f32.gmra.mxu0 %v2982
    %v3081 = vpop.f32.mrf.mxu0
    %v3082 = vadd.f32 0.0, %v3081
    %3083 = vmatmul.f32.gmra.mxu0 %v2983
    %v3084 = vpop.f32.mrf.mxu0
    %v3085 = vadd.f32 0.0, %v3084
    %3086 = vmatmul.f32.gmra.mxu0 %v2984
    %v3087 = vpop.f32.mrf.mxu0
    %v3088 = vadd.f32 0.0, %v3087
    %3089 = vmatmul.f32.gmra.mxu0 %v2985
    %v3090 = vpop.f32.mrf.mxu0
    %v3091 = vadd.f32 0.0, %v3090
    %3092 = vmatmul.f32.gmra.mxu0 %v2986
    %v3093 = vpop.f32.mrf.mxu0
    %v3094 = vadd.f32 0.0, %v3093
    %3095 = vmatmul.f32.gmra.mxu0 %v2987
    %v3096 = vpop.f32.mrf.mxu0
    %v3097 = vadd.f32 0.0, %v3096
    %3098 = vmatmul.f32.gmra.mxu0 %v2988
    %v3099 = vpop.f32.mrf.mxu0
    %v3100 = vadd.f32 0.0, %v3099
    %3101 = vmatmul.f32.gmra.mxu0 %v2989
    %v3102 = vpop.f32.mrf.mxu0
    %v3103 = vadd.f32 0.0, %v3102
    %3104 = vmatmul.f32.gmra.mxu0 %v2990
    %v3105 = vpop.f32.mrf.mxu0
    %v3106 = vadd.f32 0.0, %v3105
    %3107 = vmatmul.f32.gmra.mxu0 %v2991
    %v3108 = vpop.f32.mrf.mxu0
    %v3109 = vadd.f32 0.0, %v3108
    %3110 = vmatmul.f32.gmra.mxu0 %v2992
    %v3111 = vpop.f32.mrf.mxu0
    %v3112 = vadd.f32 0.0, %v3111
    %3113 = vmatmul.f32.gmra.mxu0 %v2993
    %v3114 = vpop.f32.mrf.mxu0
    %v3115 = vadd.f32 0.0, %v3114
    %3116 = vmatmul.f32.gmra.mxu0 %v2994
    %v3117 = vpop.f32.mrf.mxu0
    %v3118 = vadd.f32 0.0, %v3117
    %3119 = vmatmul.f32.gmra.mxu0 %v2995
    %v3120 = vpop.f32.mrf.mxu0
    %v3121 = vadd.f32 0.0, %v3120
    %3122 = vmatmul.f32.gmra.mxu0 %v2996
    %v3123 = vpop.f32.mrf.mxu0
    %v3124 = vadd.f32 0.0, %v3123
    %3125 = vmatmul.f32.gmra.mxu0 %v2997
    %v3126 = vpop.f32.mrf.mxu0
    %v3127 = vadd.f32 0.0, %v3126
    %3128 = vmatmul.f32.gmra.mxu0 %v2998
    %v3129 = vpop.f32.mrf.mxu0
    %v3130 = vadd.f32 0.0, %v3129
    %3131 = vmatmul.f32.gmra.mxu0 %v2999
    %v3132 = vpop.f32.mrf.mxu0
    %v3133 = vadd.f32 0.0, %v3132
    %3134 = vmatmul.f32.gmra.mxu0 %v3000
    %v3135 = vpop.f32.mrf.mxu0
    %v3136 = vadd.f32 0.0, %v3135
    %3137 = vmatmul.f32.gmra.mxu0 %v3001
    %v3138 = vpop.f32.mrf.mxu0
    %v3139 = vadd.f32 0.0, %v3138
    %3140 = vmatmul.f32.gmra.mxu0 %v3002
    %v3141 = vpop.f32.mrf.mxu0
    %v3142 = vadd.f32 0.0, %v3141
    %3143 = vmatmul.f32.gmra.mxu0 %v3003
    %v3144 = vpop.f32.mrf.mxu0
    %v3145 = vadd.f32 0.0, %v3144
    %3146 = vmatmul.f32.gmra.mxu0 %v3004
    %v3147 = vpop.f32.mrf.mxu0
    %v3148 = vadd.f32 0.0, %v3147
    %3149 = vmatmul.f32.gmra.mxu0 %v3005
    %v3150 = vpop.f32.mrf.mxu0
    %v3151 = vadd.f32 0.0, %v3150
    %3152 = vmatmul.f32.gmra.mxu0 %v3006
    %v3153 = vpop.f32.mrf.mxu0
    %v3154 = vadd.f32 0.0, %v3153
    %3155 = vmatmul.f32.gmra.mxu0 %v3007
    %v3156 = vpop.f32.mrf.mxu0
    %v3157 = vadd.f32 0.0, %v3156
    %3158 = vmatmul.f32.gmra.mxu0 %v3008
    %v3159 = vpop.f32.mrf.mxu0
    %v3160 = vadd.f32 0.0, %v3159
    %3161 = vmatmul.f32.gmra.mxu0 %v3009
    %v3162 = vpop.f32.mrf.mxu0
    %v3163 = vadd.f32 0.0, %v3162
    %3164 = vmatmul.f32.gmra.mxu0 %v3010
    %v3165 = vpop.f32.mrf.mxu0
    %v3166 = vadd.f32 0.0, %v3165
    %3167 = vmatmul.f32.gmra.mxu0 %v3011
    %v3168 = vpop.f32.mrf.mxu0
    %v3169 = vadd.f32 0.0, %v3168
    %3170 = vmatmul.f32.gmra.mxu0 %v3012
    %v3171 = vpop.f32.mrf.mxu0
    %v3172 = vadd.f32 0.0, %v3171
    %3173 = vmatmul.f32.gmra.mxu0 %v3013
    %v3174 = vpop.f32.mrf.mxu0
    %v3175 = vadd.f32 0.0, %v3174
    %3176 = vmatmul.f32.gmra.mxu0 %v3014
    %v3177 = vpop.f32.mrf.mxu0
    %v3178 = vadd.f32 0.0, %v3177
    %3179 = vmatmul.f32.gmra.mxu0 %v3015
    %v3180 = vpop.f32.mrf.mxu0
    %v3181 = vadd.f32 0.0, %v3180
    %3182 = vmatmul.f32.gmra.mxu0 %v3016
    %v3183 = vpop.f32.mrf.mxu0
    %v3184 = vadd.f32 0.0, %v3183
    %3185 = vmatmul.f32.gmra.mxu0 %v3017
    %v3186 = vpop.f32.mrf.mxu0
    %v3187 = vadd.f32 0.0, %v3186
    %3188 = vmatmul.f32.gmra.mxu0 %v3018
    %v3189 = vpop.f32.mrf.mxu0
    %v3190 = vadd.f32 0.0, %v3189
    %3191 = vmatmul.f32.gmra.mxu0 %v3019
    %v3192 = vpop.f32.mrf.mxu0
    %v3193 = vadd.f32 0.0, %v3192
    %3194 = vmatmul.f32.gmra.mxu0 %v3020
    %v3195 = vpop.f32.mrf.mxu0
    %v3196 = vadd.f32 0.0, %v3195
    %3197 = vmatmul.f32.gmra.mxu0 %v3021
    %v3198 = vpop.f32.mrf.mxu0
    %v3199 = vadd.f32 0.0, %v3198
    %3200 = vmatmul.f32.gmra.mxu0 %v3022
    %v3201 = vpop.f32.mrf.mxu0
    %v3202 = vadd.f32 0.0, %v3201
    %3203 = vmatmul.f32.gmra.mxu0 %v3023
    %v3204 = vpop.f32.mrf.mxu0
    %v3205 = vadd.f32 0.0, %v3204
    %3206 = vmatmul.f32.gmra.mxu0 %v3024
    %v3207 = vpop.f32.mrf.mxu0
    %v3208 = vadd.f32 0.0, %v3207
    %3209 = vmatmul.f32.gmra.mxu0 %v3025
    %v3210 = vpop.f32.mrf.mxu0
    %v3211 = vadd.f32 0.0, %v3210
    %3212 = vmatmul.f32.gmra.mxu0 %v3026
    %v3213 = vpop.f32.mrf.mxu0
    %v3214 = vadd.f32 0.0, %v3213
    %3215 = vmatmul.f32.gmra.mxu0 %v3027
    %v3216 = vpop.f32.mrf.mxu0
    %v3217 = vadd.f32 0.0, %v3216
    %3218 = vmatmul.f32.gmra.mxu0 %v3028
    %v3219 = vpop.f32.mrf.mxu0
    %v3220 = vadd.f32 0.0, %v3219
    %3221 = vmatmul.f32.gmra.mxu0 %v3029
    %v3222 = vpop.f32.mrf.mxu0
    %v3223 = vadd.f32 0.0, %v3222
    %3224 = vmatmul.f32.gmra.mxu0 %v3030
    %v3225 = vpop.f32.mrf.mxu0
    %v3226 = vadd.f32 0.0, %v3225
    %3227 = vmatmul.f32.gmra.mxu0 %v3031
    %v3228 = vpop.f32.mrf.mxu0
    %v3229 = vadd.f32 0.0, %v3228
    %3230 = vmatmul.f32.gmra.mxu0 %v3032
    %v3231 = vpop.f32.mrf.mxu0
    %v3232 = vadd.f32 0.0, %v3231
    %3233 = vmatmul.f32.gmra.mxu0 %v3033
    %v3234 = vpop.f32.mrf.mxu0
    %v3235 = vadd.f32 0.0, %v3234
    %3236 = vmatmul.f32.gmra.mxu0 %v3034
    %v3237 = vpop.f32.mrf.mxu0
    %v3238 = vadd.f32 0.0, %v3237
    %3239 = vmatmul.f32.gmra.mxu0 %v3035
    %v3240 = vpop.f32.mrf.mxu0
    %v3241 = vadd.f32 0.0, %v3240
    %3242 = vmatmul.f32.gmra.mxu0 %v3036
    %v3243 = vpop.f32.mrf.mxu0
    %v3244 = vadd.f32 0.0, %v3243
    %3245 = vmatmul.f32.gmra.mxu0 %v3037
    %v3246 = vpop.f32.mrf.mxu0
    %v3247 = vadd.f32 0.0, %v3246
    %3248 = vmatmul.f32.gmra.mxu0 %v3038
    %v3249 = vpop.f32.mrf.mxu0
    %v3250 = vadd.f32 0.0, %v3249
    %3251 = vmatmul.f32.gmra.mxu0 %v3039
    %v3252 = vpop.f32.mrf.mxu0
    %v3253 = vadd.f32 0.0, %v3252
    %3254 = vmatmul.f32.gmra.mxu0 %v3040
    %v3255 = vpop.f32.mrf.mxu0
    %v3256 = vadd.f32 0.0, %v3255
    %3257 = vmatmul.f32.gmra.mxu0 %v3041
    %v3258 = vpop.f32.mrf.mxu0
    %v3259 = vadd.f32 0.0, %v3258
    %3260 = vmatmul.f32.gmra.mxu0 %v3042
    %v3261 = vpop.f32.mrf.mxu0
    %v3262 = vadd.f32 0.0, %v3261
    %3263 = vmatmul.f32.gmra.mxu0 %v3043
    %v3264 = vpop.f32.mrf.mxu0
    %v3265 = vadd.f32 0.0, %v3264
    %3266 = vmatmul.f32.gmra.mxu0 %v3044
    %v3267 = vpop.f32.mrf.mxu0
    %v3268 = vadd.f32 0.0, %v3267
    %3269 = vdwg.mxu0
    %v3270 = vadd.f32 %v2917, %v3079
    %v3271 = vadd.f32 %v2918, %v3082
    %v3272 = vadd.f32 %v2919, %v3085
    %v3273 = vadd.f32 %v2920, %v3088
    %v3274 = vadd.f32 %v2921, %v3091
    %v3275 = vadd.f32 %v2922, %v3094
    %v3276 = vadd.f32 %v2923, %v3097
    %v3277 = vadd.f32 %v2924, %v3100
    %v3278 = vadd.f32 %v2925, %v3103
    %v3279 = vadd.f32 %v2926, %v3106
    %v3280 = vadd.f32 %v2927, %v3109
    %v3281 = vadd.f32 %v2928, %v3112
    %v3282 = vadd.f32 %v2929, %v3115
    %v3283 = vadd.f32 %v2930, %v3118
    %v3284 = vadd.f32 %v2931, %v3121
    %v3285 = vadd.f32 %v2932, %v3124
    %v3286 = vadd.f32 %v2933, %v3127
    %v3287 = vadd.f32 %v2934, %v3130
    %v3288 = vadd.f32 %v2935, %v3133
    %v3289 = vadd.f32 %v2936, %v3136
    %v3290 = vadd.f32 %v2937, %v3139
    %v3291 = vadd.f32 %v2938, %v3142
    %v3292 = vadd.f32 %v2939, %v3145
    %v3293 = vadd.f32 %v2940, %v3148
    %v3294 = vadd.f32 %v2941, %v3151
    %v3295 = vadd.f32 %v2942, %v3154
    %v3296 = vadd.f32 %v2943, %v3157
    %v3297 = vadd.f32 %v2944, %v3160
    %v3298 = vadd.f32 %v2945, %v3163
    %v3299 = vadd.f32 %v2946, %v3166
    %v3300 = vadd.f32 %v2947, %v3169
    %v3301 = vadd.f32 %v2948, %v3172
    %v3302 = vadd.f32 %v2949, %v3175
    %v3303 = vadd.f32 %v2950, %v3178
    %v3304 = vadd.f32 %v2951, %v3181
    %v3305 = vadd.f32 %v2952, %v3184
    %v3306 = vadd.f32 %v2953, %v3187
    %v3307 = vadd.f32 %v2954, %v3190
    %v3308 = vadd.f32 %v2955, %v3193
    %v3309 = vadd.f32 %v2956, %v3196
    %v3310 = vadd.f32 %v2957, %v3199
    %v3311 = vadd.f32 %v2958, %v3202
    %v3312 = vadd.f32 %v2959, %v3205
    %v3313 = vadd.f32 %v2960, %v3208
    %v3314 = vadd.f32 %v2961, %v3211
    %v3315 = vadd.f32 %v2962, %v3214
    %v3316 = vadd.f32 %v2963, %v3217
    %v3317 = vadd.f32 %v2964, %v3220
    %v3318 = vadd.f32 %v2965, %v3223
    %v3319 = vadd.f32 %v2966, %v3226
    %v3320 = vadd.f32 %v2967, %v3229
    %v3321 = vadd.f32 %v2968, %v3232
    %v3322 = vadd.f32 %v2969, %v3235
    %v3323 = vadd.f32 %v2970, %v3238
    %v3324 = vadd.f32 %v2971, %v3241
    %v3325 = vadd.f32 %v2972, %v3244
    %v3326 = vadd.f32 %v2973, %v3247
    %v3327 = vadd.f32 %v2974, %v3250
    %v3328 = vadd.f32 %v2975, %v3253
    %v3329 = vadd.f32 %v2976, %v3256
    %v3330 = vadd.f32 %v2977, %v3259
    %v3331 = vadd.f32 %v2978, %v3262
    %v3332 = vadd.f32 %v2979, %v3265
    %v3333 = vadd.f32 %v2980, %v3268
    %v3334 = vadd.f32 %v3270, %v3271
    %v3335 = vadd.f32 %v3334, %v3272
    %v3336 = vadd.f32 %v3335, %v3273
    %v3337 = vadd.f32 %v3336, %v3274
    %v3338 = vadd.f32 %v3337, %v3275
    %v3339 = vadd.f32 %v3338, %v3276
    %v3340 = vadd.f32 %v3339, %v3277
    %v3341 = vadd.f32 %v3340, %v3278
    %v3342 = vadd.f32 %v3341, %v3279
    %v3343 = vadd.f32 %v3342, %v3280
    %v3344 = vadd.f32 %v3343, %v3281
    %v3345 = vadd.f32 %v3344, %v3282
    %v3346 = vadd.f32 %v3345, %v3283
    %v3347 = vadd.f32 %v3346, %v3284
    %v3348 = vadd.f32 %v3347, %v3285
    %v3349 = vadd.f32 %v3348, %v3286
    %v3350 = vadd.f32 %v3349, %v3287
    %v3351 = vadd.f32 %v3350, %v3288
    %v3352 = vadd.f32 %v3351, %v3289
    %v3353 = vadd.f32 %v3352, %v3290
    %v3354 = vadd.f32 %v3353, %v3291
    %v3355 = vadd.f32 %v3354, %v3292
    %v3356 = vadd.f32 %v3355, %v3293
    %v3357 = vadd.f32 %v3356, %v3294
    %v3358 = vadd.f32 %v3357, %v3295
    %v3359 = vadd.f32 %v3358, %v3296
    %v3360 = vadd.f32 %v3359, %v3297
    %v3361 = vadd.f32 %v3360, %v3298
    %v3362 = vadd.f32 %v3361, %v3299
    %v3363 = vadd.f32 %v3362, %v3300
    %v3364 = vadd.f32 %v3363, %v3301
    %v3365 = vadd.f32 %v3364, %v3302
    %v3366 = vadd.f32 %v3365, %v3303
    %v3367 = vadd.f32 %v3366, %v3304
    %v3368 = vadd.f32 %v3367, %v3305
    %v3369 = vadd.f32 %v3368, %v3306
    %v3370 = vadd.f32 %v3369, %v3307
    %v3371 = vadd.f32 %v3370, %v3308
    %v3372 = vadd.f32 %v3371, %v3309
    %v3373 = vadd.f32 %v3372, %v3310
    %v3374 = vadd.f32 %v3373, %v3311
    %v3375 = vadd.f32 %v3374, %v3312
    %v3376 = vadd.f32 %v3375, %v3313
    %v3377 = vadd.f32 %v3376, %v3314
    %v3378 = vadd.f32 %v3377, %v3315
    %v3379 = vadd.f32 %v3378, %v3316
    %v3380 = vadd.f32 %v3379, %v3317
    %v3381 = vadd.f32 %v3380, %v3318
    %v3382 = vadd.f32 %v3381, %v3319
    %v3383 = vadd.f32 %v3382, %v3320
    %v3384 = vadd.f32 %v3383, %v3321
    %v3385 = vadd.f32 %v3384, %v3322
    %v3386 = vadd.f32 %v3385, %v3323
    %v3387 = vadd.f32 %v3386, %v3324
    %v3388 = vadd.f32 %v3387, %v3325
    %v3389 = vadd.f32 %v3388, %v3326
    %v3390 = vadd.f32 %v3389, %v3327
    %v3391 = vadd.f32 %v3390, %v3328
    %v3392 = vadd.f32 %v3391, %v3329
    %v3393 = vadd.f32 %v3392, %v3330
    %v3394 = vadd.f32 %v3393, %v3331
    %v3395 = vadd.f32 %v3394, %v3332
    %v3396 = vadd.f32 %v3395, %v3333
    %v3397 = vrot.slane %v3396, 4
    %v3398 = vadd.f32 %v3396, %v3397
    %v3399 = vrot.slane %v3398, 2
    %v3400 = vadd.f32 %v3398, %v3399
    %v3401 = vrot.slane %v3400, 1
    %v3402 = vadd.f32 %v3400, %v3401
    %v3403 = vmul.f32 %v3402, 0.001953125
    %v3404 = vmul.f32 %v3270, %v3270
    %v3405 = vmul.f32 %v3271, %v3271
    %v3406 = vmul.f32 %v3272, %v3272
    %v3407 = vmul.f32 %v3273, %v3273
    %v3408 = vmul.f32 %v3274, %v3274
    %v3409 = vmul.f32 %v3275, %v3275
    %v3410 = vmul.f32 %v3276, %v3276
    %v3411 = vmul.f32 %v3277, %v3277
    %v3412 = vmul.f32 %v3278, %v3278
    %v3413 = vmul.f32 %v3279, %v3279
    %v3414 = vmul.f32 %v3280, %v3280
    %v3415 = vmul.f32 %v3281, %v3281
    %v3416 = vmul.f32 %v3282, %v3282
    %v3417 = vmul.f32 %v3283, %v3283
    %v3418 = vmul.f32 %v3284, %v3284
    %v3419 = vmul.f32 %v3285, %v3285
    %v3420 = vmul.f32 %v3286, %v3286
    %v3421 = vmul.f32 %v3287, %v3287
    %v3422 = vmul.f32 %v3288, %v3288
    %v3423 = vmul.f32 %v3289, %v3289
    %v3424 = vmul.f32 %v3290, %v3290
    %v3425 = vmul.f32 %v3291, %v3291
    %v3426 = vmul.f32 %v3292, %v3292
    %v3427 = vmul.f32 %v3293, %v3293
    %v3428 = vmul.f32 %v3294, %v3294
    %v3429 = vmul.f32 %v3295, %v3295
    %v3430 = vmul.f32 %v3296, %v3296
    %v3431 = vmul.f32 %v3297, %v3297
    %v3432 = vmul.f32 %v3298, %v3298
    %v3433 = vmul.f32 %v3299, %v3299
    %v3434 = vmul.f32 %v3300, %v3300
    %v3435 = vmul.f32 %v3301, %v3301
    %v3436 = vmul.f32 %v3302, %v3302
    %v3437 = vmul.f32 %v3303, %v3303
    %v3438 = vmul.f32 %v3304, %v3304
    %v3439 = vmul.f32 %v3305, %v3305
    %v3440 = vmul.f32 %v3306, %v3306
    %v3441 = vmul.f32 %v3307, %v3307
    %v3442 = vmul.f32 %v3308, %v3308
    %v3443 = vmul.f32 %v3309, %v3309
    %v3444 = vmul.f32 %v3310, %v3310
    %v3445 = vmul.f32 %v3311, %v3311
    %v3446 = vmul.f32 %v3312, %v3312
    %v3447 = vmul.f32 %v3313, %v3313
    %v3448 = vmul.f32 %v3314, %v3314
    %v3449 = vmul.f32 %v3315, %v3315
    %v3450 = vmul.f32 %v3316, %v3316
    %v3451 = vmul.f32 %v3317, %v3317
    %v3452 = vmul.f32 %v3318, %v3318
    %v3453 = vmul.f32 %v3319, %v3319
    %v3454 = vmul.f32 %v3320, %v3320
    %v3455 = vmul.f32 %v3321, %v3321
    %v3456 = vmul.f32 %v3322, %v3322
    %v3457 = vmul.f32 %v3323, %v3323
    %v3458 = vmul.f32 %v3324, %v3324
    %v3459 = vmul.f32 %v3325, %v3325
    %v3460 = vmul.f32 %v3326, %v3326
    %v3461 = vmul.f32 %v3327, %v3327
    %v3462 = vmul.f32 %v3328, %v3328
    %v3463 = vmul.f32 %v3329, %v3329
    %v3464 = vmul.f32 %v3330, %v3330
    %v3465 = vmul.f32 %v3331, %v3331
    %v3466 = vmul.f32 %v3332, %v3332
    %v3467 = vmul.f32 %v3333, %v3333
    %v3468 = vadd.f32 %v3404, %v3405
    %v3469 = vadd.f32 %v3468, %v3406
    %v3470 = vadd.f32 %v3469, %v3407
    %v3471 = vadd.f32 %v3470, %v3408
    %v3472 = vadd.f32 %v3471, %v3409
    %v3473 = vadd.f32 %v3472, %v3410
    %v3474 = vadd.f32 %v3473, %v3411
    %v3475 = vadd.f32 %v3474, %v3412
    %v3476 = vadd.f32 %v3475, %v3413
    %v3477 = vadd.f32 %v3476, %v3414
    %v3478 = vadd.f32 %v3477, %v3415
    %v3479 = vadd.f32 %v3478, %v3416
    %v3480 = vadd.f32 %v3479, %v3417
    %v3481 = vadd.f32 %v3480, %v3418
    %v3482 = vadd.f32 %v3481, %v3419
    %v3483 = vadd.f32 %v3482, %v3420
    %v3484 = vadd.f32 %v3483, %v3421
    %v3485 = vadd.f32 %v3484, %v3422
    %v3486 = vadd.f32 %v3485, %v3423
    %v3487 = vadd.f32 %v3486, %v3424
    %v3488 = vadd.f32 %v3487, %v3425
    %v3489 = vadd.f32 %v3488, %v3426
    %v3490 = vadd.f32 %v3489, %v3427
    %v3491 = vadd.f32 %v3490, %v3428
    %v3492 = vadd.f32 %v3491, %v3429
    %v3493 = vadd.f32 %v3492, %v3430
    %v3494 = vadd.f32 %v3493, %v3431
    %v3495 = vadd.f32 %v3494, %v3432
    %v3496 = vadd.f32 %v3495, %v3433
    %v3497 = vadd.f32 %v3496, %v3434
    %v3498 = vadd.f32 %v3497, %v3435
    %v3499 = vadd.f32 %v3498, %v3436
    %v3500 = vadd.f32 %v3499, %v3437
    %v3501 = vadd.f32 %v3500, %v3438
    %v3502 = vadd.f32 %v3501, %v3439
    %v3503 = vadd.f32 %v3502, %v3440
    %v3504 = vadd.f32 %v3503, %v3441
    %v3505 = vadd.f32 %v3504, %v3442
    %v3506 = vadd.f32 %v3505, %v3443
    %v3507 = vadd.f32 %v3506, %v3444
    %v3508 = vadd.f32 %v3507, %v3445
    %v3509 = vadd.f32 %v3508, %v3446
    %v3510 = vadd.f32 %v3509, %v3447
    %v3511 = vadd.f32 %v3510, %v3448
    %v3512 = vadd.f32 %v3511, %v3449
    %v3513 = vadd.f32 %v3512, %v3450
    %v3514 = vadd.f32 %v3513, %v3451
    %v3515 = vadd.f32 %v3514, %v3452
    %v3516 = vadd.f32 %v3515, %v3453
    %v3517 = vadd.f32 %v3516, %v3454
    %v3518 = vadd.f32 %v3517, %v3455
    %v3519 = vadd.f32 %v3518, %v3456
    %v3520 = vadd.f32 %v3519, %v3457
    %v3521 = vadd.f32 %v3520, %v3458
    %v3522 = vadd.f32 %v3521, %v3459
    %v3523 = vadd.f32 %v3522, %v3460
    %v3524 = vadd.f32 %v3523, %v3461
    %v3525 = vadd.f32 %v3524, %v3462
    %v3526 = vadd.f32 %v3525, %v3463
    %v3527 = vadd.f32 %v3526, %v3464
    %v3528 = vadd.f32 %v3527, %v3465
    %v3529 = vadd.f32 %v3528, %v3466
    %v3530 = vadd.f32 %v3529, %v3467
    %v3531 = vrot.slane %v3530, 4
    %v3532 = vadd.f32 %v3530, %v3531
    %v3533 = vrot.slane %v3532, 2
    %v3534 = vadd.f32 %v3532, %v3533
    %v3535 = vrot.slane %v3534, 1
    %v3536 = vadd.f32 %v3534, %v3535
    %v3537 = vmul.f32 %v3536, 0.001953125
    %v3538 = vmul.f32 %v3403, %v3403
    %v3539 = vsub.f32 %v3537, %v3538
    %v3540 = vld [vmem:[%s2] sm:$0x1]
    %v3541 = vadd.f32 %v3539, 1e-05
    %v3542 = vrsqrt.pop %v3541
    %v3543 = vmul.f32 %v3542, %v3541
    %v3544 = vmul.f32 %v3543, %v3542
    %v3545 = vmul.f32 0.5, %v3544
    %v3546 = vsub.f32 1.5, %v3545
    %v3547 = vmul.f32 %v3542, %v3546
    %vm3548 = vweird.f32 %v3541
    %vm3549 = vweird.f32 %v3542
    %vm3550 = vmor %vm3548, %vm3549
    %v3551 = vsel %vm3550, %v3542, %v3547
    %v3552 = vmul.f32 %v3540, %v3551
    %v3553 = vld [vmem:[%s3] sm:$0x1]
    %v3554 = vmul.f32 %v3403, %v3552
    %v3555 = vsub.f32 %v3553, %v3554
    %v3557 = vperm.slane %v3552, 0
    %v3559 = vmul.f32 %v3270, %v3557
    %v3560 = vmul.f32 %v3271, %v3557
    %v3561 = vmul.f32 %v3272, %v3557
    %v3562 = vmul.f32 %v3273, %v3557
    %v3563 = vmul.f32 %v3274, %v3557
    %v3564 = vmul.f32 %v3275, %v3557
    %v3565 = vmul.f32 %v3276, %v3557
    %v3566 = vmul.f32 %v3277, %v3557
    %v3567 = vmul.f32 %v3278, %v3557
    %v3568 = vmul.f32 %v3279, %v3557
    %v3569 = vmul.f32 %v3280, %v3557
    %v3570 = vmul.f32 %v3281, %v3557
    %v3571 = vmul.f32 %v3282, %v3557
    %v3572 = vmul.f32 %v3283, %v3557
    %v3573 = vmul.f32 %v3284, %v3557
    %v3574 = vmul.f32 %v3285, %v3557
    %v3575 = vmul.f32 %v3286, %v3557
    %v3576 = vmul.f32 %v3287, %v3557
    %v3577 = vmul.f32 %v3288, %v3557
    %v3578 = vmul.f32 %v3289, %v3557
    %v3579 = vmul.f32 %v3290, %v3557
    %v3580 = vmul.f32 %v3291, %v3557
    %v3581 = vmul.f32 %v3292, %v3557
    %v3582 = vmul.f32 %v3293, %v3557
    %v3583 = vmul.f32 %v3294, %v3557
    %v3584 = vmul.f32 %v3295, %v3557
    %v3585 = vmul.f32 %v3296, %v3557
    %v3586 = vmul.f32 %v3297, %v3557
    %v3587 = vmul.f32 %v3298, %v3557
    %v3588 = vmul.f32 %v3299, %v3557
    %v3589 = vmul.f32 %v3300, %v3557
    %v3590 = vmul.f32 %v3301, %v3557
    %v3591 = vmul.f32 %v3302, %v3557
    %v3592 = vmul.f32 %v3303, %v3557
    %v3593 = vmul.f32 %v3304, %v3557
    %v3594 = vmul.f32 %v3305, %v3557
    %v3595 = vmul.f32 %v3306, %v3557
    %v3596 = vmul.f32 %v3307, %v3557
    %v3597 = vmul.f32 %v3308, %v3557
    %v3598 = vmul.f32 %v3309, %v3557
    %v3599 = vmul.f32 %v3310, %v3557
    %v3600 = vmul.f32 %v3311, %v3557
    %v3601 = vmul.f32 %v3312, %v3557
    %v3602 = vmul.f32 %v3313, %v3557
    %v3603 = vmul.f32 %v3314, %v3557
    %v3604 = vmul.f32 %v3315, %v3557
    %v3605 = vmul.f32 %v3316, %v3557
    %v3606 = vmul.f32 %v3317, %v3557
    %v3607 = vmul.f32 %v3318, %v3557
    %v3608 = vmul.f32 %v3319, %v3557
    %v3609 = vmul.f32 %v3320, %v3557
    %v3610 = vmul.f32 %v3321, %v3557
    %v3611 = vmul.f32 %v3322, %v3557
    %v3612 = vmul.f32 %v3323, %v3557
    %v3613 = vmul.f32 %v3324, %v3557
    %v3614 = vmul.f32 %v3325, %v3557
    %v3615 = vmul.f32 %v3326, %v3557
    %v3616 = vmul.f32 %v3327, %v3557
    %v3617 = vmul.f32 %v3328, %v3557
    %v3618 = vmul.f32 %v3329, %v3557
    %v3619 = vmul.f32 %v3330, %v3557
    %v3620 = vmul.f32 %v3331, %v3557
    %v3621 = vmul.f32 %v3332, %v3557
    %v3622 = vmul.f32 %v3333, %v3557
    %v3624 = vperm.slane %v3555, 0
    %v3626 = vadd.f32 %v3559, %v3624
    %v3627 = vadd.f32 %v3560, %v3624
    %v3628 = vadd.f32 %v3561, %v3624
    %v3629 = vadd.f32 %v3562, %v3624
    %v3630 = vadd.f32 %v3563, %v3624
    %v3631 = vadd.f32 %v3564, %v3624
    %v3632 = vadd.f32 %v3565, %v3624
    %v3633 = vadd.f32 %v3566, %v3624
    %v3634 = vadd.f32 %v3567, %v3624
    %v3635 = vadd.f32 %v3568, %v3624
    %v3636 = vadd.f32 %v3569, %v3624
    %v3637 = vadd.f32 %v3570, %v3624
    %v3638 = vadd.f32 %v3571, %v3624
    %v3639 = vadd.f32 %v3572, %v3624
    %v3640 = vadd.f32 %v3573, %v3624
    %v3641 = vadd.f32 %v3574, %v3624
    %v3642 = vadd.f32 %v3575, %v3624
    %v3643 = vadd.f32 %v3576, %v3624
    %v3644 = vadd.f32 %v3577, %v3624
    %v3645 = vadd.f32 %v3578, %v3624
    %v3646 = vadd.f32 %v3579, %v3624
    %v3647 = vadd.f32 %v3580, %v3624
    %v3648 = vadd.f32 %v3581, %v3624
    %v3649 = vadd.f32 %v3582, %v3624
    %v3650 = vadd.f32 %v3583, %v3624
    %v3651 = vadd.f32 %v3584, %v3624
    %v3652 = vadd.f32 %v3585, %v3624
    %v3653 = vadd.f32 %v3586, %v3624
    %v3654 = vadd.f32 %v3587, %v3624
    %v3655 = vadd.f32 %v3588, %v3624
    %v3656 = vadd.f32 %v3589, %v3624
    %v3657 = vadd.f32 %v3590, %v3624
    %v3658 = vadd.f32 %v3591, %v3624
    %v3659 = vadd.f32 %v3592, %v3624
    %v3660 = vadd.f32 %v3593, %v3624
    %v3661 = vadd.f32 %v3594, %v3624
    %v3662 = vadd.f32 %v3595, %v3624
    %v3663 = vadd.f32 %v3596, %v3624
    %v3664 = vadd.f32 %v3597, %v3624
    %v3665 = vadd.f32 %v3598, %v3624
    %v3666 = vadd.f32 %v3599, %v3624
    %v3667 = vadd.f32 %v3600, %v3624
    %v3668 = vadd.f32 %v3601, %v3624
    %v3669 = vadd.f32 %v3602, %v3624
    %v3670 = vadd.f32 %v3603, %v3624
    %v3671 = vadd.f32 %v3604, %v3624
    %v3672 = vadd.f32 %v3605, %v3624
    %v3673 = vadd.f32 %v3606, %v3624
    %v3674 = vadd.f32 %v3607, %v3624
    %v3675 = vadd.f32 %v3608, %v3624
    %v3676 = vadd.f32 %v3609, %v3624
    %v3677 = vadd.f32 %v3610, %v3624
    %v3678 = vadd.f32 %v3611, %v3624
    %v3679 = vadd.f32 %v3612, %v3624
    %v3680 = vadd.f32 %v3613, %v3624
    %v3681 = vadd.f32 %v3614, %v3624
    %v3682 = vadd.f32 %v3615, %v3624
    %v3683 = vadd.f32 %v3616, %v3624
    %v3684 = vadd.f32 %v3617, %v3624
    %v3685 = vadd.f32 %v3618, %v3624
    %v3686 = vadd.f32 %v3619, %v3624
    %v3687 = vadd.f32 %v3620, %v3624
    %v3688 = vadd.f32 %v3621, %v3624
    %v3689 = vadd.f32 %v3622, %v3624
    %v3690 = vmax.f32 %v3626, 0.0
    %v3691 = vmax.f32 %v3627, 0.0
    %v3692 = vmax.f32 %v3628, 0.0
    %v3693 = vmax.f32 %v3629, 0.0
    %v3694 = vmax.f32 %v3630, 0.0
    %v3695 = vmax.f32 %v3631, 0.0
    %v3696 = vmax.f32 %v3632, 0.0
    %v3697 = vmax.f32 %v3633, 0.0
    %v3698 = vmax.f32 %v3634, 0.0
    %v3699 = vmax.f32 %v3635, 0.0
    %v3700 = vmax.f32 %v3636, 0.0
    %v3701 = vmax.f32 %v3637, 0.0
    %v3702 = vmax.f32 %v3638, 0.0
    %v3703 = vmax.f32 %v3639, 0.0
    %v3704 = vmax.f32 %v3640, 0.0
    %v3705 = vmax.f32 %v3641, 0.0
    %v3706 = vmax.f32 %v3642, 0.0
    %v3707 = vmax.f32 %v3643, 0.0
    %v3708 = vmax.f32 %v3644, 0.0
    %v3709 = vmax.f32 %v3645, 0.0
    %v3710 = vmax.f32 %v3646, 0.0
    %v3711 = vmax.f32 %v3647, 0.0
    %v3712 = vmax.f32 %v3648, 0.0
    %v3713 = vmax.f32 %v3649, 0.0
    %v3714 = vmax.f32 %v3650, 0.0
    %v3715 = vmax.f32 %v3651, 0.0
    %v3716 = vmax.f32 %v3652, 0.0
    %v3717 = vmax.f32 %v3653, 0.0
    %v3718 = vmax.f32 %v3654, 0.0
    %v3719 = vmax.f32 %v3655, 0.0
    %v3720 = vmax.f32 %v3656, 0.0
    %v3721 = vmax.f32 %v3657, 0.0
    %v3722 = vmax.f32 %v3658, 0.0
    %v3723 = vmax.f32 %v3659, 0.0
    %v3724 = vmax.f32 %v3660, 0.0
    %v3725 = vmax.f32 %v3661, 0.0
    %v3726 = vmax.f32 %v3662, 0.0
    %v3727 = vmax.f32 %v3663, 0.0
    %v3728 = vmax.f32 %v3664, 0.0
    %v3729 = vmax.f32 %v3665, 0.0
    %v3730 = vmax.f32 %v3666, 0.0
    %v3731 = vmax.f32 %v3667, 0.0
    %v3732 = vmax.f32 %v3668, 0.0
    %v3733 = vmax.f32 %v3669, 0.0
    %v3734 = vmax.f32 %v3670, 0.0
    %v3735 = vmax.f32 %v3671, 0.0
    %v3736 = vmax.f32 %v3672, 0.0
    %v3737 = vmax.f32 %v3673, 0.0
    %v3738 = vmax.f32 %v3674, 0.0
    %v3739 = vmax.f32 %v3675, 0.0
    %v3740 = vmax.f32 %v3676, 0.0
    %v3741 = vmax.f32 %v3677, 0.0
    %v3742 = vmax.f32 %v3678, 0.0
    %v3743 = vmax.f32 %v3679, 0.0
    %v3744 = vmax.f32 %v3680, 0.0
    %v3745 = vmax.f32 %v3681, 0.0
    %v3746 = vmax.f32 %v3682, 0.0
    %v3747 = vmax.f32 %v3683, 0.0
    %v3748 = vmax.f32 %v3684, 0.0
    %v3749 = vmax.f32 %v3685, 0.0
    %v3750 = vmax.f32 %v3686, 0.0
    %v3751 = vmax.f32 %v3687, 0.0
    %v3752 = vmax.f32 %v3688, 0.0
    %v3753 = vmax.f32 %v3689, 0.0
    %3754 = vst [vmem:[%s91 + $0x8] sm:$0xff] %v3690
    %3755 = vst [vmem:[%s91 + $0x10] sm:$0xff] %v3691
    %3756 = vst [vmem:[%s91 + $0x28] sm:$0xff] %v3692
    %3757 = vst [vmem:[%s91 + $0x30] sm:$0xff] %v3693
    %3758 = vst [vmem:[%s91 + $0x48] sm:$0xff] %v3694
    %3759 = vst [vmem:[%s91 + $0x50] sm:$0xff] %v3695
    %3760 = vst [vmem:[%s91 + $0x68] sm:$0xff] %v3696
    %3761 = vst [vmem:[%s91 + $0x70] sm:$0xff] %v3697
    %3762 = vst [vmem:[%s91 + $0x88] sm:$0xff] %v3698
    %3763 = vst [vmem:[%s91 + $0x90] sm:$0xff] %v3699
    %3764 = vst [vmem:[%s91 + $0xa8] sm:$0xff] %v3700
    %3765 = vst [vmem:[%s91 + $0xb0] sm:$0xff] %v3701
    %3766 = vst [vmem:[%s91 + $0xc8] sm:$0xff] %v3702
    %3767 = vst [vmem:[%s91 + $0xd0] sm:$0xff] %v3703
    %3768 = vst [vmem:[%s91 + $0xe8] sm:$0xff] %v3704
    %3769 = vst [vmem:[%s91 + $0xf0] sm:$0xff] %v3705
    %3770 = vst [vmem:[%s91 + $0x108] sm:$0xff] %v3706
    %3771 = vst [vmem:[%s91 + $0x110] sm:$0xff] %v3707
    %3772 = vst [vmem:[%s91 + $0x128] sm:$0xff] %v3708
    %3773 = vst [vmem:[%s91 + $0x130] sm:$0xff] %v3709
    %3774 = vst [vmem:[%s91 + $0x148] sm:$0xff] %v3710
    %3775 = vst [vmem:[%s91 + $0x150] sm:$0xff] %v3711
    %3776 = vst [vmem:[%s91 + $0x168] sm:$0xff] %v3712
    %3777 = vst [vmem:[%s91 + $0x170] sm:$0xff] %v3713
    %3778 = vst [vmem:[%s91 + $0x188] sm:$0xff] %v3714
    %3779 = vst [vmem:[%s91 + $0x190] sm:$0xff] %v3715
    %3780 = vst [vmem:[%s91 + $0x1a8] sm:$0xff] %v3716
    %3781 = vst [vmem:[%s91 + $0x1b0] sm:$0xff] %v3717
    %3782 = vst [vmem:[%s91 + $0x1c8] sm:$0xff] %v3718
    %3783 = vst [vmem:[%s91 + $0x1d0] sm:$0xff] %v3719
    %3784 = vst [vmem:[%s91 + $0x1e8] sm:$0xff] %v3720
    %3785 = vst [vmem:[%s91 + $0x1f0] sm:$0xff] %v3721
    %3786 = vst [vmem:[%s91 + $0x248] sm:$0xff] %v3722
    %3787 = vst [vmem:[%s91 + $0x250] sm:$0xff] %v3723
    %3788 = vst [vmem:[%s91 + $0x268] sm:$0xff] %v3724
    %3789 = vst [vmem:[%s91 + $0x270] sm:$0xff] %v3725
    %3790 = vst [vmem:[%s91 + $0x288] sm:$0xff] %v3726
    %3791 = vst [vmem:[%s91 + $0x290] sm:$0xff] %v3727
    %3792 = vst [vmem:[%s91 + $0x2a8] sm:$0xff] %v3728
    %3793 = vst [vmem:[%s91 + $0x2b0] sm:$0xff] %v3729
    %3794 = vst [vmem:[%s91 + $0x2c8] sm:$0xff] %v3730
    %3795 = vst [vmem:[%s91 + $0x2d0] sm:$0xff] %v3731
    %3796 = vst [vmem:[%s91 + $0x2e8] sm:$0xff] %v3732
    %3797 = vst [vmem:[%s91 + $0x2f0] sm:$0xff] %v3733
    %3798 = vst [vmem:[%s91 + $0x308] sm:$0xff] %v3734
    %3799 = vst [vmem:[%s91 + $0x310] sm:$0xff] %v3735
    %3800 = vst [vmem:[%s91 + $0x328] sm:$0xff] %v3736
    %3801 = vst [vmem:[%s91 + $0x330] sm:$0xff] %v3737
    %3802 = vst [vmem:[%s91 + $0x348] sm:$0xff] %v3738
    %3803 = vst [vmem:[%s91 + $0x350] sm:$0xff] %v3739
    %3804 = vst [vmem:[%s91 + $0x368] sm:$0xff] %v3740
    %3805 = vst [vmem:[%s91 + $0x370] sm:$0xff] %v3741
    %3806 = vst [vmem:[%s91 + $0x388] sm:$0xff] %v3742
    %3807 = vst [vmem:[%s91 + $0x390] sm:$0xff] %v3743
    %3808 = vst [vmem:[%s91 + $0x3a8] sm:$0xff] %v3744
    %3809 = vst [vmem:[%s91 + $0x3b0] sm:$0xff] %v3745
    %3810 = vst [vmem:[%s91 + $0x3c8] sm:$0xff] %v3746
    %3811 = vst [vmem:[%s91 + $0x3d0] sm:$0xff] %v3747
    %3812 = vst [vmem:[%s91 + $0x3e8] sm:$0xff] %v3748
    %3813 = vst [vmem:[%s91 + $0x3f0] sm:$0xff] %v3749
    %3814 = vst [vmem:[%s91 + $0x408] sm:$0xff] %v3750
    %3815 = vst [vmem:[%s91 + $0x410] sm:$0xff] %v3751
    %3816 = vst [vmem:[%s91 + $0x428] sm:$0xff] %v3752
    %3817 = vst [vmem:[%s91 + $0x430] sm:$0xff] %v3753
    %v3818 = vld [vmem:[#allocation2 + $0x7] sm:$0xff]
    %v3819 = vld [vmem:[#allocation2 + $0xf] sm:$0xff]
    %v3820 = vld [vmem:[#allocation2 + $0x27] sm:$0xff]
    %v3821 = vld [vmem:[#allocation2 + $0x2f] sm:$0xff]
    %v3822 = vld [vmem:[#allocation2 + $0x47] sm:$0xff]
    %v3823 = vld [vmem:[#allocation2 + $0x4f] sm:$0xff]
    %v3824 = vld [vmem:[#allocation2 + $0x67] sm:$0xff]
    %v3825 = vld [vmem:[#allocation2 + $0x6f] sm:$0xff]
    %v3826 = vld [vmem:[#allocation2 + $0x87] sm:$0xff]
    %v3827 = vld [vmem:[#allocation2 + $0x8f] sm:$0xff]
    %v3828 = vld [vmem:[#allocation2 + $0xa7] sm:$0xff]
    %v3829 = vld [vmem:[#allocation2 + $0xaf] sm:$0xff]
    %v3830 = vld [vmem:[#allocation2 + $0xc7] sm:$0xff]
    %v3831 = vld [vmem:[#allocation2 + $0xcf] sm:$0xff]
    %v3832 = vld [vmem:[#allocation2 + $0xe7] sm:$0xff]
    %v3833 = vld [vmem:[#allocation2 + $0xef] sm:$0xff]
    %v3834 = vld [vmem:[#allocation2 + $0x107] sm:$0xff]
    %v3835 = vld [vmem:[#allocation2 + $0x10f] sm:$0xff]
    %v3836 = vld [vmem:[#allocation2 + $0x127] sm:$0xff]
    %v3837 = vld [vmem:[#allocation2 + $0x12f] sm:$0xff]
    %v3838 = vld [vmem:[#allocation2 + $0x147] sm:$0xff]
    %v3839 = vld [vmem:[#allocation2 + $0x14f] sm:$0xff]
    %v3840 = vld [vmem:[#allocation2 + $0x167] sm:$0xff]
    %v3841 = vld [vmem:[#allocation2 + $0x16f] sm:$0xff]
    %v3842 = vld [vmem:[#allocation2 + $0x187] sm:$0xff]
    %v3843 = vld [vmem:[#allocation2 + $0x18f] sm:$0xff]
    %v3844 = vld [vmem:[#allocation2 + $0x1a7] sm:$0xff]
    %v3845 = vld [vmem:[#allocation2 + $0x1af] sm:$0xff]
    %v3846 = vld [vmem:[#allocation2 + $0x1c7] sm:$0xff]
    %v3847 = vld [vmem:[#allocation2 + $0x1cf] sm:$0xff]
    %v3848 = vld [vmem:[#allocation2 + $0x1e7] sm:$0xff]
    %v3849 = vld [vmem:[#allocation2 + $0x1ef] sm:$0xff]
    %v3850 = vld [vmem:[#allocation2 + $0x247] sm:$0xff]
    %v3851 = vld [vmem:[#allocation2 + $0x24f] sm:$0xff]
    %v3852 = vld [vmem:[#allocation2 + $0x267] sm:$0xff]
    %v3853 = vld [vmem:[#allocation2 + $0x26f] sm:$0xff]
    %v3854 = vld [vmem:[#allocation2 + $0x287] sm:$0xff]
    %v3855 = vld [vmem:[#allocation2 + $0x28f] sm:$0xff]
    %v3856 = vld [vmem:[#allocation2 + $0x2a7] sm:$0xff]
    %v3857 = vld [vmem:[#allocation2 + $0x2af] sm:$0xff]
    %v3858 = vld [vmem:[#allocation2 + $0x2c7] sm:$0xff]
    %v3859 = vld [vmem:[#allocation2 + $0x2cf] sm:$0xff]
    %v3860 = vld [vmem:[#allocation2 + $0x2e7] sm:$0xff]
    %v3861 = vld [vmem:[#allocation2 + $0x2ef] sm:$0xff]
    %v3862 = vld [vmem:[#allocation2 + $0x307] sm:$0xff]
    %v3863 = vld [vmem:[#allocation2 + $0x30f] sm:$0xff]
    %v3864 = vld [vmem:[#allocation2 + $0x327] sm:$0xff]
    %v3865 = vld [vmem:[#allocation2 + $0x32f] sm:$0xff]
    %v3866 = vld [vmem:[#allocation2 + $0x347] sm:$0xff]
    %v3867 = vld [vmem:[#allocation2 + $0x34f] sm:$0xff]
    %v3868 = vld [vmem:[#allocation2 + $0x367] sm:$0xff]
    %v3869 = vld [vmem:[#allocation2 + $0x36f] sm:$0xff]
    %v3870 = vld [vmem:[#allocation2 + $0x387] sm:$0xff]
    %v3871 = vld [vmem:[#allocation2 + $0x38f] sm:$0xff]
    %v3872 = vld [vmem:[#allocation2 + $0x3a7] sm:$0xff]
    %v3873 = vld [vmem:[#allocation2 + $0x3af] sm:$0xff]
    %v3874 = vld [vmem:[#allocation2 + $0x3c7] sm:$0xff]
    %v3875 = vld [vmem:[#allocation2 + $0x3cf] sm:$0xff]
    %v3876 = vld [vmem:[#allocation2 + $0x3e7] sm:$0xff]
    %v3877 = vld [vmem:[#allocation2 + $0x3ef] sm:$0xff]
    %v3878 = vld [vmem:[#allocation2 + $0x407] sm:$0xff]
    %v3879 = vld [vmem:[#allocation2 + $0x40f] sm:$0xff]
    %v3880 = vld [vmem:[#allocation2 + $0x427] sm:$0xff]
    %v3881 = vld [vmem:[#allocation2 + $0x42f] sm:$0xff]
    %v3882 = vld [vmem:[#allocation8] sm:$0xff]
    %v3883 = vld [vmem:[#allocation8 + $0x8] sm:$0xff]
    %v3884 = vld [vmem:[#allocation8 + $0x10] sm:$0xff]
    %v3885 = vld [vmem:[#allocation8 + $0x18] sm:$0xff]
    %v3886 = vld [vmem:[#allocation8 + $0x20] sm:$0xff]
    %v3887 = vld [vmem:[#allocation8 + $0x28] sm:$0xff]
    %v3888 = vld [vmem:[#allocation8 + $0x30] sm:$0xff]
    %v3889 = vld [vmem:[#allocation8 + $0x38] sm:$0xff]
    %v3890 = vld [vmem:[#allocation8 + $0x40] sm:$0xff]
    %v3891 = vld [vmem:[#allocation8 + $0x48] sm:$0xff]
    %v3892 = vld [vmem:[#allocation8 + $0x50] sm:$0xff]
    %v3893 = vld [vmem:[#allocation8 + $0x58] sm:$0xff]
    %v3894 = vld [vmem:[#allocation8 + $0x60] sm:$0xff]
    %v3895 = vld [vmem:[#allocation8 + $0x68] sm:$0xff]
    %v3896 = vld [vmem:[#allocation8 + $0x70] sm:$0xff]
    %v3897 = vld [vmem:[#allocation8 + $0x78] sm:$0xff]
    %v3898 = vld [vmem:[#allocation2 + $0x8] sm:$0xff]
    %v3899 = vld [vmem:[#allocation2 + $0x10] sm:$0xff]
    %v3900 = vld [vmem:[#allocation2 + $0x28] sm:$0xff]
    %v3901 = vld [vmem:[#allocation2 + $0x30] sm:$0xff]
    %v3902 = vld [vmem:[#allocation2 + $0x48] sm:$0xff]
    %v3903 = vld [vmem:[#allocation2 + $0x50] sm:$0xff]
    %v3904 = vld [vmem:[#allocation2 + $0x68] sm:$0xff]
    %v3905 = vld [vmem:[#allocation2 + $0x70] sm:$0xff]
    %v3906 = vld [vmem:[#allocation2 + $0x88] sm:$0xff]
    %v3907 = vld [vmem:[#allocation2 + $0x90] sm:$0xff]
    %v3908 = vld [vmem:[#allocation2 + $0xa8] sm:$0xff]
    %v3909 = vld [vmem:[#allocation2 + $0xb0] sm:$0xff]
    %v3910 = vld [vmem:[#allocation2 + $0xc8] sm:$0xff]
    %v3911 = vld [vmem:[#allocation2 + $0xd0] sm:$0xff]
    %v3912 = vld [vmem:[#allocation2 + $0xe8] sm:$0xff]
    %v3913 = vld [vmem:[#allocation2 + $0xf0] sm:$0xff]
    %v3914 = vld [vmem:[#allocation2 + $0x108] sm:$0xff]
    %v3915 = vld [vmem:[#allocation2 + $0x110] sm:$0xff]
    %v3916 = vld [vmem:[#allocation2 + $0x128] sm:$0xff]
    %v3917 = vld [vmem:[#allocation2 + $0x130] sm:$0xff]
    %v3918 = vld [vmem:[#allocation2 + $0x148] sm:$0xff]
    %v3919 = vld [vmem:[#allocation2 + $0x150] sm:$0xff]
    %v3920 = vld [vmem:[#allocation2 + $0x168] sm:$0xff]
    %v3921 = vld [vmem:[#allocation2 + $0x170] sm:$0xff]
    %v3922 = vld [vmem:[#allocation2 + $0x188] sm:$0xff]
    %v3923 = vld [vmem:[#allocation2 + $0x190] sm:$0xff]
    %v3924 = vld [vmem:[#allocation2 + $0x1a8] sm:$0xff]
    %v3925 = vld [vmem:[#allocation2 + $0x1b0] sm:$0xff]
    %v3926 = vld [vmem:[#allocation2 + $0x1c8] sm:$0xff]
    %v3927 = vld [vmem:[#allocation2 + $0x1d0] sm:$0xff]
    %v3928 = vld [vmem:[#allocation2 + $0x1e8] sm:$0xff]
    %v3929 = vld [vmem:[#allocation2 + $0x1f0] sm:$0xff]
    %v3930 = vld [vmem:[#allocation2 + $0x248] sm:$0xff]
    %v3931 = vld [vmem:[#allocation2 + $0x250] sm:$0xff]
    %v3932 = vld [vmem:[#allocation2 + $0x268] sm:$0xff]
    %v3933 = vld [vmem:[#allocation2 + $0x270] sm:$0xff]
    %v3934 = vld [vmem:[#allocation2 + $0x288] sm:$0xff]
    %v3935 = vld [vmem:[#allocation2 + $0x290] sm:$0xff]
    %v3936 = vld [vmem:[#allocation2 + $0x2a8] sm:$0xff]
    %v3937 = vld [vmem:[#allocation2 + $0x2b0] sm:$0xff]
    %v3938 = vld [vmem:[#allocation2 + $0x2c8] sm:$0xff]
    %v3939 = vld [vmem:[#allocation2 + $0x2d0] sm:$0xff]
    %v3940 = vld [vmem:[#allocation2 + $0x2e8] sm:$0xff]
    %v3941 = vld [vmem:[#allocation2 + $0x2f0] sm:$0xff]
    %v3942 = vld [vmem:[#allocation2 + $0x308] sm:$0xff]
    %v3943 = vld [vmem:[#allocation2 + $0x310] sm:$0xff]
    %v3944 = vld [vmem:[#allocation2 + $0x328] sm:$0xff]
    %v3945 = vld [vmem:[#allocation2 + $0x330] sm:$0xff]
    %v3946 = vld [vmem:[#allocation2 + $0x348] sm:$0xff]
    %v3947 = vld [vmem:[#allocation2 + $0x350] sm:$0xff]
    %v3948 = vld [vmem:[#allocation2 + $0x368] sm:$0xff]
    %v3949 = vld [vmem:[#allocation2 + $0x370] sm:$0xff]
    %v3950 = vld [vmem:[#allocation2 + $0x388] sm:$0xff]
    %v3951 = vld [vmem:[#allocation2 + $0x390] sm:$0xff]
    %v3952 = vld [vmem:[#allocation2 + $0x3a8] sm:$0xff]
    %v3953 = vld [vmem:[#allocation2 + $0x3b0] sm:$0xff]
    %v3954 = vld [vmem:[#allocation2 + $0x3c8] sm:$0xff]
    %v3955 = vld [vmem:[#allocation2 + $0x3d0] sm:$0xff]
    %v3956 = vld [vmem:[#allocation2 + $0x3e8] sm:$0xff]
    %v3957 = vld [vmem:[#allocation2 + $0x3f0] sm:$0xff]
    %v3958 = vld [vmem:[#allocation2 + $0x408] sm:$0xff]
    %v3959 = vld [vmem:[#allocation2 + $0x410] sm:$0xff]
    %v3960 = vld [vmem:[#allocation2 + $0x428] sm:$0xff]
    %v3961 = vld [vmem:[#allocation2 + $0x430] sm:$0xff]
    %v3962 = vld [vmem:[#allocation8 + $0x80] sm:$0xff]
    %v3963 = vld [vmem:[#allocation8 + $0x88] sm:$0xff]
    %v3964 = vld [vmem:[#allocation8 + $0x90] sm:$0xff]
    %v3965 = vld [vmem:[#allocation8 + $0x98] sm:$0xff]
    %v3966 = vld [vmem:[#allocation8 + $0xa0] sm:$0xff]
    %v3967 = vld [vmem:[#allocation8 + $0xa8] sm:$0xff]
    %v3968 = vld [vmem:[#allocation8 + $0xb0] sm:$0xff]
    %v3969 = vld [vmem:[#allocation8 + $0xb8] sm:$0xff]
    %v3970 = vld [vmem:[#allocation8 + $0xc0] sm:$0xff]
    %v3971 = vld [vmem:[#allocation8 + $0xc8] sm:$0xff]
    %v3972 = vld [vmem:[#allocation8 + $0xd0] sm:$0xff]
    %v3973 = vld [vmem:[#allocation8 + $0xd8] sm:$0xff]
    %v3974 = vld [vmem:[#allocation8 + $0xe0] sm:$0xff]
    %v3975 = vld [vmem:[#allocation8 + $0xe8] sm:$0xff]
    %v3976 = vld [vmem:[#allocation8 + $0xf0] sm:$0xff]
    %v3977 = vld [vmem:[#allocation8 + $0xf8] sm:$0xff]
    %3978 = vmatpush.msra.mxu0 %v3977
    %3979 = vmatpush.msra.mxu0 %v3976
    %3980 = vmatpush.msra.mxu0 %v3975
    %3981 = vmatpush.msra.mxu0 %v3974
    %3982 = vmatpush.msra.mxu0 %v3973
    %3983 = vmatpush.msra.mxu0 %v3972
    %3984 = vmatpush.msra.mxu0 %v3971
    %3985 = vmatpush.msra.mxu0 %v3970
    %3986 = vmatpush.msra.mxu0 %v3969
    %3987 = vmatpush.msra.mxu0 %v3968
    %3988 = vmatpush.msra.mxu0 %v3967
    %3989 = vmatpush.msra.mxu0 %v3966
    %3990 = vmatpush.msra.mxu0 %v3965
    %3991 = vmatpush.msra.mxu0 %v3964
    %3992 = vmatpush.msra.mxu0 %v3963
    %3993 = vmatpush.msra.mxu0 %v3962
    %3994 = vmatmul.f32.gmra.mxu0 %v3898
    %v3995 = vpop.f32.mrf.mxu0
    %v3996 = vadd.f32 0.0, %v3995
    %3997 = vmatmul.f32.gmra.mxu0 %v3899
    %v3998 = vpop.f32.mrf.mxu0
    %v3999 = vadd.f32 0.0, %v3998
    %4000 = vmatmul.f32.gmra.mxu0 %v3900
    %v4001 = vpop.f32.mrf.mxu0
    %v4002 = vadd.f32 0.0, %v4001
    %4003 = vmatmul.f32.gmra.mxu0 %v3901
    %v4004 = vpop.f32.mrf.mxu0
    %v4005 = vadd.f32 0.0, %v4004
    %4006 = vmatmul.f32.gmra.mxu0 %v3902
    %v4007 = vpop.f32.mrf.mxu0
    %v4008 = vadd.f32 0.0, %v4007
    %4009 = vmatmul.f32.gmra.mxu0 %v3903
    %v4010 = vpop.f32.mrf.mxu0
    %v4011 = vadd.f32 0.0, %v4010
    %4012 = vmatmul.f32.gmra.mxu0 %v3904
    %v4013 = vpop.f32.mrf.mxu0
    %v4014 = vadd.f32 0.0, %v4013
    %4015 = vmatmul.f32.gmra.mxu0 %v3905
    %v4016 = vpop.f32.mrf.mxu0
    %v4017 = vadd.f32 0.0, %v4016
    %4018 = vmatmul.f32.gmra.mxu0 %v3906
    %v4019 = vpop.f32.mrf.mxu0
    %v4020 = vadd.f32 0.0, %v4019
    %4021 = vmatmul.f32.gmra.mxu0 %v3907
    %v4022 = vpop.f32.mrf.mxu0
    %v4023 = vadd.f32 0.0, %v4022
    %4024 = vmatmul.f32.gmra.mxu0 %v3908
    %v4025 = vpop.f32.mrf.mxu0
    %v4026 = vadd.f32 0.0, %v4025
    %4027 = vmatmul.f32.gmra.mxu0 %v3909
    %v4028 = vpop.f32.mrf.mxu0
    %v4029 = vadd.f32 0.0, %v4028
    %4030 = vmatmul.f32.gmra.mxu0 %v3910
    %v4031 = vpop.f32.mrf.mxu0
    %v4032 = vadd.f32 0.0, %v4031
    %4033 = vmatmul.f32.gmra.mxu0 %v3911
    %v4034 = vpop.f32.mrf.mxu0
    %v4035 = vadd.f32 0.0, %v4034
    %4036 = vmatmul.f32.gmra.mxu0 %v3912
    %v4037 = vpop.f32.mrf.mxu0
    %v4038 = vadd.f32 0.0, %v4037
    %4039 = vmatmul.f32.gmra.mxu0 %v3913
    %v4040 = vpop.f32.mrf.mxu0
    %v4041 = vadd.f32 0.0, %v4040
    %4042 = vmatmul.f32.gmra.mxu0 %v3914
    %v4043 = vpop.f32.mrf.mxu0
    %v4044 = vadd.f32 0.0, %v4043
    %4045 = vmatmul.f32.gmra.mxu0 %v3915
    %v4046 = vpop.f32.mrf.mxu0
    %v4047 = vadd.f32 0.0, %v4046
    %4048 = vmatmul.f32.gmra.mxu0 %v3916
    %v4049 = vpop.f32.mrf.mxu0
    %v4050 = vadd.f32 0.0, %v4049
    %4051 = vmatmul.f32.gmra.mxu0 %v3917
    %v4052 = vpop.f32.mrf.mxu0
    %v4053 = vadd.f32 0.0, %v4052
    %4054 = vmatmul.f32.gmra.mxu0 %v3918
    %v4055 = vpop.f32.mrf.mxu0
    %v4056 = vadd.f32 0.0, %v4055
    %4057 = vmatmul.f32.gmra.mxu0 %v3919
    %v4058 = vpop.f32.mrf.mxu0
    %v4059 = vadd.f32 0.0, %v4058
    %4060 = vmatmul.f32.gmra.mxu0 %v3920
    %v4061 = vpop.f32.mrf.mxu0
    %v4062 = vadd.f32 0.0, %v4061
    %4063 = vmatmul.f32.gmra.mxu0 %v3921
    %v4064 = vpop.f32.mrf.mxu0
    %v4065 = vadd.f32 0.0, %v4064
    %4066 = vmatmul.f32.gmra.mxu0 %v3922
    %v4067 = vpop.f32.mrf.mxu0
    %v4068 = vadd.f32 0.0, %v4067
    %4069 = vmatmul.f32.gmra.mxu0 %v3923
    %v4070 = vpop.f32.mrf.mxu0
    %v4071 = vadd.f32 0.0, %v4070
    %4072 = vmatmul.f32.gmra.mxu0 %v3924
    %v4073 = vpop.f32.mrf.mxu0
    %v4074 = vadd.f32 0.0, %v4073
    %4075 = vmatmul.f32.gmra.mxu0 %v3925
    %v4076 = vpop.f32.mrf.mxu0
    %v4077 = vadd.f32 0.0, %v4076
    %4078 = vmatmul.f32.gmra.mxu0 %v3926
    %v4079 = vpop.f32.mrf.mxu0
    %v4080 = vadd.f32 0.0, %v4079
    %4081 = vmatmul.f32.gmra.mxu0 %v3927
    %v4082 = vpop.f32.mrf.mxu0
    %v4083 = vadd.f32 0.0, %v4082
    %4084 = vmatmul.f32.gmra.mxu0 %v3928
    %v4085 = vpop.f32.mrf.mxu0
    %v4086 = vadd.f32 0.0, %v4085
    %4087 = vmatmul.f32.gmra.mxu0 %v3929
    %v4088 = vpop.f32.mrf.mxu0
    %v4089 = vadd.f32 0.0, %v4088
    %4090 = vmatmul.f32.gmra.mxu0 %v3930
    %v4091 = vpop.f32.mrf.mxu0
    %v4092 = vadd.f32 0.0, %v4091
    %4093 = vmatmul.f32.gmra.mxu0 %v3931
    %v4094 = vpop.f32.mrf.mxu0
    %v4095 = vadd.f32 0.0, %v4094
    %4096 = vmatmul.f32.gmra.mxu0 %v3932
    %v4097 = vpop.f32.mrf.mxu0
    %v4098 = vadd.f32 0.0, %v4097
    %4099 = vmatmul.f32.gmra.mxu0 %v3933
    %v4100 = vpop.f32.mrf.mxu0
    %v4101 = vadd.f32 0.0, %v4100
    %4102 = vmatmul.f32.gmra.mxu0 %v3934
    %v4103 = vpop.f32.mrf.mxu0
    %v4104 = vadd.f32 0.0, %v4103
    %4105 = vmatmul.f32.gmra.mxu0 %v3935
    %v4106 = vpop.f32.mrf.mxu0
    %v4107 = vadd.f32 0.0, %v4106
    %4108 = vmatmul.f32.gmra.mxu0 %v3936
    %v4109 = vpop.f32.mrf.mxu0
    %v4110 = vadd.f32 0.0, %v4109
    %4111 = vmatmul.f32.gmra.mxu0 %v3937
    %v4112 = vpop.f32.mrf.mxu0
    %v4113 = vadd.f32 0.0, %v4112
    %4114 = vmatmul.f32.gmra.mxu0 %v3938
    %v4115 = vpop.f32.mrf.mxu0
    %v4116 = vadd.f32 0.0, %v4115
    %4117 = vmatmul.f32.gmra.mxu0 %v3939
    %v4118 = vpop.f32.mrf.mxu0
    %v4119 = vadd.f32 0.0, %v4118
    %4120 = vmatmul.f32.gmra.mxu0 %v3940
    %v4121 = vpop.f32.mrf.mxu0
    %v4122 = vadd.f32 0.0, %v4121
    %4123 = vmatmul.f32.gmra.mxu0 %v3941
    %v4124 = vpop.f32.mrf.mxu0
    %v4125 = vadd.f32 0.0, %v4124
    %4126 = vmatmul.f32.gmra.mxu0 %v3942
    %v4127 = vpop.f32.mrf.mxu0
    %v4128 = vadd.f32 0.0, %v4127
    %4129 = vmatmul.f32.gmra.mxu0 %v3943
    %v4130 = vpop.f32.mrf.mxu0
    %v4131 = vadd.f32 0.0, %v4130
    %4132 = vmatmul.f32.gmra.mxu0 %v3944
    %v4133 = vpop.f32.mrf.mxu0
    %v4134 = vadd.f32 0.0, %v4133
    %4135 = vmatmul.f32.gmra.mxu0 %v3945
    %v4136 = vpop.f32.mrf.mxu0
    %v4137 = vadd.f32 0.0, %v4136
    %4138 = vmatmul.f32.gmra.mxu0 %v3946
    %v4139 = vpop.f32.mrf.mxu0
    %v4140 = vadd.f32 0.0, %v4139
    %4141 = vmatmul.f32.gmra.mxu0 %v3947
    %v4142 = vpop.f32.mrf.mxu0
    %v4143 = vadd.f32 0.0, %v4142
    %4144 = vmatmul.f32.gmra.mxu0 %v3948
    %v4145 = vpop.f32.mrf.mxu0
    %v4146 = vadd.f32 0.0, %v4145
    %4147 = vmatmul.f32.gmra.mxu0 %v3949
    %v4148 = vpop.f32.mrf.mxu0
    %v4149 = vadd.f32 0.0, %v4148
    %4150 = vmatmul.f32.gmra.mxu0 %v3950
    %v4151 = vpop.f32.mrf.mxu0
    %v4152 = vadd.f32 0.0, %v4151
    %4153 = vmatmul.f32.gmra.mxu0 %v3951
    %v4154 = vpop.f32.mrf.mxu0
    %v4155 = vadd.f32 0.0, %v4154
    %4156 = vmatmul.f32.gmra.mxu0 %v3952
    %v4157 = vpop.f32.mrf.mxu0
    %v4158 = vadd.f32 0.0, %v4157
    %4159 = vmatmul.f32.gmra.mxu0 %v3953
    %v4160 = vpop.f32.mrf.mxu0
    %v4161 = vadd.f32 0.0, %v4160
    %4162 = vmatmul.f32.gmra.mxu0 %v3954
    %v4163 = vpop.f32.mrf.mxu0
    %v4164 = vadd.f32 0.0, %v4163
    %4165 = vmatmul.f32.gmra.mxu0 %v3955
    %v4166 = vpop.f32.mrf.mxu0
    %v4167 = vadd.f32 0.0, %v4166
    %4168 = vmatmul.f32.gmra.mxu0 %v3956
    %v4169 = vpop.f32.mrf.mxu0
    %v4170 = vadd.f32 0.0, %v4169
    %4171 = vmatmul.f32.gmra.mxu0 %v3957
    %v4172 = vpop.f32.mrf.mxu0
    %v4173 = vadd.f32 0.0, %v4172
    %4174 = vmatmul.f32.gmra.mxu0 %v3958
    %v4175 = vpop.f32.mrf.mxu0
    %v4176 = vadd.f32 0.0, %v4175
    %4177 = vmatmul.f32.gmra.mxu0 %v3959
    %v4178 = vpop.f32.mrf.mxu0
    %v4179 = vadd.f32 0.0, %v4178
    %4180 = vmatmul.f32.gmra.mxu0 %v3960
    %v4181 = vpop.f32.mrf.mxu0
    %v4182 = vadd.f32 0.0, %v4181
    %4183 = vmatmul.f32.gmra.mxu0 %v3961
    %v4184 = vpop.f32.mrf.mxu0
    %v4185 = vadd.f32 0.0, %v4184
    %4186 = vdwg.mxu0
    %4187 = vmatpush.msra.mxu0 %v3897
    %4188 = vmatpush.msra.mxu0 %v3896
    %4189 = vmatpush.msra.mxu0 %v3895
    %4190 = vmatpush.msra.mxu0 %v3894
    %4191 = vmatpush.msra.mxu0 %v3893
    %4192 = vmatpush.msra.mxu0 %v3892
    %4193 = vmatpush.msra.mxu0 %v3891
    %4194 = vmatpush.msra.mxu0 %v3890
    %4195 = vmatpush.msra.mxu0 %v3889
    %4196 = vmatpush.msra.mxu0 %v3888
    %4197 = vmatpush.msra.mxu0 %v3887
    %4198 = vmatpush.msra.mxu0 %v3886
    %4199 = vmatpush.msra.mxu0 %v3885
    %4200 = vmatpush.msra.mxu0 %v3884
    %4201 = vmatpush.msra.mxu0 %v3883
    %4202 = vmatpush.msra.mxu0 %v3882
    %4203 = vmatmul.f32.gmra.mxu0 %v3818
    %v4204 = vpop.f32.mrf.mxu0
    %v4205 = vadd.f32 %v3996, %v4204
    %4206 = vmatmul.f32.gmra.mxu0 %v3819
    %v4207 = vpop.f32.mrf.mxu0
    %v4208 = vadd.f32 %v3999, %v4207
    %4209 = vmatmul.f32.gmra.mxu0 %v3820
    %v4210 = vpop.f32.mrf.mxu0
    %v4211 = vadd.f32 %v4002, %v4210
    %4212 = vmatmul.f32.gmra.mxu0 %v3821
    %v4213 = vpop.f32.mrf.mxu0
    %v4214 = vadd.f32 %v4005, %v4213
    %4215 = vmatmul.f32.gmra.mxu0 %v3822
    %v4216 = vpop.f32.mrf.mxu0
    %v4217 = vadd.f32 %v4008, %v4216
    %4218 = vmatmul.f32.gmra.mxu0 %v3823
    %v4219 = vpop.f32.mrf.mxu0
    %v4220 = vadd.f32 %v4011, %v4219
    %4221 = vmatmul.f32.gmra.mxu0 %v3824
    %v4222 = vpop.f32.mrf.mxu0
    %v4223 = vadd.f32 %v4014, %v4222
    %4224 = vmatmul.f32.gmra.mxu0 %v3825
    %v4225 = vpop.f32.mrf.mxu0
    %v4226 = vadd.f32 %v4017, %v4225
    %4227 = vmatmul.f32.gmra.mxu0 %v3826
    %v4228 = vpop.f32.mrf.mxu0
    %v4229 = vadd.f32 %v4020, %v4228
    %4230 = vmatmul.f32.gmra.mxu0 %v3827
    %v4231 = vpop.f32.mrf.mxu0
    %v4232 = vadd.f32 %v4023, %v4231
    %4233 = vmatmul.f32.gmra.mxu0 %v3828
    %v4234 = vpop.f32.mrf.mxu0
    %v4235 = vadd.f32 %v4026, %v4234
    %4236 = vmatmul.f32.gmra.mxu0 %v3829
    %v4237 = vpop.f32.mrf.mxu0
    %v4238 = vadd.f32 %v4029, %v4237
    %4239 = vmatmul.f32.gmra.mxu0 %v3830
    %v4240 = vpop.f32.mrf.mxu0
    %v4241 = vadd.f32 %v4032, %v4240
    %4242 = vmatmul.f32.gmra.mxu0 %v3831
    %v4243 = vpop.f32.mrf.mxu0
    %v4244 = vadd.f32 %v4035, %v4243
    %4245 = vmatmul.f32.gmra.mxu0 %v3832
    %v4246 = vpop.f32.mrf.mxu0
    %v4247 = vadd.f32 %v4038, %v4246
    %4248 = vmatmul.f32.gmra.mxu0 %v3833
    %v4249 = vpop.f32.mrf.mxu0
    %v4250 = vadd.f32 %v4041, %v4249
    %4251 = vmatmul.f32.gmra.mxu0 %v3834
    %v4252 = vpop.f32.mrf.mxu0
    %v4253 = vadd.f32 %v4044, %v4252
    %4254 = vmatmul.f32.gmra.mxu0 %v3835
    %v4255 = vpop.f32.mrf.mxu0
    %v4256 = vadd.f32 %v4047, %v4255
    %4257 = vmatmul.f32.gmra.mxu0 %v3836
    %v4258 = vpop.f32.mrf.mxu0
    %v4259 = vadd.f32 %v4050, %v4258
    %4260 = vmatmul.f32.gmra.mxu0 %v3837
    %v4261 = vpop.f32.mrf.mxu0
    %v4262 = vadd.f32 %v4053, %v4261
    %4263 = vmatmul.f32.gmra.mxu0 %v3838
    %v4264 = vpop.f32.mrf.mxu0
    %v4265 = vadd.f32 %v4056, %v4264
    %4266 = vmatmul.f32.gmra.mxu0 %v3839
    %v4267 = vpop.f32.mrf.mxu0
    %v4268 = vadd.f32 %v4059, %v4267
    %4269 = vmatmul.f32.gmra.mxu0 %v3840
    %v4270 = vpop.f32.mrf.mxu0
    %v4271 = vadd.f32 %v4062, %v4270
    %4272 = vmatmul.f32.gmra.mxu0 %v3841
    %v4273 = vpop.f32.mrf.mxu0
    %v4274 = vadd.f32 %v4065, %v4273
    %4275 = vmatmul.f32.gmra.mxu0 %v3842
    %v4276 = vpop.f32.mrf.mxu0
    %v4277 = vadd.f32 %v4068, %v4276
    %4278 = vmatmul.f32.gmra.mxu0 %v3843
    %v4279 = vpop.f32.mrf.mxu0
    %v4280 = vadd.f32 %v4071, %v4279
    %4281 = vmatmul.f32.gmra.mxu0 %v3844
    %v4282 = vpop.f32.mrf.mxu0
    %v4283 = vadd.f32 %v4074, %v4282
    %4284 = vmatmul.f32.gmra.mxu0 %v3845
    %v4285 = vpop.f32.mrf.mxu0
    %v4286 = vadd.f32 %v4077, %v4285
    %4287 = vmatmul.f32.gmra.mxu0 %v3846
    %v4288 = vpop.f32.mrf.mxu0
    %v4289 = vadd.f32 %v4080, %v4288
    %4290 = vmatmul.f32.gmra.mxu0 %v3847
    %v4291 = vpop.f32.mrf.mxu0
    %v4292 = vadd.f32 %v4083, %v4291
    %4293 = vmatmul.f32.gmra.mxu0 %v3848
    %v4294 = vpop.f32.mrf.mxu0
    %v4295 = vadd.f32 %v4086, %v4294
    %4296 = vmatmul.f32.gmra.mxu0 %v3849
    %v4297 = vpop.f32.mrf.mxu0
    %v4298 = vadd.f32 %v4089, %v4297
    %4299 = vmatmul.f32.gmra.mxu0 %v3850
    %v4300 = vpop.f32.mrf.mxu0
    %v4301 = vadd.f32 %v4092, %v4300
    %4302 = vmatmul.f32.gmra.mxu0 %v3851
    %v4303 = vpop.f32.mrf.mxu0
    %v4304 = vadd.f32 %v4095, %v4303
    %4305 = vmatmul.f32.gmra.mxu0 %v3852
    %v4306 = vpop.f32.mrf.mxu0
    %v4307 = vadd.f32 %v4098, %v4306
    %4308 = vmatmul.f32.gmra.mxu0 %v3853
    %v4309 = vpop.f32.mrf.mxu0
    %v4310 = vadd.f32 %v4101, %v4309
    %4311 = vmatmul.f32.gmra.mxu0 %v3854
    %v4312 = vpop.f32.mrf.mxu0
    %v4313 = vadd.f32 %v4104, %v4312
    %4314 = vmatmul.f32.gmra.mxu0 %v3855
    %v4315 = vpop.f32.mrf.mxu0
    %v4316 = vadd.f32 %v4107, %v4315
    %4317 = vmatmul.f32.gmra.mxu0 %v3856
    %v4318 = vpop.f32.mrf.mxu0
    %v4319 = vadd.f32 %v4110, %v4318
    %4320 = vmatmul.f32.gmra.mxu0 %v3857
    %v4321 = vpop.f32.mrf.mxu0
    %v4322 = vadd.f32 %v4113, %v4321
    %4323 = vmatmul.f32.gmra.mxu0 %v3858
    %v4324 = vpop.f32.mrf.mxu0
    %v4325 = vadd.f32 %v4116, %v4324
    %4326 = vmatmul.f32.gmra.mxu0 %v3859
    %v4327 = vpop.f32.mrf.mxu0
    %v4328 = vadd.f32 %v4119, %v4327
    %4329 = vmatmul.f32.gmra.mxu0 %v3860
    %v4330 = vpop.f32.mrf.mxu0
    %v4331 = vadd.f32 %v4122, %v4330
    %4332 = vmatmul.f32.gmra.mxu0 %v3861
    %v4333 = vpop.f32.mrf.mxu0
    %v4334 = vadd.f32 %v4125, %v4333
    %4335 = vmatmul.f32.gmra.mxu0 %v3862
    %v4336 = vpop.f32.mrf.mxu0
    %v4337 = vadd.f32 %v4128, %v4336
    %4338 = vmatmul.f32.gmra.mxu0 %v3863
    %v4339 = vpop.f32.mrf.mxu0
    %v4340 = vadd.f32 %v4131, %v4339
    %4341 = vmatmul.f32.gmra.mxu0 %v3864
    %v4342 = vpop.f32.mrf.mxu0
    %v4343 = vadd.f32 %v4134, %v4342
    %4344 = vmatmul.f32.gmra.mxu0 %v3865
    %v4345 = vpop.f32.mrf.mxu0
    %v4346 = vadd.f32 %v4137, %v4345
    %4347 = vmatmul.f32.gmra.mxu0 %v3866
    %v4348 = vpop.f32.mrf.mxu0
    %v4349 = vadd.f32 %v4140, %v4348
    %4350 = vmatmul.f32.gmra.mxu0 %v3867
    %v4351 = vpop.f32.mrf.mxu0
    %v4352 = vadd.f32 %v4143, %v4351
    %4353 = vmatmul.f32.gmra.mxu0 %v3868
    %v4354 = vpop.f32.mrf.mxu0
    %v4355 = vadd.f32 %v4146, %v4354
    %4356 = vmatmul.f32.gmra.mxu0 %v3869
    %v4357 = vpop.f32.mrf.mxu0
    %v4358 = vadd.f32 %v4149, %v4357
    %4359 = vmatmul.f32.gmra.mxu0 %v3870
    %v4360 = vpop.f32.mrf.mxu0
    %v4361 = vadd.f32 %v4152, %v4360
    %4362 = vmatmul.f32.gmra.mxu0 %v3871
    %v4363 = vpop.f32.mrf.mxu0
    %v4364 = vadd.f32 %v4155, %v4363
    %4365 = vmatmul.f32.gmra.mxu0 %v3872
    %v4366 = vpop.f32.mrf.mxu0
    %v4367 = vadd.f32 %v4158, %v4366
    %4368 = vmatmul.f32.gmra.mxu0 %v3873
    %v4369 = vpop.f32.mrf.mxu0
    %v4370 = vadd.f32 %v4161, %v4369
    %4371 = vmatmul.f32.gmra.mxu0 %v3874
    %v4372 = vpop.f32.mrf.mxu0
    %v4373 = vadd.f32 %v4164, %v4372
    %4374 = vmatmul.f32.gmra.mxu0 %v3875
    %v4375 = vpop.f32.mrf.mxu0
    %v4376 = vadd.f32 %v4167, %v4375
    %4377 = vmatmul.f32.gmra.mxu0 %v3876
    %v4378 = vpop.f32.mrf.mxu0
    %v4379 = vadd.f32 %v4170, %v4378
    %4380 = vmatmul.f32.gmra.mxu0 %v3877
    %v4381 = vpop.f32.mrf.mxu0
    %v4382 = vadd.f32 %v4173, %v4381
    %4383 = vmatmul.f32.gmra.mxu0 %v3878
    %v4384 = vpop.f32.mrf.mxu0
    %v4385 = vadd.f32 %v4176, %v4384
    %4386 = vmatmul.f32.gmra.mxu0 %v3879
    %v4387 = vpop.f32.mrf.mxu0
    %v4388 = vadd.f32 %v4179, %v4387
    %4389 = vmatmul.f32.gmra.mxu0 %v3880
    %v4390 = vpop.f32.mrf.mxu0
    %v4391 = vadd.f32 %v4182, %v4390
    %4392 = vmatmul.f32.gmra.mxu0 %v3881
    %v4393 = vpop.f32.mrf.mxu0
    %v4394 = vadd.f32 %v4185, %v4393
    %4395 = vdwg.mxu0
    %v4396 = vld [vmem:[#allocation2 + $0x9] sm:$0xff]
    %v4397 = vld [vmem:[#allocation2 + $0x11] sm:$0xff]
    %v4398 = vld [vmem:[#allocation2 + $0x29] sm:$0xff]
    %v4399 = vld [vmem:[#allocation2 + $0x31] sm:$0xff]
    %v4400 = vld [vmem:[#allocation2 + $0x49] sm:$0xff]
    %v4401 = vld [vmem:[#allocation2 + $0x51] sm:$0xff]
    %v4402 = vld [vmem:[#allocation2 + $0x69] sm:$0xff]
    %v4403 = vld [vmem:[#allocation2 + $0x71] sm:$0xff]
    %v4404 = vld [vmem:[#allocation2 + $0x89] sm:$0xff]
    %v4405 = vld [vmem:[#allocation2 + $0x91] sm:$0xff]
    %v4406 = vld [vmem:[#allocation2 + $0xa9] sm:$0xff]
    %v4407 = vld [vmem:[#allocation2 + $0xb1] sm:$0xff]
    %v4408 = vld [vmem:[#allocation2 + $0xc9] sm:$0xff]
    %v4409 = vld [vmem:[#allocation2 + $0xd1] sm:$0xff]
    %v4410 = vld [vmem:[#allocation2 + $0xe9] sm:$0xff]
    %v4411 = vld [vmem:[#allocation2 + $0xf1] sm:$0xff]
    %v4412 = vld [vmem:[#allocation2 + $0x109] sm:$0xff]
    %v4413 = vld [vmem:[#allocation2 + $0x111] sm:$0xff]
    %v4414 = vld [vmem:[#allocation2 + $0x129] sm:$0xff]
    %v4415 = vld [vmem:[#allocation2 + $0x131] sm:$0xff]
    %v4416 = vld [vmem:[#allocation2 + $0x149] sm:$0xff]
    %v4417 = vld [vmem:[#allocation2 + $0x151] sm:$0xff]
    %v4418 = vld [vmem:[#allocation2 + $0x169] sm:$0xff]
    %v4419 = vld [vmem:[#allocation2 + $0x171] sm:$0xff]
    %v4420 = vld [vmem:[#allocation2 + $0x189] sm:$0xff]
    %v4421 = vld [vmem:[#allocation2 + $0x191] sm:$0xff]
    %v4422 = vld [vmem:[#allocation2 + $0x1a9] sm:$0xff]
    %v4423 = vld [vmem:[#allocation2 + $0x1b1] sm:$0xff]
    %v4424 = vld [vmem:[#allocation2 + $0x1c9] sm:$0xff]
    %v4425 = vld [vmem:[#allocation2 + $0x1d1] sm:$0xff]
    %v4426 = vld [vmem:[#allocation2 + $0x1e9] sm:$0xff]
    %v4427 = vld [vmem:[#allocation2 + $0x1f1] sm:$0xff]
    %v4428 = vld [vmem:[#allocation2 + $0x249] sm:$0xff]
    %v4429 = vld [vmem:[#allocation2 + $0x251] sm:$0xff]
    %v4430 = vld [vmem:[#allocation2 + $0x269] sm:$0xff]
    %v4431 = vld [vmem:[#allocation2 + $0x271] sm:$0xff]
    %v4432 = vld [vmem:[#allocation2 + $0x289] sm:$0xff]
    %v4433 = vld [vmem:[#allocation2 + $0x291] sm:$0xff]
    %v4434 = vld [vmem:[#allocation2 + $0x2a9] sm:$0xff]
    %v4435 = vld [vmem:[#allocation2 + $0x2b1] sm:$0xff]
    %v4436 = vld [vmem:[#allocation2 + $0x2c9] sm:$0xff]
    %v4437 = vld [vmem:[#allocation2 + $0x2d1] sm:$0xff]
    %v4438 = vld [vmem:[#allocation2 + $0x2e9] sm:$0xff]
    %v4439 = vld [vmem:[#allocation2 + $0x2f1] sm:$0xff]
    %v4440 = vld [vmem:[#allocation2 + $0x309] sm:$0xff]
    %v4441 = vld [vmem:[#allocation2 + $0x311] sm:$0xff]
    %v4442 = vld [vmem:[#allocation2 + $0x329] sm:$0xff]
    %v4443 = vld [vmem:[#allocation2 + $0x331] sm:$0xff]
    %v4444 = vld [vmem:[#allocation2 + $0x349] sm:$0xff]
    %v4445 = vld [vmem:[#allocation2 + $0x351] sm:$0xff]
    %v4446 = vld [vmem:[#allocation2 + $0x369] sm:$0xff]
    %v4447 = vld [vmem:[#allocation2 + $0x371] sm:$0xff]
    %v4448 = vld [vmem:[#allocation2 + $0x389] sm:$0xff]
    %v4449 = vld [vmem:[#allocation2 + $0x391] sm:$0xff]
    %v4450 = vld [vmem:[#allocation2 + $0x3a9] sm:$0xff]
    %v4451 = vld [vmem:[#allocation2 + $0x3b1] sm:$0xff]
    %v4452 = vld [vmem:[#allocation2 + $0x3c9] sm:$0xff]
    %v4453 = vld [vmem:[#allocation2 + $0x3d1] sm:$0xff]
    %v4454 = vld [vmem:[#allocation2 + $0x3e9] sm:$0xff]
    %v4455 = vld [vmem:[#allocation2 + $0x3f1] sm:$0xff]
    %v4456 = vld [vmem:[#allocation2 + $0x409] sm:$0xff]
    %v4457 = vld [vmem:[#allocation2 + $0x411] sm:$0xff]
    %v4458 = vld [vmem:[#allocation2 + $0x429] sm:$0xff]
    %v4459 = vld [vmem:[#allocation2 + $0x431] sm:$0xff]
    %v4460 = vld [vmem:[#allocation8 + $0x100] sm:$0xff]
    %v4461 = vld [vmem:[#allocation8 + $0x108] sm:$0xff]
    %v4462 = vld [vmem:[#allocation8 + $0x110] sm:$0xff]
    %v4463 = vld [vmem:[#allocation8 + $0x118] sm:$0xff]
    %v4464 = vld [vmem:[#allocation8 + $0x120] sm:$0xff]
    %v4465 = vld [vmem:[#allocation8 + $0x128] sm:$0xff]
    %v4466 = vld [vmem:[#allocation8 + $0x130] sm:$0xff]
    %v4467 = vld [vmem:[#allocation8 + $0x138] sm:$0xff]
    %v4468 = vld [vmem:[#allocation8 + $0x140] sm:$0xff]
    %v4469 = vld [vmem:[#allocation8 + $0x148] sm:$0xff]
    %v4470 = vld [vmem:[#allocation8 + $0x150] sm:$0xff]
    %v4471 = vld [vmem:[#allocation8 + $0x158] sm:$0xff]
    %v4472 = vld [vmem:[#allocation8 + $0x160] sm:$0xff]
    %v4473 = vld [vmem:[#allocation8 + $0x168] sm:$0xff]
    %v4474 = vld [vmem:[#allocation8 + $0x170] sm:$0xff]
    %v4475 = vld [vmem:[#allocation8 + $0x178] sm:$0xff]
    %4476 = vmatpush.msra.mxu0 %v4475
    %4477 = vmatpush.msra.mxu0 %v4474
    %4478 = vmatpush.msra.mxu0 %v4473
    %4479 = vmatpush.msra.mxu0 %v4472
    %4480 = vmatpush.msra.mxu0 %v4471
    %4481 = vmatpush.msra.mxu0 %v4470
    %4482 = vmatpush.msra.mxu0 %v4469
    %4483 = vmatpush.msra.mxu0 %v4468
    %4484 = vmatpush.msra.mxu0 %v4467
    %4485 = vmatpush.msra.mxu0 %v4466
    %4486 = vmatpush.msra.mxu0 %v4465
    %4487 = vmatpush.msra.mxu0 %v4464
    %4488 = vmatpush.msra.mxu0 %v4463
    %4489 = vmatpush.msra.mxu0 %v4462
    %4490 = vmatpush.msra.mxu0 %v4461
    %4491 = vmatpush.msra.mxu0 %v4460
    %4492 = vmatmul.f32.gmra.mxu0 %v4396
    %v4493 = vpop.f32.mrf.mxu0
    %v4494 = vadd.f32 0.0, %v4493
    %4495 = vmatmul.f32.gmra.mxu0 %v4397
    %v4496 = vpop.f32.mrf.mxu0
    %v4497 = vadd.f32 0.0, %v4496
    %4498 = vmatmul.f32.gmra.mxu0 %v4398
    %v4499 = vpop.f32.mrf.mxu0
    %v4500 = vadd.f32 0.0, %v4499
    %4501 = vmatmul.f32.gmra.mxu0 %v4399
    %v4502 = vpop.f32.mrf.mxu0
    %v4503 = vadd.f32 0.0, %v4502
    %4504 = vmatmul.f32.gmra.mxu0 %v4400
    %v4505 = vpop.f32.mrf.mxu0
    %v4506 = vadd.f32 0.0, %v4505
    %4507 = vmatmul.f32.gmra.mxu0 %v4401
    %v4508 = vpop.f32.mrf.mxu0
    %v4509 = vadd.f32 0.0, %v4508
    %4510 = vmatmul.f32.gmra.mxu0 %v4402
    %v4511 = vpop.f32.mrf.mxu0
    %v4512 = vadd.f32 0.0, %v4511
    %4513 = vmatmul.f32.gmra.mxu0 %v4403
    %v4514 = vpop.f32.mrf.mxu0
    %v4515 = vadd.f32 0.0, %v4514
    %4516 = vmatmul.f32.gmra.mxu0 %v4404
    %v4517 = vpop.f32.mrf.mxu0
    %v4518 = vadd.f32 0.0, %v4517
    %4519 = vmatmul.f32.gmra.mxu0 %v4405
    %v4520 = vpop.f32.mrf.mxu0
    %v4521 = vadd.f32 0.0, %v4520
    %4522 = vmatmul.f32.gmra.mxu0 %v4406
    %v4523 = vpop.f32.mrf.mxu0
    %v4524 = vadd.f32 0.0, %v4523
    %4525 = vmatmul.f32.gmra.mxu0 %v4407
    %v4526 = vpop.f32.mrf.mxu0
    %v4527 = vadd.f32 0.0, %v4526
    %4528 = vmatmul.f32.gmra.mxu0 %v4408
    %v4529 = vpop.f32.mrf.mxu0
    %v4530 = vadd.f32 0.0, %v4529
    %4531 = vmatmul.f32.gmra.mxu0 %v4409
    %v4532 = vpop.f32.mrf.mxu0
    %v4533 = vadd.f32 0.0, %v4532
    %4534 = vmatmul.f32.gmra.mxu0 %v4410
    %v4535 = vpop.f32.mrf.mxu0
    %v4536 = vadd.f32 0.0, %v4535
    %4537 = vmatmul.f32.gmra.mxu0 %v4411
    %v4538 = vpop.f32.mrf.mxu0
    %v4539 = vadd.f32 0.0, %v4538
    %4540 = vmatmul.f32.gmra.mxu0 %v4412
    %v4541 = vpop.f32.mrf.mxu0
    %v4542 = vadd.f32 0.0, %v4541
    %4543 = vmatmul.f32.gmra.mxu0 %v4413
    %v4544 = vpop.f32.mrf.mxu0
    %v4545 = vadd.f32 0.0, %v4544
    %4546 = vmatmul.f32.gmra.mxu0 %v4414
    %v4547 = vpop.f32.mrf.mxu0
    %v4548 = vadd.f32 0.0, %v4547
    %4549 = vmatmul.f32.gmra.mxu0 %v4415
    %v4550 = vpop.f32.mrf.mxu0
    %v4551 = vadd.f32 0.0, %v4550
    %4552 = vmatmul.f32.gmra.mxu0 %v4416
    %v4553 = vpop.f32.mrf.mxu0
    %v4554 = vadd.f32 0.0, %v4553
    %4555 = vmatmul.f32.gmra.mxu0 %v4417
    %v4556 = vpop.f32.mrf.mxu0
    %v4557 = vadd.f32 0.0, %v4556
    %4558 = vmatmul.f32.gmra.mxu0 %v4418
    %v4559 = vpop.f32.mrf.mxu0
    %v4560 = vadd.f32 0.0, %v4559
    %4561 = vmatmul.f32.gmra.mxu0 %v4419
    %v4562 = vpop.f32.mrf.mxu0
    %v4563 = vadd.f32 0.0, %v4562
    %4564 = vmatmul.f32.gmra.mxu0 %v4420
    %v4565 = vpop.f32.mrf.mxu0
    %v4566 = vadd.f32 0.0, %v4565
    %4567 = vmatmul.f32.gmra.mxu0 %v4421
    %v4568 = vpop.f32.mrf.mxu0
    %v4569 = vadd.f32 0.0, %v4568
    %4570 = vmatmul.f32.gmra.mxu0 %v4422
    %v4571 = vpop.f32.mrf.mxu0
    %v4572 = vadd.f32 0.0, %v4571
    %4573 = vmatmul.f32.gmra.mxu0 %v4423
    %v4574 = vpop.f32.mrf.mxu0
    %v4575 = vadd.f32 0.0, %v4574
    %4576 = vmatmul.f32.gmra.mxu0 %v4424
    %v4577 = vpop.f32.mrf.mxu0
    %v4578 = vadd.f32 0.0, %v4577
    %4579 = vmatmul.f32.gmra.mxu0 %v4425
    %v4580 = vpop.f32.mrf.mxu0
    %v4581 = vadd.f32 0.0, %v4580
    %4582 = vmatmul.f32.gmra.mxu0 %v4426
    %v4583 = vpop.f32.mrf.mxu0
    %v4584 = vadd.f32 0.0, %v4583
    %4585 = vmatmul.f32.gmra.mxu0 %v4427
    %v4586 = vpop.f32.mrf.mxu0
    %v4587 = vadd.f32 0.0, %v4586
    %4588 = vmatmul.f32.gmra.mxu0 %v4428
    %v4589 = vpop.f32.mrf.mxu0
    %v4590 = vadd.f32 0.0, %v4589
    %4591 = vmatmul.f32.gmra.mxu0 %v4429
    %v4592 = vpop.f32.mrf.mxu0
    %v4593 = vadd.f32 0.0, %v4592
    %4594 = vmatmul.f32.gmra.mxu0 %v4430
    %v4595 = vpop.f32.mrf.mxu0
    %v4596 = vadd.f32 0.0, %v4595
    %4597 = vmatmul.f32.gmra.mxu0 %v4431
    %v4598 = vpop.f32.mrf.mxu0
    %v4599 = vadd.f32 0.0, %v4598
    %4600 = vmatmul.f32.gmra.mxu0 %v4432
    %v4601 = vpop.f32.mrf.mxu0
    %v4602 = vadd.f32 0.0, %v4601
    %4603 = vmatmul.f32.gmra.mxu0 %v4433
    %v4604 = vpop.f32.mrf.mxu0
    %v4605 = vadd.f32 0.0, %v4604
    %4606 = vmatmul.f32.gmra.mxu0 %v4434
    %v4607 = vpop.f32.mrf.mxu0
    %v4608 = vadd.f32 0.0, %v4607
    %4609 = vmatmul.f32.gmra.mxu0 %v4435
    %v4610 = vpop.f32.mrf.mxu0
    %v4611 = vadd.f32 0.0, %v4610
    %4612 = vmatmul.f32.gmra.mxu0 %v4436
    %v4613 = vpop.f32.mrf.mxu0
    %v4614 = vadd.f32 0.0, %v4613
    %4615 = vmatmul.f32.gmra.mxu0 %v4437
    %v4616 = vpop.f32.mrf.mxu0
    %v4617 = vadd.f32 0.0, %v4616
    %4618 = vmatmul.f32.gmra.mxu0 %v4438
    %v4619 = vpop.f32.mrf.mxu0
    %v4620 = vadd.f32 0.0, %v4619
    %4621 = vmatmul.f32.gmra.mxu0 %v4439
    %v4622 = vpop.f32.mrf.mxu0
    %v4623 = vadd.f32 0.0, %v4622
    %4624 = vmatmul.f32.gmra.mxu0 %v4440
    %v4625 = vpop.f32.mrf.mxu0
    %v4626 = vadd.f32 0.0, %v4625
    %4627 = vmatmul.f32.gmra.mxu0 %v4441
    %v4628 = vpop.f32.mrf.mxu0
    %v4629 = vadd.f32 0.0, %v4628
    %4630 = vmatmul.f32.gmra.mxu0 %v4442
    %v4631 = vpop.f32.mrf.mxu0
    %v4632 = vadd.f32 0.0, %v4631
    %4633 = vmatmul.f32.gmra.mxu0 %v4443
    %v4634 = vpop.f32.mrf.mxu0
    %v4635 = vadd.f32 0.0, %v4634
    %4636 = vmatmul.f32.gmra.mxu0 %v4444
    %v4637 = vpop.f32.mrf.mxu0
    %v4638 = vadd.f32 0.0, %v4637
    %4639 = vmatmul.f32.gmra.mxu0 %v4445
    %v4640 = vpop.f32.mrf.mxu0
    %v4641 = vadd.f32 0.0, %v4640
    %4642 = vmatmul.f32.gmra.mxu0 %v4446
    %v4643 = vpop.f32.mrf.mxu0
    %v4644 = vadd.f32 0.0, %v4643
    %4645 = vmatmul.f32.gmra.mxu0 %v4447
    %v4646 = vpop.f32.mrf.mxu0
    %v4647 = vadd.f32 0.0, %v4646
    %4648 = vmatmul.f32.gmra.mxu0 %v4448
    %v4649 = vpop.f32.mrf.mxu0
    %v4650 = vadd.f32 0.0, %v4649
    %4651 = vmatmul.f32.gmra.mxu0 %v4449
    %v4652 = vpop.f32.mrf.mxu0
    %v4653 = vadd.f32 0.0, %v4652
    %4654 = vmatmul.f32.gmra.mxu0 %v4450
    %v4655 = vpop.f32.mrf.mxu0
    %v4656 = vadd.f32 0.0, %v4655
    %4657 = vmatmul.f32.gmra.mxu0 %v4451
    %v4658 = vpop.f32.mrf.mxu0
    %v4659 = vadd.f32 0.0, %v4658
    %4660 = vmatmul.f32.gmra.mxu0 %v4452
    %v4661 = vpop.f32.mrf.mxu0
    %v4662 = vadd.f32 0.0, %v4661
    %4663 = vmatmul.f32.gmra.mxu0 %v4453
    %v4664 = vpop.f32.mrf.mxu0
    %v4665 = vadd.f32 0.0, %v4664
    %4666 = vmatmul.f32.gmra.mxu0 %v4454
    %v4667 = vpop.f32.mrf.mxu0
    %v4668 = vadd.f32 0.0, %v4667
    %4669 = vmatmul.f32.gmra.mxu0 %v4455
    %v4670 = vpop.f32.mrf.mxu0
    %v4671 = vadd.f32 0.0, %v4670
    %4672 = vmatmul.f32.gmra.mxu0 %v4456
    %v4673 = vpop.f32.mrf.mxu0
    %v4674 = vadd.f32 0.0, %v4673
    %4675 = vmatmul.f32.gmra.mxu0 %v4457
    %v4676 = vpop.f32.mrf.mxu0
    %v4677 = vadd.f32 0.0, %v4676
    %4678 = vmatmul.f32.gmra.mxu0 %v4458
    %v4679 = vpop.f32.mrf.mxu0
    %v4680 = vadd.f32 0.0, %v4679
    %4681 = vmatmul.f32.gmra.mxu0 %v4459
    %v4682 = vpop.f32.mrf.mxu0
    %v4683 = vadd.f32 0.0, %v4682
    %4684 = vdwg.mxu0
    %v4685 = vadd.f32 %v4205, %v4494
    %v4686 = vadd.f32 %v4208, %v4497
    %v4687 = vadd.f32 %v4211, %v4500
    %v4688 = vadd.f32 %v4214, %v4503
    %v4689 = vadd.f32 %v4217, %v4506
    %v4690 = vadd.f32 %v4220, %v4509
    %v4691 = vadd.f32 %v4223, %v4512
    %v4692 = vadd.f32 %v4226, %v4515
    %v4693 = vadd.f32 %v4229, %v4518
    %v4694 = vadd.f32 %v4232, %v4521
    %v4695 = vadd.f32 %v4235, %v4524
    %v4696 = vadd.f32 %v4238, %v4527
    %v4697 = vadd.f32 %v4241, %v4530
    %v4698 = vadd.f32 %v4244, %v4533
    %v4699 = vadd.f32 %v4247, %v4536
    %v4700 = vadd.f32 %v4250, %v4539
    %v4701 = vadd.f32 %v4253, %v4542
    %v4702 = vadd.f32 %v4256, %v4545
    %v4703 = vadd.f32 %v4259, %v4548
    %v4704 = vadd.f32 %v4262, %v4551
    %v4705 = vadd.f32 %v4265, %v4554
    %v4706 = vadd.f32 %v4268, %v4557
    %v4707 = vadd.f32 %v4271, %v4560
    %v4708 = vadd.f32 %v4274, %v4563
    %v4709 = vadd.f32 %v4277, %v4566
    %v4710 = vadd.f32 %v4280, %v4569
    %v4711 = vadd.f32 %v4283, %v4572
    %v4712 = vadd.f32 %v4286, %v4575
    %v4713 = vadd.f32 %v4289, %v4578
    %v4714 = vadd.f32 %v4292, %v4581
    %v4715 = vadd.f32 %v4295, %v4584
    %v4716 = vadd.f32 %v4298, %v4587
    %v4717 = vadd.f32 %v4301, %v4590
    %v4718 = vadd.f32 %v4304, %v4593
    %v4719 = vadd.f32 %v4307, %v4596
    %v4720 = vadd.f32 %v4310, %v4599
    %v4721 = vadd.f32 %v4313, %v4602
    %v4722 = vadd.f32 %v4316, %v4605
    %v4723 = vadd.f32 %v4319, %v4608
    %v4724 = vadd.f32 %v4322, %v4611
    %v4725 = vadd.f32 %v4325, %v4614
    %v4726 = vadd.f32 %v4328, %v4617
    %v4727 = vadd.f32 %v4331, %v4620
    %v4728 = vadd.f32 %v4334, %v4623
    %v4729 = vadd.f32 %v4337, %v4626
    %v4730 = vadd.f32 %v4340, %v4629
    %v4731 = vadd.f32 %v4343, %v4632
    %v4732 = vadd.f32 %v4346, %v4635
    %v4733 = vadd.f32 %v4349, %v4638
    %v4734 = vadd.f32 %v4352, %v4641
    %v4735 = vadd.f32 %v4355, %v4644
    %v4736 = vadd.f32 %v4358, %v4647
    %v4737 = vadd.f32 %v4361, %v4650
    %v4738 = vadd.f32 %v4364, %v4653
    %v4739 = vadd.f32 %v4367, %v4656
    %v4740 = vadd.f32 %v4370, %v4659
    %v4741 = vadd.f32 %v4373, %v4662
    %v4742 = vadd.f32 %v4376, %v4665
    %v4743 = vadd.f32 %v4379, %v4668
    %v4744 = vadd.f32 %v4382, %v4671
    %v4745 = vadd.f32 %v4385, %v4674
    %v4746 = vadd.f32 %v4388, %v4677
    %v4747 = vadd.f32 %v4391, %v4680
    %v4748 = vadd.f32 %v4394, %v4683
    %v4749 = vld [vmem:[%s91 + $0x7] sm:$0xff]
    %v4750 = vld [vmem:[%s91 + $0xf] sm:$0xff]
    %v4751 = vld [vmem:[%s91 + $0x27] sm:$0xff]
    %v4752 = vld [vmem:[%s91 + $0x2f] sm:$0xff]
    %v4753 = vld [vmem:[%s91 + $0x47] sm:$0xff]
    %v4754 = vld [vmem:[%s91 + $0x4f] sm:$0xff]
    %v4755 = vld [vmem:[%s91 + $0x67] sm:$0xff]
    %v4756 = vld [vmem:[%s91 + $0x6f] sm:$0xff]
    %v4757 = vld [vmem:[%s91 + $0x87] sm:$0xff]
    %v4758 = vld [vmem:[%s91 + $0x8f] sm:$0xff]
    %v4759 = vld [vmem:[%s91 + $0xa7] sm:$0xff]
    %v4760 = vld [vmem:[%s91 + $0xaf] sm:$0xff]
    %v4761 = vld [vmem:[%s91 + $0xc7] sm:$0xff]
    %v4762 = vld [vmem:[%s91 + $0xcf] sm:$0xff]
    %v4763 = vld [vmem:[%s91 + $0xe7] sm:$0xff]
    %v4764 = vld [vmem:[%s91 + $0xef] sm:$0xff]
    %v4765 = vld [vmem:[%s91 + $0x107] sm:$0xff]
    %v4766 = vld [vmem:[%s91 + $0x10f] sm:$0xff]
    %v4767 = vld [vmem:[%s91 + $0x127] sm:$0xff]
    %v4768 = vld [vmem:[%s91 + $0x12f] sm:$0xff]
    %v4769 = vld [vmem:[%s91 + $0x147] sm:$0xff]
    %v4770 = vld [vmem:[%s91 + $0x14f] sm:$0xff]
    %v4771 = vld [vmem:[%s91 + $0x167] sm:$0xff]
    %v4772 = vld [vmem:[%s91 + $0x16f] sm:$0xff]
    %v4773 = vld [vmem:[%s91 + $0x187] sm:$0xff]
    %v4774 = vld [vmem:[%s91 + $0x18f] sm:$0xff]
    %v4775 = vld [vmem:[%s91 + $0x1a7] sm:$0xff]
    %v4776 = vld [vmem:[%s91 + $0x1af] sm:$0xff]
    %v4777 = vld [vmem:[%s91 + $0x1c7] sm:$0xff]
    %v4778 = vld [vmem:[%s91 + $0x1cf] sm:$0xff]
    %v4779 = vld [vmem:[%s91 + $0x1e7] sm:$0xff]
    %v4780 = vld [vmem:[%s91 + $0x1ef] sm:$0xff]
    %v4781 = vld [vmem:[%s91 + $0x247] sm:$0xff]
    %v4782 = vld [vmem:[%s91 + $0x24f] sm:$0xff]
    %v4783 = vld [vmem:[%s91 + $0x267] sm:$0xff]
    %v4784 = vld [vmem:[%s91 + $0x26f] sm:$0xff]
    %v4785 = vld [vmem:[%s91 + $0x287] sm:$0xff]
    %v4786 = vld [vmem:[%s91 + $0x28f] sm:$0xff]
    %v4787 = vld [vmem:[%s91 + $0x2a7] sm:$0xff]
    %v4788 = vld [vmem:[%s91 + $0x2af] sm:$0xff]
    %v4789 = vld [vmem:[%s91 + $0x2c7] sm:$0xff]
    %v4790 = vld [vmem:[%s91 + $0x2cf] sm:$0xff]
    %v4791 = vld [vmem:[%s91 + $0x2e7] sm:$0xff]
    %v4792 = vld [vmem:[%s91 + $0x2ef] sm:$0xff]
    %v4793 = vld [vmem:[%s91 + $0x307] sm:$0xff]
    %v4794 = vld [vmem:[%s91 + $0x30f] sm:$0xff]
    %v4795 = vld [vmem:[%s91 + $0x327] sm:$0xff]
    %v4796 = vld [vmem:[%s91 + $0x32f] sm:$0xff]
    %v4797 = vld [vmem:[%s91 + $0x347] sm:$0xff]
    %v4798 = vld [vmem:[%s91 + $0x34f] sm:$0xff]
    %v4799 = vld [vmem:[%s91 + $0x367] sm:$0xff]
    %v4800 = vld [vmem:[%s91 + $0x36f] sm:$0xff]
    %v4801 = vld [vmem:[%s91 + $0x387] sm:$0xff]
    %v4802 = vld [vmem:[%s91 + $0x38f] sm:$0xff]
    %v4803 = vld [vmem:[%s91 + $0x3a7] sm:$0xff]
    %v4804 = vld [vmem:[%s91 + $0x3af] sm:$0xff]
    %v4805 = vld [vmem:[%s91 + $0x3c7] sm:$0xff]
    %v4806 = vld [vmem:[%s91 + $0x3cf] sm:$0xff]
    %v4807 = vld [vmem:[%s91 + $0x3e7] sm:$0xff]
    %v4808 = vld [vmem:[%s91 + $0x3ef] sm:$0xff]
    %v4809 = vld [vmem:[%s91 + $0x407] sm:$0xff]
    %v4810 = vld [vmem:[%s91 + $0x40f] sm:$0xff]
    %v4811 = vld [vmem:[%s91 + $0x427] sm:$0xff]
    %v4812 = vld [vmem:[%s91 + $0x42f] sm:$0xff]
    %v4813 = vld [vmem:[#allocation8 + $0x180] sm:$0xff]
    %v4814 = vld [vmem:[#allocation8 + $0x188] sm:$0xff]
    %v4815 = vld [vmem:[#allocation8 + $0x190] sm:$0xff]
    %v4816 = vld [vmem:[#allocation8 + $0x198] sm:$0xff]
    %v4817 = vld [vmem:[#allocation8 + $0x1a0] sm:$0xff]
    %v4818 = vld [vmem:[#allocation8 + $0x1a8] sm:$0xff]
    %v4819 = vld [vmem:[#allocation8 + $0x1b0] sm:$0xff]
    %v4820 = vld [vmem:[#allocation8 + $0x1b8] sm:$0xff]
    %v4821 = vld [vmem:[#allocation8 + $0x1c0] sm:$0xff]
    %v4822 = vld [vmem:[#allocation8 + $0x1c8] sm:$0xff]
    %v4823 = vld [vmem:[#allocation8 + $0x1d0] sm:$0xff]
    %v4824 = vld [vmem:[#allocation8 + $0x1d8] sm:$0xff]
    %v4825 = vld [vmem:[#allocation8 + $0x1e0] sm:$0xff]
    %v4826 = vld [vmem:[#allocation8 + $0x1e8] sm:$0xff]
    %v4827 = vld [vmem:[#allocation8 + $0x1f0] sm:$0xff]
    %v4828 = vld [vmem:[#allocation8 + $0x1f8] sm:$0xff]
    %4829 = vmatpush.msra.mxu0 %v4828
    %4830 = vmatpush.msra.mxu0 %v4827
    %4831 = vmatpush.msra.mxu0 %v4826
    %4832 = vmatpush.msra.mxu0 %v4825
    %4833 = vmatpush.msra.mxu0 %v4824
    %4834 = vmatpush.msra.mxu0 %v4823
    %4835 = vmatpush.msra.mxu0 %v4822
    %4836 = vmatpush.msra.mxu0 %v4821
    %4837 = vmatpush.msra.mxu0 %v4820
    %4838 = vmatpush.msra.mxu0 %v4819
    %4839 = vmatpush.msra.mxu0 %v4818
    %4840 = vmatpush.msra.mxu0 %v4817
    %4841 = vmatpush.msra.mxu0 %v4816
    %4842 = vmatpush.msra.mxu0 %v4815
    %4843 = vmatpush.msra.mxu0 %v4814
    %4844 = vmatpush.msra.mxu0 %v4813
    %4845 = vmatmul.f32.gmra.mxu0 %v4749
    %v4846 = vpop.f32.mrf.mxu0
    %v4847 = vadd.f32 0.0, %v4846
    %4848 = vmatmul.f32.gmra.mxu0 %v4750
    %v4849 = vpop.f32.mrf.mxu0
    %v4850 = vadd.f32 0.0, %v4849
    %4851 = vmatmul.f32.gmra.mxu0 %v4751
    %v4852 = vpop.f32.mrf.mxu0
    %v4853 = vadd.f32 0.0, %v4852
    %4854 = vmatmul.f32.gmra.mxu0 %v4752
    %v4855 = vpop.f32.mrf.mxu0
    %v4856 = vadd.f32 0.0, %v4855
    %4857 = vmatmul.f32.gmra.mxu0 %v4753
    %v4858 = vpop.f32.mrf.mxu0
    %v4859 = vadd.f32 0.0, %v4858
    %4860 = vmatmul.f32.gmra.mxu0 %v4754
    %v4861 = vpop.f32.mrf.mxu0
    %v4862 = vadd.f32 0.0, %v4861
    %4863 = vmatmul.f32.gmra.mxu0 %v4755
    %v4864 = vpop.f32.mrf.mxu0
    %v4865 = vadd.f32 0.0, %v4864
    %4866 = vmatmul.f32.gmra.mxu0 %v4756
    %v4867 = vpop.f32.mrf.mxu0
    %v4868 = vadd.f32 0.0, %v4867
    %4869 = vmatmul.f32.gmra.mxu0 %v4757
    %v4870 = vpop.f32.mrf.mxu0
    %v4871 = vadd.f32 0.0, %v4870
    %4872 = vmatmul.f32.gmra.mxu0 %v4758
    %v4873 = vpop.f32.mrf.mxu0
    %v4874 = vadd.f32 0.0, %v4873
    %4875 = vmatmul.f32.gmra.mxu0 %v4759
    %v4876 = vpop.f32.mrf.mxu0
    %v4877 = vadd.f32 0.0, %v4876
    %4878 = vmatmul.f32.gmra.mxu0 %v4760
    %v4879 = vpop.f32.mrf.mxu0
    %v4880 = vadd.f32 0.0, %v4879
    %4881 = vmatmul.f32.gmra.mxu0 %v4761
    %v4882 = vpop.f32.mrf.mxu0
    %v4883 = vadd.f32 0.0, %v4882
    %4884 = vmatmul.f32.gmra.mxu0 %v4762
    %v4885 = vpop.f32.mrf.mxu0
    %v4886 = vadd.f32 0.0, %v4885
    %4887 = vmatmul.f32.gmra.mxu0 %v4763
    %v4888 = vpop.f32.mrf.mxu0
    %v4889 = vadd.f32 0.0, %v4888
    %4890 = vmatmul.f32.gmra.mxu0 %v4764
    %v4891 = vpop.f32.mrf.mxu0
    %v4892 = vadd.f32 0.0, %v4891
    %4893 = vmatmul.f32.gmra.mxu0 %v4765
    %v4894 = vpop.f32.mrf.mxu0
    %v4895 = vadd.f32 0.0, %v4894
    %4896 = vmatmul.f32.gmra.mxu0 %v4766
    %v4897 = vpop.f32.mrf.mxu0
    %v4898 = vadd.f32 0.0, %v4897
    %4899 = vmatmul.f32.gmra.mxu0 %v4767
    %v4900 = vpop.f32.mrf.mxu0
    %v4901 = vadd.f32 0.0, %v4900
    %4902 = vmatmul.f32.gmra.mxu0 %v4768
    %v4903 = vpop.f32.mrf.mxu0
    %v4904 = vadd.f32 0.0, %v4903
    %4905 = vmatmul.f32.gmra.mxu0 %v4769
    %v4906 = vpop.f32.mrf.mxu0
    %v4907 = vadd.f32 0.0, %v4906
    %4908 = vmatmul.f32.gmra.mxu0 %v4770
    %v4909 = vpop.f32.mrf.mxu0
    %v4910 = vadd.f32 0.0, %v4909
    %4911 = vmatmul.f32.gmra.mxu0 %v4771
    %v4912 = vpop.f32.mrf.mxu0
    %v4913 = vadd.f32 0.0, %v4912
    %4914 = vmatmul.f32.gmra.mxu0 %v4772
    %v4915 = vpop.f32.mrf.mxu0
    %v4916 = vadd.f32 0.0, %v4915
    %4917 = vmatmul.f32.gmra.mxu0 %v4773
    %v4918 = vpop.f32.mrf.mxu0
    %v4919 = vadd.f32 0.0, %v4918
    %4920 = vmatmul.f32.gmra.mxu0 %v4774
    %v4921 = vpop.f32.mrf.mxu0
    %v4922 = vadd.f32 0.0, %v4921
    %4923 = vmatmul.f32.gmra.mxu0 %v4775
    %v4924 = vpop.f32.mrf.mxu0
    %v4925 = vadd.f32 0.0, %v4924
    %4926 = vmatmul.f32.gmra.mxu0 %v4776
    %v4927 = vpop.f32.mrf.mxu0
    %v4928 = vadd.f32 0.0, %v4927
    %4929 = vmatmul.f32.gmra.mxu0 %v4777
    %v4930 = vpop.f32.mrf.mxu0
    %v4931 = vadd.f32 0.0, %v4930
    %4932 = vmatmul.f32.gmra.mxu0 %v4778
    %v4933 = vpop.f32.mrf.mxu0
    %v4934 = vadd.f32 0.0, %v4933
    %4935 = vmatmul.f32.gmra.mxu0 %v4779
    %v4936 = vpop.f32.mrf.mxu0
    %v4937 = vadd.f32 0.0, %v4936
    %4938 = vmatmul.f32.gmra.mxu0 %v4780
    %v4939 = vpop.f32.mrf.mxu0
    %v4940 = vadd.f32 0.0, %v4939
    %4941 = vmatmul.f32.gmra.mxu0 %v4781
    %v4942 = vpop.f32.mrf.mxu0
    %v4943 = vadd.f32 0.0, %v4942
    %4944 = vmatmul.f32.gmra.mxu0 %v4782
    %v4945 = vpop.f32.mrf.mxu0
    %v4946 = vadd.f32 0.0, %v4945
    %4947 = vmatmul.f32.gmra.mxu0 %v4783
    %v4948 = vpop.f32.mrf.mxu0
    %v4949 = vadd.f32 0.0, %v4948
    %4950 = vmatmul.f32.gmra.mxu0 %v4784
    %v4951 = vpop.f32.mrf.mxu0
    %v4952 = vadd.f32 0.0, %v4951
    %4953 = vmatmul.f32.gmra.mxu0 %v4785
    %v4954 = vpop.f32.mrf.mxu0
    %v4955 = vadd.f32 0.0, %v4954
    %4956 = vmatmul.f32.gmra.mxu0 %v4786
    %v4957 = vpop.f32.mrf.mxu0
    %v4958 = vadd.f32 0.0, %v4957
    %4959 = vmatmul.f32.gmra.mxu0 %v4787
    %v4960 = vpop.f32.mrf.mxu0
    %v4961 = vadd.f32 0.0, %v4960
    %4962 = vmatmul.f32.gmra.mxu0 %v4788
    %v4963 = vpop.f32.mrf.mxu0
    %v4964 = vadd.f32 0.0, %v4963
    %4965 = vmatmul.f32.gmra.mxu0 %v4789
    %v4966 = vpop.f32.mrf.mxu0
    %v4967 = vadd.f32 0.0, %v4966
    %4968 = vmatmul.f32.gmra.mxu0 %v4790
    %v4969 = vpop.f32.mrf.mxu0
    %v4970 = vadd.f32 0.0, %v4969
    %4971 = vmatmul.f32.gmra.mxu0 %v4791
    %v4972 = vpop.f32.mrf.mxu0
    %v4973 = vadd.f32 0.0, %v4972
    %4974 = vmatmul.f32.gmra.mxu0 %v4792
    %v4975 = vpop.f32.mrf.mxu0
    %v4976 = vadd.f32 0.0, %v4975
    %4977 = vmatmul.f32.gmra.mxu0 %v4793
    %v4978 = vpop.f32.mrf.mxu0
    %v4979 = vadd.f32 0.0, %v4978
    %4980 = vmatmul.f32.gmra.mxu0 %v4794
    %v4981 = vpop.f32.mrf.mxu0
    %v4982 = vadd.f32 0.0, %v4981
    %4983 = vmatmul.f32.gmra.mxu0 %v4795
    %v4984 = vpop.f32.mrf.mxu0
    %v4985 = vadd.f32 0.0, %v4984
    %4986 = vmatmul.f32.gmra.mxu0 %v4796
    %v4987 = vpop.f32.mrf.mxu0
    %v4988 = vadd.f32 0.0, %v4987
    %4989 = vmatmul.f32.gmra.mxu0 %v4797
    %v4990 = vpop.f32.mrf.mxu0
    %v4991 = vadd.f32 0.0, %v4990
    %4992 = vmatmul.f32.gmra.mxu0 %v4798
    %v4993 = vpop.f32.mrf.mxu0
    %v4994 = vadd.f32 0.0, %v4993
    %4995 = vmatmul.f32.gmra.mxu0 %v4799
    %v4996 = vpop.f32.mrf.mxu0
    %v4997 = vadd.f32 0.0, %v4996
    %4998 = vmatmul.f32.gmra.mxu0 %v4800
    %v4999 = vpop.f32.mrf.mxu0
    %v5000 = vadd.f32 0.0, %v4999
    %5001 = vmatmul.f32.gmra.mxu0 %v4801
    %v5002 = vpop.f32.mrf.mxu0
    %v5003 = vadd.f32 0.0, %v5002
    %5004 = vmatmul.f32.gmra.mxu0 %v4802
    %v5005 = vpop.f32.mrf.mxu0
    %v5006 = vadd.f32 0.0, %v5005
    %5007 = vmatmul.f32.gmra.mxu0 %v4803
    %v5008 = vpop.f32.mrf.mxu0
    %v5009 = vadd.f32 0.0, %v5008
    %5010 = vmatmul.f32.gmra.mxu0 %v4804
    %v5011 = vpop.f32.mrf.mxu0
    %v5012 = vadd.f32 0.0, %v5011
    %5013 = vmatmul.f32.gmra.mxu0 %v4805
    %v5014 = vpop.f32.mrf.mxu0
    %v5015 = vadd.f32 0.0, %v5014
    %5016 = vmatmul.f32.gmra.mxu0 %v4806
    %v5017 = vpop.f32.mrf.mxu0
    %v5018 = vadd.f32 0.0, %v5017
    %5019 = vmatmul.f32.gmra.mxu0 %v4807
    %v5020 = vpop.f32.mrf.mxu0
    %v5021 = vadd.f32 0.0, %v5020
    %5022 = vmatmul.f32.gmra.mxu0 %v4808
    %v5023 = vpop.f32.mrf.mxu0
    %v5024 = vadd.f32 0.0, %v5023
    %5025 = vmatmul.f32.gmra.mxu0 %v4809
    %v5026 = vpop.f32.mrf.mxu0
    %v5027 = vadd.f32 0.0, %v5026
    %5028 = vmatmul.f32.gmra.mxu0 %v4810
    %v5029 = vpop.f32.mrf.mxu0
    %v5030 = vadd.f32 0.0, %v5029
    %5031 = vmatmul.f32.gmra.mxu0 %v4811
    %v5032 = vpop.f32.mrf.mxu0
    %v5033 = vadd.f32 0.0, %v5032
    %5034 = vmatmul.f32.gmra.mxu0 %v4812
    %v5035 = vpop.f32.mrf.mxu0
    %v5036 = vadd.f32 0.0, %v5035
    %5037 = vdwg.mxu0
    %v5038 = vadd.f32 %v4685, %v4847
    %v5039 = vadd.f32 %v4686, %v4850
    %v5040 = vadd.f32 %v4687, %v4853
    %v5041 = vadd.f32 %v4688, %v4856
    %v5042 = vadd.f32 %v4689, %v4859
    %v5043 = vadd.f32 %v4690, %v4862
    %v5044 = vadd.f32 %v4691, %v4865
    %v5045 = vadd.f32 %v4692, %v4868
    %v5046 = vadd.f32 %v4693, %v4871
    %v5047 = vadd.f32 %v4694, %v4874
    %v5048 = vadd.f32 %v4695, %v4877
    %v5049 = vadd.f32 %v4696, %v4880
    %v5050 = vadd.f32 %v4697, %v4883
    %v5051 = vadd.f32 %v4698, %v4886
    %v5052 = vadd.f32 %v4699, %v4889
    %v5053 = vadd.f32 %v4700, %v4892
    %v5054 = vadd.f32 %v4701, %v4895
    %v5055 = vadd.f32 %v4702, %v4898
    %v5056 = vadd.f32 %v4703, %v4901
    %v5057 = vadd.f32 %v4704, %v4904
    %v5058 = vadd.f32 %v4705, %v4907
    %v5059 = vadd.f32 %v4706, %v4910
    %v5060 = vadd.f32 %v4707, %v4913
    %v5061 = vadd.f32 %v4708, %v4916
    %v5062 = vadd.f32 %v4709, %v4919
    %v5063 = vadd.f32 %v4710, %v4922
    %v5064 = vadd.f32 %v4711, %v4925
    %v5065 = vadd.f32 %v4712, %v4928
    %v5066 = vadd.f32 %v4713, %v4931
    %v5067 = vadd.f32 %v4714, %v4934
    %v5068 = vadd.f32 %v4715, %v4937
    %v5069 = vadd.f32 %v4716, %v4940
    %v5070 = vadd.f32 %v4717, %v4943
    %v5071 = vadd.f32 %v4718, %v4946
    %v5072 = vadd.f32 %v4719, %v4949
    %v5073 = vadd.f32 %v4720, %v4952
    %v5074 = vadd.f32 %v4721, %v4955
    %v5075 = vadd.f32 %v4722, %v4958
    %v5076 = vadd.f32 %v4723, %v4961
    %v5077 = vadd.f32 %v4724, %v4964
    %v5078 = vadd.f32 %v4725, %v4967
    %v5079 = vadd.f32 %v4726, %v4970
    %v5080 = vadd.f32 %v4727, %v4973
    %v5081 = vadd.f32 %v4728, %v4976
    %v5082 = vadd.f32 %v4729, %v4979
    %v5083 = vadd.f32 %v4730, %v4982
    %v5084 = vadd.f32 %v4731, %v4985
    %v5085 = vadd.f32 %v4732, %v4988
    %v5086 = vadd.f32 %v4733, %v4991
    %v5087 = vadd.f32 %v4734, %v4994
    %v5088 = vadd.f32 %v4735, %v4997
    %v5089 = vadd.f32 %v4736, %v5000
    %v5090 = vadd.f32 %v4737, %v5003
    %v5091 = vadd.f32 %v4738, %v5006
    %v5092 = vadd.f32 %v4739, %v5009
    %v5093 = vadd.f32 %v4740, %v5012
    %v5094 = vadd.f32 %v4741, %v5015
    %v5095 = vadd.f32 %v4742, %v5018
    %v5096 = vadd.f32 %v4743, %v5021
    %v5097 = vadd.f32 %v4744, %v5024
    %v5098 = vadd.f32 %v4745, %v5027
    %v5099 = vadd.f32 %v4746, %v5030
    %v5100 = vadd.f32 %v4747, %v5033
    %v5101 = vadd.f32 %v4748, %v5036
    %v5102 = vld [vmem:[%s91 + $0x8] sm:$0xff]
    %v5103 = vld [vmem:[%s91 + $0x10] sm:$0xff]
    %v5104 = vld [vmem:[%s91 + $0x28] sm:$0xff]
    %v5105 = vld [vmem:[%s91 + $0x30] sm:$0xff]
    %v5106 = vld [vmem:[%s91 + $0x48] sm:$0xff]
    %v5107 = vld [vmem:[%s91 + $0x50] sm:$0xff]
    %v5108 = vld [vmem:[%s91 + $0x68] sm:$0xff]
    %v5109 = vld [vmem:[%s91 + $0x70] sm:$0xff]
    %v5110 = vld [vmem:[%s91 + $0x88] sm:$0xff]
    %v5111 = vld [vmem:[%s91 + $0x90] sm:$0xff]
    %v5112 = vld [vmem:[%s91 + $0xa8] sm:$0xff]
    %v5113 = vld [vmem:[%s91 + $0xb0] sm:$0xff]
    %v5114 = vld [vmem:[%s91 + $0xc8] sm:$0xff]
    %v5115 = vld [vmem:[%s91 + $0xd0] sm:$0xff]
    %v5116 = vld [vmem:[%s91 + $0xe8] sm:$0xff]
    %v5117 = vld [vmem:[%s91 + $0xf0] sm:$0xff]
    %v5118 = vld [vmem:[%s91 + $0x108] sm:$0xff]
    %v5119 = vld [vmem:[%s91 + $0x110] sm:$0xff]
    %v5120 = vld [vmem:[%s91 + $0x128] sm:$0xff]
    %v5121 = vld [vmem:[%s91 + $0x130] sm:$0xff]
    %v5122 = vld [vmem:[%s91 + $0x148] sm:$0xff]
    %v5123 = vld [vmem:[%s91 + $0x150] sm:$0xff]
    %v5124 = vld [vmem:[%s91 + $0x168] sm:$0xff]
    %v5125 = vld [vmem:[%s91 + $0x170] sm:$0xff]
    %v5126 = vld [vmem:[%s91 + $0x188] sm:$0xff]
    %v5127 = vld [vmem:[%s91 + $0x190] sm:$0xff]
    %v5128 = vld [vmem:[%s91 + $0x1a8] sm:$0xff]
    %v5129 = vld [vmem:[%s91 + $0x1b0] sm:$0xff]
    %v5130 = vld [vmem:[%s91 + $0x1c8] sm:$0xff]
    %v5131 = vld [vmem:[%s91 + $0x1d0] sm:$0xff]
    %v5132 = vld [vmem:[%s91 + $0x1e8] sm:$0xff]
    %v5133 = vld [vmem:[%s91 + $0x1f0] sm:$0xff]
    %v5134 = vld [vmem:[%s91 + $0x248] sm:$0xff]
    %v5135 = vld [vmem:[%s91 + $0x250] sm:$0xff]
    %v5136 = vld [vmem:[%s91 + $0x268] sm:$0xff]
    %v5137 = vld [vmem:[%s91 + $0x270] sm:$0xff]
    %v5138 = vld [vmem:[%s91 + $0x288] sm:$0xff]
    %v5139 = vld [vmem:[%s91 + $0x290] sm:$0xff]
    %v5140 = vld [vmem:[%s91 + $0x2a8] sm:$0xff]
    %v5141 = vld [vmem:[%s91 + $0x2b0] sm:$0xff]
    %v5142 = vld [vmem:[%s91 + $0x2c8] sm:$0xff]
    %v5143 = vld [vmem:[%s91 + $0x2d0] sm:$0xff]
    %v5144 = vld [vmem:[%s91 + $0x2e8] sm:$0xff]
    %v5145 = vld [vmem:[%s91 + $0x2f0] sm:$0xff]
    %v5146 = vld [vmem:[%s91 + $0x308] sm:$0xff]
    %v5147 = vld [vmem:[%s91 + $0x310] sm:$0xff]
    %v5148 = vld [vmem:[%s91 + $0x328] sm:$0xff]
    %v5149 = vld [vmem:[%s91 + $0x330] sm:$0xff]
    %v5150 = vld [vmem:[%s91 + $0x348] sm:$0xff]
    %v5151 = vld [vmem:[%s91 + $0x350] sm:$0xff]
    %v5152 = vld [vmem:[%s91 + $0x368] sm:$0xff]
    %v5153 = vld [vmem:[%s91 + $0x370] sm:$0xff]
    %v5154 = vld [vmem:[%s91 + $0x388] sm:$0xff]
    %v5155 = vld [vmem:[%s91 + $0x390] sm:$0xff]
    %v5156 = vld [vmem:[%s91 + $0x3a8] sm:$0xff]
    %v5157 = vld [vmem:[%s91 + $0x3b0] sm:$0xff]
    %v5158 = vld [vmem:[%s91 + $0x3c8] sm:$0xff]
    %v5159 = vld [vmem:[%s91 + $0x3d0] sm:$0xff]
    %v5160 = vld [vmem:[%s91 + $0x3e8] sm:$0xff]
    %v5161 = vld [vmem:[%s91 + $0x3f0] sm:$0xff]
    %v5162 = vld [vmem:[%s91 + $0x408] sm:$0xff]
    %v5163 = vld [vmem:[%s91 + $0x410] sm:$0xff]
    %v5164 = vld [vmem:[%s91 + $0x428] sm:$0xff]
    %v5165 = vld [vmem:[%s91 + $0x430] sm:$0xff]
    %v5166 = vld [vmem:[#allocation8 + $0x200] sm:$0xff]
    %v5167 = vld [vmem:[#allocation8 + $0x208] sm:$0xff]
    %v5168 = vld [vmem:[#allocation8 + $0x210] sm:$0xff]
    %v5169 = vld [vmem:[#allocation8 + $0x218] sm:$0xff]
    %v5170 = vld [vmem:[#allocation8 + $0x220] sm:$0xff]
    %v5171 = vld [vmem:[#allocation8 + $0x228] sm:$0xff]
    %v5172 = vld [vmem:[#allocation8 + $0x230] sm:$0xff]
    %v5173 = vld [vmem:[#allocation8 + $0x238] sm:$0xff]
    %v5174 = vld [vmem:[#allocation8 + $0x240] sm:$0xff]
    %v5175 = vld [vmem:[#allocation8 + $0x248] sm:$0xff]
    %v5176 = vld [vmem:[#allocation8 + $0x250] sm:$0xff]
    %v5177 = vld [vmem:[#allocation8 + $0x258] sm:$0xff]
    %v5178 = vld [vmem:[#allocation8 + $0x260] sm:$0xff]
    %v5179 = vld [vmem:[#allocation8 + $0x268] sm:$0xff]
    %v5180 = vld [vmem:[#allocation8 + $0x270] sm:$0xff]
    %v5181 = vld [vmem:[#allocation8 + $0x278] sm:$0xff]
    %5182 = vmatpush.msra.mxu0 %v5181
    %5183 = vmatpush.msra.mxu0 %v5180
    %5184 = vmatpush.msra.mxu0 %v5179
    %5185 = vmatpush.msra.mxu0 %v5178
    %5186 = vmatpush.msra.mxu0 %v5177
    %5187 = vmatpush.msra.mxu0 %v5176
    %5188 = vmatpush.msra.mxu0 %v5175
    %5189 = vmatpush.msra.mxu0 %v5174
    %5190 = vmatpush.msra.mxu0 %v5173
    %5191 = vmatpush.msra.mxu0 %v5172
    %5192 = vmatpush.msra.mxu0 %v5171
    %5193 = vmatpush.msra.mxu0 %v5170
    %5194 = vmatpush.msra.mxu0 %v5169
    %5195 = vmatpush.msra.mxu0 %v5168
    %5196 = vmatpush.msra.mxu0 %v5167
    %5197 = vmatpush.msra.mxu0 %v5166
    %5198 = vmatmul.f32.gmra.mxu0 %v5102
    %v5199 = vpop.f32.mrf.mxu0
    %v5200 = vadd.f32 0.0, %v5199
    %5201 = vmatmul.f32.gmra.mxu0 %v5103
    %v5202 = vpop.f32.mrf.mxu0
    %v5203 = vadd.f32 0.0, %v5202
    %5204 = vmatmul.f32.gmra.mxu0 %v5104
    %v5205 = vpop.f32.mrf.mxu0
    %v5206 = vadd.f32 0.0, %v5205
    %5207 = vmatmul.f32.gmra.mxu0 %v5105
    %v5208 = vpop.f32.mrf.mxu0
    %v5209 = vadd.f32 0.0, %v5208
    %5210 = vmatmul.f32.gmra.mxu0 %v5106
    %v5211 = vpop.f32.mrf.mxu0
    %v5212 = vadd.f32 0.0, %v5211
    %5213 = vmatmul.f32.gmra.mxu0 %v5107
    %v5214 = vpop.f32.mrf.mxu0
    %v5215 = vadd.f32 0.0, %v5214
    %5216 = vmatmul.f32.gmra.mxu0 %v5108
    %v5217 = vpop.f32.mrf.mxu0
    %v5218 = vadd.f32 0.0, %v5217
    %5219 = vmatmul.f32.gmra.mxu0 %v5109
    %v5220 = vpop.f32.mrf.mxu0
    %v5221 = vadd.f32 0.0, %v5220
    %5222 = vmatmul.f32.gmra.mxu0 %v5110
    %v5223 = vpop.f32.mrf.mxu0
    %v5224 = vadd.f32 0.0, %v5223
    %5225 = vmatmul.f32.gmra.mxu0 %v5111
    %v5226 = vpop.f32.mrf.mxu0
    %v5227 = vadd.f32 0.0, %v5226
    %5228 = vmatmul.f32.gmra.mxu0 %v5112
    %v5229 = vpop.f32.mrf.mxu0
    %v5230 = vadd.f32 0.0, %v5229
    %5231 = vmatmul.f32.gmra.mxu0 %v5113
    %v5232 = vpop.f32.mrf.mxu0
    %v5233 = vadd.f32 0.0, %v5232
    %5234 = vmatmul.f32.gmra.mxu0 %v5114
    %v5235 = vpop.f32.mrf.mxu0
    %v5236 = vadd.f32 0.0, %v5235
    %5237 = vmatmul.f32.gmra.mxu0 %v5115
    %v5238 = vpop.f32.mrf.mxu0
    %v5239 = vadd.f32 0.0, %v5238
    %5240 = vmatmul.f32.gmra.mxu0 %v5116
    %v5241 = vpop.f32.mrf.mxu0
    %v5242 = vadd.f32 0.0, %v5241
    %5243 = vmatmul.f32.gmra.mxu0 %v5117
    %v5244 = vpop.f32.mrf.mxu0
    %v5245 = vadd.f32 0.0, %v5244
    %5246 = vmatmul.f32.gmra.mxu0 %v5118
    %v5247 = vpop.f32.mrf.mxu0
    %v5248 = vadd.f32 0.0, %v5247
    %5249 = vmatmul.f32.gmra.mxu0 %v5119
    %v5250 = vpop.f32.mrf.mxu0
    %v5251 = vadd.f32 0.0, %v5250
    %5252 = vmatmul.f32.gmra.mxu0 %v5120
    %v5253 = vpop.f32.mrf.mxu0
    %v5254 = vadd.f32 0.0, %v5253
    %5255 = vmatmul.f32.gmra.mxu0 %v5121
    %v5256 = vpop.f32.mrf.mxu0
    %v5257 = vadd.f32 0.0, %v5256
    %5258 = vmatmul.f32.gmra.mxu0 %v5122
    %v5259 = vpop.f32.mrf.mxu0
    %v5260 = vadd.f32 0.0, %v5259
    %5261 = vmatmul.f32.gmra.mxu0 %v5123
    %v5262 = vpop.f32.mrf.mxu0
    %v5263 = vadd.f32 0.0, %v5262
    %5264 = vmatmul.f32.gmra.mxu0 %v5124
    %v5265 = vpop.f32.mrf.mxu0
    %v5266 = vadd.f32 0.0, %v5265
    %5267 = vmatmul.f32.gmra.mxu0 %v5125
    %v5268 = vpop.f32.mrf.mxu0
    %v5269 = vadd.f32 0.0, %v5268
    %5270 = vmatmul.f32.gmra.mxu0 %v5126
    %v5271 = vpop.f32.mrf.mxu0
    %v5272 = vadd.f32 0.0, %v5271
    %5273 = vmatmul.f32.gmra.mxu0 %v5127
    %v5274 = vpop.f32.mrf.mxu0
    %v5275 = vadd.f32 0.0, %v5274
    %5276 = vmatmul.f32.gmra.mxu0 %v5128
    %v5277 = vpop.f32.mrf.mxu0
    %v5278 = vadd.f32 0.0, %v5277
    %5279 = vmatmul.f32.gmra.mxu0 %v5129
    %v5280 = vpop.f32.mrf.mxu0
    %v5281 = vadd.f32 0.0, %v5280
    %5282 = vmatmul.f32.gmra.mxu0 %v5130
    %v5283 = vpop.f32.mrf.mxu0
    %v5284 = vadd.f32 0.0, %v5283
    %5285 = vmatmul.f32.gmra.mxu0 %v5131
    %v5286 = vpop.f32.mrf.mxu0
    %v5287 = vadd.f32 0.0, %v5286
    %5288 = vmatmul.f32.gmra.mxu0 %v5132
    %v5289 = vpop.f32.mrf.mxu0
    %v5290 = vadd.f32 0.0, %v5289
    %5291 = vmatmul.f32.gmra.mxu0 %v5133
    %v5292 = vpop.f32.mrf.mxu0
    %v5293 = vadd.f32 0.0, %v5292
    %5294 = vmatmul.f32.gmra.mxu0 %v5134
    %v5295 = vpop.f32.mrf.mxu0
    %v5296 = vadd.f32 0.0, %v5295
    %5297 = vmatmul.f32.gmra.mxu0 %v5135
    %v5298 = vpop.f32.mrf.mxu0
    %v5299 = vadd.f32 0.0, %v5298
    %5300 = vmatmul.f32.gmra.mxu0 %v5136
    %v5301 = vpop.f32.mrf.mxu0
    %v5302 = vadd.f32 0.0, %v5301
    %5303 = vmatmul.f32.gmra.mxu0 %v5137
    %v5304 = vpop.f32.mrf.mxu0
    %v5305 = vadd.f32 0.0, %v5304
    %5306 = vmatmul.f32.gmra.mxu0 %v5138
    %v5307 = vpop.f32.mrf.mxu0
    %v5308 = vadd.f32 0.0, %v5307
    %5309 = vmatmul.f32.gmra.mxu0 %v5139
    %v5310 = vpop.f32.mrf.mxu0
    %v5311 = vadd.f32 0.0, %v5310
    %5312 = vmatmul.f32.gmra.mxu0 %v5140
    %v5313 = vpop.f32.mrf.mxu0
    %v5314 = vadd.f32 0.0, %v5313
    %5315 = vmatmul.f32.gmra.mxu0 %v5141
    %v5316 = vpop.f32.mrf.mxu0
    %v5317 = vadd.f32 0.0, %v5316
    %5318 = vmatmul.f32.gmra.mxu0 %v5142
    %v5319 = vpop.f32.mrf.mxu0
    %v5320 = vadd.f32 0.0, %v5319
    %5321 = vmatmul.f32.gmra.mxu0 %v5143
    %v5322 = vpop.f32.mrf.mxu0
    %v5323 = vadd.f32 0.0, %v5322
    %5324 = vmatmul.f32.gmra.mxu0 %v5144
    %v5325 = vpop.f32.mrf.mxu0
    %v5326 = vadd.f32 0.0, %v5325
    %5327 = vmatmul.f32.gmra.mxu0 %v5145
    %v5328 = vpop.f32.mrf.mxu0
    %v5329 = vadd.f32 0.0, %v5328
    %5330 = vmatmul.f32.gmra.mxu0 %v5146
    %v5331 = vpop.f32.mrf.mxu0
    %v5332 = vadd.f32 0.0, %v5331
    %5333 = vmatmul.f32.gmra.mxu0 %v5147
    %v5334 = vpop.f32.mrf.mxu0
    %v5335 = vadd.f32 0.0, %v5334
    %5336 = vmatmul.f32.gmra.mxu0 %v5148
    %v5337 = vpop.f32.mrf.mxu0
    %v5338 = vadd.f32 0.0, %v5337
    %5339 = vmatmul.f32.gmra.mxu0 %v5149
    %v5340 = vpop.f32.mrf.mxu0
    %v5341 = vadd.f32 0.0, %v5340
    %5342 = vmatmul.f32.gmra.mxu0 %v5150
    %v5343 = vpop.f32.mrf.mxu0
    %v5344 = vadd.f32 0.0, %v5343
    %5345 = vmatmul.f32.gmra.mxu0 %v5151
    %v5346 = vpop.f32.mrf.mxu0
    %v5347 = vadd.f32 0.0, %v5346
    %5348 = vmatmul.f32.gmra.mxu0 %v5152
    %v5349 = vpop.f32.mrf.mxu0
    %v5350 = vadd.f32 0.0, %v5349
    %5351 = vmatmul.f32.gmra.mxu0 %v5153
    %v5352 = vpop.f32.mrf.mxu0
    %v5353 = vadd.f32 0.0, %v5352
    %5354 = vmatmul.f32.gmra.mxu0 %v5154
    %v5355 = vpop.f32.mrf.mxu0
    %v5356 = vadd.f32 0.0, %v5355
    %5357 = vmatmul.f32.gmra.mxu0 %v5155
    %v5358 = vpop.f32.mrf.mxu0
    %v5359 = vadd.f32 0.0, %v5358
    %5360 = vmatmul.f32.gmra.mxu0 %v5156
    %v5361 = vpop.f32.mrf.mxu0
    %v5362 = vadd.f32 0.0, %v5361
    %5363 = vmatmul.f32.gmra.mxu0 %v5157
    %v5364 = vpop.f32.mrf.mxu0
    %v5365 = vadd.f32 0.0, %v5364
    %5366 = vmatmul.f32.gmra.mxu0 %v5158
    %v5367 = vpop.f32.mrf.mxu0
    %v5368 = vadd.f32 0.0, %v5367
    %5369 = vmatmul.f32.gmra.mxu0 %v5159
    %v5370 = vpop.f32.mrf.mxu0
    %v5371 = vadd.f32 0.0, %v5370
    %5372 = vmatmul.f32.gmra.mxu0 %v5160
    %v5373 = vpop.f32.mrf.mxu0
    %v5374 = vadd.f32 0.0, %v5373
    %5375 = vmatmul.f32.gmra.mxu0 %v5161
    %v5376 = vpop.f32.mrf.mxu0
    %v5377 = vadd.f32 0.0, %v5376
    %5378 = vmatmul.f32.gmra.mxu0 %v5162
    %v5379 = vpop.f32.mrf.mxu0
    %v5380 = vadd.f32 0.0, %v5379
    %5381 = vmatmul.f32.gmra.mxu0 %v5163
    %v5382 = vpop.f32.mrf.mxu0
    %v5383 = vadd.f32 0.0, %v5382
    %5384 = vmatmul.f32.gmra.mxu0 %v5164
    %v5385 = vpop.f32.mrf.mxu0
    %v5386 = vadd.f32 0.0, %v5385
    %5387 = vmatmul.f32.gmra.mxu0 %v5165
    %v5388 = vpop.f32.mrf.mxu0
    %v5389 = vadd.f32 0.0, %v5388
    %5390 = vdwg.mxu0
    %v5391 = vadd.f32 %v5038, %v5200
    %v5392 = vadd.f32 %v5039, %v5203
    %v5393 = vadd.f32 %v5040, %v5206
    %v5394 = vadd.f32 %v5041, %v5209
    %v5395 = vadd.f32 %v5042, %v5212
    %v5396 = vadd.f32 %v5043, %v5215
    %v5397 = vadd.f32 %v5044, %v5218
    %v5398 = vadd.f32 %v5045, %v5221
    %v5399 = vadd.f32 %v5046, %v5224
    %v5400 = vadd.f32 %v5047, %v5227
    %v5401 = vadd.f32 %v5048, %v5230
    %v5402 = vadd.f32 %v5049, %v5233
    %v5403 = vadd.f32 %v5050, %v5236
    %v5404 = vadd.f32 %v5051, %v5239
    %v5405 = vadd.f32 %v5052, %v5242
    %v5406 = vadd.f32 %v5053, %v5245
    %v5407 = vadd.f32 %v5054, %v5248
    %v5408 = vadd.f32 %v5055, %v5251
    %v5409 = vadd.f32 %v5056, %v5254
    %v5410 = vadd.f32 %v5057, %v5257
    %v5411 = vadd.f32 %v5058, %v5260
    %v5412 = vadd.f32 %v5059, %v5263
    %v5413 = vadd.f32 %v5060, %v5266
    %v5414 = vadd.f32 %v5061, %v5269
    %v5415 = vadd.f32 %v5062, %v5272
    %v5416 = vadd.f32 %v5063, %v5275
    %v5417 = vadd.f32 %v5064, %v5278
    %v5418 = vadd.f32 %v5065, %v5281
    %v5419 = vadd.f32 %v5066, %v5284
    %v5420 = vadd.f32 %v5067, %v5287
    %v5421 = vadd.f32 %v5068, %v5290
    %v5422 = vadd.f32 %v5069, %v5293
    %v5423 = vadd.f32 %v5070, %v5296
    %v5424 = vadd.f32 %v5071, %v5299
    %v5425 = vadd.f32 %v5072, %v5302
    %v5426 = vadd.f32 %v5073, %v5305
    %v5427 = vadd.f32 %v5074, %v5308
    %v5428 = vadd.f32 %v5075, %v5311
    %v5429 = vadd.f32 %v5076, %v5314
    %v5430 = vadd.f32 %v5077, %v5317
    %v5431 = vadd.f32 %v5078, %v5320
    %v5432 = vadd.f32 %v5079, %v5323
    %v5433 = vadd.f32 %v5080, %v5326
    %v5434 = vadd.f32 %v5081, %v5329
    %v5435 = vadd.f32 %v5082, %v5332
    %v5436 = vadd.f32 %v5083, %v5335
    %v5437 = vadd.f32 %v5084, %v5338
    %v5438 = vadd.f32 %v5085, %v5341
    %v5439 = vadd.f32 %v5086, %v5344
    %v5440 = vadd.f32 %v5087, %v5347
    %v5441 = vadd.f32 %v5088, %v5350
    %v5442 = vadd.f32 %v5089, %v5353
    %v5443 = vadd.f32 %v5090, %v5356
    %v5444 = vadd.f32 %v5091, %v5359
    %v5445 = vadd.f32 %v5092, %v5362
    %v5446 = vadd.f32 %v5093, %v5365
    %v5447 = vadd.f32 %v5094, %v5368
    %v5448 = vadd.f32 %v5095, %v5371
    %v5449 = vadd.f32 %v5096, %v5374
    %v5450 = vadd.f32 %v5097, %v5377
    %v5451 = vadd.f32 %v5098, %v5380
    %v5452 = vadd.f32 %v5099, %v5383
    %v5453 = vadd.f32 %v5100, %v5386
    %v5454 = vadd.f32 %v5101, %v5389
    %v5455 = vld [vmem:[%s91 + $0x9] sm:$0xff]
    %v5456 = vld [vmem:[%s91 + $0x11] sm:$0xff]
    %v5457 = vld [vmem:[%s91 + $0x29] sm:$0xff]
    %v5458 = vld [vmem:[%s91 + $0x31] sm:$0xff]
    %v5459 = vld [vmem:[%s91 + $0x49] sm:$0xff]
    %v5460 = vld [vmem:[%s91 + $0x51] sm:$0xff]
    %v5461 = vld [vmem:[%s91 + $0x69] sm:$0xff]
    %v5462 = vld [vmem:[%s91 + $0x71] sm:$0xff]
    %v5463 = vld [vmem:[%s91 + $0x89] sm:$0xff]
    %v5464 = vld [vmem:[%s91 + $0x91] sm:$0xff]
    %v5465 = vld [vmem:[%s91 + $0xa9] sm:$0xff]
    %v5466 = vld [vmem:[%s91 + $0xb1] sm:$0xff]
    %v5467 = vld [vmem:[%s91 + $0xc9] sm:$0xff]
    %v5468 = vld [vmem:[%s91 + $0xd1] sm:$0xff]
    %v5469 = vld [vmem:[%s91 + $0xe9] sm:$0xff]
    %v5470 = vld [vmem:[%s91 + $0xf1] sm:$0xff]
    %v5471 = vld [vmem:[%s91 + $0x109] sm:$0xff]
    %v5472 = vld [vmem:[%s91 + $0x111] sm:$0xff]
    %v5473 = vld [vmem:[%s91 + $0x129] sm:$0xff]
    %v5474 = vld [vmem:[%s91 + $0x131] sm:$0xff]
    %v5475 = vld [vmem:[%s91 + $0x149] sm:$0xff]
    %v5476 = vld [vmem:[%s91 + $0x151] sm:$0xff]
    %v5477 = vld [vmem:[%s91 + $0x169] sm:$0xff]
    %v5478 = vld [vmem:[%s91 + $0x171] sm:$0xff]
    %v5479 = vld [vmem:[%s91 + $0x189] sm:$0xff]
    %v5480 = vld [vmem:[%s91 + $0x191] sm:$0xff]
    %v5481 = vld [vmem:[%s91 + $0x1a9] sm:$0xff]
    %v5482 = vld [vmem:[%s91 + $0x1b1] sm:$0xff]
    %v5483 = vld [vmem:[%s91 + $0x1c9] sm:$0xff]
    %v5484 = vld [vmem:[%s91 + $0x1d1] sm:$0xff]
    %v5485 = vld [vmem:[%s91 + $0x1e9] sm:$0xff]
    %v5486 = vld [vmem:[%s91 + $0x1f1] sm:$0xff]
    %v5487 = vld [vmem:[%s91 + $0x249] sm:$0xff]
    %v5488 = vld [vmem:[%s91 + $0x251] sm:$0xff]
    %v5489 = vld [vmem:[%s91 + $0x269] sm:$0xff]
    %v5490 = vld [vmem:[%s91 + $0x271] sm:$0xff]
    %v5491 = vld [vmem:[%s91 + $0x289] sm:$0xff]
    %v5492 = vld [vmem:[%s91 + $0x291] sm:$0xff]
    %v5493 = vld [vmem:[%s91 + $0x2a9] sm:$0xff]
    %v5494 = vld [vmem:[%s91 + $0x2b1] sm:$0xff]
    %v5495 = vld [vmem:[%s91 + $0x2c9] sm:$0xff]
    %v5496 = vld [vmem:[%s91 + $0x2d1] sm:$0xff]
    %v5497 = vld [vmem:[%s91 + $0x2e9] sm:$0xff]
    %v5498 = vld [vmem:[%s91 + $0x2f1] sm:$0xff]
    %v5499 = vld [vmem:[%s91 + $0x309] sm:$0xff]
    %v5500 = vld [vmem:[%s91 + $0x311] sm:$0xff]
    %v5501 = vld [vmem:[%s91 + $0x329] sm:$0xff]
    %v5502 = vld [vmem:[%s91 + $0x331] sm:$0xff]
    %v5503 = vld [vmem:[%s91 + $0x349] sm:$0xff]
    %v5504 = vld [vmem:[%s91 + $0x351] sm:$0xff]
    %v5505 = vld [vmem:[%s91 + $0x369] sm:$0xff]
    %v5506 = vld [vmem:[%s91 + $0x371] sm:$0xff]
    %v5507 = vld [vmem:[%s91 + $0x389] sm:$0xff]
    %v5508 = vld [vmem:[%s91 + $0x391] sm:$0xff]
    %v5509 = vld [vmem:[%s91 + $0x3a9] sm:$0xff]
    %v5510 = vld [vmem:[%s91 + $0x3b1] sm:$0xff]
    %v5511 = vld [vmem:[%s91 + $0x3c9] sm:$0xff]
    %v5512 = vld [vmem:[%s91 + $0x3d1] sm:$0xff]
    %v5513 = vld [vmem:[%s91 + $0x3e9] sm:$0xff]
    %v5514 = vld [vmem:[%s91 + $0x3f1] sm:$0xff]
    %v5515 = vld [vmem:[%s91 + $0x409] sm:$0xff]
    %v5516 = vld [vmem:[%s91 + $0x411] sm:$0xff]
    %v5517 = vld [vmem:[%s91 + $0x429] sm:$0xff]
    %v5518 = vld [vmem:[%s91 + $0x431] sm:$0xff]
    %v5519 = vld [vmem:[#allocation8 + $0x280] sm:$0xff]
    %v5520 = vld [vmem:[#allocation8 + $0x288] sm:$0xff]
    %v5521 = vld [vmem:[#allocation8 + $0x290] sm:$0xff]
    %v5522 = vld [vmem:[#allocation8 + $0x298] sm:$0xff]
    %v5523 = vld [vmem:[#allocation8 + $0x2a0] sm:$0xff]
    %v5524 = vld [vmem:[#allocation8 + $0x2a8] sm:$0xff]
    %v5525 = vld [vmem:[#allocation8 + $0x2b0] sm:$0xff]
    %v5526 = vld [vmem:[#allocation8 + $0x2b8] sm:$0xff]
    %v5527 = vld [vmem:[#allocation8 + $0x2c0] sm:$0xff]
    %v5528 = vld [vmem:[#allocation8 + $0x2c8] sm:$0xff]
    %v5529 = vld [vmem:[#allocation8 + $0x2d0] sm:$0xff]
    %v5530 = vld [vmem:[#allocation8 + $0x2d8] sm:$0xff]
    %v5531 = vld [vmem:[#allocation8 + $0x2e0] sm:$0xff]
    %v5532 = vld [vmem:[#allocation8 + $0x2e8] sm:$0xff]
    %v5533 = vld [vmem:[#allocation8 + $0x2f0] sm:$0xff]
    %v5534 = vld [vmem:[#allocation8 + $0x2f8] sm:$0xff]
    %5535 = vmatpush.msra.mxu0 %v5534
    %5536 = vmatpush.msra.mxu0 %v5533
    %5537 = vmatpush.msra.mxu0 %v5532
    %5538 = vmatpush.msra.mxu0 %v5531
    %5539 = vmatpush.msra.mxu0 %v5530
    %5540 = vmatpush.msra.mxu0 %v5529
    %5541 = vmatpush.msra.mxu0 %v5528
    %5542 = vmatpush.msra.mxu0 %v5527
    %5543 = vmatpush.msra.mxu0 %v5526
    %5544 = vmatpush.msra.mxu0 %v5525
    %5545 = vmatpush.msra.mxu0 %v5524
    %5546 = vmatpush.msra.mxu0 %v5523
    %5547 = vmatpush.msra.mxu0 %v5522
    %5548 = vmatpush.msra.mxu0 %v5521
    %5549 = vmatpush.msra.mxu0 %v5520
    %5550 = vmatpush.msra.mxu0 %v5519
    %5551 = vmatmul.f32.gmra.mxu0 %v5455
    %v5552 = vpop.f32.mrf.mxu0
    %v5553 = vadd.f32 0.0, %v5552
    %5554 = vmatmul.f32.gmra.mxu0 %v5456
    %v5555 = vpop.f32.mrf.mxu0
    %v5556 = vadd.f32 0.0, %v5555
    %5557 = vmatmul.f32.gmra.mxu0 %v5457
    %v5558 = vpop.f32.mrf.mxu0
    %v5559 = vadd.f32 0.0, %v5558
    %5560 = vmatmul.f32.gmra.mxu0 %v5458
    %v5561 = vpop.f32.mrf.mxu0
    %v5562 = vadd.f32 0.0, %v5561
    %5563 = vmatmul.f32.gmra.mxu0 %v5459
    %v5564 = vpop.f32.mrf.mxu0
    %v5565 = vadd.f32 0.0, %v5564
    %5566 = vmatmul.f32.gmra.mxu0 %v5460
    %v5567 = vpop.f32.mrf.mxu0
    %v5568 = vadd.f32 0.0, %v5567
    %5569 = vmatmul.f32.gmra.mxu0 %v5461
    %v5570 = vpop.f32.mrf.mxu0
    %v5571 = vadd.f32 0.0, %v5570
    %5572 = vmatmul.f32.gmra.mxu0 %v5462
    %v5573 = vpop.f32.mrf.mxu0
    %v5574 = vadd.f32 0.0, %v5573
    %5575 = vmatmul.f32.gmra.mxu0 %v5463
    %v5576 = vpop.f32.mrf.mxu0
    %v5577 = vadd.f32 0.0, %v5576
    %5578 = vmatmul.f32.gmra.mxu0 %v5464
    %v5579 = vpop.f32.mrf.mxu0
    %v5580 = vadd.f32 0.0, %v5579
    %5581 = vmatmul.f32.gmra.mxu0 %v5465
    %v5582 = vpop.f32.mrf.mxu0
    %v5583 = vadd.f32 0.0, %v5582
    %5584 = vmatmul.f32.gmra.mxu0 %v5466
    %v5585 = vpop.f32.mrf.mxu0
    %v5586 = vadd.f32 0.0, %v5585
    %5587 = vmatmul.f32.gmra.mxu0 %v5467
    %v5588 = vpop.f32.mrf.mxu0
    %v5589 = vadd.f32 0.0, %v5588
    %5590 = vmatmul.f32.gmra.mxu0 %v5468
    %v5591 = vpop.f32.mrf.mxu0
    %v5592 = vadd.f32 0.0, %v5591
    %5593 = vmatmul.f32.gmra.mxu0 %v5469
    %v5594 = vpop.f32.mrf.mxu0
    %v5595 = vadd.f32 0.0, %v5594
    %5596 = vmatmul.f32.gmra.mxu0 %v5470
    %v5597 = vpop.f32.mrf.mxu0
    %v5598 = vadd.f32 0.0, %v5597
    %5599 = vmatmul.f32.gmra.mxu0 %v5471
    %v5600 = vpop.f32.mrf.mxu0
    %v5601 = vadd.f32 0.0, %v5600
    %5602 = vmatmul.f32.gmra.mxu0 %v5472
    %v5603 = vpop.f32.mrf.mxu0
    %v5604 = vadd.f32 0.0, %v5603
    %5605 = vmatmul.f32.gmra.mxu0 %v5473
    %v5606 = vpop.f32.mrf.mxu0
    %v5607 = vadd.f32 0.0, %v5606
    %5608 = vmatmul.f32.gmra.mxu0 %v5474
    %v5609 = vpop.f32.mrf.mxu0
    %v5610 = vadd.f32 0.0, %v5609
    %5611 = vmatmul.f32.gmra.mxu0 %v5475
    %v5612 = vpop.f32.mrf.mxu0
    %v5613 = vadd.f32 0.0, %v5612
    %5614 = vmatmul.f32.gmra.mxu0 %v5476
    %v5615 = vpop.f32.mrf.mxu0
    %v5616 = vadd.f32 0.0, %v5615
    %5617 = vmatmul.f32.gmra.mxu0 %v5477
    %v5618 = vpop.f32.mrf.mxu0
    %v5619 = vadd.f32 0.0, %v5618
    %5620 = vmatmul.f32.gmra.mxu0 %v5478
    %v5621 = vpop.f32.mrf.mxu0
    %v5622 = vadd.f32 0.0, %v5621
    %5623 = vmatmul.f32.gmra.mxu0 %v5479
    %v5624 = vpop.f32.mrf.mxu0
    %v5625 = vadd.f32 0.0, %v5624
    %5626 = vmatmul.f32.gmra.mxu0 %v5480
    %v5627 = vpop.f32.mrf.mxu0
    %v5628 = vadd.f32 0.0, %v5627
    %5629 = vmatmul.f32.gmra.mxu0 %v5481
    %v5630 = vpop.f32.mrf.mxu0
    %v5631 = vadd.f32 0.0, %v5630
    %5632 = vmatmul.f32.gmra.mxu0 %v5482
    %v5633 = vpop.f32.mrf.mxu0
    %v5634 = vadd.f32 0.0, %v5633
    %5635 = vmatmul.f32.gmra.mxu0 %v5483
    %v5636 = vpop.f32.mrf.mxu0
    %v5637 = vadd.f32 0.0, %v5636
    %5638 = vmatmul.f32.gmra.mxu0 %v5484
    %v5639 = vpop.f32.mrf.mxu0
    %v5640 = vadd.f32 0.0, %v5639
    %5641 = vmatmul.f32.gmra.mxu0 %v5485
    %v5642 = vpop.f32.mrf.mxu0
    %v5643 = vadd.f32 0.0, %v5642
    %5644 = vmatmul.f32.gmra.mxu0 %v5486
    %v5645 = vpop.f32.mrf.mxu0
    %v5646 = vadd.f32 0.0, %v5645
    %5647 = vmatmul.f32.gmra.mxu0 %v5487
    %v5648 = vpop.f32.mrf.mxu0
    %v5649 = vadd.f32 0.0, %v5648
    %5650 = vmatmul.f32.gmra.mxu0 %v5488
    %v5651 = vpop.f32.mrf.mxu0
    %v5652 = vadd.f32 0.0, %v5651
    %5653 = vmatmul.f32.gmra.mxu0 %v5489
    %v5654 = vpop.f32.mrf.mxu0
    %v5655 = vadd.f32 0.0, %v5654
    %5656 = vmatmul.f32.gmra.mxu0 %v5490
    %v5657 = vpop.f32.mrf.mxu0
    %v5658 = vadd.f32 0.0, %v5657
    %5659 = vmatmul.f32.gmra.mxu0 %v5491
    %v5660 = vpop.f32.mrf.mxu0
    %v5661 = vadd.f32 0.0, %v5660
    %5662 = vmatmul.f32.gmra.mxu0 %v5492
    %v5663 = vpop.f32.mrf.mxu0
    %v5664 = vadd.f32 0.0, %v5663
    %5665 = vmatmul.f32.gmra.mxu0 %v5493
    %v5666 = vpop.f32.mrf.mxu0
    %v5667 = vadd.f32 0.0, %v5666
    %5668 = vmatmul.f32.gmra.mxu0 %v5494
    %v5669 = vpop.f32.mrf.mxu0
    %v5670 = vadd.f32 0.0, %v5669
    %5671 = vmatmul.f32.gmra.mxu0 %v5495
    %v5672 = vpop.f32.mrf.mxu0
    %v5673 = vadd.f32 0.0, %v5672
    %5674 = vmatmul.f32.gmra.mxu0 %v5496
    %v5675 = vpop.f32.mrf.mxu0
    %v5676 = vadd.f32 0.0, %v5675
    %5677 = vmatmul.f32.gmra.mxu0 %v5497
    %v5678 = vpop.f32.mrf.mxu0
    %v5679 = vadd.f32 0.0, %v5678
    %5680 = vmatmul.f32.gmra.mxu0 %v5498
    %v5681 = vpop.f32.mrf.mxu0
    %v5682 = vadd.f32 0.0, %v5681
    %5683 = vmatmul.f32.gmra.mxu0 %v5499
    %v5684 = vpop.f32.mrf.mxu0
    %v5685 = vadd.f32 0.0, %v5684
    %5686 = vmatmul.f32.gmra.mxu0 %v5500
    %v5687 = vpop.f32.mrf.mxu0
    %v5688 = vadd.f32 0.0, %v5687
    %5689 = vmatmul.f32.gmra.mxu0 %v5501
    %v5690 = vpop.f32.mrf.mxu0
    %v5691 = vadd.f32 0.0, %v5690
    %5692 = vmatmul.f32.gmra.mxu0 %v5502
    %v5693 = vpop.f32.mrf.mxu0
    %v5694 = vadd.f32 0.0, %v5693
    %5695 = vmatmul.f32.gmra.mxu0 %v5503
    %v5696 = vpop.f32.mrf.mxu0
    %v5697 = vadd.f32 0.0, %v5696
    %5698 = vmatmul.f32.gmra.mxu0 %v5504
    %v5699 = vpop.f32.mrf.mxu0
    %v5700 = vadd.f32 0.0, %v5699
    %5701 = vmatmul.f32.gmra.mxu0 %v5505
    %v5702 = vpop.f32.mrf.mxu0
    %v5703 = vadd.f32 0.0, %v5702
    %5704 = vmatmul.f32.gmra.mxu0 %v5506
    %v5705 = vpop.f32.mrf.mxu0
    %v5706 = vadd.f32 0.0, %v5705
    %5707 = vmatmul.f32.gmra.mxu0 %v5507
    %v5708 = vpop.f32.mrf.mxu0
    %v5709 = vadd.f32 0.0, %v5708
    %5710 = vmatmul.f32.gmra.mxu0 %v5508
    %v5711 = vpop.f32.mrf.mxu0
    %v5712 = vadd.f32 0.0, %v5711
    %5713 = vmatmul.f32.gmra.mxu0 %v5509
    %v5714 = vpop.f32.mrf.mxu0
    %v5715 = vadd.f32 0.0, %v5714
    %5716 = vmatmul.f32.gmra.mxu0 %v5510
    %v5717 = vpop.f32.mrf.mxu0
    %v5718 = vadd.f32 0.0, %v5717
    %5719 = vmatmul.f32.gmra.mxu0 %v5511
    %v5720 = vpop.f32.mrf.mxu0
    %v5721 = vadd.f32 0.0, %v5720
    %5722 = vmatmul.f32.gmra.mxu0 %v5512
    %v5723 = vpop.f32.mrf.mxu0
    %v5724 = vadd.f32 0.0, %v5723
    %5725 = vmatmul.f32.gmra.mxu0 %v5513
    %v5726 = vpop.f32.mrf.mxu0
    %v5727 = vadd.f32 0.0, %v5726
    %5728 = vmatmul.f32.gmra.mxu0 %v5514
    %v5729 = vpop.f32.mrf.mxu0
    %v5730 = vadd.f32 0.0, %v5729
    %5731 = vmatmul.f32.gmra.mxu0 %v5515
    %v5732 = vpop.f32.mrf.mxu0
    %v5733 = vadd.f32 0.0, %v5732
    %5734 = vmatmul.f32.gmra.mxu0 %v5516
    %v5735 = vpop.f32.mrf.mxu0
    %v5736 = vadd.f32 0.0, %v5735
    %5737 = vmatmul.f32.gmra.mxu0 %v5517
    %v5738 = vpop.f32.mrf.mxu0
    %v5739 = vadd.f32 0.0, %v5738
    %5740 = vmatmul.f32.gmra.mxu0 %v5518
    %v5741 = vpop.f32.mrf.mxu0
    %v5742 = vadd.f32 0.0, %v5741
    %5743 = vdwg.mxu0
    %v5744 = vadd.f32 %v5391, %v5553
    %v5745 = vadd.f32 %v5392, %v5556
    %v5746 = vadd.f32 %v5393, %v5559
    %v5747 = vadd.f32 %v5394, %v5562
    %v5748 = vadd.f32 %v5395, %v5565
    %v5749 = vadd.f32 %v5396, %v5568
    %v5750 = vadd.f32 %v5397, %v5571
    %v5751 = vadd.f32 %v5398, %v5574
    %v5752 = vadd.f32 %v5399, %v5577
    %v5753 = vadd.f32 %v5400, %v5580
    %v5754 = vadd.f32 %v5401, %v5583
    %v5755 = vadd.f32 %v5402, %v5586
    %v5756 = vadd.f32 %v5403, %v5589
    %v5757 = vadd.f32 %v5404, %v5592
    %v5758 = vadd.f32 %v5405, %v5595
    %v5759 = vadd.f32 %v5406, %v5598
    %v5760 = vadd.f32 %v5407, %v5601
    %v5761 = vadd.f32 %v5408, %v5604
    %v5762 = vadd.f32 %v5409, %v5607
    %v5763 = vadd.f32 %v5410, %v5610
    %v5764 = vadd.f32 %v5411, %v5613
    %v5765 = vadd.f32 %v5412, %v5616
    %v5766 = vadd.f32 %v5413, %v5619
    %v5767 = vadd.f32 %v5414, %v5622
    %v5768 = vadd.f32 %v5415, %v5625
    %v5769 = vadd.f32 %v5416, %v5628
    %v5770 = vadd.f32 %v5417, %v5631
    %v5771 = vadd.f32 %v5418, %v5634
    %v5772 = vadd.f32 %v5419, %v5637
    %v5773 = vadd.f32 %v5420, %v5640
    %v5774 = vadd.f32 %v5421, %v5643
    %v5775 = vadd.f32 %v5422, %v5646
    %v5776 = vadd.f32 %v5423, %v5649
    %v5777 = vadd.f32 %v5424, %v5652
    %v5778 = vadd.f32 %v5425, %v5655
    %v5779 = vadd.f32 %v5426, %v5658
    %v5780 = vadd.f32 %v5427, %v5661
    %v5781 = vadd.f32 %v5428, %v5664
    %v5782 = vadd.f32 %v5429, %v5667
    %v5783 = vadd.f32 %v5430, %v5670
    %v5784 = vadd.f32 %v5431, %v5673
    %v5785 = vadd.f32 %v5432, %v5676
    %v5786 = vadd.f32 %v5433, %v5679
    %v5787 = vadd.f32 %v5434, %v5682
    %v5788 = vadd.f32 %v5435, %v5685
    %v5789 = vadd.f32 %v5436, %v5688
    %v5790 = vadd.f32 %v5437, %v5691
    %v5791 = vadd.f32 %v5438, %v5694
    %v5792 = vadd.f32 %v5439, %v5697
    %v5793 = vadd.f32 %v5440, %v5700
    %v5794 = vadd.f32 %v5441, %v5703
    %v5795 = vadd.f32 %v5442, %v5706
    %v5796 = vadd.f32 %v5443, %v5709
    %v5797 = vadd.f32 %v5444, %v5712
    %v5798 = vadd.f32 %v5445, %v5715
    %v5799 = vadd.f32 %v5446, %v5718
    %v5800 = vadd.f32 %v5447, %v5721
    %v5801 = vadd.f32 %v5448, %v5724
    %v5802 = vadd.f32 %v5449, %v5727
    %v5803 = vadd.f32 %v5450, %v5730
    %v5804 = vadd.f32 %v5451, %v5733
    %v5805 = vadd.f32 %v5452, %v5736
    %v5806 = vadd.f32 %v5453, %v5739
    %v5807 = vadd.f32 %v5454, %v5742
    %v5808 = vld [vmem:[%s2274 + $0x7] sm:$0xff]
    %v5809 = vld [vmem:[%s2274 + $0xf] sm:$0xff]
    %v5810 = vld [vmem:[%s2274 + $0x27] sm:$0xff]
    %v5811 = vld [vmem:[%s2274 + $0x2f] sm:$0xff]
    %v5812 = vld [vmem:[%s2274 + $0x47] sm:$0xff]
    %v5813 = vld [vmem:[%s2274 + $0x4f] sm:$0xff]
    %v5814 = vld [vmem:[%s2274 + $0x67] sm:$0xff]
    %v5815 = vld [vmem:[%s2274 + $0x6f] sm:$0xff]
    %v5816 = vld [vmem:[%s2274 + $0x87] sm:$0xff]
    %v5817 = vld [vmem:[%s2274 + $0x8f] sm:$0xff]
    %v5818 = vld [vmem:[%s2274 + $0xa7] sm:$0xff]
    %v5819 = vld [vmem:[%s2274 + $0xaf] sm:$0xff]
    %v5820 = vld [vmem:[%s2274 + $0xc7] sm:$0xff]
    %v5821 = vld [vmem:[%s2274 + $0xcf] sm:$0xff]
    %v5822 = vld [vmem:[%s2274 + $0xe7] sm:$0xff]
    %v5823 = vld [vmem:[%s2274 + $0xef] sm:$0xff]
    %v5824 = vld [vmem:[%s2274 + $0x107] sm:$0xff]
    %v5825 = vld [vmem:[%s2274 + $0x10f] sm:$0xff]
    %v5826 = vld [vmem:[%s2274 + $0x127] sm:$0xff]
    %v5827 = vld [vmem:[%s2274 + $0x12f] sm:$0xff]
    %v5828 = vld [vmem:[%s2274 + $0x147] sm:$0xff]
    %v5829 = vld [vmem:[%s2274 + $0x14f] sm:$0xff]
    %v5830 = vld [vmem:[%s2274 + $0x167] sm:$0xff]
    %v5831 = vld [vmem:[%s2274 + $0x16f] sm:$0xff]
    %v5832 = vld [vmem:[%s2274 + $0x187] sm:$0xff]
    %v5833 = vld [vmem:[%s2274 + $0x18f] sm:$0xff]
    %v5834 = vld [vmem:[%s2274 + $0x1a7] sm:$0xff]
    %v5835 = vld [vmem:[%s2274 + $0x1af] sm:$0xff]
    %v5836 = vld [vmem:[%s2274 + $0x1c7] sm:$0xff]
    %v5837 = vld [vmem:[%s2274 + $0x1cf] sm:$0xff]
    %v5838 = vld [vmem:[%s2274 + $0x1e7] sm:$0xff]
    %v5839 = vld [vmem:[%s2274 + $0x1ef] sm:$0xff]
    %v5840 = vld [vmem:[%s2274 + $0x247] sm:$0xff]
    %v5841 = vld [vmem:[%s2274 + $0x24f] sm:$0xff]
    %v5842 = vld [vmem:[%s2274 + $0x267] sm:$0xff]
    %v5843 = vld [vmem:[%s2274 + $0x26f] sm:$0xff]
    %v5844 = vld [vmem:[%s2274 + $0x287] sm:$0xff]
    %v5845 = vld [vmem:[%s2274 + $0x28f] sm:$0xff]
    %v5846 = vld [vmem:[%s2274 + $0x2a7] sm:$0xff]
    %v5847 = vld [vmem:[%s2274 + $0x2af] sm:$0xff]
    %v5848 = vld [vmem:[%s2274 + $0x2c7] sm:$0xff]
    %v5849 = vld [vmem:[%s2274 + $0x2cf] sm:$0xff]
    %v5850 = vld [vmem:[%s2274 + $0x2e7] sm:$0xff]
    %v5851 = vld [vmem:[%s2274 + $0x2ef] sm:$0xff]
    %v5852 = vld [vmem:[%s2274 + $0x307] sm:$0xff]
    %v5853 = vld [vmem:[%s2274 + $0x30f] sm:$0xff]
    %v5854 = vld [vmem:[%s2274 + $0x327] sm:$0xff]
    %v5855 = vld [vmem:[%s2274 + $0x32f] sm:$0xff]
    %v5856 = vld [vmem:[%s2274 + $0x347] sm:$0xff]
    %v5857 = vld [vmem:[%s2274 + $0x34f] sm:$0xff]
    %v5858 = vld [vmem:[%s2274 + $0x367] sm:$0xff]
    %v5859 = vld [vmem:[%s2274 + $0x36f] sm:$0xff]
    %v5860 = vld [vmem:[%s2274 + $0x387] sm:$0xff]
    %v5861 = vld [vmem:[%s2274 + $0x38f] sm:$0xff]
    %v5862 = vld [vmem:[%s2274 + $0x3a7] sm:$0xff]
    %v5863 = vld [vmem:[%s2274 + $0x3af] sm:$0xff]
    %v5864 = vld [vmem:[%s2274 + $0x3c7] sm:$0xff]
    %v5865 = vld [vmem:[%s2274 + $0x3cf] sm:$0xff]
    %v5866 = vld [vmem:[%s2274 + $0x3e7] sm:$0xff]
    %v5867 = vld [vmem:[%s2274 + $0x3ef] sm:$0xff]
    %v5868 = vld [vmem:[%s2274 + $0x407] sm:$0xff]
    %v5869 = vld [vmem:[%s2274 + $0x40f] sm:$0xff]
    %v5870 = vld [vmem:[%s2274 + $0x427] sm:$0xff]
    %v5871 = vld [vmem:[%s2274 + $0x42f] sm:$0xff]
    %v5872 = vld [vmem:[#allocation8 + $0x300] sm:$0xff]
    %v5873 = vld [vmem:[#allocation8 + $0x308] sm:$0xff]
    %v5874 = vld [vmem:[#allocation8 + $0x310] sm:$0xff]
    %v5875 = vld [vmem:[#allocation8 + $0x318] sm:$0xff]
    %v5876 = vld [vmem:[#allocation8 + $0x320] sm:$0xff]
    %v5877 = vld [vmem:[#allocation8 + $0x328] sm:$0xff]
    %v5878 = vld [vmem:[#allocation8 + $0x330] sm:$0xff]
    %v5879 = vld [vmem:[#allocation8 + $0x338] sm:$0xff]
    %v5880 = vld [vmem:[#allocation8 + $0x340] sm:$0xff]
    %v5881 = vld [vmem:[#allocation8 + $0x348] sm:$0xff]
    %v5882 = vld [vmem:[#allocation8 + $0x350] sm:$0xff]
    %v5883 = vld [vmem:[#allocation8 + $0x358] sm:$0xff]
    %v5884 = vld [vmem:[#allocation8 + $0x360] sm:$0xff]
    %v5885 = vld [vmem:[#allocation8 + $0x368] sm:$0xff]
    %v5886 = vld [vmem:[#allocation8 + $0x370] sm:$0xff]
    %v5887 = vld [vmem:[#allocation8 + $0x378] sm:$0xff]
    %5888 = vmatpush.msra.mxu0 %v5887
    %5889 = vmatpush.msra.mxu0 %v5886
    %5890 = vmatpush.msra.mxu0 %v5885
    %5891 = vmatpush.msra.mxu0 %v5884
    %5892 = vmatpush.msra.mxu0 %v5883
    %5893 = vmatpush.msra.mxu0 %v5882
    %5894 = vmatpush.msra.mxu0 %v5881
    %5895 = vmatpush.msra.mxu0 %v5880
    %5896 = vmatpush.msra.mxu0 %v5879
    %5897 = vmatpush.msra.mxu0 %v5878
    %5898 = vmatpush.msra.mxu0 %v5877
    %5899 = vmatpush.msra.mxu0 %v5876
    %5900 = vmatpush.msra.mxu0 %v5875
    %5901 = vmatpush.msra.mxu0 %v5874
    %5902 = vmatpush.msra.mxu0 %v5873
    %5903 = vmatpush.msra.mxu0 %v5872
    %5904 = vmatmul.f32.gmra.mxu0 %v5808
    %v5905 = vpop.f32.mrf.mxu0
    %v5906 = vadd.f32 0.0, %v5905
    %5907 = vmatmul.f32.gmra.mxu0 %v5809
    %v5908 = vpop.f32.mrf.mxu0
    %v5909 = vadd.f32 0.0, %v5908
    %5910 = vmatmul.f32.gmra.mxu0 %v5810
    %v5911 = vpop.f32.mrf.mxu0
    %v5912 = vadd.f32 0.0, %v5911
    %5913 = vmatmul.f32.gmra.mxu0 %v5811
    %v5914 = vpop.f32.mrf.mxu0
    %v5915 = vadd.f32 0.0, %v5914
    %5916 = vmatmul.f32.gmra.mxu0 %v5812
    %v5917 = vpop.f32.mrf.mxu0
    %v5918 = vadd.f32 0.0, %v5917
    %5919 = vmatmul.f32.gmra.mxu0 %v5813
    %v5920 = vpop.f32.mrf.mxu0
    %v5921 = vadd.f32 0.0, %v5920
    %5922 = vmatmul.f32.gmra.mxu0 %v5814
    %v5923 = vpop.f32.mrf.mxu0
    %v5924 = vadd.f32 0.0, %v5923
    %5925 = vmatmul.f32.gmra.mxu0 %v5815
    %v5926 = vpop.f32.mrf.mxu0
    %v5927 = vadd.f32 0.0, %v5926
    %5928 = vmatmul.f32.gmra.mxu0 %v5816
    %v5929 = vpop.f32.mrf.mxu0
    %v5930 = vadd.f32 0.0, %v5929
    %5931 = vmatmul.f32.gmra.mxu0 %v5817
    %v5932 = vpop.f32.mrf.mxu0
    %v5933 = vadd.f32 0.0, %v5932
    %5934 = vmatmul.f32.gmra.mxu0 %v5818
    %v5935 = vpop.f32.mrf.mxu0
    %v5936 = vadd.f32 0.0, %v5935
    %5937 = vmatmul.f32.gmra.mxu0 %v5819
    %v5938 = vpop.f32.mrf.mxu0
    %v5939 = vadd.f32 0.0, %v5938
    %5940 = vmatmul.f32.gmra.mxu0 %v5820
    %v5941 = vpop.f32.mrf.mxu0
    %v5942 = vadd.f32 0.0, %v5941
    %5943 = vmatmul.f32.gmra.mxu0 %v5821
    %v5944 = vpop.f32.mrf.mxu0
    %v5945 = vadd.f32 0.0, %v5944
    %5946 = vmatmul.f32.gmra.mxu0 %v5822
    %v5947 = vpop.f32.mrf.mxu0
    %v5948 = vadd.f32 0.0, %v5947
    %5949 = vmatmul.f32.gmra.mxu0 %v5823
    %v5950 = vpop.f32.mrf.mxu0
    %v5951 = vadd.f32 0.0, %v5950
    %5952 = vmatmul.f32.gmra.mxu0 %v5824
    %v5953 = vpop.f32.mrf.mxu0
    %v5954 = vadd.f32 0.0, %v5953
    %5955 = vmatmul.f32.gmra.mxu0 %v5825
    %v5956 = vpop.f32.mrf.mxu0
    %v5957 = vadd.f32 0.0, %v5956
    %5958 = vmatmul.f32.gmra.mxu0 %v5826
    %v5959 = vpop.f32.mrf.mxu0
    %v5960 = vadd.f32 0.0, %v5959
    %5961 = vmatmul.f32.gmra.mxu0 %v5827
    %v5962 = vpop.f32.mrf.mxu0
    %v5963 = vadd.f32 0.0, %v5962
    %5964 = vmatmul.f32.gmra.mxu0 %v5828
    %v5965 = vpop.f32.mrf.mxu0
    %v5966 = vadd.f32 0.0, %v5965
    %5967 = vmatmul.f32.gmra.mxu0 %v5829
    %v5968 = vpop.f32.mrf.mxu0
    %v5969 = vadd.f32 0.0, %v5968
    %5970 = vmatmul.f32.gmra.mxu0 %v5830
    %v5971 = vpop.f32.mrf.mxu0
    %v5972 = vadd.f32 0.0, %v5971
    %5973 = vmatmul.f32.gmra.mxu0 %v5831
    %v5974 = vpop.f32.mrf.mxu0
    %v5975 = vadd.f32 0.0, %v5974
    %5976 = vmatmul.f32.gmra.mxu0 %v5832
    %v5977 = vpop.f32.mrf.mxu0
    %v5978 = vadd.f32 0.0, %v5977
    %5979 = vmatmul.f32.gmra.mxu0 %v5833
    %v5980 = vpop.f32.mrf.mxu0
    %v5981 = vadd.f32 0.0, %v5980
    %5982 = vmatmul.f32.gmra.mxu0 %v5834
    %v5983 = vpop.f32.mrf.mxu0
    %v5984 = vadd.f32 0.0, %v5983
    %5985 = vmatmul.f32.gmra.mxu0 %v5835
    %v5986 = vpop.f32.mrf.mxu0
    %v5987 = vadd.f32 0.0, %v5986
    %5988 = vmatmul.f32.gmra.mxu0 %v5836
    %v5989 = vpop.f32.mrf.mxu0
    %v5990 = vadd.f32 0.0, %v5989
    %5991 = vmatmul.f32.gmra.mxu0 %v5837
    %v5992 = vpop.f32.mrf.mxu0
    %v5993 = vadd.f32 0.0, %v5992
    %5994 = vmatmul.f32.gmra.mxu0 %v5838
    %v5995 = vpop.f32.mrf.mxu0
    %v5996 = vadd.f32 0.0, %v5995
    %5997 = vmatmul.f32.gmra.mxu0 %v5839
    %v5998 = vpop.f32.mrf.mxu0
    %v5999 = vadd.f32 0.0, %v5998
    %6000 = vmatmul.f32.gmra.mxu0 %v5840
    %v6001 = vpop.f32.mrf.mxu0
    %v6002 = vadd.f32 0.0, %v6001
    %6003 = vmatmul.f32.gmra.mxu0 %v5841
    %v6004 = vpop.f32.mrf.mxu0
    %v6005 = vadd.f32 0.0, %v6004
    %6006 = vmatmul.f32.gmra.mxu0 %v5842
    %v6007 = vpop.f32.mrf.mxu0
    %v6008 = vadd.f32 0.0, %v6007
    %6009 = vmatmul.f32.gmra.mxu0 %v5843
    %v6010 = vpop.f32.mrf.mxu0
    %v6011 = vadd.f32 0.0, %v6010
    %6012 = vmatmul.f32.gmra.mxu0 %v5844
    %v6013 = vpop.f32.mrf.mxu0
    %v6014 = vadd.f32 0.0, %v6013
    %6015 = vmatmul.f32.gmra.mxu0 %v5845
    %v6016 = vpop.f32.mrf.mxu0
    %v6017 = vadd.f32 0.0, %v6016
    %6018 = vmatmul.f32.gmra.mxu0 %v5846
    %v6019 = vpop.f32.mrf.mxu0
    %v6020 = vadd.f32 0.0, %v6019
    %6021 = vmatmul.f32.gmra.mxu0 %v5847
    %v6022 = vpop.f32.mrf.mxu0
    %v6023 = vadd.f32 0.0, %v6022
    %6024 = vmatmul.f32.gmra.mxu0 %v5848
    %v6025 = vpop.f32.mrf.mxu0
    %v6026 = vadd.f32 0.0, %v6025
    %6027 = vmatmul.f32.gmra.mxu0 %v5849
    %v6028 = vpop.f32.mrf.mxu0
    %v6029 = vadd.f32 0.0, %v6028
    %6030 = vmatmul.f32.gmra.mxu0 %v5850
    %v6031 = vpop.f32.mrf.mxu0
    %v6032 = vadd.f32 0.0, %v6031
    %6033 = vmatmul.f32.gmra.mxu0 %v5851
    %v6034 = vpop.f32.mrf.mxu0
    %v6035 = vadd.f32 0.0, %v6034
    %6036 = vmatmul.f32.gmra.mxu0 %v5852
    %v6037 = vpop.f32.mrf.mxu0
    %v6038 = vadd.f32 0.0, %v6037
    %6039 = vmatmul.f32.gmra.mxu0 %v5853
    %v6040 = vpop.f32.mrf.mxu0
    %v6041 = vadd.f32 0.0, %v6040
    %6042 = vmatmul.f32.gmra.mxu0 %v5854
    %v6043 = vpop.f32.mrf.mxu0
    %v6044 = vadd.f32 0.0, %v6043
    %6045 = vmatmul.f32.gmra.mxu0 %v5855
    %v6046 = vpop.f32.mrf.mxu0
    %v6047 = vadd.f32 0.0, %v6046
    %6048 = vmatmul.f32.gmra.mxu0 %v5856
    %v6049 = vpop.f32.mrf.mxu0
    %v6050 = vadd.f32 0.0, %v6049
    %6051 = vmatmul.f32.gmra.mxu0 %v5857
    %v6052 = vpop.f32.mrf.mxu0
    %v6053 = vadd.f32 0.0, %v6052
    %6054 = vmatmul.f32.gmra.mxu0 %v5858
    %v6055 = vpop.f32.mrf.mxu0
    %v6056 = vadd.f32 0.0, %v6055
    %6057 = vmatmul.f32.gmra.mxu0 %v5859
    %v6058 = vpop.f32.mrf.mxu0
    %v6059 = vadd.f32 0.0, %v6058
    %6060 = vmatmul.f32.gmra.mxu0 %v5860
    %v6061 = vpop.f32.mrf.mxu0
    %v6062 = vadd.f32 0.0, %v6061
    %6063 = vmatmul.f32.gmra.mxu0 %v5861
    %v6064 = vpop.f32.mrf.mxu0
    %v6065 = vadd.f32 0.0, %v6064
    %6066 = vmatmul.f32.gmra.mxu0 %v5862
    %v6067 = vpop.f32.mrf.mxu0
    %v6068 = vadd.f32 0.0, %v6067
    %6069 = vmatmul.f32.gmra.mxu0 %v5863
    %v6070 = vpop.f32.mrf.mxu0
    %v6071 = vadd.f32 0.0, %v6070
    %6072 = vmatmul.f32.gmra.mxu0 %v5864
    %v6073 = vpop.f32.mrf.mxu0
    %v6074 = vadd.f32 0.0, %v6073
    %6075 = vmatmul.f32.gmra.mxu0 %v5865
    %v6076 = vpop.f32.mrf.mxu0
    %v6077 = vadd.f32 0.0, %v6076
    %6078 = vmatmul.f32.gmra.mxu0 %v5866
    %v6079 = vpop.f32.mrf.mxu0
    %v6080 = vadd.f32 0.0, %v6079
    %6081 = vmatmul.f32.gmra.mxu0 %v5867
    %v6082 = vpop.f32.mrf.mxu0
    %v6083 = vadd.f32 0.0, %v6082
    %6084 = vmatmul.f32.gmra.mxu0 %v5868
    %v6085 = vpop.f32.mrf.mxu0
    %v6086 = vadd.f32 0.0, %v6085
    %6087 = vmatmul.f32.gmra.mxu0 %v5869
    %v6088 = vpop.f32.mrf.mxu0
    %v6089 = vadd.f32 0.0, %v6088
    %6090 = vmatmul.f32.gmra.mxu0 %v5870
    %v6091 = vpop.f32.mrf.mxu0
    %v6092 = vadd.f32 0.0, %v6091
    %6093 = vmatmul.f32.gmra.mxu0 %v5871
    %v6094 = vpop.f32.mrf.mxu0
    %v6095 = vadd.f32 0.0, %v6094
    %6096 = vdwg.mxu0
    %v6097 = vadd.f32 %v5744, %v5906
    %v6098 = vadd.f32 %v5745, %v5909
    %v6099 = vadd.f32 %v5746, %v5912
    %v6100 = vadd.f32 %v5747, %v5915
    %v6101 = vadd.f32 %v5748, %v5918
    %v6102 = vadd.f32 %v5749, %v5921
    %v6103 = vadd.f32 %v5750, %v5924
    %v6104 = vadd.f32 %v5751, %v5927
    %v6105 = vadd.f32 %v5752, %v5930
    %v6106 = vadd.f32 %v5753, %v5933
    %v6107 = vadd.f32 %v5754, %v5936
    %v6108 = vadd.f32 %v5755, %v5939
    %v6109 = vadd.f32 %v5756, %v5942
    %v6110 = vadd.f32 %v5757, %v5945
    %v6111 = vadd.f32 %v5758, %v5948
    %v6112 = vadd.f32 %v5759, %v5951
    %v6113 = vadd.f32 %v5760, %v5954
    %v6114 = vadd.f32 %v5761, %v5957
    %v6115 = vadd.f32 %v5762, %v5960
    %v6116 = vadd.f32 %v5763, %v5963
    %v6117 = vadd.f32 %v5764, %v5966
    %v6118 = vadd.f32 %v5765, %v5969
    %v6119 = vadd.f32 %v5766, %v5972
    %v6120 = vadd.f32 %v5767, %v5975
    %v6121 = vadd.f32 %v5768, %v5978
    %v6122 = vadd.f32 %v5769, %v5981
    %v6123 = vadd.f32 %v5770, %v5984
    %v6124 = vadd.f32 %v5771, %v5987
    %v6125 = vadd.f32 %v5772, %v5990
    %v6126 = vadd.f32 %v5773, %v5993
    %v6127 = vadd.f32 %v5774, %v5996
    %v6128 = vadd.f32 %v5775, %v5999
    %v6129 = vadd.f32 %v5776, %v6002
    %v6130 = vadd.f32 %v5777, %v6005
    %v6131 = vadd.f32 %v5778, %v6008
    %v6132 = vadd.f32 %v5779, %v6011
    %v6133 = vadd.f32 %v5780, %v6014
    %v6134 = vadd.f32 %v5781, %v6017
    %v6135 = vadd.f32 %v5782, %v6020
    %v6136 = vadd.f32 %v5783, %v6023
    %v6137 = vadd.f32 %v5784, %v6026
    %v6138 = vadd.f32 %v5785, %v6029
    %v6139 = vadd.f32 %v5786, %v6032
    %v6140 = vadd.f32 %v5787, %v6035
    %v6141 = vadd.f32 %v5788, %v6038
    %v6142 = vadd.f32 %v5789, %v6041
    %v6143 = vadd.f32 %v5790, %v6044
    %v6144 = vadd.f32 %v5791, %v6047
    %v6145 = vadd.f32 %v5792, %v6050
    %v6146 = vadd.f32 %v5793, %v6053
    %v6147 = vadd.f32 %v5794, %v6056
    %v6148 = vadd.f32 %v5795, %v6059
    %v6149 = vadd.f32 %v5796, %v6062
    %v6150 = vadd.f32 %v5797, %v6065
    %v6151 = vadd.f32 %v5798, %v6068
    %v6152 = vadd.f32 %v5799, %v6071
    %v6153 = vadd.f32 %v5800, %v6074
    %v6154 = vadd.f32 %v5801, %v6077
    %v6155 = vadd.f32 %v5802, %v6080
    %v6156 = vadd.f32 %v5803, %v6083
    %v6157 = vadd.f32 %v5804, %v6086
    %v6158 = vadd.f32 %v5805, %v6089
    %v6159 = vadd.f32 %v5806, %v6092
    %v6160 = vadd.f32 %v5807, %v6095
    %v6161 = vld [vmem:[%s2274 + $0x8] sm:$0xff]
    %v6162 = vld [vmem:[%s2274 + $0x10] sm:$0xff]
    %v6163 = vld [vmem:[%s2274 + $0x28] sm:$0xff]
    %v6164 = vld [vmem:[%s2274 + $0x30] sm:$0xff]
    %v6165 = vld [vmem:[%s2274 + $0x48] sm:$0xff]
    %v6166 = vld [vmem:[%s2274 + $0x50] sm:$0xff]
    %v6167 = vld [vmem:[%s2274 + $0x68] sm:$0xff]
    %v6168 = vld [vmem:[%s2274 + $0x70] sm:$0xff]
    %v6169 = vld [vmem:[%s2274 + $0x88] sm:$0xff]
    %v6170 = vld [vmem:[%s2274 + $0x90] sm:$0xff]
    %v6171 = vld [vmem:[%s2274 + $0xa8] sm:$0xff]
    %v6172 = vld [vmem:[%s2274 + $0xb0] sm:$0xff]
    %v6173 = vld [vmem:[%s2274 + $0xc8] sm:$0xff]
    %v6174 = vld [vmem:[%s2274 + $0xd0] sm:$0xff]
    %v6175 = vld [vmem:[%s2274 + $0xe8] sm:$0xff]
    %v6176 = vld [vmem:[%s2274 + $0xf0] sm:$0xff]
    %v6177 = vld [vmem:[%s2274 + $0x108] sm:$0xff]
    %v6178 = vld [vmem:[%s2274 + $0x110] sm:$0xff]
    %v6179 = vld [vmem:[%s2274 + $0x128] sm:$0xff]
    %v6180 = vld [vmem:[%s2274 + $0x130] sm:$0xff]
    %v6181 = vld [vmem:[%s2274 + $0x148] sm:$0xff]
    %v6182 = vld [vmem:[%s2274 + $0x150] sm:$0xff]
    %v6183 = vld [vmem:[%s2274 + $0x168] sm:$0xff]
    %v6184 = vld [vmem:[%s2274 + $0x170] sm:$0xff]
    %v6185 = vld [vmem:[%s2274 + $0x188] sm:$0xff]
    %v6186 = vld [vmem:[%s2274 + $0x190] sm:$0xff]
    %v6187 = vld [vmem:[%s2274 + $0x1a8] sm:$0xff]
    %v6188 = vld [vmem:[%s2274 + $0x1b0] sm:$0xff]
    %v6189 = vld [vmem:[%s2274 + $0x1c8] sm:$0xff]
    %v6190 = vld [vmem:[%s2274 + $0x1d0] sm:$0xff]
    %v6191 = vld [vmem:[%s2274 + $0x1e8] sm:$0xff]
    %v6192 = vld [vmem:[%s2274 + $0x1f0] sm:$0xff]
    %v6193 = vld [vmem:[%s2274 + $0x248] sm:$0xff]
    %v6194 = vld [vmem:[%s2274 + $0x250] sm:$0xff]
    %v6195 = vld [vmem:[%s2274 + $0x268] sm:$0xff]
    %v6196 = vld [vmem:[%s2274 + $0x270] sm:$0xff]
    %v6197 = vld [vmem:[%s2274 + $0x288] sm:$0xff]
    %v6198 = vld [vmem:[%s2274 + $0x290] sm:$0xff]
    %v6199 = vld [vmem:[%s2274 + $0x2a8] sm:$0xff]
    %v6200 = vld [vmem:[%s2274 + $0x2b0] sm:$0xff]
    %v6201 = vld [vmem:[%s2274 + $0x2c8] sm:$0xff]
    %v6202 = vld [vmem:[%s2274 + $0x2d0] sm:$0xff]
    %v6203 = vld [vmem:[%s2274 + $0x2e8] sm:$0xff]
    %v6204 = vld [vmem:[%s2274 + $0x2f0] sm:$0xff]
    %v6205 = vld [vmem:[%s2274 + $0x308] sm:$0xff]
    %v6206 = vld [vmem:[%s2274 + $0x310] sm:$0xff]
    %v6207 = vld [vmem:[%s2274 + $0x328] sm:$0xff]
    %v6208 = vld [vmem:[%s2274 + $0x330] sm:$0xff]
    %v6209 = vld [vmem:[%s2274 + $0x348] sm:$0xff]
    %v6210 = vld [vmem:[%s2274 + $0x350] sm:$0xff]
    %v6211 = vld [vmem:[%s2274 + $0x368] sm:$0xff]
    %v6212 = vld [vmem:[%s2274 + $0x370] sm:$0xff]
    %v6213 = vld [vmem:[%s2274 + $0x388] sm:$0xff]
    %v6214 = vld [vmem:[%s2274 + $0x390] sm:$0xff]
    %v6215 = vld [vmem:[%s2274 + $0x3a8] sm:$0xff]
    %v6216 = vld [vmem:[%s2274 + $0x3b0] sm:$0xff]
    %v6217 = vld [vmem:[%s2274 + $0x3c8] sm:$0xff]
    %v6218 = vld [vmem:[%s2274 + $0x3d0] sm:$0xff]
    %v6219 = vld [vmem:[%s2274 + $0x3e8] sm:$0xff]
    %v6220 = vld [vmem:[%s2274 + $0x3f0] sm:$0xff]
    %v6221 = vld [vmem:[%s2274 + $0x408] sm:$0xff]
    %v6222 = vld [vmem:[%s2274 + $0x410] sm:$0xff]
    %v6223 = vld [vmem:[%s2274 + $0x428] sm:$0xff]
    %v6224 = vld [vmem:[%s2274 + $0x430] sm:$0xff]
    %v6225 = vld [vmem:[#allocation8 + $0x380] sm:$0xff]
    %v6226 = vld [vmem:[#allocation8 + $0x388] sm:$0xff]
    %v6227 = vld [vmem:[#allocation8 + $0x390] sm:$0xff]
    %v6228 = vld [vmem:[#allocation8 + $0x398] sm:$0xff]
    %v6229 = vld [vmem:[#allocation8 + $0x3a0] sm:$0xff]
    %v6230 = vld [vmem:[#allocation8 + $0x3a8] sm:$0xff]
    %v6231 = vld [vmem:[#allocation8 + $0x3b0] sm:$0xff]
    %v6232 = vld [vmem:[#allocation8 + $0x3b8] sm:$0xff]
    %v6233 = vld [vmem:[#allocation8 + $0x3c0] sm:$0xff]
    %v6234 = vld [vmem:[#allocation8 + $0x3c8] sm:$0xff]
    %v6235 = vld [vmem:[#allocation8 + $0x3d0] sm:$0xff]
    %v6236 = vld [vmem:[#allocation8 + $0x3d8] sm:$0xff]
    %v6237 = vld [vmem:[#allocation8 + $0x3e0] sm:$0xff]
    %v6238 = vld [vmem:[#allocation8 + $0x3e8] sm:$0xff]
    %v6239 = vld [vmem:[#allocation8 + $0x3f0] sm:$0xff]
    %v6240 = vld [vmem:[#allocation8 + $0x3f8] sm:$0xff]
    %6241 = vmatpush.msra.mxu0 %v6240
    %6242 = vmatpush.msra.mxu0 %v6239
    %6243 = vmatpush.msra.mxu0 %v6238
    %6244 = vmatpush.msra.mxu0 %v6237
    %6245 = vmatpush.msra.mxu0 %v6236
    %6246 = vmatpush.msra.mxu0 %v6235
    %6247 = vmatpush.msra.mxu0 %v6234
    %6248 = vmatpush.msra.mxu0 %v6233
    %6249 = vmatpush.msra.mxu0 %v6232
    %6250 = vmatpush.msra.mxu0 %v6231
    %6251 = vmatpush.msra.mxu0 %v6230
    %6252 = vmatpush.msra.mxu0 %v6229
    %6253 = vmatpush.msra.mxu0 %v6228
    %6254 = vmatpush.msra.mxu0 %v6227
    %6255 = vmatpush.msra.mxu0 %v6226
    %6256 = vmatpush.msra.mxu0 %v6225
    %6257 = vmatmul.f32.gmra.mxu0 %v6161
    %v6258 = vpop.f32.mrf.mxu0
    %v6259 = vadd.f32 0.0, %v6258
    %6260 = vmatmul.f32.gmra.mxu0 %v6162
    %v6261 = vpop.f32.mrf.mxu0
    %v6262 = vadd.f32 0.0, %v6261
    %6263 = vmatmul.f32.gmra.mxu0 %v6163
    %v6264 = vpop.f32.mrf.mxu0
    %v6265 = vadd.f32 0.0, %v6264
    %6266 = vmatmul.f32.gmra.mxu0 %v6164
    %v6267 = vpop.f32.mrf.mxu0
    %v6268 = vadd.f32 0.0, %v6267
    %6269 = vmatmul.f32.gmra.mxu0 %v6165
    %v6270 = vpop.f32.mrf.mxu0
    %v6271 = vadd.f32 0.0, %v6270
    %6272 = vmatmul.f32.gmra.mxu0 %v6166
    %v6273 = vpop.f32.mrf.mxu0
    %v6274 = vadd.f32 0.0, %v6273
    %6275 = vmatmul.f32.gmra.mxu0 %v6167
    %v6276 = vpop.f32.mrf.mxu0
    %v6277 = vadd.f32 0.0, %v6276
    %6278 = vmatmul.f32.gmra.mxu0 %v6168
    %v6279 = vpop.f32.mrf.mxu0
    %v6280 = vadd.f32 0.0, %v6279
    %6281 = vmatmul.f32.gmra.mxu0 %v6169
    %v6282 = vpop.f32.mrf.mxu0
    %v6283 = vadd.f32 0.0, %v6282
    %6284 = vmatmul.f32.gmra.mxu0 %v6170
    %v6285 = vpop.f32.mrf.mxu0
    %v6286 = vadd.f32 0.0, %v6285
    %6287 = vmatmul.f32.gmra.mxu0 %v6171
    %v6288 = vpop.f32.mrf.mxu0
    %v6289 = vadd.f32 0.0, %v6288
    %6290 = vmatmul.f32.gmra.mxu0 %v6172
    %v6291 = vpop.f32.mrf.mxu0
    %v6292 = vadd.f32 0.0, %v6291
    %6293 = vmatmul.f32.gmra.mxu0 %v6173
    %v6294 = vpop.f32.mrf.mxu0
    %v6295 = vadd.f32 0.0, %v6294
    %6296 = vmatmul.f32.gmra.mxu0 %v6174
    %v6297 = vpop.f32.mrf.mxu0
    %v6298 = vadd.f32 0.0, %v6297
    %6299 = vmatmul.f32.gmra.mxu0 %v6175
    %v6300 = vpop.f32.mrf.mxu0
    %v6301 = vadd.f32 0.0, %v6300
    %6302 = vmatmul.f32.gmra.mxu0 %v6176
    %v6303 = vpop.f32.mrf.mxu0
    %v6304 = vadd.f32 0.0, %v6303
    %6305 = vmatmul.f32.gmra.mxu0 %v6177
    %v6306 = vpop.f32.mrf.mxu0
    %v6307 = vadd.f32 0.0, %v6306
    %6308 = vmatmul.f32.gmra.mxu0 %v6178
    %v6309 = vpop.f32.mrf.mxu0
    %v6310 = vadd.f32 0.0, %v6309
    %6311 = vmatmul.f32.gmra.mxu0 %v6179
    %v6312 = vpop.f32.mrf.mxu0
    %v6313 = vadd.f32 0.0, %v6312
    %6314 = vmatmul.f32.gmra.mxu0 %v6180
    %v6315 = vpop.f32.mrf.mxu0
    %v6316 = vadd.f32 0.0, %v6315
    %6317 = vmatmul.f32.gmra.mxu0 %v6181
    %v6318 = vpop.f32.mrf.mxu0
    %v6319 = vadd.f32 0.0, %v6318
    %6320 = vmatmul.f32.gmra.mxu0 %v6182
    %v6321 = vpop.f32.mrf.mxu0
    %v6322 = vadd.f32 0.0, %v6321
    %6323 = vmatmul.f32.gmra.mxu0 %v6183
    %v6324 = vpop.f32.mrf.mxu0
    %v6325 = vadd.f32 0.0, %v6324
    %6326 = vmatmul.f32.gmra.mxu0 %v6184
    %v6327 = vpop.f32.mrf.mxu0
    %v6328 = vadd.f32 0.0, %v6327
    %6329 = vmatmul.f32.gmra.mxu0 %v6185
    %v6330 = vpop.f32.mrf.mxu0
    %v6331 = vadd.f32 0.0, %v6330
    %6332 = vmatmul.f32.gmra.mxu0 %v6186
    %v6333 = vpop.f32.mrf.mxu0
    %v6334 = vadd.f32 0.0, %v6333
    %6335 = vmatmul.f32.gmra.mxu0 %v6187
    %v6336 = vpop.f32.mrf.mxu0
    %v6337 = vadd.f32 0.0, %v6336
    %6338 = vmatmul.f32.gmra.mxu0 %v6188
    %v6339 = vpop.f32.mrf.mxu0
    %v6340 = vadd.f32 0.0, %v6339
    %6341 = vmatmul.f32.gmra.mxu0 %v6189
    %v6342 = vpop.f32.mrf.mxu0
    %v6343 = vadd.f32 0.0, %v6342
    %6344 = vmatmul.f32.gmra.mxu0 %v6190
    %v6345 = vpop.f32.mrf.mxu0
    %v6346 = vadd.f32 0.0, %v6345
    %6347 = vmatmul.f32.gmra.mxu0 %v6191
    %v6348 = vpop.f32.mrf.mxu0
    %v6349 = vadd.f32 0.0, %v6348
    %6350 = vmatmul.f32.gmra.mxu0 %v6192
    %v6351 = vpop.f32.mrf.mxu0
    %v6352 = vadd.f32 0.0, %v6351
    %6353 = vmatmul.f32.gmra.mxu0 %v6193
    %v6354 = vpop.f32.mrf.mxu0
    %v6355 = vadd.f32 0.0, %v6354
    %6356 = vmatmul.f32.gmra.mxu0 %v6194
    %v6357 = vpop.f32.mrf.mxu0
    %v6358 = vadd.f32 0.0, %v6357
    %6359 = vmatmul.f32.gmra.mxu0 %v6195
    %v6360 = vpop.f32.mrf.mxu0
    %v6361 = vadd.f32 0.0, %v6360
    %6362 = vmatmul.f32.gmra.mxu0 %v6196
    %v6363 = vpop.f32.mrf.mxu0
    %v6364 = vadd.f32 0.0, %v6363
    %6365 = vmatmul.f32.gmra.mxu0 %v6197
    %v6366 = vpop.f32.mrf.mxu0
    %v6367 = vadd.f32 0.0, %v6366
    %6368 = vmatmul.f32.gmra.mxu0 %v6198
    %v6369 = vpop.f32.mrf.mxu0
    %v6370 = vadd.f32 0.0, %v6369
    %6371 = vmatmul.f32.gmra.mxu0 %v6199
    %v6372 = vpop.f32.mrf.mxu0
    %v6373 = vadd.f32 0.0, %v6372
    %6374 = vmatmul.f32.gmra.mxu0 %v6200
    %v6375 = vpop.f32.mrf.mxu0
    %v6376 = vadd.f32 0.0, %v6375
    %6377 = vmatmul.f32.gmra.mxu0 %v6201
    %v6378 = vpop.f32.mrf.mxu0
    %v6379 = vadd.f32 0.0, %v6378
    %6380 = vmatmul.f32.gmra.mxu0 %v6202
    %v6381 = vpop.f32.mrf.mxu0
    %v6382 = vadd.f32 0.0, %v6381
    %6383 = vmatmul.f32.gmra.mxu0 %v6203
    %v6384 = vpop.f32.mrf.mxu0
    %v6385 = vadd.f32 0.0, %v6384
    %6386 = vmatmul.f32.gmra.mxu0 %v6204
    %v6387 = vpop.f32.mrf.mxu0
    %v6388 = vadd.f32 0.0, %v6387
    %6389 = vmatmul.f32.gmra.mxu0 %v6205
    %v6390 = vpop.f32.mrf.mxu0
    %v6391 = vadd.f32 0.0, %v6390
    %6392 = vmatmul.f32.gmra.mxu0 %v6206
    %v6393 = vpop.f32.mrf.mxu0
    %v6394 = vadd.f32 0.0, %v6393
    %6395 = vmatmul.f32.gmra.mxu0 %v6207
    %v6396 = vpop.f32.mrf.mxu0
    %v6397 = vadd.f32 0.0, %v6396
    %6398 = vmatmul.f32.gmra.mxu0 %v6208
    %v6399 = vpop.f32.mrf.mxu0
    %v6400 = vadd.f32 0.0, %v6399
    %6401 = vmatmul.f32.gmra.mxu0 %v6209
    %v6402 = vpop.f32.mrf.mxu0
    %v6403 = vadd.f32 0.0, %v6402
    %6404 = vmatmul.f32.gmra.mxu0 %v6210
    %v6405 = vpop.f32.mrf.mxu0
    %v6406 = vadd.f32 0.0, %v6405
    %6407 = vmatmul.f32.gmra.mxu0 %v6211
    %v6408 = vpop.f32.mrf.mxu0
    %v6409 = vadd.f32 0.0, %v6408
    %6410 = vmatmul.f32.gmra.mxu0 %v6212
    %v6411 = vpop.f32.mrf.mxu0
    %v6412 = vadd.f32 0.0, %v6411
    %6413 = vmatmul.f32.gmra.mxu0 %v6213
    %v6414 = vpop.f32.mrf.mxu0
    %v6415 = vadd.f32 0.0, %v6414
    %6416 = vmatmul.f32.gmra.mxu0 %v6214
    %v6417 = vpop.f32.mrf.mxu0
    %v6418 = vadd.f32 0.0, %v6417
    %6419 = vmatmul.f32.gmra.mxu0 %v6215
    %v6420 = vpop.f32.mrf.mxu0
    %v6421 = vadd.f32 0.0, %v6420
    %6422 = vmatmul.f32.gmra.mxu0 %v6216
    %v6423 = vpop.f32.mrf.mxu0
    %v6424 = vadd.f32 0.0, %v6423
    %6425 = vmatmul.f32.gmra.mxu0 %v6217
    %v6426 = vpop.f32.mrf.mxu0
    %v6427 = vadd.f32 0.0, %v6426
    %6428 = vmatmul.f32.gmra.mxu0 %v6218
    %v6429 = vpop.f32.mrf.mxu0
    %v6430 = vadd.f32 0.0, %v6429
    %6431 = vmatmul.f32.gmra.mxu0 %v6219
    %v6432 = vpop.f32.mrf.mxu0
    %v6433 = vadd.f32 0.0, %v6432
    %6434 = vmatmul.f32.gmra.mxu0 %v6220
    %v6435 = vpop.f32.mrf.mxu0
    %v6436 = vadd.f32 0.0, %v6435
    %6437 = vmatmul.f32.gmra.mxu0 %v6221
    %v6438 = vpop.f32.mrf.mxu0
    %v6439 = vadd.f32 0.0, %v6438
    %6440 = vmatmul.f32.gmra.mxu0 %v6222
    %v6441 = vpop.f32.mrf.mxu0
    %v6442 = vadd.f32 0.0, %v6441
    %6443 = vmatmul.f32.gmra.mxu0 %v6223
    %v6444 = vpop.f32.mrf.mxu0
    %v6445 = vadd.f32 0.0, %v6444
    %6446 = vmatmul.f32.gmra.mxu0 %v6224
    %v6447 = vpop.f32.mrf.mxu0
    %v6448 = vadd.f32 0.0, %v6447
    %6449 = vdwg.mxu0
    %v6450 = vadd.f32 %v6097, %v6259
    %v6451 = vadd.f32 %v6098, %v6262
    %v6452 = vadd.f32 %v6099, %v6265
    %v6453 = vadd.f32 %v6100, %v6268
    %v6454 = vadd.f32 %v6101, %v6271
    %v6455 = vadd.f32 %v6102, %v6274
    %v6456 = vadd.f32 %v6103, %v6277
    %v6457 = vadd.f32 %v6104, %v6280
    %v6458 = vadd.f32 %v6105, %v6283
    %v6459 = vadd.f32 %v6106, %v6286
    %v6460 = vadd.f32 %v6107, %v6289
    %v6461 = vadd.f32 %v6108, %v6292
    %v6462 = vadd.f32 %v6109, %v6295
    %v6463 = vadd.f32 %v6110, %v6298
    %v6464 = vadd.f32 %v6111, %v6301
    %v6465 = vadd.f32 %v6112, %v6304
    %v6466 = vadd.f32 %v6113, %v6307
    %v6467 = vadd.f32 %v6114, %v6310
    %v6468 = vadd.f32 %v6115, %v6313
    %v6469 = vadd.f32 %v6116, %v6316
    %v6470 = vadd.f32 %v6117, %v6319
    %v6471 = vadd.f32 %v6118, %v6322
    %v6472 = vadd.f32 %v6119, %v6325
    %v6473 = vadd.f32 %v6120, %v6328
    %v6474 = vadd.f32 %v6121, %v6331
    %v6475 = vadd.f32 %v6122, %v6334
    %v6476 = vadd.f32 %v6123, %v6337
    %v6477 = vadd.f32 %v6124, %v6340
    %v6478 = vadd.f32 %v6125, %v6343
    %v6479 = vadd.f32 %v6126, %v6346
    %v6480 = vadd.f32 %v6127, %v6349
    %v6481 = vadd.f32 %v6128, %v6352
    %v6482 = vadd.f32 %v6129, %v6355
    %v6483 = vadd.f32 %v6130, %v6358
    %v6484 = vadd.f32 %v6131, %v6361
    %v6485 = vadd.f32 %v6132, %v6364
    %v6486 = vadd.f32 %v6133, %v6367
    %v6487 = vadd.f32 %v6134, %v6370
    %v6488 = vadd.f32 %v6135, %v6373
    %v6489 = vadd.f32 %v6136, %v6376
    %v6490 = vadd.f32 %v6137, %v6379
    %v6491 = vadd.f32 %v6138, %v6382
    %v6492 = vadd.f32 %v6139, %v6385
    %v6493 = vadd.f32 %v6140, %v6388
    %v6494 = vadd.f32 %v6141, %v6391
    %v6495 = vadd.f32 %v6142, %v6394
    %v6496 = vadd.f32 %v6143, %v6397
    %v6497 = vadd.f32 %v6144, %v6400
    %v6498 = vadd.f32 %v6145, %v6403
    %v6499 = vadd.f32 %v6146, %v6406
    %v6500 = vadd.f32 %v6147, %v6409
    %v6501 = vadd.f32 %v6148, %v6412
    %v6502 = vadd.f32 %v6149, %v6415
    %v6503 = vadd.f32 %v6150, %v6418
    %v6504 = vadd.f32 %v6151, %v6421
    %v6505 = vadd.f32 %v6152, %v6424
    %v6506 = vadd.f32 %v6153, %v6427
    %v6507 = vadd.f32 %v6154, %v6430
    %v6508 = vadd.f32 %v6155, %v6433
    %v6509 = vadd.f32 %v6156, %v6436
    %v6510 = vadd.f32 %v6157, %v6439
    %v6511 = vadd.f32 %v6158, %v6442
    %v6512 = vadd.f32 %v6159, %v6445
    %v6513 = vadd.f32 %v6160, %v6448
    %v6514 = vld [vmem:[%s2274 + $0x9] sm:$0xff]
    %v6515 = vld [vmem:[%s2274 + $0x11] sm:$0xff]
    %v6516 = vld [vmem:[%s2274 + $0x29] sm:$0xff]
    %v6517 = vld [vmem:[%s2274 + $0x31] sm:$0xff]
    %v6518 = vld [vmem:[%s2274 + $0x49] sm:$0xff]
    %v6519 = vld [vmem:[%s2274 + $0x51] sm:$0xff]
    %v6520 = vld [vmem:[%s2274 + $0x69] sm:$0xff]
    %v6521 = vld [vmem:[%s2274 + $0x71] sm:$0xff]
    %v6522 = vld [vmem:[%s2274 + $0x89] sm:$0xff]
    %v6523 = vld [vmem:[%s2274 + $0x91] sm:$0xff]
    %v6524 = vld [vmem:[%s2274 + $0xa9] sm:$0xff]
    %v6525 = vld [vmem:[%s2274 + $0xb1] sm:$0xff]
    %v6526 = vld [vmem:[%s2274 + $0xc9] sm:$0xff]
    %v6527 = vld [vmem:[%s2274 + $0xd1] sm:$0xff]
    %v6528 = vld [vmem:[%s2274 + $0xe9] sm:$0xff]
    %v6529 = vld [vmem:[%s2274 + $0xf1] sm:$0xff]
    %v6530 = vld [vmem:[%s2274 + $0x109] sm:$0xff]
    %v6531 = vld [vmem:[%s2274 + $0x111] sm:$0xff]
    %v6532 = vld [vmem:[%s2274 + $0x129] sm:$0xff]
    %v6533 = vld [vmem:[%s2274 + $0x131] sm:$0xff]
    %v6534 = vld [vmem:[%s2274 + $0x149] sm:$0xff]
    %v6535 = vld [vmem:[%s2274 + $0x151] sm:$0xff]
    %v6536 = vld [vmem:[%s2274 + $0x169] sm:$0xff]
    %v6537 = vld [vmem:[%s2274 + $0x171] sm:$0xff]
    %v6538 = vld [vmem:[%s2274 + $0x189] sm:$0xff]
    %v6539 = vld [vmem:[%s2274 + $0x191] sm:$0xff]
    %v6540 = vld [vmem:[%s2274 + $0x1a9] sm:$0xff]
    %v6541 = vld [vmem:[%s2274 + $0x1b1] sm:$0xff]
    %v6542 = vld [vmem:[%s2274 + $0x1c9] sm:$0xff]
    %v6543 = vld [vmem:[%s2274 + $0x1d1] sm:$0xff]
    %v6544 = vld [vmem:[%s2274 + $0x1e9] sm:$0xff]
    %v6545 = vld [vmem:[%s2274 + $0x1f1] sm:$0xff]
    %v6546 = vld [vmem:[%s2274 + $0x249] sm:$0xff]
    %v6547 = vld [vmem:[%s2274 + $0x251] sm:$0xff]
    %v6548 = vld [vmem:[%s2274 + $0x269] sm:$0xff]
    %v6549 = vld [vmem:[%s2274 + $0x271] sm:$0xff]
    %v6550 = vld [vmem:[%s2274 + $0x289] sm:$0xff]
    %v6551 = vld [vmem:[%s2274 + $0x291] sm:$0xff]
    %v6552 = vld [vmem:[%s2274 + $0x2a9] sm:$0xff]
    %v6553 = vld [vmem:[%s2274 + $0x2b1] sm:$0xff]
    %v6554 = vld [vmem:[%s2274 + $0x2c9] sm:$0xff]
    %v6555 = vld [vmem:[%s2274 + $0x2d1] sm:$0xff]
    %v6556 = vld [vmem:[%s2274 + $0x2e9] sm:$0xff]
    %v6557 = vld [vmem:[%s2274 + $0x2f1] sm:$0xff]
    %v6558 = vld [vmem:[%s2274 + $0x309] sm:$0xff]
    %v6559 = vld [vmem:[%s2274 + $0x311] sm:$0xff]
    %v6560 = vld [vmem:[%s2274 + $0x329] sm:$0xff]
    %v6561 = vld [vmem:[%s2274 + $0x331] sm:$0xff]
    %v6562 = vld [vmem:[%s2274 + $0x349] sm:$0xff]
    %v6563 = vld [vmem:[%s2274 + $0x351] sm:$0xff]
    %v6564 = vld [vmem:[%s2274 + $0x369] sm:$0xff]
    %v6565 = vld [vmem:[%s2274 + $0x371] sm:$0xff]
    %v6566 = vld [vmem:[%s2274 + $0x389] sm:$0xff]
    %v6567 = vld [vmem:[%s2274 + $0x391] sm:$0xff]
    %v6568 = vld [vmem:[%s2274 + $0x3a9] sm:$0xff]
    %v6569 = vld [vmem:[%s2274 + $0x3b1] sm:$0xff]
    %v6570 = vld [vmem:[%s2274 + $0x3c9] sm:$0xff]
    %v6571 = vld [vmem:[%s2274 + $0x3d1] sm:$0xff]
    %v6572 = vld [vmem:[%s2274 + $0x3e9] sm:$0xff]
    %v6573 = vld [vmem:[%s2274 + $0x3f1] sm:$0xff]
    %v6574 = vld [vmem:[%s2274 + $0x409] sm:$0xff]
    %v6575 = vld [vmem:[%s2274 + $0x411] sm:$0xff]
    %v6576 = vld [vmem:[%s2274 + $0x429] sm:$0xff]
    %v6577 = vld [vmem:[%s2274 + $0x431] sm:$0xff]
    %v6578 = vld [vmem:[#allocation8 + $0x400] sm:$0xff]
    %v6579 = vld [vmem:[#allocation8 + $0x408] sm:$0xff]
    %v6580 = vld [vmem:[#allocation8 + $0x410] sm:$0xff]
    %v6581 = vld [vmem:[#allocation8 + $0x418] sm:$0xff]
    %v6582 = vld [vmem:[#allocation8 + $0x420] sm:$0xff]
    %v6583 = vld [vmem:[#allocation8 + $0x428] sm:$0xff]
    %v6584 = vld [vmem:[#allocation8 + $0x430] sm:$0xff]
    %v6585 = vld [vmem:[#allocation8 + $0x438] sm:$0xff]
    %v6586 = vld [vmem:[#allocation8 + $0x440] sm:$0xff]
    %v6587 = vld [vmem:[#allocation8 + $0x448] sm:$0xff]
    %v6588 = vld [vmem:[#allocation8 + $0x450] sm:$0xff]
    %v6589 = vld [vmem:[#allocation8 + $0x458] sm:$0xff]
    %v6590 = vld [vmem:[#allocation8 + $0x460] sm:$0xff]
    %v6591 = vld [vmem:[#allocation8 + $0x468] sm:$0xff]
    %v6592 = vld [vmem:[#allocation8 + $0x470] sm:$0xff]
    %v6593 = vld [vmem:[#allocation8 + $0x478] sm:$0xff]
    %6594 = vmatpush.msra.mxu0 %v6593
    %6595 = vmatpush.msra.mxu0 %v6592
    %6596 = vmatpush.msra.mxu0 %v6591
    %6597 = vmatpush.msra.mxu0 %v6590
    %6598 = vmatpush.msra.mxu0 %v6589
    %6599 = vmatpush.msra.mxu0 %v6588
    %6600 = vmatpush.msra.mxu0 %v6587
    %6601 = vmatpush.msra.mxu0 %v6586
    %6602 = vmatpush.msra.mxu0 %v6585
    %6603 = vmatpush.msra.mxu0 %v6584
    %6604 = vmatpush.msra.mxu0 %v6583
    %6605 = vmatpush.msra.mxu0 %v6582
    %6606 = vmatpush.msra.mxu0 %v6581
    %6607 = vmatpush.msra.mxu0 %v6580
    %6608 = vmatpush.msra.mxu0 %v6579
    %6609 = vmatpush.msra.mxu0 %v6578
    %6610 = vmatmul.f32.gmra.mxu0 %v6514
    %v6611 = vpop.f32.mrf.mxu0
    %v6612 = vadd.f32 0.0, %v6611
    %6613 = vmatmul.f32.gmra.mxu0 %v6515
    %v6614 = vpop.f32.mrf.mxu0
    %v6615 = vadd.f32 0.0, %v6614
    %6616 = vmatmul.f32.gmra.mxu0 %v6516
    %v6617 = vpop.f32.mrf.mxu0
    %v6618 = vadd.f32 0.0, %v6617
    %6619 = vmatmul.f32.gmra.mxu0 %v6517
    %v6620 = vpop.f32.mrf.mxu0
    %v6621 = vadd.f32 0.0, %v6620
    %6622 = vmatmul.f32.gmra.mxu0 %v6518
    %v6623 = vpop.f32.mrf.mxu0
    %v6624 = vadd.f32 0.0, %v6623
    %6625 = vmatmul.f32.gmra.mxu0 %v6519
    %v6626 = vpop.f32.mrf.mxu0
    %v6627 = vadd.f32 0.0, %v6626
    %6628 = vmatmul.f32.gmra.mxu0 %v6520
    %v6629 = vpop.f32.mrf.mxu0
    %v6630 = vadd.f32 0.0, %v6629
    %6631 = vmatmul.f32.gmra.mxu0 %v6521
    %v6632 = vpop.f32.mrf.mxu0
    %v6633 = vadd.f32 0.0, %v6632
    %6634 = vmatmul.f32.gmra.mxu0 %v6522
    %v6635 = vpop.f32.mrf.mxu0
    %v6636 = vadd.f32 0.0, %v6635
    %6637 = vmatmul.f32.gmra.mxu0 %v6523
    %v6638 = vpop.f32.mrf.mxu0
    %v6639 = vadd.f32 0.0, %v6638
    %6640 = vmatmul.f32.gmra.mxu0 %v6524
    %v6641 = vpop.f32.mrf.mxu0
    %v6642 = vadd.f32 0.0, %v6641
    %6643 = vmatmul.f32.gmra.mxu0 %v6525
    %v6644 = vpop.f32.mrf.mxu0
    %v6645 = vadd.f32 0.0, %v6644
    %6646 = vmatmul.f32.gmra.mxu0 %v6526
    %v6647 = vpop.f32.mrf.mxu0
    %v6648 = vadd.f32 0.0, %v6647
    %6649 = vmatmul.f32.gmra.mxu0 %v6527
    %v6650 = vpop.f32.mrf.mxu0
    %v6651 = vadd.f32 0.0, %v6650
    %6652 = vmatmul.f32.gmra.mxu0 %v6528
    %v6653 = vpop.f32.mrf.mxu0
    %v6654 = vadd.f32 0.0, %v6653
    %6655 = vmatmul.f32.gmra.mxu0 %v6529
    %v6656 = vpop.f32.mrf.mxu0
    %v6657 = vadd.f32 0.0, %v6656
    %6658 = vmatmul.f32.gmra.mxu0 %v6530
    %v6659 = vpop.f32.mrf.mxu0
    %v6660 = vadd.f32 0.0, %v6659
    %6661 = vmatmul.f32.gmra.mxu0 %v6531
    %v6662 = vpop.f32.mrf.mxu0
    %v6663 = vadd.f32 0.0, %v6662
    %6664 = vmatmul.f32.gmra.mxu0 %v6532
    %v6665 = vpop.f32.mrf.mxu0
    %v6666 = vadd.f32 0.0, %v6665
    %6667 = vmatmul.f32.gmra.mxu0 %v6533
    %v6668 = vpop.f32.mrf.mxu0
    %v6669 = vadd.f32 0.0, %v6668
    %6670 = vmatmul.f32.gmra.mxu0 %v6534
    %v6671 = vpop.f32.mrf.mxu0
    %v6672 = vadd.f32 0.0, %v6671
    %6673 = vmatmul.f32.gmra.mxu0 %v6535
    %v6674 = vpop.f32.mrf.mxu0
    %v6675 = vadd.f32 0.0, %v6674
    %6676 = vmatmul.f32.gmra.mxu0 %v6536
    %v6677 = vpop.f32.mrf.mxu0
    %v6678 = vadd.f32 0.0, %v6677
    %6679 = vmatmul.f32.gmra.mxu0 %v6537
    %v6680 = vpop.f32.mrf.mxu0
    %v6681 = vadd.f32 0.0, %v6680
    %6682 = vmatmul.f32.gmra.mxu0 %v6538
    %v6683 = vpop.f32.mrf.mxu0
    %v6684 = vadd.f32 0.0, %v6683
    %6685 = vmatmul.f32.gmra.mxu0 %v6539
    %v6686 = vpop.f32.mrf.mxu0
    %v6687 = vadd.f32 0.0, %v6686
    %6688 = vmatmul.f32.gmra.mxu0 %v6540
    %v6689 = vpop.f32.mrf.mxu0
    %v6690 = vadd.f32 0.0, %v6689
    %6691 = vmatmul.f32.gmra.mxu0 %v6541
    %v6692 = vpop.f32.mrf.mxu0
    %v6693 = vadd.f32 0.0, %v6692
    %6694 = vmatmul.f32.gmra.mxu0 %v6542
    %v6695 = vpop.f32.mrf.mxu0
    %v6696 = vadd.f32 0.0, %v6695
    %6697 = vmatmul.f32.gmra.mxu0 %v6543
    %v6698 = vpop.f32.mrf.mxu0
    %v6699 = vadd.f32 0.0, %v6698
    %6700 = vmatmul.f32.gmra.mxu0 %v6544
    %v6701 = vpop.f32.mrf.mxu0
    %v6702 = vadd.f32 0.0, %v6701
    %6703 = vmatmul.f32.gmra.mxu0 %v6545
    %v6704 = vpop.f32.mrf.mxu0
    %v6705 = vadd.f32 0.0, %v6704
    %6706 = vmatmul.f32.gmra.mxu0 %v6546
    %v6707 = vpop.f32.mrf.mxu0
    %v6708 = vadd.f32 0.0, %v6707
    %6709 = vmatmul.f32.gmra.mxu0 %v6547
    %v6710 = vpop.f32.mrf.mxu0
    %v6711 = vadd.f32 0.0, %v6710
    %6712 = vmatmul.f32.gmra.mxu0 %v6548
    %v6713 = vpop.f32.mrf.mxu0
    %v6714 = vadd.f32 0.0, %v6713
    %6715 = vmatmul.f32.gmra.mxu0 %v6549
    %v6716 = vpop.f32.mrf.mxu0
    %v6717 = vadd.f32 0.0, %v6716
    %6718 = vmatmul.f32.gmra.mxu0 %v6550
    %v6719 = vpop.f32.mrf.mxu0
    %v6720 = vadd.f32 0.0, %v6719
    %6721 = vmatmul.f32.gmra.mxu0 %v6551
    %v6722 = vpop.f32.mrf.mxu0
    %v6723 = vadd.f32 0.0, %v6722
    %6724 = vmatmul.f32.gmra.mxu0 %v6552
    %v6725 = vpop.f32.mrf.mxu0
    %v6726 = vadd.f32 0.0, %v6725
    %6727 = vmatmul.f32.gmra.mxu0 %v6553
    %v6728 = vpop.f32.mrf.mxu0
    %v6729 = vadd.f32 0.0, %v6728
    %6730 = vmatmul.f32.gmra.mxu0 %v6554
    %v6731 = vpop.f32.mrf.mxu0
    %v6732 = vadd.f32 0.0, %v6731
    %6733 = vmatmul.f32.gmra.mxu0 %v6555
    %v6734 = vpop.f32.mrf.mxu0
    %v6735 = vadd.f32 0.0, %v6734
    %6736 = vmatmul.f32.gmra.mxu0 %v6556
    %v6737 = vpop.f32.mrf.mxu0
    %v6738 = vadd.f32 0.0, %v6737
    %6739 = vmatmul.f32.gmra.mxu0 %v6557
    %v6740 = vpop.f32.mrf.mxu0
    %v6741 = vadd.f32 0.0, %v6740
    %6742 = vmatmul.f32.gmra.mxu0 %v6558
    %v6743 = vpop.f32.mrf.mxu0
    %v6744 = vadd.f32 0.0, %v6743
    %6745 = vmatmul.f32.gmra.mxu0 %v6559
    %v6746 = vpop.f32.mrf.mxu0
    %v6747 = vadd.f32 0.0, %v6746
    %6748 = vmatmul.f32.gmra.mxu0 %v6560
    %v6749 = vpop.f32.mrf.mxu0
    %v6750 = vadd.f32 0.0, %v6749
    %6751 = vmatmul.f32.gmra.mxu0 %v6561
    %v6752 = vpop.f32.mrf.mxu0
    %v6753 = vadd.f32 0.0, %v6752
    %6754 = vmatmul.f32.gmra.mxu0 %v6562
    %v6755 = vpop.f32.mrf.mxu0
    %v6756 = vadd.f32 0.0, %v6755
    %6757 = vmatmul.f32.gmra.mxu0 %v6563
    %v6758 = vpop.f32.mrf.mxu0
    %v6759 = vadd.f32 0.0, %v6758
    %6760 = vmatmul.f32.gmra.mxu0 %v6564
    %v6761 = vpop.f32.mrf.mxu0
    %v6762 = vadd.f32 0.0, %v6761
    %6763 = vmatmul.f32.gmra.mxu0 %v6565
    %v6764 = vpop.f32.mrf.mxu0
    %v6765 = vadd.f32 0.0, %v6764
    %6766 = vmatmul.f32.gmra.mxu0 %v6566
    %v6767 = vpop.f32.mrf.mxu0
    %v6768 = vadd.f32 0.0, %v6767
    %6769 = vmatmul.f32.gmra.mxu0 %v6567
    %v6770 = vpop.f32.mrf.mxu0
    %v6771 = vadd.f32 0.0, %v6770
    %6772 = vmatmul.f32.gmra.mxu0 %v6568
    %v6773 = vpop.f32.mrf.mxu0
    %v6774 = vadd.f32 0.0, %v6773
    %6775 = vmatmul.f32.gmra.mxu0 %v6569
    %v6776 = vpop.f32.mrf.mxu0
    %v6777 = vadd.f32 0.0, %v6776
    %6778 = vmatmul.f32.gmra.mxu0 %v6570
    %v6779 = vpop.f32.mrf.mxu0
    %v6780 = vadd.f32 0.0, %v6779
    %6781 = vmatmul.f32.gmra.mxu0 %v6571
    %v6782 = vpop.f32.mrf.mxu0
    %v6783 = vadd.f32 0.0, %v6782
    %6784 = vmatmul.f32.gmra.mxu0 %v6572
    %v6785 = vpop.f32.mrf.mxu0
    %v6786 = vadd.f32 0.0, %v6785
    %6787 = vmatmul.f32.gmra.mxu0 %v6573
    %v6788 = vpop.f32.mrf.mxu0
    %v6789 = vadd.f32 0.0, %v6788
    %6790 = vmatmul.f32.gmra.mxu0 %v6574
    %v6791 = vpop.f32.mrf.mxu0
    %v6792 = vadd.f32 0.0, %v6791
    %6793 = vmatmul.f32.gmra.mxu0 %v6575
    %v6794 = vpop.f32.mrf.mxu0
    %v6795 = vadd.f32 0.0, %v6794
    %6796 = vmatmul.f32.gmra.mxu0 %v6576
    %v6797 = vpop.f32.mrf.mxu0
    %v6798 = vadd.f32 0.0, %v6797
    %6799 = vmatmul.f32.gmra.mxu0 %v6577
    %v6800 = vpop.f32.mrf.mxu0
    %v6801 = vadd.f32 0.0, %v6800
    %6802 = vdwg.mxu0
    %v6803 = vadd.f32 %v6450, %v6612
    %v6804 = vadd.f32 %v6451, %v6615
    %v6805 = vadd.f32 %v6452, %v6618
    %v6806 = vadd.f32 %v6453, %v6621
    %v6807 = vadd.f32 %v6454, %v6624
    %v6808 = vadd.f32 %v6455, %v6627
    %v6809 = vadd.f32 %v6456, %v6630
    %v6810 = vadd.f32 %v6457, %v6633
    %v6811 = vadd.f32 %v6458, %v6636
    %v6812 = vadd.f32 %v6459, %v6639
    %v6813 = vadd.f32 %v6460, %v6642
    %v6814 = vadd.f32 %v6461, %v6645
    %v6815 = vadd.f32 %v6462, %v6648
    %v6816 = vadd.f32 %v6463, %v6651
    %v6817 = vadd.f32 %v6464, %v6654
    %v6818 = vadd.f32 %v6465, %v6657
    %v6819 = vadd.f32 %v6466, %v6660
    %v6820 = vadd.f32 %v6467, %v6663
    %v6821 = vadd.f32 %v6468, %v6666
    %v6822 = vadd.f32 %v6469, %v6669
    %v6823 = vadd.f32 %v6470, %v6672
    %v6824 = vadd.f32 %v6471, %v6675
    %v6825 = vadd.f32 %v6472, %v6678
    %v6826 = vadd.f32 %v6473, %v6681
    %v6827 = vadd.f32 %v6474, %v6684
    %v6828 = vadd.f32 %v6475, %v6687
    %v6829 = vadd.f32 %v6476, %v6690
    %v6830 = vadd.f32 %v6477, %v6693
    %v6831 = vadd.f32 %v6478, %v6696
    %v6832 = vadd.f32 %v6479, %v6699
    %v6833 = vadd.f32 %v6480, %v6702
    %v6834 = vadd.f32 %v6481, %v6705
    %v6835 = vadd.f32 %v6482, %v6708
    %v6836 = vadd.f32 %v6483, %v6711
    %v6837 = vadd.f32 %v6484, %v6714
    %v6838 = vadd.f32 %v6485, %v6717
    %v6839 = vadd.f32 %v6486, %v6720
    %v6840 = vadd.f32 %v6487, %v6723
    %v6841 = vadd.f32 %v6488, %v6726
    %v6842 = vadd.f32 %v6489, %v6729
    %v6843 = vadd.f32 %v6490, %v6732
    %v6844 = vadd.f32 %v6491, %v6735
    %v6845 = vadd.f32 %v6492, %v6738
    %v6846 = vadd.f32 %v6493, %v6741
    %v6847 = vadd.f32 %v6494, %v6744
    %v6848 = vadd.f32 %v6495, %v6747
    %v6849 = vadd.f32 %v6496, %v6750
    %v6850 = vadd.f32 %v6497, %v6753
    %v6851 = vadd.f32 %v6498, %v6756
    %v6852 = vadd.f32 %v6499, %v6759
    %v6853 = vadd.f32 %v6500, %v6762
    %v6854 = vadd.f32 %v6501, %v6765
    %v6855 = vadd.f32 %v6502, %v6768
    %v6856 = vadd.f32 %v6503, %v6771
    %v6857 = vadd.f32 %v6504, %v6774
    %v6858 = vadd.f32 %v6505, %v6777
    %v6859 = vadd.f32 %v6506, %v6780
    %v6860 = vadd.f32 %v6507, %v6783
    %v6861 = vadd.f32 %v6508, %v6786
    %v6862 = vadd.f32 %v6509, %v6789
    %v6863 = vadd.f32 %v6510, %v6792
    %v6864 = vadd.f32 %v6511, %v6795
    %v6865 = vadd.f32 %v6512, %v6798
    %v6866 = vadd.f32 %v6513, %v6801
    %v6867 = vadd.f32 %v6803, %v6804
    %v6868 = vadd.f32 %v6867, %v6805
    %v6869 = vadd.f32 %v6868, %v6806
    %v6870 = vadd.f32 %v6869, %v6807
    %v6871 = vadd.f32 %v6870, %v6808
    %v6872 = vadd.f32 %v6871, %v6809
    %v6873 = vadd.f32 %v6872, %v6810
    %v6874 = vadd.f32 %v6873, %v6811
    %v6875 = vadd.f32 %v6874, %v6812
    %v6876 = vadd.f32 %v6875, %v6813
    %v6877 = vadd.f32 %v6876, %v6814
    %v6878 = vadd.f32 %v6877, %v6815
    %v6879 = vadd.f32 %v6878, %v6816
    %v6880 = vadd.f32 %v6879, %v6817
    %v6881 = vadd.f32 %v6880, %v6818
    %v6882 = vadd.f32 %v6881, %v6819
    %v6883 = vadd.f32 %v6882, %v6820
    %v6884 = vadd.f32 %v6883, %v6821
    %v6885 = vadd.f32 %v6884, %v6822
    %v6886 = vadd.f32 %v6885, %v6823
    %v6887 = vadd.f32 %v6886, %v6824
    %v6888 = vadd.f32 %v6887, %v6825
    %v6889 = vadd.f32 %v6888, %v6826
    %v6890 = vadd.f32 %v6889, %v6827
    %v6891 = vadd.f32 %v6890, %v6828
    %v6892 = vadd.f32 %v6891, %v6829
    %v6893 = vadd.f32 %v6892, %v6830
    %v6894 = vadd.f32 %v6893, %v6831
    %v6895 = vadd.f32 %v6894, %v6832
    %v6896 = vadd.f32 %v6895, %v6833
    %v6897 = vadd.f32 %v6896, %v6834
    %v6898 = vadd.f32 %v6897, %v6835
    %v6899 = vadd.f32 %v6898, %v6836
    %v6900 = vadd.f32 %v6899, %v6837
    %v6901 = vadd.f32 %v6900, %v6838
    %v6902 = vadd.f32 %v6901, %v6839
    %v6903 = vadd.f32 %v6902, %v6840
    %v6904 = vadd.f32 %v6903, %v6841
    %v6905 = vadd.f32 %v6904, %v6842
    %v6906 = vadd.f32 %v6905, %v6843
    %v6907 = vadd.f32 %v6906, %v6844
    %v6908 = vadd.f32 %v6907, %v6845
    %v6909 = vadd.f32 %v6908, %v6846
    %v6910 = vadd.f32 %v6909, %v6847
    %v6911 = vadd.f32 %v6910, %v6848
    %v6912 = vadd.f32 %v6911, %v6849
    %v6913 = vadd.f32 %v6912, %v6850
    %v6914 = vadd.f32 %v6913, %v6851
    %v6915 = vadd.f32 %v6914, %v6852
    %v6916 = vadd.f32 %v6915, %v6853
    %v6917 = vadd.f32 %v6916, %v6854
    %v6918 = vadd.f32 %v6917, %v6855
    %v6919 = vadd.f32 %v6918, %v6856
    %v6920 = vadd.f32 %v6919, %v6857
    %v6921 = vadd.f32 %v6920, %v6858
    %v6922 = vadd.f32 %v6921, %v6859
    %v6923 = vadd.f32 %v6922, %v6860
    %v6924 = vadd.f32 %v6923, %v6861
    %v6925 = vadd.f32 %v6924, %v6862
    %v6926 = vadd.f32 %v6925, %v6863
    %v6927 = vadd.f32 %v6926, %v6864
    %v6928 = vadd.f32 %v6927, %v6865
    %v6929 = vadd.f32 %v6928, %v6866
    %v6930 = vrot.slane %v6929, 4
    %v6931 = vadd.f32 %v6929, %v6930
    %v6932 = vrot.slane %v6931, 2
    %v6933 = vadd.f32 %v6931, %v6932
    %v6934 = vrot.slane %v6933, 1
    %v6935 = vadd.f32 %v6933, %v6934
    %v6936 = vmul.f32 %v6935, 0.001953125
    %v6937 = vmul.f32 %v6803, %v6803
    %v6938 = vmul.f32 %v6804, %v6804
    %v6939 = vmul.f32 %v6805, %v6805
    %v6940 = vmul.f32 %v6806, %v6806
    %v6941 = vmul.f32 %v6807, %v6807
    %v6942 = vmul.f32 %v6808, %v6808
    %v6943 = vmul.f32 %v6809, %v6809
    %v6944 = vmul.f32 %v6810, %v6810
    %v6945 = vmul.f32 %v6811, %v6811
    %v6946 = vmul.f32 %v6812, %v6812
    %v6947 = vmul.f32 %v6813, %v6813
    %v6948 = vmul.f32 %v6814, %v6814
    %v6949 = vmul.f32 %v6815, %v6815
    %v6950 = vmul.f32 %v6816, %v6816
    %v6951 = vmul.f32 %v6817, %v6817
    %v6952 = vmul.f32 %v6818, %v6818
    %v6953 = vmul.f32 %v6819, %v6819
    %v6954 = vmul.f32 %v6820, %v6820
    %v6955 = vmul.f32 %v6821, %v6821
    %v6956 = vmul.f32 %v6822, %v6822
    %v6957 = vmul.f32 %v6823, %v6823
    %v6958 = vmul.f32 %v6824, %v6824
    %v6959 = vmul.f32 %v6825, %v6825
    %v6960 = vmul.f32 %v6826, %v6826
    %v6961 = vmul.f32 %v6827, %v6827
    %v6962 = vmul.f32 %v6828, %v6828
    %v6963 = vmul.f32 %v6829, %v6829
    %v6964 = vmul.f32 %v6830, %v6830
    %v6965 = vmul.f32 %v6831, %v6831
    %v6966 = vmul.f32 %v6832, %v6832
    %v6967 = vmul.f32 %v6833, %v6833
    %v6968 = vmul.f32 %v6834, %v6834
    %v6969 = vmul.f32 %v6835, %v6835
    %v6970 = vmul.f32 %v6836, %v6836
    %v6971 = vmul.f32 %v6837, %v6837
    %v6972 = vmul.f32 %v6838, %v6838
    %v6973 = vmul.f32 %v6839, %v6839
    %v6974 = vmul.f32 %v6840, %v6840
    %v6975 = vmul.f32 %v6841, %v6841
    %v6976 = vmul.f32 %v6842, %v6842
    %v6977 = vmul.f32 %v6843, %v6843
    %v6978 = vmul.f32 %v6844, %v6844
    %v6979 = vmul.f32 %v6845, %v6845
    %v6980 = vmul.f32 %v6846, %v6846
    %v6981 = vmul.f32 %v6847, %v6847
    %v6982 = vmul.f32 %v6848, %v6848
    %v6983 = vmul.f32 %v6849, %v6849
    %v6984 = vmul.f32 %v6850, %v6850
    %v6985 = vmul.f32 %v6851, %v6851
    %v6986 = vmul.f32 %v6852, %v6852
    %v6987 = vmul.f32 %v6853, %v6853
    %v6988 = vmul.f32 %v6854, %v6854
    %v6989 = vmul.f32 %v6855, %v6855
    %v6990 = vmul.f32 %v6856, %v6856
    %v6991 = vmul.f32 %v6857, %v6857
    %v6992 = vmul.f32 %v6858, %v6858
    %v6993 = vmul.f32 %v6859, %v6859
    %v6994 = vmul.f32 %v6860, %v6860
    %v6995 = vmul.f32 %v6861, %v6861
    %v6996 = vmul.f32 %v6862, %v6862
    %v6997 = vmul.f32 %v6863, %v6863
    %v6998 = vmul.f32 %v6864, %v6864
    %v6999 = vmul.f32 %v6865, %v6865
    %v7000 = vmul.f32 %v6866, %v6866
    %v7001 = vadd.f32 %v6937, %v6938
    %v7002 = vadd.f32 %v7001, %v6939
    %v7003 = vadd.f32 %v7002, %v6940
    %v7004 = vadd.f32 %v7003, %v6941
    %v7005 = vadd.f32 %v7004, %v6942
    %v7006 = vadd.f32 %v7005, %v6943
    %v7007 = vadd.f32 %v7006, %v6944
    %v7008 = vadd.f32 %v7007, %v6945
    %v7009 = vadd.f32 %v7008, %v6946
    %v7010 = vadd.f32 %v7009, %v6947
    %v7011 = vadd.f32 %v7010, %v6948
    %v7012 = vadd.f32 %v7011, %v6949
    %v7013 = vadd.f32 %v7012, %v6950
    %v7014 = vadd.f32 %v7013, %v6951
    %v7015 = vadd.f32 %v7014, %v6952
    %v7016 = vadd.f32 %v7015, %v6953
    %v7017 = vadd.f32 %v7016, %v6954
    %v7018 = vadd.f32 %v7017, %v6955
    %v7019 = vadd.f32 %v7018, %v6956
    %v7020 = vadd.f32 %v7019, %v6957
    %v7021 = vadd.f32 %v7020, %v6958
    %v7022 = vadd.f32 %v7021, %v6959
    %v7023 = vadd.f32 %v7022, %v6960
    %v7024 = vadd.f32 %v7023, %v6961
    %v7025 = vadd.f32 %v7024, %v6962
    %v7026 = vadd.f32 %v7025, %v6963
    %v7027 = vadd.f32 %v7026, %v6964
    %v7028 = vadd.f32 %v7027, %v6965
    %v7029 = vadd.f32 %v7028, %v6966
    %v7030 = vadd.f32 %v7029, %v6967
    %v7031 = vadd.f32 %v7030, %v6968
    %v7032 = vadd.f32 %v7031, %v6969
    %v7033 = vadd.f32 %v7032, %v6970
    %v7034 = vadd.f32 %v7033, %v6971
    %v7035 = vadd.f32 %v7034, %v6972
    %v7036 = vadd.f32 %v7035, %v6973
    %v7037 = vadd.f32 %v7036, %v6974
    %v7038 = vadd.f32 %v7037, %v6975
    %v7039 = vadd.f32 %v7038, %v6976
    %v7040 = vadd.f32 %v7039, %v6977
    %v7041 = vadd.f32 %v7040, %v6978
    %v7042 = vadd.f32 %v7041, %v6979
    %v7043 = vadd.f32 %v7042, %v6980
    %v7044 = vadd.f32 %v7043, %v6981
    %v7045 = vadd.f32 %v7044, %v6982
    %v7046 = vadd.f32 %v7045, %v6983
    %v7047 = vadd.f32 %v7046, %v6984
    %v7048 = vadd.f32 %v7047, %v6985
    %v7049 = vadd.f32 %v7048, %v6986
    %v7050 = vadd.f32 %v7049, %v6987
    %v7051 = vadd.f32 %v7050, %v6988
    %v7052 = vadd.f32 %v7051, %v6989
    %v7053 = vadd.f32 %v7052, %v6990
    %v7054 = vadd.f32 %v7053, %v6991
    %v7055 = vadd.f32 %v7054, %v6992
    %v7056 = vadd.f32 %v7055, %v6993
    %v7057 = vadd.f32 %v7056, %v6994
    %v7058 = vadd.f32 %v7057, %v6995
    %v7059 = vadd.f32 %v7058, %v6996
    %v7060 = vadd.f32 %v7059, %v6997
    %v7061 = vadd.f32 %v7060, %v6998
    %v7062 = vadd.f32 %v7061, %v6999
    %v7063 = vadd.f32 %v7062, %v7000
    %v7064 = vrot.slane %v7063, 4
    %v7065 = vadd.f32 %v7063, %v7064
    %v7066 = vrot.slane %v7065, 2
    %v7067 = vadd.f32 %v7065, %v7066
    %v7068 = vrot.slane %v7067, 1
    %v7069 = vadd.f32 %v7067, %v7068
    %v7070 = vmul.f32 %v7069, 0.001953125
    %v7071 = vmul.f32 %v6936, %v6936
    %v7072 = vsub.f32 %v7070, %v7071
    %v7073 = vld [vmem:[%s5] sm:$0x1]
    %v7074 = vadd.f32 %v7072, 1e-05
    %v7075 = vrsqrt.pop %v7074
    %v7076 = vmul.f32 %v7075, %v7074
    %v7077 = vmul.f32 %v7076, %v7075
    %v7078 = vmul.f32 0.5, %v7077
    %v7079 = vsub.f32 1.5, %v7078
    %v7080 = vmul.f32 %v7075, %v7079
    %vm7081 = vweird.f32 %v7074
    %vm7082 = vweird.f32 %v7075
    %vm7083 = vmor %vm7081, %vm7082
    %v7084 = vsel %vm7083, %v7075, %v7080
    %v7085 = vmul.f32 %v7073, %v7084
    %v7086 = vld [vmem:[%s6] sm:$0x1]
    %v7087 = vmul.f32 %v6936, %v7085
    %v7088 = vsub.f32 %v7086, %v7087
    %v7090 = vperm.slane %v7085, 0
    %v7092 = vmul.f32 %v6803, %v7090
    %v7093 = vmul.f32 %v6804, %v7090
    %v7094 = vmul.f32 %v6805, %v7090
    %v7095 = vmul.f32 %v6806, %v7090
    %v7096 = vmul.f32 %v6807, %v7090
    %v7097 = vmul.f32 %v6808, %v7090
    %v7098 = vmul.f32 %v6809, %v7090
    %v7099 = vmul.f32 %v6810, %v7090
    %v7100 = vmul.f32 %v6811, %v7090
    %v7101 = vmul.f32 %v6812, %v7090
    %v7102 = vmul.f32 %v6813, %v7090
    %v7103 = vmul.f32 %v6814, %v7090
    %v7104 = vmul.f32 %v6815, %v7090
    %v7105 = vmul.f32 %v6816, %v7090
    %v7106 = vmul.f32 %v6817, %v7090
    %v7107 = vmul.f32 %v6818, %v7090
    %v7108 = vmul.f32 %v6819, %v7090
    %v7109 = vmul.f32 %v6820, %v7090
    %v7110 = vmul.f32 %v6821, %v7090
    %v7111 = vmul.f32 %v6822, %v7090
    %v7112 = vmul.f32 %v6823, %v7090
    %v7113 = vmul.f32 %v6824, %v7090
    %v7114 = vmul.f32 %v6825, %v7090
    %v7115 = vmul.f32 %v6826, %v7090
    %v7116 = vmul.f32 %v6827, %v7090
    %v7117 = vmul.f32 %v6828, %v7090
    %v7118 = vmul.f32 %v6829, %v7090
    %v7119 = vmul.f32 %v6830, %v7090
    %v7120 = vmul.f32 %v6831, %v7090
    %v7121 = vmul.f32 %v6832, %v7090
    %v7122 = vmul.f32 %v6833, %v7090
    %v7123 = vmul.f32 %v6834, %v7090
    %v7124 = vmul.f32 %v6835, %v7090
    %v7125 = vmul.f32 %v6836, %v7090
    %v7126 = vmul.f32 %v6837, %v7090
    %v7127 = vmul.f32 %v6838, %v7090
    %v7128 = vmul.f32 %v6839, %v7090
    %v7129 = vmul.f32 %v6840, %v7090
    %v7130 = vmul.f32 %v6841, %v7090
    %v7131 = vmul.f32 %v6842, %v7090
    %v7132 = vmul.f32 %v6843, %v7090
    %v7133 = vmul.f32 %v6844, %v7090
    %v7134 = vmul.f32 %v6845, %v7090
    %v7135 = vmul.f32 %v6846, %v7090
    %v7136 = vmul.f32 %v6847, %v7090
    %v7137 = vmul.f32 %v6848, %v7090
    %v7138 = vmul.f32 %v6849, %v7090
    %v7139 = vmul.f32 %v6850, %v7090
    %v7140 = vmul.f32 %v6851, %v7090
    %v7141 = vmul.f32 %v6852, %v7090
    %v7142 = vmul.f32 %v6853, %v7090
    %v7143 = vmul.f32 %v6854, %v7090
    %v7144 = vmul.f32 %v6855, %v7090
    %v7145 = vmul.f32 %v6856, %v7090
    %v7146 = vmul.f32 %v6857, %v7090
    %v7147 = vmul.f32 %v6858, %v7090
    %v7148 = vmul.f32 %v6859, %v7090
    %v7149 = vmul.f32 %v6860, %v7090
    %v7150 = vmul.f32 %v6861, %v7090
    %v7151 = vmul.f32 %v6862, %v7090
    %v7152 = vmul.f32 %v6863, %v7090
    %v7153 = vmul.f32 %v6864, %v7090
    %v7154 = vmul.f32 %v6865, %v7090
    %v7155 = vmul.f32 %v6866, %v7090
    %v7157 = vperm.slane %v7088, 0
    %v7159 = vadd.f32 %v7092, %v7157
    %v7160 = vadd.f32 %v7093, %v7157
    %v7161 = vadd.f32 %v7094, %v7157
    %v7162 = vadd.f32 %v7095, %v7157
    %v7163 = vadd.f32 %v7096, %v7157
    %v7164 = vadd.f32 %v7097, %v7157
    %v7165 = vadd.f32 %v7098, %v7157
    %v7166 = vadd.f32 %v7099, %v7157
    %v7167 = vadd.f32 %v7100, %v7157
    %v7168 = vadd.f32 %v7101, %v7157
    %v7169 = vadd.f32 %v7102, %v7157
    %v7170 = vadd.f32 %v7103, %v7157
    %v7171 = vadd.f32 %v7104, %v7157
    %v7172 = vadd.f32 %v7105, %v7157
    %v7173 = vadd.f32 %v7106, %v7157
    %v7174 = vadd.f32 %v7107, %v7157
    %v7175 = vadd.f32 %v7108, %v7157
    %v7176 = vadd.f32 %v7109, %v7157
    %v7177 = vadd.f32 %v7110, %v7157
    %v7178 = vadd.f32 %v7111, %v7157
    %v7179 = vadd.f32 %v7112, %v7157
    %v7180 = vadd.f32 %v7113, %v7157
    %v7181 = vadd.f32 %v7114, %v7157
    %v7182 = vadd.f32 %v7115, %v7157
    %v7183 = vadd.f32 %v7116, %v7157
    %v7184 = vadd.f32 %v7117, %v7157
    %v7185 = vadd.f32 %v7118, %v7157
    %v7186 = vadd.f32 %v7119, %v7157
    %v7187 = vadd.f32 %v7120, %v7157
    %v7188 = vadd.f32 %v7121, %v7157
    %v7189 = vadd.f32 %v7122, %v7157
    %v7190 = vadd.f32 %v7123, %v7157
    %v7191 = vadd.f32 %v7124, %v7157
    %v7192 = vadd.f32 %v7125, %v7157
    %v7193 = vadd.f32 %v7126, %v7157
    %v7194 = vadd.f32 %v7127, %v7157
    %v7195 = vadd.f32 %v7128, %v7157
    %v7196 = vadd.f32 %v7129, %v7157
    %v7197 = vadd.f32 %v7130, %v7157
    %v7198 = vadd.f32 %v7131, %v7157
    %v7199 = vadd.f32 %v7132, %v7157
    %v7200 = vadd.f32 %v7133, %v7157
    %v7201 = vadd.f32 %v7134, %v7157
    %v7202 = vadd.f32 %v7135, %v7157
    %v7203 = vadd.f32 %v7136, %v7157
    %v7204 = vadd.f32 %v7137, %v7157
    %v7205 = vadd.f32 %v7138, %v7157
    %v7206 = vadd.f32 %v7139, %v7157
    %v7207 = vadd.f32 %v7140, %v7157
    %v7208 = vadd.f32 %v7141, %v7157
    %v7209 = vadd.f32 %v7142, %v7157
    %v7210 = vadd.f32 %v7143, %v7157
    %v7211 = vadd.f32 %v7144, %v7157
    %v7212 = vadd.f32 %v7145, %v7157
    %v7213 = vadd.f32 %v7146, %v7157
    %v7214 = vadd.f32 %v7147, %v7157
    %v7215 = vadd.f32 %v7148, %v7157
    %v7216 = vadd.f32 %v7149, %v7157
    %v7217 = vadd.f32 %v7150, %v7157
    %v7218 = vadd.f32 %v7151, %v7157
    %v7219 = vadd.f32 %v7152, %v7157
    %v7220 = vadd.f32 %v7153, %v7157
    %v7221 = vadd.f32 %v7154, %v7157
    %v7222 = vadd.f32 %v7155, %v7157
    %v7223 = vmax.f32 %v7159, 0.0
    %v7224 = vmax.f32 %v7160, 0.0
    %v7225 = vmax.f32 %v7161, 0.0
    %v7226 = vmax.f32 %v7162, 0.0
    %v7227 = vmax.f32 %v7163, 0.0
    %v7228 = vmax.f32 %v7164, 0.0
    %v7229 = vmax.f32 %v7165, 0.0
    %v7230 = vmax.f32 %v7166, 0.0
    %v7231 = vmax.f32 %v7167, 0.0
    %v7232 = vmax.f32 %v7168, 0.0
    %v7233 = vmax.f32 %v7169, 0.0
    %v7234 = vmax.f32 %v7170, 0.0
    %v7235 = vmax.f32 %v7171, 0.0
    %v7236 = vmax.f32 %v7172, 0.0
    %v7237 = vmax.f32 %v7173, 0.0
    %v7238 = vmax.f32 %v7174, 0.0
    %v7239 = vmax.f32 %v7175, 0.0
    %v7240 = vmax.f32 %v7176, 0.0
    %v7241 = vmax.f32 %v7177, 0.0
    %v7242 = vmax.f32 %v7178, 0.0
    %v7243 = vmax.f32 %v7179, 0.0
    %v7244 = vmax.f32 %v7180, 0.0
    %v7245 = vmax.f32 %v7181, 0.0
    %v7246 = vmax.f32 %v7182, 0.0
    %v7247 = vmax.f32 %v7183, 0.0
    %v7248 = vmax.f32 %v7184, 0.0
    %v7249 = vmax.f32 %v7185, 0.0
    %v7250 = vmax.f32 %v7186, 0.0
    %v7251 = vmax.f32 %v7187, 0.0
    %v7252 = vmax.f32 %v7188, 0.0
    %v7253 = vmax.f32 %v7189, 0.0
    %v7254 = vmax.f32 %v7190, 0.0
    %v7255 = vmax.f32 %v7191, 0.0
    %v7256 = vmax.f32 %v7192, 0.0
    %v7257 = vmax.f32 %v7193, 0.0
    %v7258 = vmax.f32 %v7194, 0.0
    %v7259 = vmax.f32 %v7195, 0.0
    %v7260 = vmax.f32 %v7196, 0.0
    %v7261 = vmax.f32 %v7197, 0.0
    %v7262 = vmax.f32 %v7198, 0.0
    %v7263 = vmax.f32 %v7199, 0.0
    %v7264 = vmax.f32 %v7200, 0.0
    %v7265 = vmax.f32 %v7201, 0.0
    %v7266 = vmax.f32 %v7202, 0.0
    %v7267 = vmax.f32 %v7203, 0.0
    %v7268 = vmax.f32 %v7204, 0.0
    %v7269 = vmax.f32 %v7205, 0.0
    %v7270 = vmax.f32 %v7206, 0.0
    %v7271 = vmax.f32 %v7207, 0.0
    %v7272 = vmax.f32 %v7208, 0.0
    %v7273 = vmax.f32 %v7209, 0.0
    %v7274 = vmax.f32 %v7210, 0.0
    %v7275 = vmax.f32 %v7211, 0.0
    %v7276 = vmax.f32 %v7212, 0.0
    %v7277 = vmax.f32 %v7213, 0.0
    %v7278 = vmax.f32 %v7214, 0.0
    %v7279 = vmax.f32 %v7215, 0.0
    %v7280 = vmax.f32 %v7216, 0.0
    %v7281 = vmax.f32 %v7217, 0.0
    %v7282 = vmax.f32 %v7218, 0.0
    %v7283 = vmax.f32 %v7219, 0.0
    %v7284 = vmax.f32 %v7220, 0.0
    %v7285 = vmax.f32 %v7221, 0.0
    %v7286 = vmax.f32 %v7222, 0.0
    %7287 = vst [vmem:[#allocation9] sm:$0xff] %v7223
    %7288 = vst [vmem:[#allocation9 + $0x8] sm:$0xff] %v7224
    %7289 = vst [vmem:[#allocation9 + $0x10] sm:$0xff] %v7225
    %7290 = vst [vmem:[#allocation9 + $0x18] sm:$0xff] %v7226
    %7291 = vst [vmem:[#allocation9 + $0x20] sm:$0xff] %v7227
    %7292 = vst [vmem:[#allocation9 + $0x28] sm:$0xff] %v7228
    %7293 = vst [vmem:[#allocation9 + $0x30] sm:$0xff] %v7229
    %7294 = vst [vmem:[#allocation9 + $0x38] sm:$0xff] %v7230
    %7295 = vst [vmem:[#allocation9 + $0x40] sm:$0xff] %v7231
    %7296 = vst [vmem:[#allocation9 + $0x48] sm:$0xff] %v7232
    %7297 = vst [vmem:[#allocation9 + $0x50] sm:$0xff] %v7233
    %7298 = vst [vmem:[#allocation9 + $0x58] sm:$0xff] %v7234
    %7299 = vst [vmem:[#allocation9 + $0x60] sm:$0xff] %v7235
    %7300 = vst [vmem:[#allocation9 + $0x68] sm:$0xff] %v7236
    %7301 = vst [vmem:[#allocation9 + $0x70] sm:$0xff] %v7237
    %7302 = vst [vmem:[#allocation9 + $0x78] sm:$0xff] %v7238
    %7303 = vst [vmem:[#allocation9 + $0x80] sm:$0xff] %v7239
    %7304 = vst [vmem:[#allocation9 + $0x88] sm:$0xff] %v7240
    %7305 = vst [vmem:[#allocation9 + $0x90] sm:$0xff] %v7241
    %7306 = vst [vmem:[#allocation9 + $0x98] sm:$0xff] %v7242
    %7307 = vst [vmem:[#allocation9 + $0xa0] sm:$0xff] %v7243
    %7308 = vst [vmem:[#allocation9 + $0xa8] sm:$0xff] %v7244
    %7309 = vst [vmem:[#allocation9 + $0xb0] sm:$0xff] %v7245
    %7310 = vst [vmem:[#allocation9 + $0xb8] sm:$0xff] %v7246
    %7311 = vst [vmem:[#allocation9 + $0xc0] sm:$0xff] %v7247
    %7312 = vst [vmem:[#allocation9 + $0xc8] sm:$0xff] %v7248
    %7313 = vst [vmem:[#allocation9 + $0xd0] sm:$0xff] %v7249
    %7314 = vst [vmem:[#allocation9 + $0xd8] sm:$0xff] %v7250
    %7315 = vst [vmem:[#allocation9 + $0xe0] sm:$0xff] %v7251
    %7316 = vst [vmem:[#allocation9 + $0xe8] sm:$0xff] %v7252
    %7317 = vst [vmem:[#allocation9 + $0xf0] sm:$0xff] %v7253
    %7318 = vst [vmem:[#allocation9 + $0xf8] sm:$0xff] %v7254
    %7319 = vst [vmem:[#allocation9 + $0x100] sm:$0xff] %v7255
    %7320 = vst [vmem:[#allocation9 + $0x108] sm:$0xff] %v7256
    %7321 = vst [vmem:[#allocation9 + $0x110] sm:$0xff] %v7257
    %7322 = vst [vmem:[#allocation9 + $0x118] sm:$0xff] %v7258
    %7323 = vst [vmem:[#allocation9 + $0x120] sm:$0xff] %v7259
    %7324 = vst [vmem:[#allocation9 + $0x128] sm:$0xff] %v7260
    %7325 = vst [vmem:[#allocation9 + $0x130] sm:$0xff] %v7261
    %7326 = vst [vmem:[#allocation9 + $0x138] sm:$0xff] %v7262
    %7327 = vst [vmem:[#allocation9 + $0x140] sm:$0xff] %v7263
    %7328 = vst [vmem:[#allocation9 + $0x148] sm:$0xff] %v7264
    %7329 = vst [vmem:[#allocation9 + $0x150] sm:$0xff] %v7265
    %7330 = vst [vmem:[#allocation9 + $0x158] sm:$0xff] %v7266
    %7331 = vst [vmem:[#allocation9 + $0x160] sm:$0xff] %v7267
    %7332 = vst [vmem:[#allocation9 + $0x168] sm:$0xff] %v7268
    %7333 = vst [vmem:[#allocation9 + $0x170] sm:$0xff] %v7269
    %7334 = vst [vmem:[#allocation9 + $0x178] sm:$0xff] %v7270
    %7335 = vst [vmem:[#allocation9 + $0x180] sm:$0xff] %v7271
    %7336 = vst [vmem:[#allocation9 + $0x188] sm:$0xff] %v7272
    %7337 = vst [vmem:[#allocation9 + $0x190] sm:$0xff] %v7273
    %7338 = vst [vmem:[#allocation9 + $0x198] sm:$0xff] %v7274
    %7339 = vst [vmem:[#allocation9 + $0x1a0] sm:$0xff] %v7275
    %7340 = vst [vmem:[#allocation9 + $0x1a8] sm:$0xff] %v7276
    %7341 = vst [vmem:[#allocation9 + $0x1b0] sm:$0xff] %v7277
    %7342 = vst [vmem:[#allocation9 + $0x1b8] sm:$0xff] %v7278
    %7343 = vst [vmem:[#allocation9 + $0x1c0] sm:$0xff] %v7279
    %7344 = vst [vmem:[#allocation9 + $0x1c8] sm:$0xff] %v7280
    %7345 = vst [vmem:[#allocation9 + $0x1d0] sm:$0xff] %v7281
    %7346 = vst [vmem:[#allocation9 + $0x1d8] sm:$0xff] %v7282
    %7347 = vst [vmem:[#allocation9 + $0x1e0] sm:$0xff] %v7283
    %7348 = vst [vmem:[#allocation9 + $0x1e8] sm:$0xff] %v7284
    %7349 = vst [vmem:[#allocation9 + $0x1f0] sm:$0xff] %v7285
    %7350 = vst [vmem:[#allocation9 + $0x1f8] sm:$0xff] %v7286
    // Predicated region
    $region42: #{tpu_custom_call.1} parent=1 // pred_check
      _
    $region43: #{tpu_custom_call.1} parent=1 // pred_check_branch
      %7352 = sbr.rel (0) target = $region45
    $region44: #{tpu_custom_call.1} parent=1 // pred_region
      %7354 = vsyncadd [#allocation5], 0
      %s7355 = sshll.u32 [#allocation9], 4
      %s7356 = int_to_ptr.vmem [resolvable:$true] %s7355
      %s7357 = sshll.u32 %s7, 4
      %s7358 = int_to_ptr.hbm [resolvable:$true] %s7357
      %7363 = dma.vmem_to_hbm [thread:$0]  %s7356, 8192, %s7358, [#allocation5], 128, 128, 8
    $region45: #{tpu_custom_call.1} parent=1 // pred_fallthru
      _
    // Predicated region
    $region46: #{tpu_custom_call.1} parent=1 // pred_check
      _
    $region47: #{tpu_custom_call.1} parent=1 // pred_check_branch
      %7365 = sbr.rel (0) target = $region49
    $region48: #{tpu_custom_call.1} parent=1 // pred_region
      %7367 = dma.done [#allocation5], 8192
    $region49: #{tpu_custom_call.1} parent=1 // pred_fallthru
      _
    %7368 = vsyncpa [#allocation4], 1
    %7369 = vsyncpa [#allocation7], 1
    %7370 = vsyncpa [#allocation5], 1

</llo_original>
